<compile_context>
chip_gen: v7x
topology: tpu7x:2x2x1
jax: 0.10.0
libtpu: 0.0.40
codegen_flags: <defaults>
</compile_context>

<pallas_src>
import jax
import jax.numpy as jnp
from jax.experimental import pallas as pl
from jax.experimental.pallas import tpu as pltpu

CPAD = 128        # intermediate channel padding -> full 128-lane utilization
LOGIT_PAD = 128   # padded logits width -> lane-dense output store


def _round_up(v, m):
    return (v + m - 1) // m * m


def _schedule(in_channels, input_size, conv_channel_dims, conv_kernel_dims):
    """Static per-layer geometry (Python ints only)."""
    h, w = input_size
    cin = in_channels
    layers = []
    for cout, k in zip(conv_channel_dims, conv_kernel_dims):
        oh, ow = h - k + 1, w - k + 1
        ph, pw = oh // 2, ow // 2
        layers.append(dict(cin=cin, cout=cout, k=k, hin=h, win=w,
                           oh=oh, ow=ow, ph=ph, pw=pw))
        cin, h, w = cout, ph, pw
    # rows buffer l must expose so layer l's shifted conv slices stay in bounds
    buf_rows = []
    for L in layers:
        need = (L["k"] - 1) * (L["win"] + 1) + L["oh"] * L["win"]
        buf_rows.append(_round_up(max(need, L["hin"] * L["win"]), 8))
    last = layers[-1]
    buf_rows.append(_round_up(last["ph"] * last["pw"], 8))
    return layers, buf_rows


def _build_kernel(layers, n_fc_pos):
    """Fused conv->relu->pool (xN) -> flatten -> linear kernel (one batch element)."""
    n_layers = len(layers)

    def kernel(*refs):
        it = iter(refs)
        x_ref = next(it)
        conv_wb = [(next(it), next(it)) for _ in range(n_layers)]
        fcw_ref = next(it)
        fcb_ref = next(it)
        out_ref = next(it)
        acc_refs = [next(it) for _ in range(n_layers)]
        pool_refs = [next(it) for _ in range(n_layers)]

        src = x_ref                                   # flat image: (rows, channels)
        for li, L in enumerate(layers):
            k, win, oh, ph, pw = L["k"], L["win"], L["oh"], L["ph"], L["pw"]
            w_ref, b_ref = conv_wb[li]
            acc = acc_refs[li]                        # (oh*win, CPAD) f32 accumulator
            pool = pool_refs[li]                      # (>= ph*pw, CPAD) pooled output
            rows = oh * win

            # conv = sum of K*K shifted matmuls (in-VMEM, no im2col materialization).
            # Row p of acc is output position (h=p//win, w=p%win); columns w >= ow are
            # garbage that the pooling below never reads.
            for ki in range(k):
                for kj in range(k):
                    off = ki * win + kj
                    contrib = jnp.dot(src[off:off + rows, :],
                                      w_ref[ki * k + kj],
                                      preferred_element_type=jnp.float32)
                    if ki == 0 and kj == 0:
                        acc[...] = contrib
                    else:
                        acc[...] += contrib

            # bias + ReLU (VPU) on the whole plane.
            acc[...] = jnp.maximum(acc[...] + b_ref[...], 0.0)

            # fused 2x2 max pool (floor) -> lane-dense (ph*pw, CPAD) flat image.
            pool[...] = jnp.zeros(pool.shape, jnp.float32)   # zero tail rows too
            for p_h in range(ph):
                r0 = acc[(2 * p_h) * win:(2 * p_h) * win + 2 * pw, :]
                r1 = acc[(2 * p_h + 1) * win:(2 * p_h + 1) * win + 2 * pw, :]
                m = jnp.maximum(r0, r1)               # vertical max, (2*pw, CPAD)
                base = p_h * pw
                for p_w in range(pw):                 # horizontal max
                    pool[base + p_w:base + p_w + 1, :] = jnp.maximum(
                        m[2 * p_w:2 * p_w + 1, :],
                        m[2 * p_w + 1:2 * p_w + 2, :])
            src = pool

        # flatten (NHWC order baked into fcw at prep time) + linear, padded logits.
        logits = fcb_ref[...]                         # (1, LOGIT_PAD)
        for p in range(n_fc_pos):
            logits = logits + jnp.dot(src[p:p + 1, :], fcw_ref[p],
                                      preferred_element_type=jnp.float32)
        out_ref[...] = logits

    return kernel


def build_forward(in_channels, input_size, conv_channel_dims, conv_kernel_dims,
                  out_dim):
    layers, buf_rows = _schedule(in_channels, input_size,
                                 conv_channel_dims, conv_kernel_dims)
    cin0_pad = _round_up(in_channels, 8)
    last = layers[-1]
    n_fc_pos = last["ph"] * last["pw"]
    kernel = _build_kernel(layers, n_fc_pos)
    h0, w0 = input_size

    def forward(x_nchw, kp):
        n = x_nchw.shape[0]
        # Only per-forward XLA glue: tiny transpose/reshape/pad of the RAW input
        # (no intermediate ever leaves VMEM).
        x = jnp.transpose(x_nchw, (0, 2, 3, 1)).reshape(n, h0 * w0, in_channels)
        x = jnp.pad(x, ((0, 0), (0, buf_rows[0] - h0 * w0),
                        (0, cin0_pad - in_channels)))

        operands = [x]
        in_specs = [pl.BlockSpec((None, buf_rows[0], cin0_pad),
                                 lambda b: (b, 0, 0))]
        for wk, bk in kp["conv"]:
            operands += [wk, bk]
            in_specs += [pl.BlockSpec(wk.shape, lambda b: (0, 0, 0)),
                         pl.BlockSpec(bk.shape, lambda b: (0, 0))]
        operands += [kp["fc_w"], kp["fc_b"]]
        in_specs += [pl.BlockSpec(kp["fc_w"].shape, lambda b: (0, 0, 0)),
                     pl.BlockSpec(kp["fc_b"].shape, lambda b: (0, 0))]

        scratch = [pltpu.VMEM((L["oh"] * L["win"], CPAD), jnp.float32)
                   for L in layers]
        scratch += [pltpu.VMEM((buf_rows[li + 1], CPAD), jnp.float32)
                    for li in range(len(layers))]

        out = pl.pallas_call(
            kernel,
            out_shape=jax.ShapeDtypeStruct((n, 1, LOGIT_PAD), jnp.float32),
            grid=(n,),
            in_specs=in_specs,
            out_specs=pl.BlockSpec((None, 1, LOGIT_PAD), lambda b: (b, 0, 0)),
            scratch_shapes=scratch,
            compiler_params=pltpu.CompilerParams(
                dimension_semantics=("parallel",)),
        )(*operands)
        return out[:, 0, :out_dim]

    return jax.jit(forward)


# ---------------- Parameters ------------------------------------------------------


def init_params(key, in_channels, conv_channel_dims, conv_kernel_dims,
                flattened_dim, out_dim):
    """Raw parameters (PyTorch-equivalent layouts / flatten order)."""
    params = {"conv": []}
    cin = in_channels
    for idx, (cout, k) in enumerate(zip(conv_channel_dims, conv_kernel_dims)):
        kw, kb = jax.random.split(jax.random.fold_in(key, idx))
        w = 0.1 * jax.random.normal(kw, (k, k, cin, cout), jnp.float32)
        b = 0.1 * jax.random.normal(kb, (cout,), jnp.float32)
        params["conv"].append((w, b))
        cin = cout
    kw, kb = jax.random.split(jax.random.fold_in(key, 999))
    # fc_w rows follow torch.flatten(NCHW, start_dim=1) order: (c, h, w)
    params["fc_w"] = 0.1 * jax.random.normal(kw, (flattened_dim, out_dim), jnp.float32)
    params["fc_b"] = 0.1 * jax.random.normal(kb, (out_dim,), jnp.float32)
    return params


def prep_params(params, layers, in_channels, out_dim):
    """One-time repack into the fused kernel's padded, lane-dense layout."""
    kp = {"conv": []}
    for li, (L, (w, b)) in enumerate(zip(layers, params["conv"])):
        k, cin, cout = L["k"], L["cin"], L["cout"]
        cin_pad = _round_up(in_channels, 8) if li == 0 else CPAD
        wk = jnp.zeros((k * k, cin_pad, CPAD), jnp.float32)
        wk = wk.at[:, :cin, :cout].set(w.reshape(k * k, cin, cout))
        bk = jnp.zeros((1, CPAD), jnp.float32).at[0, :cout].set(b)
        kp["conv"].append((wk, bk))
    last = layers[-1]
    c_l, h_l, w_l = last["cout"], last["ph"], last["pw"]
    # Permute fc rows (c, h, w) -> (h, w, c) ONCE so the kernel's NHWC flatten needs
    # no runtime transpose; pad to lane-dense (CPAD, LOGIT_PAD) tiles.
    fcw = params["fc_w"].reshape(c_l, h_l, w_l, out_dim).transpose(1, 2, 0, 3)
    fcw = fcw.reshape(h_l * w_l, c_l, out_dim)
    fcw_k = jnp.zeros((h_l * w_l, CPAD, LOGIT_PAD), jnp.float32)
    fcw_k = fcw_k.at[:, :c_l, :out_dim].set(fcw)
    fcb_k = jnp.zeros((1, LOGIT_PAD), jnp.float32).at[0, :out_dim].set(params["fc_b"])
    kp["fc_w"] = fcw_k
    kp["fc_b"] = fcb_k
    return kp


# ---------------- Demo ------------------------------------------------------------


if __name__ == "__main__":
    key = jax.random.PRNGKey(0)

    # Small shapes consistent with the module's constructor
    batch = 2
    in_channels = 3
    input_size = (16, 16)
    conv_channel_dims = [8, 16]
    conv_kernel_dims = [3, 3]
    out_dim = 10

    # _compute_flattened_dim equivalent (valid conv, stride 1, pool /2 per block)
    h, w = input_size
    c = in_channels
    for cout, k in zip(conv_channel_dims, conv_kernel_dims):
        h, w = (h - k + 1) // 2, (w - k + 1) // 2
        c = cout
    flattened_dim = c * h * w        # 16 * 2 * 2 = 64

    params = init_params(key, in_channels, conv_channel_dims, conv_kernel_dims,
                         flattened_dim, out_dim)
    layers, _ = _schedule(in_channels, input_size, conv_channel_dims,
                          conv_kernel_dims)
    kparams = prep_params(params, layers, in_channels, out_dim)
    forward = build_forward(in_channels, input_size, conv_channel_dims,
                            conv_kernel_dims, out_dim)

    x = jax.random.normal(jax.random.fold_in(key, 123),
                          (batch, in_channels, *input_size), jnp.float32)

    out = forward(x, kparams)
    out = jax.block_until_ready(out)
    assert out.shape == (batch, out_dim), out.shape
    assert out.dtype == jnp.float32
    print("KERNEL_OK")
</pallas_src>

<mosaic_0001>
module attributes {stable_mosaic.version = 11 : i64} {
  func.func @kernel(%arg0: i32, %arg1: memref<1x264x8xf32, #tpu.memory_space<vmem>>, %arg2: memref<9x8x128xf32, #tpu.memory_space<vmem>>, %arg3: memref<1x128xf32, #tpu.memory_space<vmem>>, %arg4: memref<9x128x128xf32, #tpu.memory_space<vmem>>, %arg5: memref<1x128xf32, #tpu.memory_space<vmem>>, %arg6: memref<4x128x128xf32, #tpu.memory_space<vmem>>, %arg7: memref<1x128xf32, #tpu.memory_space<vmem>>, %arg8: memref<1x1x128xf32, #tpu.memory_space<vmem>>, %arg9: memref<224x128xf32, #tpu.memory_space<vmem>>, %arg10: memref<35x128xf32, #tpu.memory_space<vmem>>, %arg11: memref<56x128xf32, #tpu.memory_space<vmem>>, %arg12: memref<8x128xf32, #tpu.memory_space<vmem>>) attributes {dimension_semantics = [#tpu.dimension_semantics<parallel>], iteration_bounds = array<i64: 2>, scalar_prefetch = 0 : i64, scratch_operands = 4 : i64, tpu.core_type = #tpu.core_type<tc>, window_params = [{transform_indices = @transform_0, window_bounds = array<i64: 1, 264, 8>}, {pipeline_mode = #tpu.pipeline_mode<synchronous>, transform_indices = @transform_1, window_bounds = array<i64: 9, 8, 128>}, {pipeline_mode = #tpu.pipeline_mode<synchronous>, transform_indices = @transform_2, window_bounds = array<i64: 1, 128>}, {pipeline_mode = #tpu.pipeline_mode<synchronous>, transform_indices = @transform_3, window_bounds = array<i64: 9, 128, 128>}, {pipeline_mode = #tpu.pipeline_mode<synchronous>, transform_indices = @transform_4, window_bounds = array<i64: 1, 128>}, {pipeline_mode = #tpu.pipeline_mode<synchronous>, transform_indices = @transform_5, window_bounds = array<i64: 4, 128, 128>}, {pipeline_mode = #tpu.pipeline_mode<synchronous>, transform_indices = @transform_6, window_bounds = array<i64: 1, 128>}, {transform_indices = @transform_7, window_bounds = array<i64: 1, 1, 128>}]} {
    %c0 = arith.constant 0 : index
    %c0_0 = arith.constant 0 : index
    %c0_1 = arith.constant 0 : index
    %0 = vector.load %arg1[%c0, %c0_0, %c0_1] : memref<1x264x8xf32, #tpu.memory_space<vmem>>, vector<1x224x8xf32>
    %1 = vector.shape_cast %0 : vector<1x224x8xf32> to vector<224x8xf32>
    %c0_2 = arith.constant 0 : index
    %c0_3 = arith.constant 0 : index
    %c0_4 = arith.constant 0 : index
    %2 = vector.load %arg2[%c0_2, %c0_3, %c0_4] : memref<9x8x128xf32, #tpu.memory_space<vmem>>, vector<1x8x128xf32>
    %3 = vector.shape_cast %2 : vector<1x8x128xf32> to vector<8x128xf32>
    %cst = arith.constant dense<0.000000e+00> : vector<224x128xf32>
    %4 = tpu.matmul %1, %3, %cst {dimension_numbers = #tpu.dot_dimension_numbers<[1], [0], [0], [1], [0, 0, 1, 1], [], []>} : vector<224x8xf32>, vector<8x128xf32>, vector<224x128xf32> -> vector<224x128xf32>
    %c0_5 = arith.constant 0 : index
    %c0_6 = arith.constant 0 : index
    %5 = vector.load %arg9[%c0_5, %c0_6] : memref<224x128xf32, #tpu.memory_space<vmem>>, vector<224x128xf32>
    tpu.vector_store %arg9[%c0_5, %c0_6], %4 {strides = array<i32>} : memref<224x128xf32, #tpu.memory_space<vmem>>, vector<224x128xf32>,
    %c0_7 = arith.constant 0 : index
    %c1 = arith.constant 1 : index
    %c0_8 = arith.constant 0 : index
    %6 = vector.load %arg1[%c0_7, %c1, %c0_8] : memref<1x264x8xf32, #tpu.memory_space<vmem>>, vector<1x224x8xf32>
    %7 = vector.shape_cast %6 : vector<1x224x8xf32> to vector<224x8xf32>
    %c1_9 = arith.constant 1 : index
    %c0_10 = arith.constant 0 : index
    %c0_11 = arith.constant 0 : index
    %8 = vector.load %arg2[%c1_9, %c0_10, %c0_11] : memref<9x8x128xf32, #tpu.memory_space<vmem>>, vector<1x8x128xf32>
    %9 = vector.shape_cast %8 : vector<1x8x128xf32> to vector<8x128xf32>
    %cst_12 = arith.constant dense<0.000000e+00> : vector<224x128xf32>
    %10 = tpu.matmul %7, %9, %cst_12 {dimension_numbers = #tpu.dot_dimension_numbers<[1], [0], [0], [1], [0, 0, 1, 1], [], []>} : vector<224x8xf32>, vector<8x128xf32>, vector<224x128xf32> -> vector<224x128xf32>
    %c0_13 = arith.constant 0 : index
    %c0_14 = arith.constant 0 : index
    %11 = vector.load %arg9[%c0_13, %c0_14] : memref<224x128xf32, #tpu.memory_space<vmem>>, vector<224x128xf32>
    %12 = arith.addf %11, %10 : vector<224x128xf32>
    %c0_15 = arith.constant 0 : index
    %c0_16 = arith.constant 0 : index
    %13 = vector.load %arg9[%c0_15, %c0_16] : memref<224x128xf32, #tpu.memory_space<vmem>>, vector<224x128xf32>
    tpu.vector_store %arg9[%c0_15, %c0_16], %12 {strides = array<i32>} : memref<224x128xf32, #tpu.memory_space<vmem>>, vector<224x128xf32>,
    %c0_17 = arith.constant 0 : index
    %c2 = arith.constant 2 : index
    %c0_18 = arith.constant 0 : index
    %14 = vector.load %arg1[%c0_17, %c2, %c0_18] : memref<1x264x8xf32, #tpu.memory_space<vmem>>, vector<1x224x8xf32>
    %15 = vector.shape_cast %14 : vector<1x224x8xf32> to vector<224x8xf32>
    %c2_19 = arith.constant 2 : index
    %c0_20 = arith.constant 0 : index
    %c0_21 = arith.constant 0 : index
    %16 = vector.load %arg2[%c2_19, %c0_20, %c0_21] : memref<9x8x128xf32, #tpu.memory_space<vmem>>, vector<1x8x128xf32>
    %17 = vector.shape_cast %16 : vector<1x8x128xf32> to vector<8x128xf32>
    %cst_22 = arith.constant dense<0.000000e+00> : vector<224x128xf32>
    %18 = tpu.matmul %15, %17, %cst_22 {dimension_numbers = #tpu.dot_dimension_numbers<[1], [0], [0], [1], [0, 0, 1, 1], [], []>} : vector<224x8xf32>, vector<8x128xf32>, vector<224x128xf32> -> vector<224x128xf32>
    %c0_23 = arith.constant 0 : index
    %c0_24 = arith.constant 0 : index
    %19 = vector.load %arg9[%c0_23, %c0_24] : memref<224x128xf32, #tpu.memory_space<vmem>>, vector<224x128xf32>
    %20 = arith.addf %19, %18 : vector<224x128xf32>
    %c0_25 = arith.constant 0 : index
    %c0_26 = arith.constant 0 : index
    %21 = vector.load %arg9[%c0_25, %c0_26] : memref<224x128xf32, #tpu.memory_space<vmem>>, vector<224x128xf32>
    tpu.vector_store %arg9[%c0_25, %c0_26], %20 {strides = array<i32>} : memref<224x128xf32, #tpu.memory_space<vmem>>, vector<224x128xf32>,
    %c0_27 = arith.constant 0 : index
    %c16 = arith.constant 16 : index
    %c0_28 = arith.constant 0 : index
    %22 = vector.load %arg1[%c0_27, %c16, %c0_28] : memref<1x264x8xf32, #tpu.memory_space<vmem>>, vector<1x224x8xf32>
    %23 = vector.shape_cast %22 : vector<1x224x8xf32> to vector<224x8xf32>
    %c3 = arith.constant 3 : index
    %c0_29 = arith.constant 0 : index
    %c0_30 = arith.constant 0 : index
    %24 = vector.load %arg2[%c3, %c0_29, %c0_30] : memref<9x8x128xf32, #tpu.memory_space<vmem>>, vector<1x8x128xf32>
    %25 = vector.shape_cast %24 : vector<1x8x128xf32> to vector<8x128xf32>
    %cst_31 = arith.constant dense<0.000000e+00> : vector<224x128xf32>
    %26 = tpu.matmul %23, %25, %cst_31 {dimension_numbers = #tpu.dot_dimension_numbers<[1], [0], [0], [1], [0, 0, 1, 1], [], []>} : vector<224x8xf32>, vector<8x128xf32>, vector<224x128xf32> -> vector<224x128xf32>
    %c0_32 = arith.constant 0 : index
    %c0_33 = arith.constant 0 : index
    %27 = vector.load %arg9[%c0_32, %c0_33] : memref<224x128xf32, #tpu.memory_space<vmem>>, vector<224x128xf32>
    %28 = arith.addf %27, %26 : vector<224x128xf32>
    %c0_34 = arith.constant 0 : index
    %c0_35 = arith.constant 0 : index
    %29 = vector.load %arg9[%c0_34, %c0_35] : memref<224x128xf32, #tpu.memory_space<vmem>>, vector<224x128xf32>
    tpu.vector_store %arg9[%c0_34, %c0_35], %28 {strides = array<i32>} : memref<224x128xf32, #tpu.memory_space<vmem>>, vector<224x128xf32>,
    %c0_36 = arith.constant 0 : index
    %c17 = arith.constant 17 : index
    %c0_37 = arith.constant 0 : index
    %30 = vector.load %arg1[%c0_36, %c17, %c0_37] : memref<1x264x8xf32, #tpu.memory_space<vmem>>, vector<1x224x8xf32>
    %31 = vector.shape_cast %30 : vector<1x224x8xf32> to vector<224x8xf32>
    %c4 = arith.constant 4 : index
    %c0_38 = arith.constant 0 : index
    %c0_39 = arith.constant 0 : index
    %32 = vector.load %arg2[%c4, %c0_38, %c0_39] : memref<9x8x128xf32, #tpu.memory_space<vmem>>, vector<1x8x128xf32>
    %33 = vector.shape_cast %32 : vector<1x8x128xf32> to vector<8x128xf32>
    %cst_40 = arith.constant dense<0.000000e+00> : vector<224x128xf32>
    %34 = tpu.matmul %31, %33, %cst_40 {dimension_numbers = #tpu.dot_dimension_numbers<[1], [0], [0], [1], [0, 0, 1, 1], [], []>} : vector<224x8xf32>, vector<8x128xf32>, vector<224x128xf32> -> vector<224x128xf32>
    %c0_41 = arith.constant 0 : index
    %c0_42 = arith.constant 0 : index
    %35 = vector.load %arg9[%c0_41, %c0_42] : memref<224x128xf32, #tpu.memory_space<vmem>>, vector<224x128xf32>
    %36 = arith.addf %35, %34 : vector<224x128xf32>
    %c0_43 = arith.constant 0 : index
    %c0_44 = arith.constant 0 : index
    %37 = vector.load %arg9[%c0_43, %c0_44] : memref<224x128xf32, #tpu.memory_space<vmem>>, vector<224x128xf32>
    tpu.vector_store %arg9[%c0_43, %c0_44], %36 {strides = array<i32>} : memref<224x128xf32, #tpu.memory_space<vmem>>, vector<224x128xf32>,
    %c0_45 = arith.constant 0 : index
    %c18 = arith.constant 18 : index
    %c0_46 = arith.constant 0 : index
    %38 = vector.load %arg1[%c0_45, %c18, %c0_46] : memref<1x264x8xf32, #tpu.memory_space<vmem>>, vector<1x224x8xf32>
    %39 = vector.shape_cast %38 : vector<1x224x8xf32> to vector<224x8xf32>
    %c5 = arith.constant 5 : index
    %c0_47 = arith.constant 0 : index
    %c0_48 = arith.constant 0 : index
    %40 = vector.load %arg2[%c5, %c0_47, %c0_48] : memref<9x8x128xf32, #tpu.memory_space<vmem>>, vector<1x8x128xf32>
    %41 = vector.shape_cast %40 : vector<1x8x128xf32> to vector<8x128xf32>
    %cst_49 = arith.constant dense<0.000000e+00> : vector<224x128xf32>
    %42 = tpu.matmul %39, %41, %cst_49 {dimension_numbers = #tpu.dot_dimension_numbers<[1], [0], [0], [1], [0, 0, 1, 1], [], []>} : vector<224x8xf32>, vector<8x128xf32>, vector<224x128xf32> -> vector<224x128xf32>
    %c0_50 = arith.constant 0 : index
    %c0_51 = arith.constant 0 : index
    %43 = vector.load %arg9[%c0_50, %c0_51] : memref<224x128xf32, #tpu.memory_space<vmem>>, vector<224x128xf32>
    %44 = arith.addf %43, %42 : vector<224x128xf32>
    %c0_52 = arith.constant 0 : index
    %c0_53 = arith.constant 0 : index
    %45 = vector.load %arg9[%c0_52, %c0_53] : memref<224x128xf32, #tpu.memory_space<vmem>>, vector<224x128xf32>
    tpu.vector_store %arg9[%c0_52, %c0_53], %44 {strides = array<i32>} : memref<224x128xf32, #tpu.memory_space<vmem>>, vector<224x128xf32>,
    %c0_54 = arith.constant 0 : index
    %c32 = arith.constant 32 : index
    %c0_55 = arith.constant 0 : index
    %46 = vector.load %arg1[%c0_54, %c32, %c0_55] : memref<1x264x8xf32, #tpu.memory_space<vmem>>, vector<1x224x8xf32>
    %47 = vector.shape_cast %46 : vector<1x224x8xf32> to vector<224x8xf32>
    %c6 = arith.constant 6 : index
    %c0_56 = arith.constant 0 : index
    %c0_57 = arith.constant 0 : index
    %48 = vector.load %arg2[%c6, %c0_56, %c0_57] : memref<9x8x128xf32, #tpu.memory_space<vmem>>, vector<1x8x128xf32>
    %49 = vector.shape_cast %48 : vector<1x8x128xf32> to vector<8x128xf32>
    %cst_58 = arith.constant dense<0.000000e+00> : vector<224x128xf32>
    %50 = tpu.matmul %47, %49, %cst_58 {dimension_numbers = #tpu.dot_dimension_numbers<[1], [0], [0], [1], [0, 0, 1, 1], [], []>} : vector<224x8xf32>, vector<8x128xf32>, vector<224x128xf32> -> vector<224x128xf32>
    %c0_59 = arith.constant 0 : index
    %c0_60 = arith.constant 0 : index
    %51 = vector.load %arg9[%c0_59, %c0_60] : memref<224x128xf32, #tpu.memory_space<vmem>>, vector<224x128xf32>
    %52 = arith.addf %51, %50 : vector<224x128xf32>
    %c0_61 = arith.constant 0 : index
    %c0_62 = arith.constant 0 : index
    %53 = vector.load %arg9[%c0_61, %c0_62] : memref<224x128xf32, #tpu.memory_space<vmem>>, vector<224x128xf32>
    tpu.vector_store %arg9[%c0_61, %c0_62], %52 {strides = array<i32>} : memref<224x128xf32, #tpu.memory_space<vmem>>, vector<224x128xf32>,
    %c0_63 = arith.constant 0 : index
    %c33 = arith.constant 33 : index
    %c0_64 = arith.constant 0 : index
    %54 = vector.load %arg1[%c0_63, %c33, %c0_64] : memref<1x264x8xf32, #tpu.memory_space<vmem>>, vector<1x224x8xf32>
    %55 = vector.shape_cast %54 : vector<1x224x8xf32> to vector<224x8xf32>
    %c7 = arith.constant 7 : index
    %c0_65 = arith.constant 0 : index
    %c0_66 = arith.constant 0 : index
    %56 = vector.load %arg2[%c7, %c0_65, %c0_66] : memref<9x8x128xf32, #tpu.memory_space<vmem>>, vector<1x8x128xf32>
    %57 = vector.shape_cast %56 : vector<1x8x128xf32> to vector<8x128xf32>
    %cst_67 = arith.constant dense<0.000000e+00> : vector<224x128xf32>
    %58 = tpu.matmul %55, %57, %cst_67 {dimension_numbers = #tpu.dot_dimension_numbers<[1], [0], [0], [1], [0, 0, 1, 1], [], []>} : vector<224x8xf32>, vector<8x128xf32>, vector<224x128xf32> -> vector<224x128xf32>
    %c0_68 = arith.constant 0 : index
    %c0_69 = arith.constant 0 : index
    %59 = vector.load %arg9[%c0_68, %c0_69] : memref<224x128xf32, #tpu.memory_space<vmem>>, vector<224x128xf32>
    %60 = arith.addf %59, %58 : vector<224x128xf32>
    %c0_70 = arith.constant 0 : index
    %c0_71 = arith.constant 0 : index
    %61 = vector.load %arg9[%c0_70, %c0_71] : memref<224x128xf32, #tpu.memory_space<vmem>>, vector<224x128xf32>
    tpu.vector_store %arg9[%c0_70, %c0_71], %60 {strides = array<i32>} : memref<224x128xf32, #tpu.memory_space<vmem>>, vector<224x128xf32>,
    %c0_72 = arith.constant 0 : index
    %c34 = arith.constant 34 : index
    %c0_73 = arith.constant 0 : index
    %62 = vector.load %arg1[%c0_72, %c34, %c0_73] : memref<1x264x8xf32, #tpu.memory_space<vmem>>, vector<1x224x8xf32>
    %63 = vector.shape_cast %62 : vector<1x224x8xf32> to vector<224x8xf32>
    %c8 = arith.constant 8 : index
    %c0_74 = arith.constant 0 : index
    %c0_75 = arith.constant 0 : index
    %64 = vector.load %arg2[%c8, %c0_74, %c0_75] : memref<9x8x128xf32, #tpu.memory_space<vmem>>, vector<1x8x128xf32>
    %65 = vector.shape_cast %64 : vector<1x8x128xf32> to vector<8x128xf32>
    %cst_76 = arith.constant dense<0.000000e+00> : vector<224x128xf32>
    %66 = tpu.matmul %63, %65, %cst_76 {dimension_numbers = #tpu.dot_dimension_numbers<[1], [0], [0], [1], [0, 0, 1, 1], [], []>} : vector<224x8xf32>, vector<8x128xf32>, vector<224x128xf32> -> vector<224x128xf32>
    %c0_77 = arith.constant 0 : index
    %c0_78 = arith.constant 0 : index
    %67 = vector.load %arg9[%c0_77, %c0_78] : memref<224x128xf32, #tpu.memory_space<vmem>>, vector<224x128xf32>
    %68 = arith.addf %67, %66 : vector<224x128xf32>
    %c0_79 = arith.constant 0 : index
    %c0_80 = arith.constant 0 : index
    %69 = vector.load %arg9[%c0_79, %c0_80] : memref<224x128xf32, #tpu.memory_space<vmem>>, vector<224x128xf32>
    tpu.vector_store %arg9[%c0_79, %c0_80], %68 {strides = array<i32>} : memref<224x128xf32, #tpu.memory_space<vmem>>, vector<224x128xf32>,
    %c0_81 = arith.constant 0 : index
    %c0_82 = arith.constant 0 : index
    %70 = vector.load %arg9[%c0_81, %c0_82] : memref<224x128xf32, #tpu.memory_space<vmem>>, vector<224x128xf32>
    %c0_83 = arith.constant 0 : index
    %c0_84 = arith.constant 0 : index
    %71 = vector.load %arg3[%c0_83, %c0_84] : memref<1x128xf32, #tpu.memory_space<vmem>>, vector<1x128xf32>
    %72 = vector.broadcast %71 : vector<1x128xf32> to vector<224x128xf32>
    %73 = arith.addf %70, %72 : vector<224x128xf32>
    %cst_85 = arith.constant 0.000000e+00 : f32
    %74 = vector.broadcast %cst_85 : f32 to vector<224x128xf32>
    %75 = arith.maximumf %73, %74 : vector<224x128xf32>
    %c0_86 = arith.constant 0 : index
    %c0_87 = arith.constant 0 : index
    %76 = vector.load %arg9[%c0_86, %c0_87] : memref<224x128xf32, #tpu.memory_space<vmem>>, vector<224x128xf32>
    tpu.vector_store %arg9[%c0_86, %c0_87], %75 {strides = array<i32>} : memref<224x128xf32, #tpu.memory_space<vmem>>, vector<224x128xf32>,
    %cst_88 = arith.constant 0.000000e+00 : f32
    %77 = vector.broadcast %cst_88 : f32 to vector<56x128xf32>
    %c0_89 = arith.constant 0 : index
    %c0_90 = arith.constant 0 : index
    %78 = vector.load %arg11[%c0_89, %c0_90] : memref<56x128xf32, #tpu.memory_space<vmem>>, vector<56x128xf32>
    tpu.vector_store %arg11[%c0_89, %c0_90], %77 {strides = array<i32>} : memref<56x128xf32, #tpu.memory_space<vmem>>, vector<56x128xf32>,
    %c0_91 = arith.constant 0 : index
    %c0_92 = arith.constant 0 : index
    %79 = vector.load %arg9[%c0_91, %c0_92] : memref<224x128xf32, #tpu.memory_space<vmem>>, vector<14x128xf32>
    %c16_93 = arith.constant 16 : index
    %c0_94 = arith.constant 0 : index
    %80 = vector.load %arg9[%c16_93, %c0_94] : memref<224x128xf32, #tpu.memory_space<vmem>>, vector<14x128xf32>
    %81 = arith.maximumf %79, %80 : vector<14x128xf32>
    %82 = vector.extract_strided_slice %81 {offsets = [0, 0], sizes = [1, 128], strides = [1, 1]} : vector<14x128xf32> to vector<1x128xf32>
    %83 = vector.extract_strided_slice %81 {offsets = [1, 0], sizes = [1, 128], strides = [1, 1]} : vector<14x128xf32> to vector<1x128xf32>
    %84 = arith.maximumf %82, %83 : vector<1x128xf32>
    %c0_95 = arith.constant 0 : index
    %c0_96 = arith.constant 0 : index
    %85 = vector.load %arg11[%c0_95, %c0_96] : memref<56x128xf32, #tpu.memory_space<vmem>>, vector<1x128xf32>
    tpu.vector_store %arg11[%c0_95, %c0_96], %84 {strides = array<i32>} : memref<56x128xf32, #tpu.memory_space<vmem>>, vector<1x128xf32>,
    %86 = vector.extract_strided_slice %81 {offsets = [2, 0], sizes = [1, 128], strides = [1, 1]} : vector<14x128xf32> to vector<1x128xf32>
    %87 = vector.extract_strided_slice %81 {offsets = [3, 0], sizes = [1, 128], strides = [1, 1]} : vector<14x128xf32> to vector<1x128xf32>
    %88 = arith.maximumf %86, %87 : vector<1x128xf32>
    %c1_97 = arith.constant 1 : index
    %c0_98 = arith.constant 0 : index
    %89 = vector.load %arg11[%c1_97, %c0_98] : memref<56x128xf32, #tpu.memory_space<vmem>>, vector<1x128xf32>
    tpu.vector_store %arg11[%c1_97, %c0_98], %88 {strides = array<i32>} : memref<56x128xf32, #tpu.memory_space<vmem>>, vector<1x128xf32>,
    %90 = vector.extract_strided_slice %81 {offsets = [4, 0], sizes = [1, 128], strides = [1, 1]} : vector<14x128xf32> to vector<1x128xf32>
    %91 = vector.extract_strided_slice %81 {offsets = [5, 0], sizes = [1, 128], strides = [1, 1]} : vector<14x128xf32> to vector<1x128xf32>
    %92 = arith.maximumf %90, %91 : vector<1x128xf32>
    %c2_99 = arith.constant 2 : index
    %c0_100 = arith.constant 0 : index
    %93 = vector.load %arg11[%c2_99, %c0_100] : memref<56x128xf32, #tpu.memory_space<vmem>>, vector<1x128xf32>
    tpu.vector_store %arg11[%c2_99, %c0_100], %92 {strides = array<i32>} : memref<56x128xf32, #tpu.memory_space<vmem>>, vector<1x128xf32>,
    %94 = vector.extract_strided_slice %81 {offsets = [6, 0], sizes = [1, 128], strides = [1, 1]} : vector<14x128xf32> to vector<1x128xf32>
    %95 = vector.extract_strided_slice %81 {offsets = [7, 0], sizes = [1, 128], strides = [1, 1]} : vector<14x128xf32> to vector<1x128xf32>
    %96 = arith.maximumf %94, %95 : vector<1x128xf32>
    %c3_101 = arith.constant 3 : index
    %c0_102 = arith.constant 0 : index
    %97 = vector.load %arg11[%c3_101, %c0_102] : memref<56x128xf32, #tpu.memory_space<vmem>>, vector<1x128xf32>
    tpu.vector_store %arg11[%c3_101, %c0_102], %96 {strides = array<i32>} : memref<56x128xf32, #tpu.memory_space<vmem>>, vector<1x128xf32>,
    %98 = vector.extract_strided_slice %81 {offsets = [8, 0], sizes = [1, 128], strides = [1, 1]} : vector<14x128xf32> to vector<1x128xf32>
    %99 = vector.extract_strided_slice %81 {offsets = [9, 0], sizes = [1, 128], strides = [1, 1]} : vector<14x128xf32> to vector<1x128xf32>
    %100 = arith.maximumf %98, %99 : vector<1x128xf32>
    %c4_103 = arith.constant 4 : index
    %c0_104 = arith.constant 0 : index
    %101 = vector.load %arg11[%c4_103, %c0_104] : memref<56x128xf32, #tpu.memory_space<vmem>>, vector<1x128xf32>
    tpu.vector_store %arg11[%c4_103, %c0_104], %100 {strides = array<i32>} : memref<56x128xf32, #tpu.memory_space<vmem>>, vector<1x128xf32>,
    %102 = vector.extract_strided_slice %81 {offsets = [10, 0], sizes = [1, 128], strides = [1, 1]} : vector<14x128xf32> to vector<1x128xf32>
    %103 = vector.extract_strided_slice %81 {offsets = [11, 0], sizes = [1, 128], strides = [1, 1]} : vector<14x128xf32> to vector<1x128xf32>
    %104 = arith.maximumf %102, %103 : vector<1x128xf32>
    %c5_105 = arith.constant 5 : index
    %c0_106 = arith.constant 0 : index
    %105 = vector.load %arg11[%c5_105, %c0_106] : memref<56x128xf32, #tpu.memory_space<vmem>>, vector<1x128xf32>
    tpu.vector_store %arg11[%c5_105, %c0_106], %104 {strides = array<i32>} : memref<56x128xf32, #tpu.memory_space<vmem>>, vector<1x128xf32>,
    %106 = vector.extract_strided_slice %81 {offsets = [12, 0], sizes = [1, 128], strides = [1, 1]} : vector<14x128xf32> to vector<1x128xf32>
    %107 = vector.extract_strided_slice %81 {offsets = [13, 0], sizes = [1, 128], strides = [1, 1]} : vector<14x128xf32> to vector<1x128xf32>
    %108 = arith.maximumf %106, %107 : vector<1x128xf32>
    %c6_107 = arith.constant 6 : index
    %c0_108 = arith.constant 0 : index
    %109 = vector.load %arg11[%c6_107, %c0_108] : memref<56x128xf32, #tpu.memory_space<vmem>>, vector<1x128xf32>
    tpu.vector_store %arg11[%c6_107, %c0_108], %108 {strides = array<i32>} : memref<56x128xf32, #tpu.memory_space<vmem>>, vector<1x128xf32>,
    %c32_109 = arith.constant 32 : index
    %c0_110 = arith.constant 0 : index
    %110 = vector.load %arg9[%c32_109, %c0_110] : memref<224x128xf32, #tpu.memory_space<vmem>>, vector<14x128xf32>
    %c48 = arith.constant 48 : index
    %c0_111 = arith.constant 0 : index
    %111 = vector.load %arg9[%c48, %c0_111] : memref<224x128xf32, #tpu.memory_space<vmem>>, vector<14x128xf32>
    %112 = arith.maximumf %110, %111 : vector<14x128xf32>
    %113 = vector.extract_strided_slice %112 {offsets = [0, 0], sizes = [1, 128], strides = [1, 1]} : vector<14x128xf32> to vector<1x128xf32>
    %114 = vector.extract_strided_slice %112 {offsets = [1, 0], sizes = [1, 128], strides = [1, 1]} : vector<14x128xf32> to vector<1x128xf32>
    %115 = arith.maximumf %113, %114 : vector<1x128xf32>
    %c7_112 = arith.constant 7 : index
    %c0_113 = arith.constant 0 : index
    %116 = vector.load %arg11[%c7_112, %c0_113] : memref<56x128xf32, #tpu.memory_space<vmem>>, vector<1x128xf32>
    tpu.vector_store %arg11[%c7_112, %c0_113], %115 {strides = array<i32>} : memref<56x128xf32, #tpu.memory_space<vmem>>, vector<1x128xf32>,
    %117 = vector.extract_strided_slice %112 {offsets = [2, 0], sizes = [1, 128], strides = [1, 1]} : vector<14x128xf32> to vector<1x128xf32>
    %118 = vector.extract_strided_slice %112 {offsets = [3, 0], sizes = [1, 128], strides = [1, 1]} : vector<14x128xf32> to vector<1x128xf32>
    %119 = arith.maximumf %117, %118 : vector<1x128xf32>
    %c8_114 = arith.constant 8 : index
    %c0_115 = arith.constant 0 : index
    %120 = vector.load %arg11[%c8_114, %c0_115] : memref<56x128xf32, #tpu.memory_space<vmem>>, vector<1x128xf32>
    tpu.vector_store %arg11[%c8_114, %c0_115], %119 {strides = array<i32>} : memref<56x128xf32, #tpu.memory_space<vmem>>, vector<1x128xf32>,
    %121 = vector.extract_strided_slice %112 {offsets = [4, 0], sizes = [1, 128], strides = [1, 1]} : vector<14x128xf32> to vector<1x128xf32>
    %122 = vector.extract_strided_slice %112 {offsets = [5, 0], sizes = [1, 128], strides = [1, 1]} : vector<14x128xf32> to vector<1x128xf32>
    %123 = arith.maximumf %121, %122 : vector<1x128xf32>
    %c9 = arith.constant 9 : index
    %c0_116 = arith.constant 0 : index
    %124 = vector.load %arg11[%c9, %c0_116] : memref<56x128xf32, #tpu.memory_space<vmem>>, vector<1x128xf32>
    tpu.vector_store %arg11[%c9, %c0_116], %123 {strides = array<i32>} : memref<56x128xf32, #tpu.memory_space<vmem>>, vector<1x128xf32>,
    %125 = vector.extract_strided_slice %112 {offsets = [6, 0], sizes = [1, 128], strides = [1, 1]} : vector<14x128xf32> to vector<1x128xf32>
    %126 = vector.extract_strided_slice %112 {offsets = [7, 0], sizes = [1, 128], strides = [1, 1]} : vector<14x128xf32> to vector<1x128xf32>
    %127 = arith.maximumf %125, %126 : vector<1x128xf32>
    %c10 = arith.constant 10 : index
    %c0_117 = arith.constant 0 : index
    %128 = vector.load %arg11[%c10, %c0_117] : memref<56x128xf32, #tpu.memory_space<vmem>>, vector<1x128xf32>
    tpu.vector_store %arg11[%c10, %c0_117], %127 {strides = array<i32>} : memref<56x128xf32, #tpu.memory_space<vmem>>, vector<1x128xf32>,
    %129 = vector.extract_strided_slice %112 {offsets = [8, 0], sizes = [1, 128], strides = [1, 1]} : vector<14x128xf32> to vector<1x128xf32>
    %130 = vector.extract_strided_slice %112 {offsets = [9, 0], sizes = [1, 128], strides = [1, 1]} : vector<14x128xf32> to vector<1x128xf32>
    %131 = arith.maximumf %129, %130 : vector<1x128xf32>
    %c11 = arith.constant 11 : index
    %c0_118 = arith.constant 0 : index
    %132 = vector.load %arg11[%c11, %c0_118] : memref<56x128xf32, #tpu.memory_space<vmem>>, vector<1x128xf32>
    tpu.vector_store %arg11[%c11, %c0_118], %131 {strides = array<i32>} : memref<56x128xf32, #tpu.memory_space<vmem>>, vector<1x128xf32>,
    %133 = vector.extract_strided_slice %112 {offsets = [10, 0], sizes = [1, 128], strides = [1, 1]} : vector<14x128xf32> to vector<1x128xf32>
    %134 = vector.extract_strided_slice %112 {offsets = [11, 0], sizes = [1, 128], strides = [1, 1]} : vector<14x128xf32> to vector<1x128xf32>
    %135 = arith.maximumf %133, %134 : vector<1x128xf32>
    %c12 = arith.constant 12 : index
    %c0_119 = arith.constant 0 : index
    %136 = vector.load %arg11[%c12, %c0_119] : memref<56x128xf32, #tpu.memory_space<vmem>>, vector<1x128xf32>
    tpu.vector_store %arg11[%c12, %c0_119], %135 {strides = array<i32>} : memref<56x128xf32, #tpu.memory_space<vmem>>, vector<1x128xf32>,
    %137 = vector.extract_strided_slice %112 {offsets = [12, 0], sizes = [1, 128], strides = [1, 1]} : vector<14x128xf32> to vector<1x128xf32>
    %138 = vector.extract_strided_slice %112 {offsets = [13, 0], sizes = [1, 128], strides = [1, 1]} : vector<14x128xf32> to vector<1x128xf32>
    %139 = arith.maximumf %137, %138 : vector<1x128xf32>
    %c13 = arith.constant 13 : index
    %c0_120 = arith.constant 0 : index
    %140 = vector.load %arg11[%c13, %c0_120] : memref<56x128xf32, #tpu.memory_space<vmem>>, vector<1x128xf32>
    tpu.vector_store %arg11[%c13, %c0_120], %139 {strides = array<i32>} : memref<56x128xf32, #tpu.memory_space<vmem>>, vector<1x128xf32>,
    %c64 = arith.constant 64 : index
    %c0_121 = arith.constant 0 : index
    %141 = vector.load %arg9[%c64, %c0_121] : memref<224x128xf32, #tpu.memory_space<vmem>>, vector<14x128xf32>
    %c80 = arith.constant 80 : index
    %c0_122 = arith.constant 0 : index
    %142 = vector.load %arg9[%c80, %c0_122] : memref<224x128xf32, #tpu.memory_space<vmem>>, vector<14x128xf32>
    %143 = arith.maximumf %141, %142 : vector<14x128xf32>
    %144 = vector.extract_strided_slice %143 {offsets = [0, 0], sizes = [1, 128], strides = [1, 1]} : vector<14x128xf32> to vector<1x128xf32>
    %145 = vector.extract_strided_slice %143 {offsets = [1, 0], sizes = [1, 128], strides = [1, 1]} : vector<14x128xf32> to vector<1x128xf32>
    %146 = arith.maximumf %144, %145 : vector<1x128xf32>
    %c14 = arith.constant 14 : index
    %c0_123 = arith.constant 0 : index
    %147 = vector.load %arg11[%c14, %c0_123] : memref<56x128xf32, #tpu.memory_space<vmem>>, vector<1x128xf32>
    tpu.vector_store %arg11[%c14, %c0_123], %146 {strides = array<i32>} : memref<56x128xf32, #tpu.memory_space<vmem>>, vector<1x128xf32>,
    %148 = vector.extract_strided_slice %143 {offsets = [2, 0], sizes = [1, 128], strides = [1, 1]} : vector<14x128xf32> to vector<1x128xf32>
    %149 = vector.extract_strided_slice %143 {offsets = [3, 0], sizes = [1, 128], strides = [1, 1]} : vector<14x128xf32> to vector<1x128xf32>
    %150 = arith.maximumf %148, %149 : vector<1x128xf32>
    %c15 = arith.constant 15 : index
    %c0_124 = arith.constant 0 : index
    %151 = vector.load %arg11[%c15, %c0_124] : memref<56x128xf32, #tpu.memory_space<vmem>>, vector<1x128xf32>
    tpu.vector_store %arg11[%c15, %c0_124], %150 {strides = array<i32>} : memref<56x128xf32, #tpu.memory_space<vmem>>, vector<1x128xf32>,
    %152 = vector.extract_strided_slice %143 {offsets = [4, 0], sizes = [1, 128], strides = [1, 1]} : vector<14x128xf32> to vector<1x128xf32>
    %153 = vector.extract_strided_slice %143 {offsets = [5, 0], sizes = [1, 128], strides = [1, 1]} : vector<14x128xf32> to vector<1x128xf32>
    %154 = arith.maximumf %152, %153 : vector<1x128xf32>
    %c16_125 = arith.constant 16 : index
    %c0_126 = arith.constant 0 : index
    %155 = vector.load %arg11[%c16_125, %c0_126] : memref<56x128xf32, #tpu.memory_space<vmem>>, vector<1x128xf32>
    tpu.vector_store %arg11[%c16_125, %c0_126], %154 {strides = array<i32>} : memref<56x128xf32, #tpu.memory_space<vmem>>, vector<1x128xf32>,
    %156 = vector.extract_strided_slice %143 {offsets = [6, 0], sizes = [1, 128], strides = [1, 1]} : vector<14x128xf32> to vector<1x128xf32>
    %157 = vector.extract_strided_slice %143 {offsets = [7, 0], sizes = [1, 128], strides = [1, 1]} : vector<14x128xf32> to vector<1x128xf32>
    %158 = arith.maximumf %156, %157 : vector<1x128xf32>
    %c17_127 = arith.constant 17 : index
    %c0_128 = arith.constant 0 : index
    %159 = vector.load %arg11[%c17_127, %c0_128] : memref<56x128xf32, #tpu.memory_space<vmem>>, vector<1x128xf32>
    tpu.vector_store %arg11[%c17_127, %c0_128], %158 {strides = array<i32>} : memref<56x128xf32, #tpu.memory_space<vmem>>, vector<1x128xf32>,
    %160 = vector.extract_strided_slice %143 {offsets = [8, 0], sizes = [1, 128], strides = [1, 1]} : vector<14x128xf32> to vector<1x128xf32>
    %161 = vector.extract_strided_slice %143 {offsets = [9, 0], sizes = [1, 128], strides = [1, 1]} : vector<14x128xf32> to vector<1x128xf32>
    %162 = arith.maximumf %160, %161 : vector<1x128xf32>
    %c18_129 = arith.constant 18 : index
    %c0_130 = arith.constant 0 : index
    %163 = vector.load %arg11[%c18_129, %c0_130] : memref<56x128xf32, #tpu.memory_space<vmem>>, vector<1x128xf32>
    tpu.vector_store %arg11[%c18_129, %c0_130], %162 {strides = array<i32>} : memref<56x128xf32, #tpu.memory_space<vmem>>, vector<1x128xf32>,
    %164 = vector.extract_strided_slice %143 {offsets = [10, 0], sizes = [1, 128], strides = [1, 1]} : vector<14x128xf32> to vector<1x128xf32>
    %165 = vector.extract_strided_slice %143 {offsets = [11, 0], sizes = [1, 128], strides = [1, 1]} : vector<14x128xf32> to vector<1x128xf32>
    %166 = arith.maximumf %164, %165 : vector<1x128xf32>
    %c19 = arith.constant 19 : index
    %c0_131 = arith.constant 0 : index
    %167 = vector.load %arg11[%c19, %c0_131] : memref<56x128xf32, #tpu.memory_space<vmem>>, vector<1x128xf32>
    tpu.vector_store %arg11[%c19, %c0_131], %166 {strides = array<i32>} : memref<56x128xf32, #tpu.memory_space<vmem>>, vector<1x128xf32>,
    %168 = vector.extract_strided_slice %143 {offsets = [12, 0], sizes = [1, 128], strides = [1, 1]} : vector<14x128xf32> to vector<1x128xf32>
    %169 = vector.extract_strided_slice %143 {offsets = [13, 0], sizes = [1, 128], strides = [1, 1]} : vector<14x128xf32> to vector<1x128xf32>
    %170 = arith.maximumf %168, %169 : vector<1x128xf32>
    %c20 = arith.constant 20 : index
    %c0_132 = arith.constant 0 : index
    %171 = vector.load %arg11[%c20, %c0_132] : memref<56x128xf32, #tpu.memory_space<vmem>>, vector<1x128xf32>
    tpu.vector_store %arg11[%c20, %c0_132], %170 {strides = array<i32>} : memref<56x128xf32, #tpu.memory_space<vmem>>, vector<1x128xf32>,
    %c96 = arith.constant 96 : index
    %c0_133 = arith.constant 0 : index
    %172 = vector.load %arg9[%c96, %c0_133] : memref<224x128xf32, #tpu.memory_space<vmem>>, vector<14x128xf32>
    %c112 = arith.constant 112 : index
    %c0_134 = arith.constant 0 : index
    %173 = vector.load %arg9[%c112, %c0_134] : memref<224x128xf32, #tpu.memory_space<vmem>>, vector<14x128xf32>
    %174 = arith.maximumf %172, %173 : vector<14x128xf32>
    %175 = vector.extract_strided_slice %174 {offsets = [0, 0], sizes = [1, 128], strides = [1, 1]} : vector<14x128xf32> to vector<1x128xf32>
    %176 = vector.extract_strided_slice %174 {offsets = [1, 0], sizes = [1, 128], strides = [1, 1]} : vector<14x128xf32> to vector<1x128xf32>
    %177 = arith.maximumf %175, %176 : vector<1x128xf32>
    %c21 = arith.constant 21 : index
    %c0_135 = arith.constant 0 : index
    %178 = vector.load %arg11[%c21, %c0_135] : memref<56x128xf32, #tpu.memory_space<vmem>>, vector<1x128xf32>
    tpu.vector_store %arg11[%c21, %c0_135], %177 {strides = array<i32>} : memref<56x128xf32, #tpu.memory_space<vmem>>, vector<1x128xf32>,
    %179 = vector.extract_strided_slice %174 {offsets = [2, 0], sizes = [1, 128], strides = [1, 1]} : vector<14x128xf32> to vector<1x128xf32>
    %180 = vector.extract_strided_slice %174 {offsets = [3, 0], sizes = [1, 128], strides = [1, 1]} : vector<14x128xf32> to vector<1x128xf32>
    %181 = arith.maximumf %179, %180 : vector<1x128xf32>
    %c22 = arith.constant 22 : index
    %c0_136 = arith.constant 0 : index
    %182 = vector.load %arg11[%c22, %c0_136] : memref<56x128xf32, #tpu.memory_space<vmem>>, vector<1x128xf32>
    tpu.vector_store %arg11[%c22, %c0_136], %181 {strides = array<i32>} : memref<56x128xf32, #tpu.memory_space<vmem>>, vector<1x128xf32>,
    %183 = vector.extract_strided_slice %174 {offsets = [4, 0], sizes = [1, 128], strides = [1, 1]} : vector<14x128xf32> to vector<1x128xf32>
    %184 = vector.extract_strided_slice %174 {offsets = [5, 0], sizes = [1, 128], strides = [1, 1]} : vector<14x128xf32> to vector<1x128xf32>
    %185 = arith.maximumf %183, %184 : vector<1x128xf32>
    %c23 = arith.constant 23 : index
    %c0_137 = arith.constant 0 : index
    %186 = vector.load %arg11[%c23, %c0_137] : memref<56x128xf32, #tpu.memory_space<vmem>>, vector<1x128xf32>
    tpu.vector_store %arg11[%c23, %c0_137], %185 {strides = array<i32>} : memref<56x128xf32, #tpu.memory_space<vmem>>, vector<1x128xf32>,
    %187 = vector.extract_strided_slice %174 {offsets = [6, 0], sizes = [1, 128], strides = [1, 1]} : vector<14x128xf32> to vector<1x128xf32>
    %188 = vector.extract_strided_slice %174 {offsets = [7, 0], sizes = [1, 128], strides = [1, 1]} : vector<14x128xf32> to vector<1x128xf32>
    %189 = arith.maximumf %187, %188 : vector<1x128xf32>
    %c24 = arith.constant 24 : index
    %c0_138 = arith.constant 0 : index
    %190 = vector.load %arg11[%c24, %c0_138] : memref<56x128xf32, #tpu.memory_space<vmem>>, vector<1x128xf32>
    tpu.vector_store %arg11[%c24, %c0_138], %189 {strides = array<i32>} : memref<56x128xf32, #tpu.memory_space<vmem>>, vector<1x128xf32>,
    %191 = vector.extract_strided_slice %174 {offsets = [8, 0], sizes = [1, 128], strides = [1, 1]} : vector<14x128xf32> to vector<1x128xf32>
    %192 = vector.extract_strided_slice %174 {offsets = [9, 0], sizes = [1, 128], strides = [1, 1]} : vector<14x128xf32> to vector<1x128xf32>
    %193 = arith.maximumf %191, %192 : vector<1x128xf32>
    %c25 = arith.constant 25 : index
    %c0_139 = arith.constant 0 : index
    %194 = vector.load %arg11[%c25, %c0_139] : memref<56x128xf32, #tpu.memory_space<vmem>>, vector<1x128xf32>
    tpu.vector_store %arg11[%c25, %c0_139], %193 {strides = array<i32>} : memref<56x128xf32, #tpu.memory_space<vmem>>, vector<1x128xf32>,
    %195 = vector.extract_strided_slice %174 {offsets = [10, 0], sizes = [1, 128], strides = [1, 1]} : vector<14x128xf32> to vector<1x128xf32>
    %196 = vector.extract_strided_slice %174 {offsets = [11, 0], sizes = [1, 128], strides = [1, 1]} : vector<14x128xf32> to vector<1x128xf32>
    %197 = arith.maximumf %195, %196 : vector<1x128xf32>
    %c26 = arith.constant 26 : index
    %c0_140 = arith.constant 0 : index
    %198 = vector.load %arg11[%c26, %c0_140] : memref<56x128xf32, #tpu.memory_space<vmem>>, vector<1x128xf32>
    tpu.vector_store %arg11[%c26, %c0_140], %197 {strides = array<i32>} : memref<56x128xf32, #tpu.memory_space<vmem>>, vector<1x128xf32>,
    %199 = vector.extract_strided_slice %174 {offsets = [12, 0], sizes = [1, 128], strides = [1, 1]} : vector<14x128xf32> to vector<1x128xf32>
    %200 = vector.extract_strided_slice %174 {offsets = [13, 0], sizes = [1, 128], strides = [1, 1]} : vector<14x128xf32> to vector<1x128xf32>
    %201 = arith.maximumf %199, %200 : vector<1x128xf32>
    %c27 = arith.constant 27 : index
    %c0_141 = arith.constant 0 : index
    %202 = vector.load %arg11[%c27, %c0_141] : memref<56x128xf32, #tpu.memory_space<vmem>>, vector<1x128xf32>
    tpu.vector_store %arg11[%c27, %c0_141], %201 {strides = array<i32>} : memref<56x128xf32, #tpu.memory_space<vmem>>, vector<1x128xf32>,
    %c128 = arith.constant 128 : index
    %c0_142 = arith.constant 0 : index
    %203 = vector.load %arg9[%c128, %c0_142] : memref<224x128xf32, #tpu.memory_space<vmem>>, vector<14x128xf32>
    %c144 = arith.constant 144 : index
    %c0_143 = arith.constant 0 : index
    %204 = vector.load %arg9[%c144, %c0_143] : memref<224x128xf32, #tpu.memory_space<vmem>>, vector<14x128xf32>
    %205 = arith.maximumf %203, %204 : vector<14x128xf32>
    %206 = vector.extract_strided_slice %205 {offsets = [0, 0], sizes = [1, 128], strides = [1, 1]} : vector<14x128xf32> to vector<1x128xf32>
    %207 = vector.extract_strided_slice %205 {offsets = [1, 0], sizes = [1, 128], strides = [1, 1]} : vector<14x128xf32> to vector<1x128xf32>
    %208 = arith.maximumf %206, %207 : vector<1x128xf32>
    %c28 = arith.constant 28 : index
    %c0_144 = arith.constant 0 : index
    %209 = vector.load %arg11[%c28, %c0_144] : memref<56x128xf32, #tpu.memory_space<vmem>>, vector<1x128xf32>
    tpu.vector_store %arg11[%c28, %c0_144], %208 {strides = array<i32>} : memref<56x128xf32, #tpu.memory_space<vmem>>, vector<1x128xf32>,
    %210 = vector.extract_strided_slice %205 {offsets = [2, 0], sizes = [1, 128], strides = [1, 1]} : vector<14x128xf32> to vector<1x128xf32>
    %211 = vector.extract_strided_slice %205 {offsets = [3, 0], sizes = [1, 128], strides = [1, 1]} : vector<14x128xf32> to vector<1x128xf32>
    %212 = arith.maximumf %210, %211 : vector<1x128xf32>
    %c29 = arith.constant 29 : index
    %c0_145 = arith.constant 0 : index
    %213 = vector.load %arg11[%c29, %c0_145] : memref<56x128xf32, #tpu.memory_space<vmem>>, vector<1x128xf32>
    tpu.vector_store %arg11[%c29, %c0_145], %212 {strides = array<i32>} : memref<56x128xf32, #tpu.memory_space<vmem>>, vector<1x128xf32>,
    %214 = vector.extract_strided_slice %205 {offsets = [4, 0], sizes = [1, 128], strides = [1, 1]} : vector<14x128xf32> to vector<1x128xf32>
    %215 = vector.extract_strided_slice %205 {offsets = [5, 0], sizes = [1, 128], strides = [1, 1]} : vector<14x128xf32> to vector<1x128xf32>
    %216 = arith.maximumf %214, %215 : vector<1x128xf32>
    %c30 = arith.constant 30 : index
    %c0_146 = arith.constant 0 : index
    %217 = vector.load %arg11[%c30, %c0_146] : memref<56x128xf32, #tpu.memory_space<vmem>>, vector<1x128xf32>
    tpu.vector_store %arg11[%c30, %c0_146], %216 {strides = array<i32>} : memref<56x128xf32, #tpu.memory_space<vmem>>, vector<1x128xf32>,
    %218 = vector.extract_strided_slice %205 {offsets = [6, 0], sizes = [1, 128], strides = [1, 1]} : vector<14x128xf32> to vector<1x128xf32>
    %219 = vector.extract_strided_slice %205 {offsets = [7, 0], sizes = [1, 128], strides = [1, 1]} : vector<14x128xf32> to vector<1x128xf32>
    %220 = arith.maximumf %218, %219 : vector<1x128xf32>
    %c31 = arith.constant 31 : index
    %c0_147 = arith.constant 0 : index
    %221 = vector.load %arg11[%c31, %c0_147] : memref<56x128xf32, #tpu.memory_space<vmem>>, vector<1x128xf32>
    tpu.vector_store %arg11[%c31, %c0_147], %220 {strides = array<i32>} : memref<56x128xf32, #tpu.memory_space<vmem>>, vector<1x128xf32>,
    %222 = vector.extract_strided_slice %205 {offsets = [8, 0], sizes = [1, 128], strides = [1, 1]} : vector<14x128xf32> to vector<1x128xf32>
    %223 = vector.extract_strided_slice %205 {offsets = [9, 0], sizes = [1, 128], strides = [1, 1]} : vector<14x128xf32> to vector<1x128xf32>
    %224 = arith.maximumf %222, %223 : vector<1x128xf32>
    %c32_148 = arith.constant 32 : index
    %c0_149 = arith.constant 0 : index
    %225 = vector.load %arg11[%c32_148, %c0_149] : memref<56x128xf32, #tpu.memory_space<vmem>>, vector<1x128xf32>
    tpu.vector_store %arg11[%c32_148, %c0_149], %224 {strides = array<i32>} : memref<56x128xf32, #tpu.memory_space<vmem>>, vector<1x128xf32>,
    %226 = vector.extract_strided_slice %205 {offsets = [10, 0], sizes = [1, 128], strides = [1, 1]} : vector<14x128xf32> to vector<1x128xf32>
    %227 = vector.extract_strided_slice %205 {offsets = [11, 0], sizes = [1, 128], strides = [1, 1]} : vector<14x128xf32> to vector<1x128xf32>
    %228 = arith.maximumf %226, %227 : vector<1x128xf32>
    %c33_150 = arith.constant 33 : index
    %c0_151 = arith.constant 0 : index
    %229 = vector.load %arg11[%c33_150, %c0_151] : memref<56x128xf32, #tpu.memory_space<vmem>>, vector<1x128xf32>
    tpu.vector_store %arg11[%c33_150, %c0_151], %228 {strides = array<i32>} : memref<56x128xf32, #tpu.memory_space<vmem>>, vector<1x128xf32>,
    %230 = vector.extract_strided_slice %205 {offsets = [12, 0], sizes = [1, 128], strides = [1, 1]} : vector<14x128xf32> to vector<1x128xf32>
    %231 = vector.extract_strided_slice %205 {offsets = [13, 0], sizes = [1, 128], strides = [1, 1]} : vector<14x128xf32> to vector<1x128xf32>
    %232 = arith.maximumf %230, %231 : vector<1x128xf32>
    %c34_152 = arith.constant 34 : index
    %c0_153 = arith.constant 0 : index
    %233 = vector.load %arg11[%c34_152, %c0_153] : memref<56x128xf32, #tpu.memory_space<vmem>>, vector<1x128xf32>
    tpu.vector_store %arg11[%c34_152, %c0_153], %232 {strides = array<i32>} : memref<56x128xf32, #tpu.memory_space<vmem>>, vector<1x128xf32>,
    %c160 = arith.constant 160 : index
    %c0_154 = arith.constant 0 : index
    %234 = vector.load %arg9[%c160, %c0_154] : memref<224x128xf32, #tpu.memory_space<vmem>>, vector<14x128xf32>
    %c176 = arith.constant 176 : index
    %c0_155 = arith.constant 0 : index
    %235 = vector.load %arg9[%c176, %c0_155] : memref<224x128xf32, #tpu.memory_space<vmem>>, vector<14x128xf32>
    %236 = arith.maximumf %234, %235 : vector<14x128xf32>
    %237 = vector.extract_strided_slice %236 {offsets = [0, 0], sizes = [1, 128], strides = [1, 1]} : vector<14x128xf32> to vector<1x128xf32>
    %238 = vector.extract_strided_slice %236 {offsets = [1, 0], sizes = [1, 128], strides = [1, 1]} : vector<14x128xf32> to vector<1x128xf32>
    %239 = arith.maximumf %237, %238 : vector<1x128xf32>
    %c35 = arith.constant 35 : index
    %c0_156 = arith.constant 0 : index
    %240 = vector.load %arg11[%c35, %c0_156] : memref<56x128xf32, #tpu.memory_space<vmem>>, vector<1x128xf32>
    tpu.vector_store %arg11[%c35, %c0_156], %239 {strides = array<i32>} : memref<56x128xf32, #tpu.memory_space<vmem>>, vector<1x128xf32>,
    %241 = vector.extract_strided_slice %236 {offsets = [2, 0], sizes = [1, 128], strides = [1, 1]} : vector<14x128xf32> to vector<1x128xf32>
    %242 = vector.extract_strided_slice %236 {offsets = [3, 0], sizes = [1, 128], strides = [1, 1]} : vector<14x128xf32> to vector<1x128xf32>
    %243 = arith.maximumf %241, %242 : vector<1x128xf32>
    %c36 = arith.constant 36 : index
    %c0_157 = arith.constant 0 : index
    %244 = vector.load %arg11[%c36, %c0_157] : memref<56x128xf32, #tpu.memory_space<vmem>>, vector<1x128xf32>
    tpu.vector_store %arg11[%c36, %c0_157], %243 {strides = array<i32>} : memref<56x128xf32, #tpu.memory_space<vmem>>, vector<1x128xf32>,
    %245 = vector.extract_strided_slice %236 {offsets = [4, 0], sizes = [1, 128], strides = [1, 1]} : vector<14x128xf32> to vector<1x128xf32>
    %246 = vector.extract_strided_slice %236 {offsets = [5, 0], sizes = [1, 128], strides = [1, 1]} : vector<14x128xf32> to vector<1x128xf32>
    %247 = arith.maximumf %245, %246 : vector<1x128xf32>
    %c37 = arith.constant 37 : index
    %c0_158 = arith.constant 0 : index
    %248 = vector.load %arg11[%c37, %c0_158] : memref<56x128xf32, #tpu.memory_space<vmem>>, vector<1x128xf32>
    tpu.vector_store %arg11[%c37, %c0_158], %247 {strides = array<i32>} : memref<56x128xf32, #tpu.memory_space<vmem>>, vector<1x128xf32>,
    %249 = vector.extract_strided_slice %236 {offsets = [6, 0], sizes = [1, 128], strides = [1, 1]} : vector<14x128xf32> to vector<1x128xf32>
    %250 = vector.extract_strided_slice %236 {offsets = [7, 0], sizes = [1, 128], strides = [1, 1]} : vector<14x128xf32> to vector<1x128xf32>
    %251 = arith.maximumf %249, %250 : vector<1x128xf32>
    %c38 = arith.constant 38 : index
    %c0_159 = arith.constant 0 : index
    %252 = vector.load %arg11[%c38, %c0_159] : memref<56x128xf32, #tpu.memory_space<vmem>>, vector<1x128xf32>
    tpu.vector_store %arg11[%c38, %c0_159], %251 {strides = array<i32>} : memref<56x128xf32, #tpu.memory_space<vmem>>, vector<1x128xf32>,
    %253 = vector.extract_strided_slice %236 {offsets = [8, 0], sizes = [1, 128], strides = [1, 1]} : vector<14x128xf32> to vector<1x128xf32>
    %254 = vector.extract_strided_slice %236 {offsets = [9, 0], sizes = [1, 128], strides = [1, 1]} : vector<14x128xf32> to vector<1x128xf32>
    %255 = arith.maximumf %253, %254 : vector<1x128xf32>
    %c39 = arith.constant 39 : index
    %c0_160 = arith.constant 0 : index
    %256 = vector.load %arg11[%c39, %c0_160] : memref<56x128xf32, #tpu.memory_space<vmem>>, vector<1x128xf32>
    tpu.vector_store %arg11[%c39, %c0_160], %255 {strides = array<i32>} : memref<56x128xf32, #tpu.memory_space<vmem>>, vector<1x128xf32>,
    %257 = vector.extract_strided_slice %236 {offsets = [10, 0], sizes = [1, 128], strides = [1, 1]} : vector<14x128xf32> to vector<1x128xf32>
    %258 = vector.extract_strided_slice %236 {offsets = [11, 0], sizes = [1, 128], strides = [1, 1]} : vector<14x128xf32> to vector<1x128xf32>
    %259 = arith.maximumf %257, %258 : vector<1x128xf32>
    %c40 = arith.constant 40 : index
    %c0_161 = arith.constant 0 : index
    %260 = vector.load %arg11[%c40, %c0_161] : memref<56x128xf32, #tpu.memory_space<vmem>>, vector<1x128xf32>
    tpu.vector_store %arg11[%c40, %c0_161], %259 {strides = array<i32>} : memref<56x128xf32, #tpu.memory_space<vmem>>, vector<1x128xf32>,
    %261 = vector.extract_strided_slice %236 {offsets = [12, 0], sizes = [1, 128], strides = [1, 1]} : vector<14x128xf32> to vector<1x128xf32>
    %262 = vector.extract_strided_slice %236 {offsets = [13, 0], sizes = [1, 128], strides = [1, 1]} : vector<14x128xf32> to vector<1x128xf32>
    %263 = arith.maximumf %261, %262 : vector<1x128xf32>
    %c41 = arith.constant 41 : index
    %c0_162 = arith.constant 0 : index
    %264 = vector.load %arg11[%c41, %c0_162] : memref<56x128xf32, #tpu.memory_space<vmem>>, vector<1x128xf32>
    tpu.vector_store %arg11[%c41, %c0_162], %263 {strides = array<i32>} : memref<56x128xf32, #tpu.memory_space<vmem>>, vector<1x128xf32>,
    %c192 = arith.constant 192 : index
    %c0_163 = arith.constant 0 : index
    %265 = vector.load %arg9[%c192, %c0_163] : memref<224x128xf32, #tpu.memory_space<vmem>>, vector<14x128xf32>
    %c208 = arith.constant 208 : index
    %c0_164 = arith.constant 0 : index
    %266 = vector.load %arg9[%c208, %c0_164] : memref<224x128xf32, #tpu.memory_space<vmem>>, vector<14x128xf32>
    %267 = arith.maximumf %265, %266 : vector<14x128xf32>
    %268 = vector.extract_strided_slice %267 {offsets = [0, 0], sizes = [1, 128], strides = [1, 1]} : vector<14x128xf32> to vector<1x128xf32>
    %269 = vector.extract_strided_slice %267 {offsets = [1, 0], sizes = [1, 128], strides = [1, 1]} : vector<14x128xf32> to vector<1x128xf32>
    %270 = arith.maximumf %268, %269 : vector<1x128xf32>
    %c42 = arith.constant 42 : index
    %c0_165 = arith.constant 0 : index
    %271 = vector.load %arg11[%c42, %c0_165] : memref<56x128xf32, #tpu.memory_space<vmem>>, vector<1x128xf32>
    tpu.vector_store %arg11[%c42, %c0_165], %270 {strides = array<i32>} : memref<56x128xf32, #tpu.memory_space<vmem>>, vector<1x128xf32>,
    %272 = vector.extract_strided_slice %267 {offsets = [2, 0], sizes = [1, 128], strides = [1, 1]} : vector<14x128xf32> to vector<1x128xf32>
    %273 = vector.extract_strided_slice %267 {offsets = [3, 0], sizes = [1, 128], strides = [1, 1]} : vector<14x128xf32> to vector<1x128xf32>
    %274 = arith.maximumf %272, %273 : vector<1x128xf32>
    %c43 = arith.constant 43 : index
    %c0_166 = arith.constant 0 : index
    %275 = vector.load %arg11[%c43, %c0_166] : memref<56x128xf32, #tpu.memory_space<vmem>>, vector<1x128xf32>
    tpu.vector_store %arg11[%c43, %c0_166], %274 {strides = array<i32>} : memref<56x128xf32, #tpu.memory_space<vmem>>, vector<1x128xf32>,
    %276 = vector.extract_strided_slice %267 {offsets = [4, 0], sizes = [1, 128], strides = [1, 1]} : vector<14x128xf32> to vector<1x128xf32>
    %277 = vector.extract_strided_slice %267 {offsets = [5, 0], sizes = [1, 128], strides = [1, 1]} : vector<14x128xf32> to vector<1x128xf32>
    %278 = arith.maximumf %276, %277 : vector<1x128xf32>
    %c44 = arith.constant 44 : index
    %c0_167 = arith.constant 0 : index
    %279 = vector.load %arg11[%c44, %c0_167] : memref<56x128xf32, #tpu.memory_space<vmem>>, vector<1x128xf32>
    tpu.vector_store %arg11[%c44, %c0_167], %278 {strides = array<i32>} : memref<56x128xf32, #tpu.memory_space<vmem>>, vector<1x128xf32>,
    %280 = vector.extract_strided_slice %267 {offsets = [6, 0], sizes = [1, 128], strides = [1, 1]} : vector<14x128xf32> to vector<1x128xf32>
    %281 = vector.extract_strided_slice %267 {offsets = [7, 0], sizes = [1, 128], strides = [1, 1]} : vector<14x128xf32> to vector<1x128xf32>
    %282 = arith.maximumf %280, %281 : vector<1x128xf32>
    %c45 = arith.constant 45 : index
    %c0_168 = arith.constant 0 : index
    %283 = vector.load %arg11[%c45, %c0_168] : memref<56x128xf32, #tpu.memory_space<vmem>>, vector<1x128xf32>
    tpu.vector_store %arg11[%c45, %c0_168], %282 {strides = array<i32>} : memref<56x128xf32, #tpu.memory_space<vmem>>, vector<1x128xf32>,
    %284 = vector.extract_strided_slice %267 {offsets = [8, 0], sizes = [1, 128], strides = [1, 1]} : vector<14x128xf32> to vector<1x128xf32>
    %285 = vector.extract_strided_slice %267 {offsets = [9, 0], sizes = [1, 128], strides = [1, 1]} : vector<14x128xf32> to vector<1x128xf32>
    %286 = arith.maximumf %284, %285 : vector<1x128xf32>
    %c46 = arith.constant 46 : index
    %c0_169 = arith.constant 0 : index
    %287 = vector.load %arg11[%c46, %c0_169] : memref<56x128xf32, #tpu.memory_space<vmem>>, vector<1x128xf32>
    tpu.vector_store %arg11[%c46, %c0_169], %286 {strides = array<i32>} : memref<56x128xf32, #tpu.memory_space<vmem>>, vector<1x128xf32>,
    %288 = vector.extract_strided_slice %267 {offsets = [10, 0], sizes = [1, 128], strides = [1, 1]} : vector<14x128xf32> to vector<1x128xf32>
    %289 = vector.extract_strided_slice %267 {offsets = [11, 0], sizes = [1, 128], strides = [1, 1]} : vector<14x128xf32> to vector<1x128xf32>
    %290 = arith.maximumf %288, %289 : vector<1x128xf32>
    %c47 = arith.constant 47 : index
    %c0_170 = arith.constant 0 : index
    %291 = vector.load %arg11[%c47, %c0_170] : memref<56x128xf32, #tpu.memory_space<vmem>>, vector<1x128xf32>
    tpu.vector_store %arg11[%c47, %c0_170], %290 {strides = array<i32>} : memref<56x128xf32, #tpu.memory_space<vmem>>, vector<1x128xf32>,
    %292 = vector.extract_strided_slice %267 {offsets = [12, 0], sizes = [1, 128], strides = [1, 1]} : vector<14x128xf32> to vector<1x128xf32>
    %293 = vector.extract_strided_slice %267 {offsets = [13, 0], sizes = [1, 128], strides = [1, 1]} : vector<14x128xf32> to vector<1x128xf32>
    %294 = arith.maximumf %292, %293 : vector<1x128xf32>
    %c48_171 = arith.constant 48 : index
    %c0_172 = arith.constant 0 : index
    %295 = vector.load %arg11[%c48_171, %c0_172] : memref<56x128xf32, #tpu.memory_space<vmem>>, vector<1x128xf32>
    tpu.vector_store %arg11[%c48_171, %c0_172], %294 {strides = array<i32>} : memref<56x128xf32, #tpu.memory_space<vmem>>, vector<1x128xf32>,
    %c0_173 = arith.constant 0 : index
    %c0_174 = arith.constant 0 : index
    %296 = vector.load %arg11[%c0_173, %c0_174] : memref<56x128xf32, #tpu.memory_space<vmem>>, vector<35x128xf32>
    %c0_175 = arith.constant 0 : index
    %c0_176 = arith.constant 0 : index
    %c0_177 = arith.constant 0 : index
    %297 = vector.load %arg4[%c0_175, %c0_176, %c0_177] : memref<9x128x128xf32, #tpu.memory_space<vmem>>, vector<1x128x128xf32>
    %298 = vector.shape_cast %297 : vector<1x128x128xf32> to vector<128x128xf32>
    %cst_178 = arith.constant dense<0.000000e+00> : vector<35x128xf32>
    %299 = tpu.matmul %296, %298, %cst_178 {dimension_numbers = #tpu.dot_dimension_numbers<[1], [0], [0], [1], [0, 0, 1, 1], [], []>} : vector<35x128xf32>, vector<128x128xf32>, vector<35x128xf32> -> vector<35x128xf32>
    %c0_179 = arith.constant 0 : index
    %c0_180 = arith.constant 0 : index
    %300 = vector.load %arg10[%c0_179, %c0_180] : memref<35x128xf32, #tpu.memory_space<vmem>>, vector<35x128xf32>
    tpu.vector_store %arg10[%c0_179, %c0_180], %299 {strides = array<i32>} : memref<35x128xf32, #tpu.memory_space<vmem>>, vector<35x128xf32>,
    %c1_181 = arith.constant 1 : index
    %c0_182 = arith.constant 0 : index
    %301 = vector.load %arg11[%c1_181, %c0_182] : memref<56x128xf32, #tpu.memory_space<vmem>>, vector<35x128xf32>
    %c1_183 = arith.constant 1 : index
    %c0_184 = arith.constant 0 : index
    %c0_185 = arith.constant 0 : index
    %302 = vector.load %arg4[%c1_183, %c0_184, %c0_185] : memref<9x128x128xf32, #tpu.memory_space<vmem>>, vector<1x128x128xf32>
    %303 = vector.shape_cast %302 : vector<1x128x128xf32> to vector<128x128xf32>
    %cst_186 = arith.constant dense<0.000000e+00> : vector<35x128xf32>
    %304 = tpu.matmul %301, %303, %cst_186 {dimension_numbers = #tpu.dot_dimension_numbers<[1], [0], [0], [1], [0, 0, 1, 1], [], []>} : vector<35x128xf32>, vector<128x128xf32>, vector<35x128xf32> -> vector<35x128xf32>
    %c0_187 = arith.constant 0 : index
    %c0_188 = arith.constant 0 : index
    %305 = vector.load %arg10[%c0_187, %c0_188] : memref<35x128xf32, #tpu.memory_space<vmem>>, vector<35x128xf32>
    %306 = arith.addf %305, %304 : vector<35x128xf32>
    %c0_189 = arith.constant 0 : index
    %c0_190 = arith.constant 0 : index
    %307 = vector.load %arg10[%c0_189, %c0_190] : memref<35x128xf32, #tpu.memory_space<vmem>>, vector<35x128xf32>
    tpu.vector_store %arg10[%c0_189, %c0_190], %306 {strides = array<i32>} : memref<35x128xf32, #tpu.memory_space<vmem>>, vector<35x128xf32>,
    %c2_191 = arith.constant 2 : index
    %c0_192 = arith.constant 0 : index
    %308 = vector.load %arg11[%c2_191, %c0_192] : memref<56x128xf32, #tpu.memory_space<vmem>>, vector<35x128xf32>
    %c2_193 = arith.constant 2 : index
    %c0_194 = arith.constant 0 : index
    %c0_195 = arith.constant 0 : index
    %309 = vector.load %arg4[%c2_193, %c0_194, %c0_195] : memref<9x128x128xf32, #tpu.memory_space<vmem>>, vector<1x128x128xf32>
    %310 = vector.shape_cast %309 : vector<1x128x128xf32> to vector<128x128xf32>
    %cst_196 = arith.constant dense<0.000000e+00> : vector<35x128xf32>
    %311 = tpu.matmul %308, %310, %cst_196 {dimension_numbers = #tpu.dot_dimension_numbers<[1], [0], [0], [1], [0, 0, 1, 1], [], []>} : vector<35x128xf32>, vector<128x128xf32>, vector<35x128xf32> -> vector<35x128xf32>
    %c0_197 = arith.constant 0 : index
    %c0_198 = arith.constant 0 : index
    %312 = vector.load %arg10[%c0_197, %c0_198] : memref<35x128xf32, #tpu.memory_space<vmem>>, vector<35x128xf32>
    %313 = arith.addf %312, %311 : vector<35x128xf32>
    %c0_199 = arith.constant 0 : index
    %c0_200 = arith.constant 0 : index
    %314 = vector.load %arg10[%c0_199, %c0_200] : memref<35x128xf32, #tpu.memory_space<vmem>>, vector<35x128xf32>
    tpu.vector_store %arg10[%c0_199, %c0_200], %313 {strides = array<i32>} : memref<35x128xf32, #tpu.memory_space<vmem>>, vector<35x128xf32>,
    %c7_201 = arith.constant 7 : index
    %c0_202 = arith.constant 0 : index
    %315 = vector.load %arg11[%c7_201, %c0_202] : memref<56x128xf32, #tpu.memory_space<vmem>>, vector<35x128xf32>
    %c3_203 = arith.constant 3 : index
    %c0_204 = arith.constant 0 : index
    %c0_205 = arith.constant 0 : index
    %316 = vector.load %arg4[%c3_203, %c0_204, %c0_205] : memref<9x128x128xf32, #tpu.memory_space<vmem>>, vector<1x128x128xf32>
    %317 = vector.shape_cast %316 : vector<1x128x128xf32> to vector<128x128xf32>
    %cst_206 = arith.constant dense<0.000000e+00> : vector<35x128xf32>
    %318 = tpu.matmul %315, %317, %cst_206 {dimension_numbers = #tpu.dot_dimension_numbers<[1], [0], [0], [1], [0, 0, 1, 1], [], []>} : vector<35x128xf32>, vector<128x128xf32>, vector<35x128xf32> -> vector<35x128xf32>
    %c0_207 = arith.constant 0 : index
    %c0_208 = arith.constant 0 : index
    %319 = vector.load %arg10[%c0_207, %c0_208] : memref<35x128xf32, #tpu.memory_space<vmem>>, vector<35x128xf32>
    %320 = arith.addf %319, %318 : vector<35x128xf32>
    %c0_209 = arith.constant 0 : index
    %c0_210 = arith.constant 0 : index
    %321 = vector.load %arg10[%c0_209, %c0_210] : memref<35x128xf32, #tpu.memory_space<vmem>>, vector<35x128xf32>
    tpu.vector_store %arg10[%c0_209, %c0_210], %320 {strides = array<i32>} : memref<35x128xf32, #tpu.memory_space<vmem>>, vector<35x128xf32>,
    %c8_211 = arith.constant 8 : index
    %c0_212 = arith.constant 0 : index
    %322 = vector.load %arg11[%c8_211, %c0_212] : memref<56x128xf32, #tpu.memory_space<vmem>>, vector<35x128xf32>
    %c4_213 = arith.constant 4 : index
    %c0_214 = arith.constant 0 : index
    %c0_215 = arith.constant 0 : index
    %323 = vector.load %arg4[%c4_213, %c0_214, %c0_215] : memref<9x128x128xf32, #tpu.memory_space<vmem>>, vector<1x128x128xf32>
    %324 = vector.shape_cast %323 : vector<1x128x128xf32> to vector<128x128xf32>
    %cst_216 = arith.constant dense<0.000000e+00> : vector<35x128xf32>
    %325 = tpu.matmul %322, %324, %cst_216 {dimension_numbers = #tpu.dot_dimension_numbers<[1], [0], [0], [1], [0, 0, 1, 1], [], []>} : vector<35x128xf32>, vector<128x128xf32>, vector<35x128xf32> -> vector<35x128xf32>
    %c0_217 = arith.constant 0 : index
    %c0_218 = arith.constant 0 : index
    %326 = vector.load %arg10[%c0_217, %c0_218] : memref<35x128xf32, #tpu.memory_space<vmem>>, vector<35x128xf32>
    %327 = arith.addf %326, %325 : vector<35x128xf32>
    %c0_219 = arith.constant 0 : index
    %c0_220 = arith.constant 0 : index
    %328 = vector.load %arg10[%c0_219, %c0_220] : memref<35x128xf32, #tpu.memory_space<vmem>>, vector<35x128xf32>
    tpu.vector_store %arg10[%c0_219, %c0_220], %327 {strides = array<i32>} : memref<35x128xf32, #tpu.memory_space<vmem>>, vector<35x128xf32>,
    %c9_221 = arith.constant 9 : index
    %c0_222 = arith.constant 0 : index
    %329 = vector.load %arg11[%c9_221, %c0_222] : memref<56x128xf32, #tpu.memory_space<vmem>>, vector<35x128xf32>
    %c5_223 = arith.constant 5 : index
    %c0_224 = arith.constant 0 : index
    %c0_225 = arith.constant 0 : index
    %330 = vector.load %arg4[%c5_223, %c0_224, %c0_225] : memref<9x128x128xf32, #tpu.memory_space<vmem>>, vector<1x128x128xf32>
    %331 = vector.shape_cast %330 : vector<1x128x128xf32> to vector<128x128xf32>
    %cst_226 = arith.constant dense<0.000000e+00> : vector<35x128xf32>
    %332 = tpu.matmul %329, %331, %cst_226 {dimension_numbers = #tpu.dot_dimension_numbers<[1], [0], [0], [1], [0, 0, 1, 1], [], []>} : vector<35x128xf32>, vector<128x128xf32>, vector<35x128xf32> -> vector<35x128xf32>
    %c0_227 = arith.constant 0 : index
    %c0_228 = arith.constant 0 : index
    %333 = vector.load %arg10[%c0_227, %c0_228] : memref<35x128xf32, #tpu.memory_space<vmem>>, vector<35x128xf32>
    %334 = arith.addf %333, %332 : vector<35x128xf32>
    %c0_229 = arith.constant 0 : index
    %c0_230 = arith.constant 0 : index
    %335 = vector.load %arg10[%c0_229, %c0_230] : memref<35x128xf32, #tpu.memory_space<vmem>>, vector<35x128xf32>
    tpu.vector_store %arg10[%c0_229, %c0_230], %334 {strides = array<i32>} : memref<35x128xf32, #tpu.memory_space<vmem>>, vector<35x128xf32>,
    %c14_231 = arith.constant 14 : index
    %c0_232 = arith.constant 0 : index
    %336 = vector.load %arg11[%c14_231, %c0_232] : memref<56x128xf32, #tpu.memory_space<vmem>>, vector<35x128xf32>
    %c6_233 = arith.constant 6 : index
    %c0_234 = arith.constant 0 : index
    %c0_235 = arith.constant 0 : index
    %337 = vector.load %arg4[%c6_233, %c0_234, %c0_235] : memref<9x128x128xf32, #tpu.memory_space<vmem>>, vector<1x128x128xf32>
    %338 = vector.shape_cast %337 : vector<1x128x128xf32> to vector<128x128xf32>
    %cst_236 = arith.constant dense<0.000000e+00> : vector<35x128xf32>
    %339 = tpu.matmul %336, %338, %cst_236 {dimension_numbers = #tpu.dot_dimension_numbers<[1], [0], [0], [1], [0, 0, 1, 1], [], []>} : vector<35x128xf32>, vector<128x128xf32>, vector<35x128xf32> -> vector<35x128xf32>
    %c0_237 = arith.constant 0 : index
    %c0_238 = arith.constant 0 : index
    %340 = vector.load %arg10[%c0_237, %c0_238] : memref<35x128xf32, #tpu.memory_space<vmem>>, vector<35x128xf32>
    %341 = arith.addf %340, %339 : vector<35x128xf32>
    %c0_239 = arith.constant 0 : index
    %c0_240 = arith.constant 0 : index
    %342 = vector.load %arg10[%c0_239, %c0_240] : memref<35x128xf32, #tpu.memory_space<vmem>>, vector<35x128xf32>
    tpu.vector_store %arg10[%c0_239, %c0_240], %341 {strides = array<i32>} : memref<35x128xf32, #tpu.memory_space<vmem>>, vector<35x128xf32>,
    %c15_241 = arith.constant 15 : index
    %c0_242 = arith.constant 0 : index
    %343 = vector.load %arg11[%c15_241, %c0_242] : memref<56x128xf32, #tpu.memory_space<vmem>>, vector<35x128xf32>
    %c7_243 = arith.constant 7 : index
    %c0_244 = arith.constant 0 : index
    %c0_245 = arith.constant 0 : index
    %344 = vector.load %arg4[%c7_243, %c0_244, %c0_245] : memref<9x128x128xf32, #tpu.memory_space<vmem>>, vector<1x128x128xf32>
    %345 = vector.shape_cast %344 : vector<1x128x128xf32> to vector<128x128xf32>
    %cst_246 = arith.constant dense<0.000000e+00> : vector<35x128xf32>
    %346 = tpu.matmul %343, %345, %cst_246 {dimension_numbers = #tpu.dot_dimension_numbers<[1], [0], [0], [1], [0, 0, 1, 1], [], []>} : vector<35x128xf32>, vector<128x128xf32>, vector<35x128xf32> -> vector<35x128xf32>
    %c0_247 = arith.constant 0 : index
    %c0_248 = arith.constant 0 : index
    %347 = vector.load %arg10[%c0_247, %c0_248] : memref<35x128xf32, #tpu.memory_space<vmem>>, vector<35x128xf32>
    %348 = arith.addf %347, %346 : vector<35x128xf32>
    %c0_249 = arith.constant 0 : index
    %c0_250 = arith.constant 0 : index
    %349 = vector.load %arg10[%c0_249, %c0_250] : memref<35x128xf32, #tpu.memory_space<vmem>>, vector<35x128xf32>
    tpu.vector_store %arg10[%c0_249, %c0_250], %348 {strides = array<i32>} : memref<35x128xf32, #tpu.memory_space<vmem>>, vector<35x128xf32>,
    %c16_251 = arith.constant 16 : index
    %c0_252 = arith.constant 0 : index
    %350 = vector.load %arg11[%c16_251, %c0_252] : memref<56x128xf32, #tpu.memory_space<vmem>>, vector<35x128xf32>
    %c8_253 = arith.constant 8 : index
    %c0_254 = arith.constant 0 : index
    %c0_255 = arith.constant 0 : index
    %351 = vector.load %arg4[%c8_253, %c0_254, %c0_255] : memref<9x128x128xf32, #tpu.memory_space<vmem>>, vector<1x128x128xf32>
    %352 = vector.shape_cast %351 : vector<1x128x128xf32> to vector<128x128xf32>
    %cst_256 = arith.constant dense<0.000000e+00> : vector<35x128xf32>
    %353 = tpu.matmul %350, %352, %cst_256 {dimension_numbers = #tpu.dot_dimension_numbers<[1], [0], [0], [1], [0, 0, 1, 1], [], []>} : vector<35x128xf32>, vector<128x128xf32>, vector<35x128xf32> -> vector<35x128xf32>
    %c0_257 = arith.constant 0 : index
    %c0_258 = arith.constant 0 : index
    %354 = vector.load %arg10[%c0_257, %c0_258] : memref<35x128xf32, #tpu.memory_space<vmem>>, vector<35x128xf32>
    %355 = arith.addf %354, %353 : vector<35x128xf32>
    %c0_259 = arith.constant 0 : index
    %c0_260 = arith.constant 0 : index
    %356 = vector.load %arg10[%c0_259, %c0_260] : memref<35x128xf32, #tpu.memory_space<vmem>>, vector<35x128xf32>
    tpu.vector_store %arg10[%c0_259, %c0_260], %355 {strides = array<i32>} : memref<35x128xf32, #tpu.memory_space<vmem>>, vector<35x128xf32>,
    %c0_261 = arith.constant 0 : index
    %c0_262 = arith.constant 0 : index
    %357 = vector.load %arg10[%c0_261, %c0_262] : memref<35x128xf32, #tpu.memory_space<vmem>>, vector<35x128xf32>
    %c0_263 = arith.constant 0 : index
    %c0_264 = arith.constant 0 : index
    %358 = vector.load %arg5[%c0_263, %c0_264] : memref<1x128xf32, #tpu.memory_space<vmem>>, vector<1x128xf32>
    %359 = vector.broadcast %358 : vector<1x128xf32> to vector<35x128xf32>
    %360 = arith.addf %357, %359 : vector<35x128xf32>
    %cst_265 = arith.constant 0.000000e+00 : f32
    %361 = vector.broadcast %cst_265 : f32 to vector<35x128xf32>
    %362 = arith.maximumf %360, %361 : vector<35x128xf32>
    %c0_266 = arith.constant 0 : index
    %c0_267 = arith.constant 0 : index
    %363 = vector.load %arg10[%c0_266, %c0_267] : memref<35x128xf32, #tpu.memory_space<vmem>>, vector<35x128xf32>
    tpu.vector_store %arg10[%c0_266, %c0_267], %362 {strides = array<i32>} : memref<35x128xf32, #tpu.memory_space<vmem>>, vector<35x128xf32>,
    %cst_268 = arith.constant 0.000000e+00 : f32
    %364 = vector.broadcast %cst_268 : f32 to vector<8x128xf32>
    %c0_269 = arith.constant 0 : index
    %c0_270 = arith.constant 0 : index
    %365 = vector.load %arg12[%c0_269, %c0_270] : memref<8x128xf32, #tpu.memory_space<vmem>>, vector<8x128xf32>
    tpu.vector_store %arg12[%c0_269, %c0_270], %364 {strides = array<i32>} : memref<8x128xf32, #tpu.memory_space<vmem>>, vector<8x128xf32>,
    %c0_271 = arith.constant 0 : index
    %c0_272 = arith.constant 0 : index
    %366 = vector.load %arg10[%c0_271, %c0_272] : memref<35x128xf32, #tpu.memory_space<vmem>>, vector<4x128xf32>
    %c7_273 = arith.constant 7 : index
    %c0_274 = arith.constant 0 : index
    %367 = vector.load %arg10[%c7_273, %c0_274] : memref<35x128xf32, #tpu.memory_space<vmem>>, vector<4x128xf32>
    %368 = arith.maximumf %366, %367 : vector<4x128xf32>
    %369 = vector.extract_strided_slice %368 {offsets = [0, 0], sizes = [1, 128], strides = [1, 1]} : vector<4x128xf32> to vector<1x128xf32>
    %370 = vector.extract_strided_slice %368 {offsets = [1, 0], sizes = [1, 128], strides = [1, 1]} : vector<4x128xf32> to vector<1x128xf32>
    %371 = arith.maximumf %369, %370 : vector<1x128xf32>
    %c0_275 = arith.constant 0 : index
    %c0_276 = arith.constant 0 : index
    %372 = vector.load %arg12[%c0_275, %c0_276] : memref<8x128xf32, #tpu.memory_space<vmem>>, vector<1x128xf32>
    tpu.vector_store %arg12[%c0_275, %c0_276], %371 {strides = array<i32>} : memref<8x128xf32, #tpu.memory_space<vmem>>, vector<1x128xf32>,
    %373 = vector.extract_strided_slice %368 {offsets = [2, 0], sizes = [1, 128], strides = [1, 1]} : vector<4x128xf32> to vector<1x128xf32>
    %374 = vector.extract_strided_slice %368 {offsets = [3, 0], sizes = [1, 128], strides = [1, 1]} : vector<4x128xf32> to vector<1x128xf32>
    %375 = arith.maximumf %373, %374 : vector<1x128xf32>
    %c1_277 = arith.constant 1 : index
    %c0_278 = arith.constant 0 : index
    %376 = vector.load %arg12[%c1_277, %c0_278] : memref<8x128xf32, #tpu.memory_space<vmem>>, vector<1x128xf32>
    tpu.vector_store %arg12[%c1_277, %c0_278], %375 {strides = array<i32>} : memref<8x128xf32, #tpu.memory_space<vmem>>, vector<1x128xf32>,
    %c14_279 = arith.constant 14 : index
    %c0_280 = arith.constant 0 : index
    %377 = vector.load %arg10[%c14_279, %c0_280] : memref<35x128xf32, #tpu.memory_space<vmem>>, vector<4x128xf32>
    %c21_281 = arith.constant 21 : index
    %c0_282 = arith.constant 0 : index
    %378 = vector.load %arg10[%c21_281, %c0_282] : memref<35x128xf32, #tpu.memory_space<vmem>>, vector<4x128xf32>
    %379 = arith.maximumf %377, %378 : vector<4x128xf32>
    %380 = vector.extract_strided_slice %379 {offsets = [0, 0], sizes = [1, 128], strides = [1, 1]} : vector<4x128xf32> to vector<1x128xf32>
    %381 = vector.extract_strided_slice %379 {offsets = [1, 0], sizes = [1, 128], strides = [1, 1]} : vector<4x128xf32> to vector<1x128xf32>
    %382 = arith.maximumf %380, %381 : vector<1x128xf32>
    %c2_283 = arith.constant 2 : index
    %c0_284 = arith.constant 0 : index
    %383 = vector.load %arg12[%c2_283, %c0_284] : memref<8x128xf32, #tpu.memory_space<vmem>>, vector<1x128xf32>
    tpu.vector_store %arg12[%c2_283, %c0_284], %382 {strides = array<i32>} : memref<8x128xf32, #tpu.memory_space<vmem>>, vector<1x128xf32>,
    %384 = vector.extract_strided_slice %379 {offsets = [2, 0], sizes = [1, 128], strides = [1, 1]} : vector<4x128xf32> to vector<1x128xf32>
    %385 = vector.extract_strided_slice %379 {offsets = [3, 0], sizes = [1, 128], strides = [1, 1]} : vector<4x128xf32> to vector<1x128xf32>
    %386 = arith.maximumf %384, %385 : vector<1x128xf32>
    %c3_285 = arith.constant 3 : index
    %c0_286 = arith.constant 0 : index
    %387 = vector.load %arg12[%c3_285, %c0_286] : memref<8x128xf32, #tpu.memory_space<vmem>>, vector<1x128xf32>
    tpu.vector_store %arg12[%c3_285, %c0_286], %386 {strides = array<i32>} : memref<8x128xf32, #tpu.memory_space<vmem>>, vector<1x128xf32>,
    %c0_287 = arith.constant 0 : index
    %c0_288 = arith.constant 0 : index
    %388 = vector.load %arg7[%c0_287, %c0_288] : memref<1x128xf32, #tpu.memory_space<vmem>>, vector<1x128xf32>
    %c0_289 = arith.constant 0 : index
    %c0_290 = arith.constant 0 : index
    %389 = vector.load %arg12[%c0_289, %c0_290] : memref<8x128xf32, #tpu.memory_space<vmem>>, vector<1x128xf32>
    %c0_291 = arith.constant 0 : index
    %c0_292 = arith.constant 0 : index
    %c0_293 = arith.constant 0 : index
    %390 = vector.load %arg6[%c0_291, %c0_292, %c0_293] : memref<4x128x128xf32, #tpu.memory_space<vmem>>, vector<1x128x128xf32>
    %391 = vector.shape_cast %390 : vector<1x128x128xf32> to vector<128x128xf32>
    %cst_294 = arith.constant dense<0.000000e+00> : vector<1x128xf32>
    %392 = tpu.matmul %389, %391, %cst_294 {dimension_numbers = #tpu.dot_dimension_numbers<[1], [0], [0], [1], [0, 0, 1, 1], [], []>} : vector<1x128xf32>, vector<128x128xf32>, vector<1x128xf32> -> vector<1x128xf32>
    %393 = arith.addf %388, %392 : vector<1x128xf32>
    %c1_295 = arith.constant 1 : index
    %c0_296 = arith.constant 0 : index
    %394 = vector.load %arg12[%c1_295, %c0_296] : memref<8x128xf32, #tpu.memory_space<vmem>>, vector<1x128xf32>
    %c1_297 = arith.constant 1 : index
    %c0_298 = arith.constant 0 : index
    %c0_299 = arith.constant 0 : index
    %395 = vector.load %arg6[%c1_297, %c0_298, %c0_299] : memref<4x128x128xf32, #tpu.memory_space<vmem>>, vector<1x128x128xf32>
    %396 = vector.shape_cast %395 : vector<1x128x128xf32> to vector<128x128xf32>
    %cst_300 = arith.constant dense<0.000000e+00> : vector<1x128xf32>
    %397 = tpu.matmul %394, %396, %cst_300 {dimension_numbers = #tpu.dot_dimension_numbers<[1], [0], [0], [1], [0, 0, 1, 1], [], []>} : vector<1x128xf32>, vector<128x128xf32>, vector<1x128xf32> -> vector<1x128xf32>
    %398 = arith.addf %393, %397 : vector<1x128xf32>
    %c2_301 = arith.constant 2 : index
    %c0_302 = arith.constant 0 : index
    %399 = vector.load %arg12[%c2_301, %c0_302] : memref<8x128xf32, #tpu.memory_space<vmem>>, vector<1x128xf32>
    %c2_303 = arith.constant 2 : index
    %c0_304 = arith.constant 0 : index
    %c0_305 = arith.constant 0 : index
    %400 = vector.load %arg6[%c2_303, %c0_304, %c0_305] : memref<4x128x128xf32, #tpu.memory_space<vmem>>, vector<1x128x128xf32>
    %401 = vector.shape_cast %400 : vector<1x128x128xf32> to vector<128x128xf32>
    %cst_306 = arith.constant dense<0.000000e+00> : vector<1x128xf32>
    %402 = tpu.matmul %399, %401, %cst_306 {dimension_numbers = #tpu.dot_dimension_numbers<[1], [0], [0], [1], [0, 0, 1, 1], [], []>} : vector<1x128xf32>, vector<128x128xf32>, vector<1x128xf32> -> vector<1x128xf32>
    %403 = arith.addf %398, %402 : vector<1x128xf32>
    %c3_307 = arith.constant 3 : index
    %c0_308 = arith.constant 0 : index
    %404 = vector.load %arg12[%c3_307, %c0_308] : memref<8x128xf32, #tpu.memory_space<vmem>>, vector<1x128xf32>
    %c3_309 = arith.constant 3 : index
    %c0_310 = arith.constant 0 : index
    %c0_311 = arith.constant 0 : index
    %405 = vector.load %arg6[%c3_309, %c0_310, %c0_311] : memref<4x128x128xf32, #tpu.memory_space<vmem>>, vector<1x128x128xf32>
    %406 = vector.shape_cast %405 : vector<1x128x128xf32> to vector<128x128xf32>
    %cst_312 = arith.constant dense<0.000000e+00> : vector<1x128xf32>
    %407 = tpu.matmul %404, %406, %cst_312 {dimension_numbers = #tpu.dot_dimension_numbers<[1], [0], [0], [1], [0, 0, 1, 1], [], []>} : vector<1x128xf32>, vector<128x128xf32>, vector<1x128xf32> -> vector<1x128xf32>
    %408 = arith.addf %403, %407 : vector<1x128xf32>
    %c0_313 = arith.constant 0 : index
    %c0_314 = arith.constant 0 : index
    %c0_315 = arith.constant 0 : index
    %409 = vector.load %arg8[%c0_313, %c0_314, %c0_315] : memref<1x1x128xf32, #tpu.memory_space<vmem>>, vector<1x1x128xf32>
    %410 = vector.shape_cast %409 : vector<1x1x128xf32> to vector<1x128xf32>
    %411 = vector.shape_cast %408 : vector<1x128xf32> to vector<1x1x128xf32>
    tpu.vector_store %arg8[%c0_313, %c0_314, %c0_315], %411 {strides = array<i32>} : memref<1x1x128xf32, #tpu.memory_space<vmem>>, vector<1x1x128xf32>,
    return
  }
  func.func @transform_0(%arg0: i32) -> (i32, i32, i32) {
    %c0_i32 = arith.constant 0 : i32
    %c0_i32_0 = arith.constant 0 : i32
    %c0_i32_1 = arith.constant 0 : i32
    return %arg0, %c0_i32, %c0_i32_0 : i32, i32, i32
  }
  func.func @transform_1(%arg0: i32) -> (i32, i32, i32) {
    %c0_i32 = arith.constant 0 : i32
    %c0_i32_0 = arith.constant 0 : i32
    %c0_i32_1 = arith.constant 0 : i32
    %c0_i32_2 = arith.constant 0 : i32
    return %c0_i32, %c0_i32_0, %c0_i32_1 : i32, i32, i32
  }
  func.func @transform_2(%arg0: i32) -> (i32, i32) {
    %c0_i32 = arith.constant 0 : i32
    %c0_i32_0 = arith.constant 0 : i32
    %c0_i32_1 = arith.constant 0 : i32
    return %c0_i32, %c0_i32_0 : i32, i32
  }
  func.func @transform_3(%arg0: i32) -> (i32, i32, i32) {
    %c0_i32 = arith.constant 0 : i32
    %c0_i32_0 = arith.constant 0 : i32
    %c0_i32_1 = arith.constant 0 : i32
    %c0_i32_2 = arith.constant 0 : i32
    return %c0_i32, %c0_i32_0, %c0_i32_1 : i32, i32, i32
  }
  func.func @transform_4(%arg0: i32) -> (i32, i32) {
    %c0_i32 = arith.constant 0 : i32
    %c0_i32_0 = arith.constant 0 : i32
    %c0_i32_1 = arith.constant 0 : i32
    return %c0_i32, %c0_i32_0 : i32, i32
  }
  func.func @transform_5(%arg0: i32) -> (i32, i32, i32) {
    %c0_i32 = arith.constant 0 : i32
    %c0_i32_0 = arith.constant 0 : i32
    %c0_i32_1 = arith.constant 0 : i32
    %c0_i32_2 = arith.constant 0 : i32
    return %c0_i32, %c0_i32_0, %c0_i32_1 : i32, i32, i32
  }
  func.func @transform_6(%arg0: i32) -> (i32, i32) {
    %c0_i32 = arith.constant 0 : i32
    %c0_i32_0 = arith.constant 0 : i32
    %c0_i32_1 = arith.constant 0 : i32
    return %c0_i32, %c0_i32_0 : i32, i32
  }
  func.func @transform_7(%arg0: i32) -> (i32, i32, i32) {
    %c0_i32 = arith.constant 0 : i32
    %c0_i32_0 = arith.constant 0 : i32
    %c0_i32_1 = arith.constant 0 : i32
    return %arg0, %c0_i32, %c0_i32_0 : i32, i32, i32
  }
}

</mosaic_0001>

<llo_original>
// kernel: forward.1
$region0: #{forward.1}
  #allocation0 [shape = 'u32[]', space=smem, size = 0x4, offset = 0x4, fixed_abs, tag = 'smem constant byte address 0x4 - core index']
  #allocation1 [shape = 'u32[144,128]{1,0:T(1,128)}', space=vmem, size = 0x12000, scoped, tag = 'internal scratch']
  #allocation2 [shape = 'f32[224,128]{1,0:T(8,128)}', space=vmem, size = 0x1c000, scoped, tag = 'scratch operand']
  #allocation3 [shape = 'f32[35,128]{1,0:T(8,128)}', space=vmem, size = 0x5000, scoped, tag = 'scratch operand']
  #allocation4 [shape = 'f32[56,128]{1,0:T(8,128)}', space=vmem, size = 0x7000, scoped, tag = 'scratch operand']
  #allocation5 [shape = 'f32[8,128]{1,0:T(8,128)}', space=vmem, size = 0x1000, scoped, tag = 'scratch operand']
  %s0 = inlined_call_operand.vmem [shape: f32[2,264,8], index: 0, kind: input, shape index: {}]
  %s1 = inlined_call_operand.hbm [shape: f32[9,8,128], index: 1, kind: input, shape index: {}]
  %s2 = inlined_call_operand.vmem [shape: f32[1,128], index: 2, kind: input, shape index: {}]
  %s3 = inlined_call_operand.vmem [shape: f32[9,128,128], index: 3, kind: input, shape index: {}]
  %s4 = inlined_call_operand.vmem [shape: f32[1,128], index: 4, kind: input, shape index: {}]
  %s5 = inlined_call_operand.vmem [shape: f32[4,128,128], index: 5, kind: input, shape index: {}]
  %s6 = inlined_call_operand.vmem [shape: f32[1,128], index: 6, kind: input, shape index: {}]
  %s7 = inlined_call_operand.hbm [shape: f32[2,1,128], index: 7, kind: output, shape index: {}]
  %s8 = sld [smem:[#allocation0]]
  $region65: #{forward.1} parent=0
    _
  %s10 = ssub.s32 1, %s8
  %s11 = scalar_select 0, %s10, %s8
  $region1: #{forward.1} parent=0
    #allocation6 [shape = 'u8[36864]{0}', space=vmem, size = 0x9000, scoped, tag = 'input window, operand 1, single buffered']
    #allocation7 [shape = 's32[2]{0}', space=sflag, size = 0x8, scoped, tag = 'scoped memory for forward.1']
    #allocation8 [shape = 's32[2]{0}', space=sflag, size = 0x8, scoped, tag = 'scoped memory for forward.1']
    #allocation9 [shape = 'u8[1024]{0}', space=vmem, size = 0x400, scoped, tag = 'output window, operand 0']
    %12 = vsyncpa [#allocation7], 0
    %13 = vsyncpa [#allocation8], 0
    %s14 = scalar_lea.sflag [#allocation8], 1
    %15 = vsyncpa %s14, 0
    loop: start=0, step=1, limit=4
    $region2: #{forward.1} parent=1 // loop_pre_header
      _
    $region3: #{forward.1} parent=1 // loop_header
      %s17 = sphi 0, %s21
      %p18 = scmp.ge.s32.totalorder %s17, 4
      %s27 = sphi 0, %s29
      %s30 = sphi 0, %s27
      %s31 = sphi 0, %s30
      %s47 = sphi 0, %s31
      %s51 = sphi 0, %s51
      %s53 = sphi 0, %s51
      %s54 = sphi 0, %s53
      %s68 = sphi 0, %s54
      %s72 = sphi 0, %s72
      %s74 = sphi 0, %s72
      %s75 = sphi 0, %s74
      %s89 = sphi 0, %s75
      %s93 = sphi 0, %s93
      %s95 = sphi 0, %s93
      %s96 = sphi 0, %s95
      %s110 = sphi 0, %s96
      %s114 = sphi 0, %s114
      %s116 = sphi 0, %s114
      %s117 = sphi 0, %s116
      %s131 = sphi 0, %s117
      %s135 = sphi 0, %s135
      %s137 = sphi 0, %s135
      %s138 = sphi 0, %s137
      %s152 = sphi 0, %s138
      %s156 = sphi 0, %s156
      %s158 = sphi 0, %s156
      %s159 = sphi 0, %s158
      %s173 = sphi 0, %s159
      %s179 = sphi 0, %s181
      %s182 = sphi 0, %s179
      %s183 = sphi 0, %s182
      %s199 = sphi 0, %s183
    $region4: #{forward.1} parent=1 // loop_header_branch
      %20 = sbr.rel (%p18) target = $region8
    $region5: #{forward.1} parent=1 // loop_body
      %s22 = ssub.s32 %s17, 1
      %s23 = ssub.s32 %s17, 2
      %s24 = sadd.s32 %s17, 1
      %s25 = ssub.s32 %s17, %s24
      %p26 = scmp.eq.s32.totalorder %s25, 0
      %s28 = sadd.s32 %s27, 1
      %s29 = scalar_select %p26, %s27, %s28
      %p32 = pneg %p26
      %p33 = scmp.eq.s32.totalorder %s17, 1
      %p34 = por %p32, %p33
      %p35 = scmp.ne.s32.totalorder %s27, %s30
      %p36 = scmp.eq.s32.totalorder %s17, 0
      %p37 = por %p35, %p36
      %p38 = scmp.ne.s32.totalorder %s27, %s30
      %p39 = scmp.eq.s32.totalorder %s22, 1
      %p40 = por %p38, %p39
      %p41 = scmp.ne.s32.totalorder %s30, %s31
      %p42 = scmp.eq.s32.totalorder %s22, 0
      %p43 = por %p41, %p42
      %p44 = scmp.ne.s32.totalorder %s30, %s31
      %p45 = scmp.eq.s32.totalorder %s23, 1
      %p46 = por %p44, %p45
      %p48 = scmp.ne.s32.totalorder %s31, %s47
      %p49 = scmp.eq.s32.totalorder %s23, 0
      %p50 = por %p48, %p49
      %s52 = sadd.s32 %s51, 1
      %p55 = scmp.eq.s32.totalorder %s17, 1
      %p56 = scmp.ne.s32.totalorder %s51, %s53
      %p57 = scmp.eq.s32.totalorder %s17, 0
      %p58 = por %p56, %p57
      %p59 = scmp.ne.s32.totalorder %s51, %s53
      %p60 = scmp.eq.s32.totalorder %s22, 1
      %p61 = por %p59, %p60
      %p62 = scmp.ne.s32.totalorder %s53, %s54
      %p63 = scmp.eq.s32.totalorder %s22, 0
      %p64 = por %p62, %p63
      %p65 = scmp.ne.s32.totalorder %s53, %s54
      %p66 = scmp.eq.s32.totalorder %s23, 1
      %p67 = por %p65, %p66
      %p69 = scmp.ne.s32.totalorder %s54, %s68
      %p70 = scmp.eq.s32.totalorder %s23, 0
      %p71 = por %p69, %p70
      %s73 = sadd.s32 %s72, 1
      %p76 = scmp.eq.s32.totalorder %s17, 1
      %p77 = scmp.ne.s32.totalorder %s72, %s74
      %p78 = scmp.eq.s32.totalorder %s17, 0
      %p79 = por %p77, %p78
      %p80 = scmp.ne.s32.totalorder %s72, %s74
      %p81 = scmp.eq.s32.totalorder %s22, 1
      %p82 = por %p80, %p81
      %p83 = scmp.ne.s32.totalorder %s74, %s75
      %p84 = scmp.eq.s32.totalorder %s22, 0
      %p85 = por %p83, %p84
      %p86 = scmp.ne.s32.totalorder %s74, %s75
      %p87 = scmp.eq.s32.totalorder %s23, 1
      %p88 = por %p86, %p87
      %p90 = scmp.ne.s32.totalorder %s75, %s89
      %p91 = scmp.eq.s32.totalorder %s23, 0
      %p92 = por %p90, %p91
      %s94 = sadd.s32 %s93, 1
      %p97 = scmp.eq.s32.totalorder %s17, 1
      %p98 = scmp.ne.s32.totalorder %s93, %s95
      %p99 = scmp.eq.s32.totalorder %s17, 0
      %p100 = por %p98, %p99
      %p101 = scmp.ne.s32.totalorder %s93, %s95
      %p102 = scmp.eq.s32.totalorder %s22, 1
      %p103 = por %p101, %p102
      %p104 = scmp.ne.s32.totalorder %s95, %s96
      %p105 = scmp.eq.s32.totalorder %s22, 0
      %p106 = por %p104, %p105
      %p107 = scmp.ne.s32.totalorder %s95, %s96
      %p108 = scmp.eq.s32.totalorder %s23, 1
      %p109 = por %p107, %p108
      %p111 = scmp.ne.s32.totalorder %s96, %s110
      %p112 = scmp.eq.s32.totalorder %s23, 0
      %p113 = por %p111, %p112
      %s115 = sadd.s32 %s114, 1
      %p118 = scmp.eq.s32.totalorder %s17, 1
      %p119 = scmp.ne.s32.totalorder %s114, %s116
      %p120 = scmp.eq.s32.totalorder %s17, 0
      %p121 = por %p119, %p120
      %p122 = scmp.ne.s32.totalorder %s114, %s116
      %p123 = scmp.eq.s32.totalorder %s22, 1
      %p124 = por %p122, %p123
      %p125 = scmp.ne.s32.totalorder %s116, %s117
      %p126 = scmp.eq.s32.totalorder %s22, 0
      %p127 = por %p125, %p126
      %p128 = scmp.ne.s32.totalorder %s116, %s117
      %p129 = scmp.eq.s32.totalorder %s23, 1
      %p130 = por %p128, %p129
      %p132 = scmp.ne.s32.totalorder %s117, %s131
      %p133 = scmp.eq.s32.totalorder %s23, 0
      %p134 = por %p132, %p133
      %s136 = sadd.s32 %s135, 1
      %p139 = scmp.eq.s32.totalorder %s17, 1
      %p140 = scmp.ne.s32.totalorder %s135, %s137
      %p141 = scmp.eq.s32.totalorder %s17, 0
      %p142 = por %p140, %p141
      %p143 = scmp.ne.s32.totalorder %s135, %s137
      %p144 = scmp.eq.s32.totalorder %s22, 1
      %p145 = por %p143, %p144
      %p146 = scmp.ne.s32.totalorder %s137, %s138
      %p147 = scmp.eq.s32.totalorder %s22, 0
      %p148 = por %p146, %p147
      %p149 = scmp.ne.s32.totalorder %s137, %s138
      %p150 = scmp.eq.s32.totalorder %s23, 1
      %p151 = por %p149, %p150
      %p153 = scmp.ne.s32.totalorder %s138, %s152
      %p154 = scmp.eq.s32.totalorder %s23, 0
      %p155 = por %p153, %p154
      %s157 = sadd.s32 %s156, 1
      %p160 = scmp.eq.s32.totalorder %s17, 1
      %p161 = scmp.ne.s32.totalorder %s156, %s158
      %p162 = scmp.eq.s32.totalorder %s17, 0
      %p163 = por %p161, %p162
      %p164 = scmp.ne.s32.totalorder %s156, %s158
      %p165 = scmp.eq.s32.totalorder %s22, 1
      %p166 = por %p164, %p165
      %p167 = scmp.ne.s32.totalorder %s158, %s159
      %p168 = scmp.eq.s32.totalorder %s22, 0
      %p169 = por %p167, %p168
      %p170 = scmp.ne.s32.totalorder %s158, %s159
      %p171 = scmp.eq.s32.totalorder %s23, 1
      %p172 = por %p170, %p171
      %p174 = scmp.ne.s32.totalorder %s159, %s173
      %p175 = scmp.eq.s32.totalorder %s23, 0
      %p176 = por %p174, %p175
      %s177 = ssub.s32 %s17, %s24
      %p178 = scmp.eq.s32.totalorder %s177, 0
      %s180 = sadd.s32 %s179, 1
      %s181 = scalar_select %p178, %s179, %s180
      %p184 = pneg %p178
      %p185 = scmp.eq.s32.totalorder %s17, 1
      %p186 = por %p184, %p185
      %p187 = scmp.ne.s32.totalorder %s179, %s182
      %p188 = scmp.eq.s32.totalorder %s17, 0
      %p189 = por %p187, %p188
      %p190 = scmp.ne.s32.totalorder %s179, %s182
      %p191 = scmp.eq.s32.totalorder %s22, 1
      %p192 = por %p190, %p191
      %p193 = scmp.ne.s32.totalorder %s182, %s183
      %p194 = scmp.eq.s32.totalorder %s22, 0
      %p195 = por %p193, %p194
      %p196 = scmp.ne.s32.totalorder %s182, %s183
      %p197 = scmp.eq.s32.totalorder %s23, 1
      %p198 = por %p196, %p197
      %p200 = scmp.ne.s32.totalorder %s183, %s199
      %p201 = scmp.eq.s32.totalorder %s23, 0
      %p202 = por %p200, %p201
      %p203 = scmp.le.s32.totalorder 1, %s17
      %p204 = scmp.lt.s32.totalorder %s17, 3
      %p205 = pnand %p203, %p204
      %p206 = pneg %p205
      // Predicated region
      $region9: #{forward.1} parent=5 // pred_check
        _
      $region10: #{forward.1} parent=5 // pred_check_branch
        %208 = sbr.rel (%p205) target = $region12
      $region11: #{forward.1} parent=5 // pred_region
        %s209 = ssub.s32 %s17, 1
        // Predicated region
        $region13: #{forward.1} parent=11 // pred_check
          %p210 = pneg %p64
        $region14: #{forward.1} parent=11 // pred_check_branch
          %212 = sbr.rel (%p210) target = $region16
        $region15: #{forward.1} parent=11 // pred_region
          %s214 = ssub.s32 1152, 1152
          %215 = vsyncadd [#allocation7], %s214
          %s216 = sshll.u32 [#allocation6], 4
          %s217 = int_to_ptr.vmem [resolvable:$true] %s216
          %222 = dma.hbm_to_vmem [thread:$0]  %s1, 1152, %s217, [#allocation7], 128, 128, 8
        $region16: #{forward.1} parent=11 // pred_fallthru
          _
        // Predicated region
        $region17: #{forward.1} parent=11 // pred_check
          %p223 = pneg %p85
        $region18: #{forward.1} parent=11 // pred_check_branch
          %225 = sbr.rel (%p223) target = $region20
        $region19: #{forward.1} parent=11 // pred_region
          _
        $region20: #{forward.1} parent=11 // pred_fallthru
          _
        // Predicated region
        $region21: #{forward.1} parent=11 // pred_check
          %p226 = pneg %p106
        $region22: #{forward.1} parent=11 // pred_check_branch
          %228 = sbr.rel (%p226) target = $region24
        $region23: #{forward.1} parent=11 // pred_region
          _
        $region24: #{forward.1} parent=11 // pred_fallthru
          _
        // Predicated region
        $region25: #{forward.1} parent=11 // pred_check
          %p229 = pneg %p127
        $region26: #{forward.1} parent=11 // pred_check_branch
          %231 = sbr.rel (%p229) target = $region28
        $region27: #{forward.1} parent=11 // pred_region
          _
        $region28: #{forward.1} parent=11 // pred_fallthru
          _
        // Predicated region
        $region29: #{forward.1} parent=11 // pred_check
          %p232 = pneg %p148
        $region30: #{forward.1} parent=11 // pred_check_branch
          %234 = sbr.rel (%p232) target = $region32
        $region31: #{forward.1} parent=11 // pred_region
          _
        $region32: #{forward.1} parent=11 // pred_fallthru
          _
        // Predicated region
        $region33: #{forward.1} parent=11 // pred_check
          %p235 = pneg %p169
        $region34: #{forward.1} parent=11 // pred_check_branch
          %237 = sbr.rel (%p235) target = $region36
        $region35: #{forward.1} parent=11 // pred_region
          _
        $region36: #{forward.1} parent=11 // pred_fallthru
          _
      $region12: #{forward.1} parent=5 // pred_fallthru
        _
      %p238 = scmp.lt.s32.totalorder %s17, 2
      // Predicated region
      $region37: #{forward.1} parent=5 // pred_check
        %p239 = pneg %p238
      $region38: #{forward.1} parent=5 // pred_check_branch
        %241 = sbr.rel (%p239) target = $region40
      $region39: #{forward.1} parent=5 // pred_region
        // Predicated region
        $region41: #{forward.1} parent=39 // pred_check
          %p242 = pneg %p37
        $region42: #{forward.1} parent=39 // pred_check_branch
          %244 = sbr.rel (%p242) target = $region44
        $region43: #{forward.1} parent=39 // pred_region
          %p245 = scmp.lt.s32.totalorder %s17, 1
          %s246 = scalar_select %p245, %s17, 1
          %s247 = smul.addr %s246, 33
          %s248 = smul.addr %s247, 8
          %s249 = scalar_lea.vmem %s0, %s248
        $region44: #{forward.1} parent=39 // pred_fallthru
          _
      $region40: #{forward.1} parent=5 // pred_fallthru
        _
      %p250 = scmp.le.s32.totalorder 1, %s17
      %p251 = scmp.lt.s32.totalorder %s17, 3
      %p252 = pnand %p250, %p251
      %p253 = pneg %p252
      // Predicated region
      $region45: #{forward.1} parent=5 // pred_check
        _
      $region46: #{forward.1} parent=5 // pred_check_branch
        %255 = sbr.rel (%p252) target = $region48
      $region47: #{forward.1} parent=5 // pred_region
        %s256 = ssub.s32 %s17, 1
        // Predicated region
        $region49: #{forward.1} parent=47 // pred_check
          %p257 = pneg %p64
        $region50: #{forward.1} parent=47 // pred_check_branch
          %259 = sbr.rel (%p257) target = $region52
        $region51: #{forward.1} parent=47 // pred_region
          %260 = dma.done [#allocation7], 1152
        $region52: #{forward.1} parent=47 // pred_fallthru
          _
        %p261 = scmp.lt.s32.totalorder %s22, 1
        %s262 = scalar_select %p261, %s22, 1
        %s263 = smul.addr %s262, 33
        %s264 = smul.addr %s263, 8
        %s265 = scalar_lea.vmem %s0, %s264
        %p266 = pneg %p43
        %p267 = pneg %p40
        %p268 = pneg %p64
        %p269 = pneg %p61
        %p270 = pneg %p85
        %p271 = pneg %p82
        %p272 = pneg %p106
        %p273 = pneg %p103
        %p274 = pneg %p127
        %p275 = pneg %p124
        %p276 = pneg %p148
        %p277 = pneg %p145
        %p278 = pneg %p169
        %p279 = pneg %p166
        %p280 = pneg %p195
        %p281 = pneg %p192
        %s282 = sand.u32 %s182, 1
        %s283 = scalar_lea.sflag [#allocation8], %s282
        %s284 = sand.u32 %s182, 1
        %s285 = scalar_lea.vmem [#allocation9], %s284
        %p286 = scmp.lt.s32.totalorder %s22, 1
        %s287 = scalar_select %p286, %s22, 1
        %s288 = smul.addr %s287, 33
        %s289 = smul.addr %s288, 8
        %s290 = scalar_lea.vmem %s0, %s289
        %v291 = vld [vmem:[%s290] sm:$0xff]
        %v292 = vld [vmem:[%s290 + $0x8] sm:$0xff]
        %v293 = vld [vmem:[%s290 + $0x10] sm:$0xff]
        %v294 = vld [vmem:[%s290 + $0x18] sm:$0xff]
        %v295 = vld [vmem:[%s290 + $0x20] sm:$0xff]
        %v296 = vld [vmem:[%s290 + $0x28] sm:$0xff]
        %v297 = vld [vmem:[%s290 + $0x30] sm:$0xff]
        %v298 = vld [vmem:[%s290 + $0x38] sm:$0xff]
        %v299 = vld [vmem:[%s290 + $0x40] sm:$0xff]
        %v300 = vld [vmem:[%s290 + $0x48] sm:$0xff]
        %v301 = vld [vmem:[%s290 + $0x50] sm:$0xff]
        %v302 = vld [vmem:[%s290 + $0x58] sm:$0xff]
        %v303 = vld [vmem:[%s290 + $0x60] sm:$0xff]
        %v304 = vld [vmem:[%s290 + $0x68] sm:$0xff]
        %v305 = vld [vmem:[%s290 + $0x70] sm:$0xff]
        %v306 = vld [vmem:[%s290 + $0x78] sm:$0xff]
        %v307 = vld [vmem:[%s290 + $0x80] sm:$0xff]
        %v308 = vld [vmem:[%s290 + $0x88] sm:$0xff]
        %v309 = vld [vmem:[%s290 + $0x90] sm:$0xff]
        %v310 = vld [vmem:[%s290 + $0x98] sm:$0xff]
        %v311 = vld [vmem:[%s290 + $0xa0] sm:$0xff]
        %v312 = vld [vmem:[%s290 + $0xa8] sm:$0xff]
        %v313 = vld [vmem:[%s290 + $0xb0] sm:$0xff]
        %v314 = vld [vmem:[%s290 + $0xb8] sm:$0xff]
        %v315 = vld [vmem:[%s290 + $0xc0] sm:$0xff]
        %v316 = vld [vmem:[%s290 + $0xc8] sm:$0xff]
        %v317 = vld [vmem:[%s290 + $0xd0] sm:$0xff]
        %v318 = vld [vmem:[%s290 + $0xd8] sm:$0xff]
        %v319 = vld [vmem:[#allocation6] sm:$0xff]
        %vm320 = vcmask 64512
        %v322 = vsel %vm320, %v291, 0
        %v325 = vsel %vm320, %v292, 0
        %v328 = vsel %vm320, %v293, 0
        %v331 = vsel %vm320, %v294, 0
        %v334 = vsel %vm320, %v295, 0
        %v337 = vsel %vm320, %v296, 0
        %v340 = vsel %vm320, %v297, 0
        %v343 = vsel %vm320, %v298, 0
        %v346 = vsel %vm320, %v299, 0
        %v349 = vsel %vm320, %v300, 0
        %v352 = vsel %vm320, %v301, 0
        %v355 = vsel %vm320, %v302, 0
        %v358 = vsel %vm320, %v303, 0
        %v361 = vsel %vm320, %v304, 0
        %v364 = vsel %vm320, %v305, 0
        %v367 = vsel %vm320, %v306, 0
        %v370 = vsel %vm320, %v307, 0
        %v373 = vsel %vm320, %v308, 0
        %v376 = vsel %vm320, %v309, 0
        %v379 = vsel %vm320, %v310, 0
        %v382 = vsel %vm320, %v311, 0
        %v385 = vsel %vm320, %v312, 0
        %v388 = vsel %vm320, %v313, 0
        %v391 = vsel %vm320, %v314, 0
        %v394 = vsel %vm320, %v315, 0
        %v397 = vsel %vm320, %v316, 0
        %v400 = vsel %vm320, %v317, 0
        %v403 = vsel %vm320, %v318, 0
        %405 = vmatprep.subr.mxu0 0.0
        %406 = vmatpush1.msra.mxu0 %v319
        %407 = vmatprep.subr.mxu0 0.0
        %408 = vmatpush1.msra.mxu0 0.0
        %409 = vmatprep.subr.mxu0 0.0
        %410 = vmatpush1.msra.mxu0 0.0
        %411 = vmatprep.subr.mxu0 0.0
        %412 = vmatpush1.msra.mxu0 0.0
        %413 = vmatprep.subr.mxu0 0.0
        %414 = vmatpush1.msra.mxu0 0.0
        %415 = vmatprep.subr.mxu0 0.0
        %416 = vmatpush1.msra.mxu0 0.0
        %417 = vmatprep.subr.mxu0 0.0
        %418 = vmatpush1.msra.mxu0 0.0
        %419 = vmatprep.subr.mxu0 0.0
        %420 = vmatpush1.msra.mxu0 0.0
        %421 = vmatprep.subr.mxu0 0.0
        %422 = vmatpush1.msra.mxu0 0.0
        %423 = vmatprep.subr.mxu0 0.0
        %424 = vmatpush1.msra.mxu0 0.0
        %425 = vmatprep.subr.mxu0 0.0
        %426 = vmatpush1.msra.mxu0 0.0
        %427 = vmatprep.subr.mxu0 0.0
        %428 = vmatpush1.msra.mxu0 0.0
        %429 = vmatprep.subr.mxu0 0.0
        %430 = vmatpush1.msra.mxu0 0.0
        %431 = vmatprep.subr.mxu0 0.0
        %432 = vmatpush1.msra.mxu0 0.0
        %433 = vmatprep.subr.mxu0 0.0
        %434 = vmatpush1.msra.mxu0 0.0
        %435 = vmatprep.subr.mxu0 0.0
        %436 = vmatpush1.msra.mxu0 0.0
        %437 = vmatprep.subr.mxu0 0.0
        %438 = vmatpush1.msra.mxu0 0.0
        %439 = vmatprep.subr.mxu0 0.0
        %440 = vmatpush1.msra.mxu0 0.0
        %441 = vmatprep.subr.mxu0 0.0
        %442 = vmatpush1.msra.mxu0 0.0
        %443 = vmatprep.subr.mxu0 0.0
        %444 = vmatpush1.msra.mxu0 0.0
        %445 = vmatprep.subr.mxu0 0.0
        %446 = vmatpush1.msra.mxu0 0.0
        %447 = vmatprep.subr.mxu0 0.0
        %448 = vmatpush1.msra.mxu0 0.0
        %449 = vmatprep.subr.mxu0 0.0
        %450 = vmatpush1.msra.mxu0 0.0
        %451 = vmatprep.subr.mxu0 0.0
        %452 = vmatpush1.msra.mxu0 0.0
        %453 = vmatprep.subr.mxu0 0.0
        %454 = vmatpush1.msra.mxu0 0.0
        %455 = vmatprep.subr.mxu0 0.0
        %456 = vmatpush1.msra.mxu0 0.0
        %457 = vmatprep.subr.mxu0 0.0
        %458 = vmatpush1.msra.mxu0 0.0
        %459 = vmatprep.subr.mxu0 0.0
        %460 = vmatpush1.msra.mxu0 0.0
        %461 = vmatprep.subr.mxu0 0.0
        %462 = vmatpush1.msra.mxu0 0.0
        %463 = vmatprep.subr.mxu0 0.0
        %464 = vmatpush1.msra.mxu0 0.0
        %465 = vmatprep.subr.mxu0 0.0
        %466 = vmatpush1.msra.mxu0 0.0
        %467 = vmatprep.subr.mxu0 0.0
        %468 = vmatpush1.msra.mxu0 0.0
        %469 = vmatprep.mubr.f32.mxu0 0.0
        %470 = vmatmul.mubr.f32.gmra.mrb[0].mxu0 %v322
        %v471 = vpop.f32.mrb[0].mxu0
        %v472 = vadd.f32 0.0, %v471
        %v473 = vpop.f32.mrb[0].mxu0
        %474 = vmatprep.mubr.f32.mxu0 0.0
        %475 = vmatmul.mubr.f32.gmra.mrb[0].mxu0 %v325
        %v476 = vpop.f32.mrb[0].mxu0
        %v477 = vadd.f32 0.0, %v476
        %v478 = vpop.f32.mrb[0].mxu0
        %479 = vmatprep.mubr.f32.mxu0 0.0
        %480 = vmatmul.mubr.f32.gmra.mrb[0].mxu0 %v328
        %v481 = vpop.f32.mrb[0].mxu0
        %v482 = vadd.f32 0.0, %v481
        %v483 = vpop.f32.mrb[0].mxu0
        %484 = vmatprep.mubr.f32.mxu0 0.0
        %485 = vmatmul.mubr.f32.gmra.mrb[0].mxu0 %v331
        %v486 = vpop.f32.mrb[0].mxu0
        %v487 = vadd.f32 0.0, %v486
        %v488 = vpop.f32.mrb[0].mxu0
        %489 = vmatprep.mubr.f32.mxu0 0.0
        %490 = vmatmul.mubr.f32.gmra.mrb[0].mxu0 %v334
        %v491 = vpop.f32.mrb[0].mxu0
        %v492 = vadd.f32 0.0, %v491
        %v493 = vpop.f32.mrb[0].mxu0
        %494 = vmatprep.mubr.f32.mxu0 0.0
        %495 = vmatmul.mubr.f32.gmra.mrb[0].mxu0 %v337
        %v496 = vpop.f32.mrb[0].mxu0
        %v497 = vadd.f32 0.0, %v496
        %v498 = vpop.f32.mrb[0].mxu0
        %499 = vmatprep.mubr.f32.mxu0 0.0
        %500 = vmatmul.mubr.f32.gmra.mrb[0].mxu0 %v340
        %v501 = vpop.f32.mrb[0].mxu0
        %v502 = vadd.f32 0.0, %v501
        %v503 = vpop.f32.mrb[0].mxu0
        %504 = vmatprep.mubr.f32.mxu0 0.0
        %505 = vmatmul.mubr.f32.gmra.mrb[0].mxu0 %v343
        %v506 = vpop.f32.mrb[0].mxu0
        %v507 = vadd.f32 0.0, %v506
        %v508 = vpop.f32.mrb[0].mxu0
        %509 = vmatprep.mubr.f32.mxu0 0.0
        %510 = vmatmul.mubr.f32.gmra.mrb[0].mxu0 %v346
        %v511 = vpop.f32.mrb[0].mxu0
        %v512 = vadd.f32 0.0, %v511
        %v513 = vpop.f32.mrb[0].mxu0
        %514 = vmatprep.mubr.f32.mxu0 0.0
        %515 = vmatmul.mubr.f32.gmra.mrb[0].mxu0 %v349
        %v516 = vpop.f32.mrb[0].mxu0
        %v517 = vadd.f32 0.0, %v516
        %v518 = vpop.f32.mrb[0].mxu0
        %519 = vmatprep.mubr.f32.mxu0 0.0
        %520 = vmatmul.mubr.f32.gmra.mrb[0].mxu0 %v352
        %v521 = vpop.f32.mrb[0].mxu0
        %v522 = vadd.f32 0.0, %v521
        %v523 = vpop.f32.mrb[0].mxu0
        %524 = vmatprep.mubr.f32.mxu0 0.0
        %525 = vmatmul.mubr.f32.gmra.mrb[0].mxu0 %v355
        %v526 = vpop.f32.mrb[0].mxu0
        %v527 = vadd.f32 0.0, %v526
        %v528 = vpop.f32.mrb[0].mxu0
        %529 = vmatprep.mubr.f32.mxu0 0.0
        %530 = vmatmul.mubr.f32.gmra.mrb[0].mxu0 %v358
        %v531 = vpop.f32.mrb[0].mxu0
        %v532 = vadd.f32 0.0, %v531
        %v533 = vpop.f32.mrb[0].mxu0
        %534 = vmatprep.mubr.f32.mxu0 0.0
        %535 = vmatmul.mubr.f32.gmra.mrb[0].mxu0 %v361
        %v536 = vpop.f32.mrb[0].mxu0
        %v537 = vadd.f32 0.0, %v536
        %v538 = vpop.f32.mrb[0].mxu0
        %539 = vmatprep.mubr.f32.mxu0 0.0
        %540 = vmatmul.mubr.f32.gmra.mrb[0].mxu0 %v364
        %v541 = vpop.f32.mrb[0].mxu0
        %v542 = vadd.f32 0.0, %v541
        %v543 = vpop.f32.mrb[0].mxu0
        %544 = vmatprep.mubr.f32.mxu0 0.0
        %545 = vmatmul.mubr.f32.gmra.mrb[0].mxu0 %v367
        %v546 = vpop.f32.mrb[0].mxu0
        %v547 = vadd.f32 0.0, %v546
        %v548 = vpop.f32.mrb[0].mxu0
        %549 = vmatprep.mubr.f32.mxu0 0.0
        %550 = vmatmul.mubr.f32.gmra.mrb[0].mxu0 %v370
        %v551 = vpop.f32.mrb[0].mxu0
        %v552 = vadd.f32 0.0, %v551
        %v553 = vpop.f32.mrb[0].mxu0
        %554 = vmatprep.mubr.f32.mxu0 0.0
        %555 = vmatmul.mubr.f32.gmra.mrb[0].mxu0 %v373
        %v556 = vpop.f32.mrb[0].mxu0
        %v557 = vadd.f32 0.0, %v556
        %v558 = vpop.f32.mrb[0].mxu0
        %559 = vmatprep.mubr.f32.mxu0 0.0
        %560 = vmatmul.mubr.f32.gmra.mrb[0].mxu0 %v376
        %v561 = vpop.f32.mrb[0].mxu0
        %v562 = vadd.f32 0.0, %v561
        %v563 = vpop.f32.mrb[0].mxu0
        %564 = vmatprep.mubr.f32.mxu0 0.0
        %565 = vmatmul.mubr.f32.gmra.mrb[0].mxu0 %v379
        %v566 = vpop.f32.mrb[0].mxu0
        %v567 = vadd.f32 0.0, %v566
        %v568 = vpop.f32.mrb[0].mxu0
        %569 = vmatprep.mubr.f32.mxu0 0.0
        %570 = vmatmul.mubr.f32.gmra.mrb[0].mxu0 %v382
        %v571 = vpop.f32.mrb[0].mxu0
        %v572 = vadd.f32 0.0, %v571
        %v573 = vpop.f32.mrb[0].mxu0
        %574 = vmatprep.mubr.f32.mxu0 0.0
        %575 = vmatmul.mubr.f32.gmra.mrb[0].mxu0 %v385
        %v576 = vpop.f32.mrb[0].mxu0
        %v577 = vadd.f32 0.0, %v576
        %v578 = vpop.f32.mrb[0].mxu0
        %579 = vmatprep.mubr.f32.mxu0 0.0
        %580 = vmatmul.mubr.f32.gmra.mrb[0].mxu0 %v388
        %v581 = vpop.f32.mrb[0].mxu0
        %v582 = vadd.f32 0.0, %v581
        %v583 = vpop.f32.mrb[0].mxu0
        %584 = vmatprep.mubr.f32.mxu0 0.0
        %585 = vmatmul.mubr.f32.gmra.mrb[0].mxu0 %v391
        %v586 = vpop.f32.mrb[0].mxu0
        %v587 = vadd.f32 0.0, %v586
        %v588 = vpop.f32.mrb[0].mxu0
        %589 = vmatprep.mubr.f32.mxu0 0.0
        %590 = vmatmul.mubr.f32.gmra.mrb[0].mxu0 %v394
        %v591 = vpop.f32.mrb[0].mxu0
        %v592 = vadd.f32 0.0, %v591
        %v593 = vpop.f32.mrb[0].mxu0
        %594 = vmatprep.mubr.f32.mxu0 0.0
        %595 = vmatmul.mubr.f32.gmra.mrb[0].mxu0 %v397
        %v596 = vpop.f32.mrb[0].mxu0
        %v597 = vadd.f32 0.0, %v596
        %v598 = vpop.f32.mrb[0].mxu0
        %599 = vmatprep.mubr.f32.mxu0 0.0
        %600 = vmatmul.mubr.f32.gmra.mrb[0].mxu0 %v400
        %v601 = vpop.f32.mrb[0].mxu0
        %v602 = vadd.f32 0.0, %v601
        %v603 = vpop.f32.mrb[0].mxu0
        %604 = vmatprep.mubr.f32.mxu0 0.0
        %605 = vmatmul.mubr.f32.gmra.mrb[0].mxu0 %v403
        %v606 = vpop.f32.mrb[0].mxu0
        %v607 = vadd.f32 0.0, %v606
        %v608 = vpop.f32.mrb[0].mxu0
        %609 = vdwg.mxu0
        %610 = vst [vmem:[#allocation2] sm:$0xff] %v472
        %611 = vst [vmem:[#allocation2 + $0x8] sm:$0xff] %v477
        %612 = vst [vmem:[#allocation2 + $0x10] sm:$0xff] %v482
        %613 = vst [vmem:[#allocation2 + $0x18] sm:$0xff] %v487
        %614 = vst [vmem:[#allocation2 + $0x20] sm:$0xff] %v492
        %615 = vst [vmem:[#allocation2 + $0x28] sm:$0xff] %v497
        %616 = vst [vmem:[#allocation2 + $0x30] sm:$0xff] %v502
        %617 = vst [vmem:[#allocation2 + $0x38] sm:$0xff] %v507
        %618 = vst [vmem:[#allocation2 + $0x40] sm:$0xff] %v512
        %619 = vst [vmem:[#allocation2 + $0x48] sm:$0xff] %v517
        %620 = vst [vmem:[#allocation2 + $0x50] sm:$0xff] %v522
        %621 = vst [vmem:[#allocation2 + $0x58] sm:$0xff] %v527
        %622 = vst [vmem:[#allocation2 + $0x60] sm:$0xff] %v532
        %623 = vst [vmem:[#allocation2 + $0x68] sm:$0xff] %v537
        %624 = vst [vmem:[#allocation2 + $0x70] sm:$0xff] %v542
        %625 = vst [vmem:[#allocation2 + $0x78] sm:$0xff] %v547
        %626 = vst [vmem:[#allocation2 + $0x80] sm:$0xff] %v552
        %627 = vst [vmem:[#allocation2 + $0x88] sm:$0xff] %v557
        %628 = vst [vmem:[#allocation2 + $0x90] sm:$0xff] %v562
        %629 = vst [vmem:[#allocation2 + $0x98] sm:$0xff] %v567
        %630 = vst [vmem:[#allocation2 + $0xa0] sm:$0xff] %v572
        %631 = vst [vmem:[#allocation2 + $0xa8] sm:$0xff] %v577
        %632 = vst [vmem:[#allocation2 + $0xb0] sm:$0xff] %v582
        %633 = vst [vmem:[#allocation2 + $0xb8] sm:$0xff] %v587
        %634 = vst [vmem:[#allocation2 + $0xc0] sm:$0xff] %v592
        %635 = vst [vmem:[#allocation2 + $0xc8] sm:$0xff] %v597
        %636 = vst [vmem:[#allocation2 + $0xd0] sm:$0xff] %v602
        %637 = vst [vmem:[#allocation2 + $0xd8] sm:$0xff] %v607
        %v638 = vld [vmem:[%s290 + $0x1] sm:$0xff]
        %v639 = vld [vmem:[%s290 + $0x9] sm:$0xff]
        %v640 = vld [vmem:[%s290 + $0x11] sm:$0xff]
        %v641 = vld [vmem:[%s290 + $0x19] sm:$0xff]
        %v642 = vld [vmem:[%s290 + $0x21] sm:$0xff]
        %v643 = vld [vmem:[%s290 + $0x29] sm:$0xff]
        %v644 = vld [vmem:[%s290 + $0x31] sm:$0xff]
        %v645 = vld [vmem:[%s290 + $0x39] sm:$0xff]
        %v646 = vld [vmem:[%s290 + $0x41] sm:$0xff]
        %v647 = vld [vmem:[%s290 + $0x49] sm:$0xff]
        %v648 = vld [vmem:[%s290 + $0x51] sm:$0xff]
        %v649 = vld [vmem:[%s290 + $0x59] sm:$0xff]
        %v650 = vld [vmem:[%s290 + $0x61] sm:$0xff]
        %v651 = vld [vmem:[%s290 + $0x69] sm:$0xff]
        %v652 = vld [vmem:[%s290 + $0x71] sm:$0xff]
        %v653 = vld [vmem:[%s290 + $0x79] sm:$0xff]
        %v654 = vld [vmem:[%s290 + $0x81] sm:$0xff]
        %v655 = vld [vmem:[%s290 + $0x89] sm:$0xff]
        %v656 = vld [vmem:[%s290 + $0x91] sm:$0xff]
        %v657 = vld [vmem:[%s290 + $0x99] sm:$0xff]
        %v658 = vld [vmem:[%s290 + $0xa1] sm:$0xff]
        %v659 = vld [vmem:[%s290 + $0xa9] sm:$0xff]
        %v660 = vld [vmem:[%s290 + $0xb1] sm:$0xff]
        %v661 = vld [vmem:[%s290 + $0xb9] sm:$0xff]
        %v662 = vld [vmem:[%s290 + $0xc1] sm:$0xff]
        %v663 = vld [vmem:[%s290 + $0xc9] sm:$0xff]
        %v664 = vld [vmem:[%s290 + $0xd1] sm:$0xff]
        %v665 = vld [vmem:[%s290 + $0xd9] sm:$0xff]
        %s666 = scalar_lea.vmem [#allocation6], 8
        %v667 = vld [vmem:[%s666] sm:$0xff]
        %v669 = vsel %vm320, %v638, 0
        %v672 = vsel %vm320, %v639, 0
        %v675 = vsel %vm320, %v640, 0
        %v678 = vsel %vm320, %v641, 0
        %v681 = vsel %vm320, %v642, 0
        %v684 = vsel %vm320, %v643, 0
        %v687 = vsel %vm320, %v644, 0
        %v690 = vsel %vm320, %v645, 0
        %v693 = vsel %vm320, %v646, 0
        %v696 = vsel %vm320, %v647, 0
        %v699 = vsel %vm320, %v648, 0
        %v702 = vsel %vm320, %v649, 0
        %v705 = vsel %vm320, %v650, 0
        %v708 = vsel %vm320, %v651, 0
        %v711 = vsel %vm320, %v652, 0
        %v714 = vsel %vm320, %v653, 0
        %v717 = vsel %vm320, %v654, 0
        %v720 = vsel %vm320, %v655, 0
        %v723 = vsel %vm320, %v656, 0
        %v726 = vsel %vm320, %v657, 0
        %v729 = vsel %vm320, %v658, 0
        %v732 = vsel %vm320, %v659, 0
        %v735 = vsel %vm320, %v660, 0
        %v738 = vsel %vm320, %v661, 0
        %v741 = vsel %vm320, %v662, 0
        %v744 = vsel %vm320, %v663, 0
        %v747 = vsel %vm320, %v664, 0
        %v750 = vsel %vm320, %v665, 0
        %752 = vmatprep.subr.mxu0 0.0
        %753 = vmatpush1.msra.mxu0 %v667
        %754 = vmatprep.subr.mxu0 0.0
        %755 = vmatpush1.msra.mxu0 0.0
        %756 = vmatprep.subr.mxu0 0.0
        %757 = vmatpush1.msra.mxu0 0.0
        %758 = vmatprep.subr.mxu0 0.0
        %759 = vmatpush1.msra.mxu0 0.0
        %760 = vmatprep.subr.mxu0 0.0
        %761 = vmatpush1.msra.mxu0 0.0
        %762 = vmatprep.subr.mxu0 0.0
        %763 = vmatpush1.msra.mxu0 0.0
        %764 = vmatprep.subr.mxu0 0.0
        %765 = vmatpush1.msra.mxu0 0.0
        %766 = vmatprep.subr.mxu0 0.0
        %767 = vmatpush1.msra.mxu0 0.0
        %768 = vmatprep.subr.mxu0 0.0
        %769 = vmatpush1.msra.mxu0 0.0
        %770 = vmatprep.subr.mxu0 0.0
        %771 = vmatpush1.msra.mxu0 0.0
        %772 = vmatprep.subr.mxu0 0.0
        %773 = vmatpush1.msra.mxu0 0.0
        %774 = vmatprep.subr.mxu0 0.0
        %775 = vmatpush1.msra.mxu0 0.0
        %776 = vmatprep.subr.mxu0 0.0
        %777 = vmatpush1.msra.mxu0 0.0
        %778 = vmatprep.subr.mxu0 0.0
        %779 = vmatpush1.msra.mxu0 0.0
        %780 = vmatprep.subr.mxu0 0.0
        %781 = vmatpush1.msra.mxu0 0.0
        %782 = vmatprep.subr.mxu0 0.0
        %783 = vmatpush1.msra.mxu0 0.0
        %784 = vmatprep.subr.mxu0 0.0
        %785 = vmatpush1.msra.mxu0 0.0
        %786 = vmatprep.subr.mxu0 0.0
        %787 = vmatpush1.msra.mxu0 0.0
        %788 = vmatprep.subr.mxu0 0.0
        %789 = vmatpush1.msra.mxu0 0.0
        %790 = vmatprep.subr.mxu0 0.0
        %791 = vmatpush1.msra.mxu0 0.0
        %792 = vmatprep.subr.mxu0 0.0
        %793 = vmatpush1.msra.mxu0 0.0
        %794 = vmatprep.subr.mxu0 0.0
        %795 = vmatpush1.msra.mxu0 0.0
        %796 = vmatprep.subr.mxu0 0.0
        %797 = vmatpush1.msra.mxu0 0.0
        %798 = vmatprep.subr.mxu0 0.0
        %799 = vmatpush1.msra.mxu0 0.0
        %800 = vmatprep.subr.mxu0 0.0
        %801 = vmatpush1.msra.mxu0 0.0
        %802 = vmatprep.subr.mxu0 0.0
        %803 = vmatpush1.msra.mxu0 0.0
        %804 = vmatprep.subr.mxu0 0.0
        %805 = vmatpush1.msra.mxu0 0.0
        %806 = vmatprep.subr.mxu0 0.0
        %807 = vmatpush1.msra.mxu0 0.0
        %808 = vmatprep.subr.mxu0 0.0
        %809 = vmatpush1.msra.mxu0 0.0
        %810 = vmatprep.subr.mxu0 0.0
        %811 = vmatpush1.msra.mxu0 0.0
        %812 = vmatprep.subr.mxu0 0.0
        %813 = vmatpush1.msra.mxu0 0.0
        %814 = vmatprep.subr.mxu0 0.0
        %815 = vmatpush1.msra.mxu0 0.0
        %816 = vmatprep.mubr.f32.mxu0 0.0
        %817 = vmatmul.mubr.f32.gmra.mrb[0].mxu0 %v669
        %v818 = vpop.f32.mrb[0].mxu0
        %v819 = vadd.f32 0.0, %v818
        %v820 = vpop.f32.mrb[0].mxu0
        %821 = vmatprep.mubr.f32.mxu0 0.0
        %822 = vmatmul.mubr.f32.gmra.mrb[0].mxu0 %v672
        %v823 = vpop.f32.mrb[0].mxu0
        %v824 = vadd.f32 0.0, %v823
        %v825 = vpop.f32.mrb[0].mxu0
        %826 = vmatprep.mubr.f32.mxu0 0.0
        %827 = vmatmul.mubr.f32.gmra.mrb[0].mxu0 %v675
        %v828 = vpop.f32.mrb[0].mxu0
        %v829 = vadd.f32 0.0, %v828
        %v830 = vpop.f32.mrb[0].mxu0
        %831 = vmatprep.mubr.f32.mxu0 0.0
        %832 = vmatmul.mubr.f32.gmra.mrb[0].mxu0 %v678
        %v833 = vpop.f32.mrb[0].mxu0
        %v834 = vadd.f32 0.0, %v833
        %v835 = vpop.f32.mrb[0].mxu0
        %836 = vmatprep.mubr.f32.mxu0 0.0
        %837 = vmatmul.mubr.f32.gmra.mrb[0].mxu0 %v681
        %v838 = vpop.f32.mrb[0].mxu0
        %v839 = vadd.f32 0.0, %v838
        %v840 = vpop.f32.mrb[0].mxu0
        %841 = vmatprep.mubr.f32.mxu0 0.0
        %842 = vmatmul.mubr.f32.gmra.mrb[0].mxu0 %v684
        %v843 = vpop.f32.mrb[0].mxu0
        %v844 = vadd.f32 0.0, %v843
        %v845 = vpop.f32.mrb[0].mxu0
        %846 = vmatprep.mubr.f32.mxu0 0.0
        %847 = vmatmul.mubr.f32.gmra.mrb[0].mxu0 %v687
        %v848 = vpop.f32.mrb[0].mxu0
        %v849 = vadd.f32 0.0, %v848
        %v850 = vpop.f32.mrb[0].mxu0
        %851 = vmatprep.mubr.f32.mxu0 0.0
        %852 = vmatmul.mubr.f32.gmra.mrb[0].mxu0 %v690
        %v853 = vpop.f32.mrb[0].mxu0
        %v854 = vadd.f32 0.0, %v853
        %v855 = vpop.f32.mrb[0].mxu0
        %856 = vmatprep.mubr.f32.mxu0 0.0
        %857 = vmatmul.mubr.f32.gmra.mrb[0].mxu0 %v693
        %v858 = vpop.f32.mrb[0].mxu0
        %v859 = vadd.f32 0.0, %v858
        %v860 = vpop.f32.mrb[0].mxu0
        %861 = vmatprep.mubr.f32.mxu0 0.0
        %862 = vmatmul.mubr.f32.gmra.mrb[0].mxu0 %v696
        %v863 = vpop.f32.mrb[0].mxu0
        %v864 = vadd.f32 0.0, %v863
        %v865 = vpop.f32.mrb[0].mxu0
        %866 = vmatprep.mubr.f32.mxu0 0.0
        %867 = vmatmul.mubr.f32.gmra.mrb[0].mxu0 %v699
        %v868 = vpop.f32.mrb[0].mxu0
        %v869 = vadd.f32 0.0, %v868
        %v870 = vpop.f32.mrb[0].mxu0
        %871 = vmatprep.mubr.f32.mxu0 0.0
        %872 = vmatmul.mubr.f32.gmra.mrb[0].mxu0 %v702
        %v873 = vpop.f32.mrb[0].mxu0
        %v874 = vadd.f32 0.0, %v873
        %v875 = vpop.f32.mrb[0].mxu0
        %876 = vmatprep.mubr.f32.mxu0 0.0
        %877 = vmatmul.mubr.f32.gmra.mrb[0].mxu0 %v705
        %v878 = vpop.f32.mrb[0].mxu0
        %v879 = vadd.f32 0.0, %v878
        %v880 = vpop.f32.mrb[0].mxu0
        %881 = vmatprep.mubr.f32.mxu0 0.0
        %882 = vmatmul.mubr.f32.gmra.mrb[0].mxu0 %v708
        %v883 = vpop.f32.mrb[0].mxu0
        %v884 = vadd.f32 0.0, %v883
        %v885 = vpop.f32.mrb[0].mxu0
        %886 = vmatprep.mubr.f32.mxu0 0.0
        %887 = vmatmul.mubr.f32.gmra.mrb[0].mxu0 %v711
        %v888 = vpop.f32.mrb[0].mxu0
        %v889 = vadd.f32 0.0, %v888
        %v890 = vpop.f32.mrb[0].mxu0
        %891 = vmatprep.mubr.f32.mxu0 0.0
        %892 = vmatmul.mubr.f32.gmra.mrb[0].mxu0 %v714
        %v893 = vpop.f32.mrb[0].mxu0
        %v894 = vadd.f32 0.0, %v893
        %v895 = vpop.f32.mrb[0].mxu0
        %896 = vmatprep.mubr.f32.mxu0 0.0
        %897 = vmatmul.mubr.f32.gmra.mrb[0].mxu0 %v717
        %v898 = vpop.f32.mrb[0].mxu0
        %v899 = vadd.f32 0.0, %v898
        %v900 = vpop.f32.mrb[0].mxu0
        %901 = vmatprep.mubr.f32.mxu0 0.0
        %902 = vmatmul.mubr.f32.gmra.mrb[0].mxu0 %v720
        %v903 = vpop.f32.mrb[0].mxu0
        %v904 = vadd.f32 0.0, %v903
        %v905 = vpop.f32.mrb[0].mxu0
        %906 = vmatprep.mubr.f32.mxu0 0.0
        %907 = vmatmul.mubr.f32.gmra.mrb[0].mxu0 %v723
        %v908 = vpop.f32.mrb[0].mxu0
        %v909 = vadd.f32 0.0, %v908
        %v910 = vpop.f32.mrb[0].mxu0
        %911 = vmatprep.mubr.f32.mxu0 0.0
        %912 = vmatmul.mubr.f32.gmra.mrb[0].mxu0 %v726
        %v913 = vpop.f32.mrb[0].mxu0
        %v914 = vadd.f32 0.0, %v913
        %v915 = vpop.f32.mrb[0].mxu0
        %916 = vmatprep.mubr.f32.mxu0 0.0
        %917 = vmatmul.mubr.f32.gmra.mrb[0].mxu0 %v729
        %v918 = vpop.f32.mrb[0].mxu0
        %v919 = vadd.f32 0.0, %v918
        %v920 = vpop.f32.mrb[0].mxu0
        %921 = vmatprep.mubr.f32.mxu0 0.0
        %922 = vmatmul.mubr.f32.gmra.mrb[0].mxu0 %v732
        %v923 = vpop.f32.mrb[0].mxu0
        %v924 = vadd.f32 0.0, %v923
        %v925 = vpop.f32.mrb[0].mxu0
        %926 = vmatprep.mubr.f32.mxu0 0.0
        %927 = vmatmul.mubr.f32.gmra.mrb[0].mxu0 %v735
        %v928 = vpop.f32.mrb[0].mxu0
        %v929 = vadd.f32 0.0, %v928
        %v930 = vpop.f32.mrb[0].mxu0
        %931 = vmatprep.mubr.f32.mxu0 0.0
        %932 = vmatmul.mubr.f32.gmra.mrb[0].mxu0 %v738
        %v933 = vpop.f32.mrb[0].mxu0
        %v934 = vadd.f32 0.0, %v933
        %v935 = vpop.f32.mrb[0].mxu0
        %936 = vmatprep.mubr.f32.mxu0 0.0
        %937 = vmatmul.mubr.f32.gmra.mrb[0].mxu0 %v741
        %v938 = vpop.f32.mrb[0].mxu0
        %v939 = vadd.f32 0.0, %v938
        %v940 = vpop.f32.mrb[0].mxu0
        %941 = vmatprep.mubr.f32.mxu0 0.0
        %942 = vmatmul.mubr.f32.gmra.mrb[0].mxu0 %v744
        %v943 = vpop.f32.mrb[0].mxu0
        %v944 = vadd.f32 0.0, %v943
        %v945 = vpop.f32.mrb[0].mxu0
        %946 = vmatprep.mubr.f32.mxu0 0.0
        %947 = vmatmul.mubr.f32.gmra.mrb[0].mxu0 %v747
        %v948 = vpop.f32.mrb[0].mxu0
        %v949 = vadd.f32 0.0, %v948
        %v950 = vpop.f32.mrb[0].mxu0
        %951 = vmatprep.mubr.f32.mxu0 0.0
        %952 = vmatmul.mubr.f32.gmra.mrb[0].mxu0 %v750
        %v953 = vpop.f32.mrb[0].mxu0
        %v954 = vadd.f32 0.0, %v953
        %v955 = vpop.f32.mrb[0].mxu0
        %956 = vdwg.mxu0
        %v957 = vld [vmem:[#allocation2] sm:$0xff]
        %v958 = vld [vmem:[#allocation2 + $0x8] sm:$0xff]
        %v959 = vld [vmem:[#allocation2 + $0x10] sm:$0xff]
        %v960 = vld [vmem:[#allocation2 + $0x18] sm:$0xff]
        %v961 = vld [vmem:[#allocation2 + $0x20] sm:$0xff]
        %v962 = vld [vmem:[#allocation2 + $0x28] sm:$0xff]
        %v963 = vld [vmem:[#allocation2 + $0x30] sm:$0xff]
        %v964 = vld [vmem:[#allocation2 + $0x38] sm:$0xff]
        %v965 = vld [vmem:[#allocation2 + $0x40] sm:$0xff]
        %v966 = vld [vmem:[#allocation2 + $0x48] sm:$0xff]
        %v967 = vld [vmem:[#allocation2 + $0x50] sm:$0xff]
        %v968 = vld [vmem:[#allocation2 + $0x58] sm:$0xff]
        %v969 = vld [vmem:[#allocation2 + $0x60] sm:$0xff]
        %v970 = vld [vmem:[#allocation2 + $0x68] sm:$0xff]
        %v971 = vld [vmem:[#allocation2 + $0x70] sm:$0xff]
        %v972 = vld [vmem:[#allocation2 + $0x78] sm:$0xff]
        %v973 = vld [vmem:[#allocation2 + $0x80] sm:$0xff]
        %v974 = vld [vmem:[#allocation2 + $0x88] sm:$0xff]
        %v975 = vld [vmem:[#allocation2 + $0x90] sm:$0xff]
        %v976 = vld [vmem:[#allocation2 + $0x98] sm:$0xff]
        %v977 = vld [vmem:[#allocation2 + $0xa0] sm:$0xff]
        %v978 = vld [vmem:[#allocation2 + $0xa8] sm:$0xff]
        %v979 = vld [vmem:[#allocation2 + $0xb0] sm:$0xff]
        %v980 = vld [vmem:[#allocation2 + $0xb8] sm:$0xff]
        %v981 = vld [vmem:[#allocation2 + $0xc0] sm:$0xff]
        %v982 = vld [vmem:[#allocation2 + $0xc8] sm:$0xff]
        %v983 = vld [vmem:[#allocation2 + $0xd0] sm:$0xff]
        %v984 = vld [vmem:[#allocation2 + $0xd8] sm:$0xff]
        %v985 = vadd.f32 %v957, %v819
        %v986 = vadd.f32 %v958, %v824
        %v987 = vadd.f32 %v959, %v829
        %v988 = vadd.f32 %v960, %v834
        %v989 = vadd.f32 %v961, %v839
        %v990 = vadd.f32 %v962, %v844
        %v991 = vadd.f32 %v963, %v849
        %v992 = vadd.f32 %v964, %v854
        %v993 = vadd.f32 %v965, %v859
        %v994 = vadd.f32 %v966, %v864
        %v995 = vadd.f32 %v967, %v869
        %v996 = vadd.f32 %v968, %v874
        %v997 = vadd.f32 %v969, %v879
        %v998 = vadd.f32 %v970, %v884
        %v999 = vadd.f32 %v971, %v889
        %v1000 = vadd.f32 %v972, %v894
        %v1001 = vadd.f32 %v973, %v899
        %v1002 = vadd.f32 %v974, %v904
        %v1003 = vadd.f32 %v975, %v909
        %v1004 = vadd.f32 %v976, %v914
        %v1005 = vadd.f32 %v977, %v919
        %v1006 = vadd.f32 %v978, %v924
        %v1007 = vadd.f32 %v979, %v929
        %v1008 = vadd.f32 %v980, %v934
        %v1009 = vadd.f32 %v981, %v939
        %v1010 = vadd.f32 %v982, %v944
        %v1011 = vadd.f32 %v983, %v949
        %v1012 = vadd.f32 %v984, %v954
        %1013 = vst [vmem:[#allocation2] sm:$0xff] %v985
        %1014 = vst [vmem:[#allocation2 + $0x8] sm:$0xff] %v986
        %1015 = vst [vmem:[#allocation2 + $0x10] sm:$0xff] %v987
        %1016 = vst [vmem:[#allocation2 + $0x18] sm:$0xff] %v988
        %1017 = vst [vmem:[#allocation2 + $0x20] sm:$0xff] %v989
        %1018 = vst [vmem:[#allocation2 + $0x28] sm:$0xff] %v990
        %1019 = vst [vmem:[#allocation2 + $0x30] sm:$0xff] %v991
        %1020 = vst [vmem:[#allocation2 + $0x38] sm:$0xff] %v992
        %1021 = vst [vmem:[#allocation2 + $0x40] sm:$0xff] %v993
        %1022 = vst [vmem:[#allocation2 + $0x48] sm:$0xff] %v994
        %1023 = vst [vmem:[#allocation2 + $0x50] sm:$0xff] %v995
        %1024 = vst [vmem:[#allocation2 + $0x58] sm:$0xff] %v996
        %1025 = vst [vmem:[#allocation2 + $0x60] sm:$0xff] %v997
        %1026 = vst [vmem:[#allocation2 + $0x68] sm:$0xff] %v998
        %1027 = vst [vmem:[#allocation2 + $0x70] sm:$0xff] %v999
        %1028 = vst [vmem:[#allocation2 + $0x78] sm:$0xff] %v1000
        %1029 = vst [vmem:[#allocation2 + $0x80] sm:$0xff] %v1001
        %1030 = vst [vmem:[#allocation2 + $0x88] sm:$0xff] %v1002
        %1031 = vst [vmem:[#allocation2 + $0x90] sm:$0xff] %v1003
        %1032 = vst [vmem:[#allocation2 + $0x98] sm:$0xff] %v1004
        %1033 = vst [vmem:[#allocation2 + $0xa0] sm:$0xff] %v1005
        %1034 = vst [vmem:[#allocation2 + $0xa8] sm:$0xff] %v1006
        %1035 = vst [vmem:[#allocation2 + $0xb0] sm:$0xff] %v1007
        %1036 = vst [vmem:[#allocation2 + $0xb8] sm:$0xff] %v1008
        %1037 = vst [vmem:[#allocation2 + $0xc0] sm:$0xff] %v1009
        %1038 = vst [vmem:[#allocation2 + $0xc8] sm:$0xff] %v1010
        %1039 = vst [vmem:[#allocation2 + $0xd0] sm:$0xff] %v1011
        %1040 = vst [vmem:[#allocation2 + $0xd8] sm:$0xff] %v1012
        %v1041 = vld [vmem:[%s290 + $0x2] sm:$0xff]
        %v1042 = vld [vmem:[%s290 + $0xa] sm:$0xff]
        %v1043 = vld [vmem:[%s290 + $0x12] sm:$0xff]
        %v1044 = vld [vmem:[%s290 + $0x1a] sm:$0xff]
        %v1045 = vld [vmem:[%s290 + $0x22] sm:$0xff]
        %v1046 = vld [vmem:[%s290 + $0x2a] sm:$0xff]
        %v1047 = vld [vmem:[%s290 + $0x32] sm:$0xff]
        %v1048 = vld [vmem:[%s290 + $0x3a] sm:$0xff]
        %v1049 = vld [vmem:[%s290 + $0x42] sm:$0xff]
        %v1050 = vld [vmem:[%s290 + $0x4a] sm:$0xff]
        %v1051 = vld [vmem:[%s290 + $0x52] sm:$0xff]
        %v1052 = vld [vmem:[%s290 + $0x5a] sm:$0xff]
        %v1053 = vld [vmem:[%s290 + $0x62] sm:$0xff]
        %v1054 = vld [vmem:[%s290 + $0x6a] sm:$0xff]
        %v1055 = vld [vmem:[%s290 + $0x72] sm:$0xff]
        %v1056 = vld [vmem:[%s290 + $0x7a] sm:$0xff]
        %v1057 = vld [vmem:[%s290 + $0x82] sm:$0xff]
        %v1058 = vld [vmem:[%s290 + $0x8a] sm:$0xff]
        %v1059 = vld [vmem:[%s290 + $0x92] sm:$0xff]
        %v1060 = vld [vmem:[%s290 + $0x9a] sm:$0xff]
        %v1061 = vld [vmem:[%s290 + $0xa2] sm:$0xff]
        %v1062 = vld [vmem:[%s290 + $0xaa] sm:$0xff]
        %v1063 = vld [vmem:[%s290 + $0xb2] sm:$0xff]
        %v1064 = vld [vmem:[%s290 + $0xba] sm:$0xff]
        %v1065 = vld [vmem:[%s290 + $0xc2] sm:$0xff]
        %v1066 = vld [vmem:[%s290 + $0xca] sm:$0xff]
        %v1067 = vld [vmem:[%s290 + $0xd2] sm:$0xff]
        %v1068 = vld [vmem:[%s290 + $0xda] sm:$0xff]
        %s1069 = scalar_lea.vmem [#allocation6], 16
        %v1070 = vld [vmem:[%s1069] sm:$0xff]
        %v1072 = vsel %vm320, %v1041, 0
        %v1075 = vsel %vm320, %v1042, 0
        %v1078 = vsel %vm320, %v1043, 0
        %v1081 = vsel %vm320, %v1044, 0
        %v1084 = vsel %vm320, %v1045, 0
        %v1087 = vsel %vm320, %v1046, 0
        %v1090 = vsel %vm320, %v1047, 0
        %v1093 = vsel %vm320, %v1048, 0
        %v1096 = vsel %vm320, %v1049, 0
        %v1099 = vsel %vm320, %v1050, 0
        %v1102 = vsel %vm320, %v1051, 0
        %v1105 = vsel %vm320, %v1052, 0
        %v1108 = vsel %vm320, %v1053, 0
        %v1111 = vsel %vm320, %v1054, 0
        %v1114 = vsel %vm320, %v1055, 0
        %v1117 = vsel %vm320, %v1056, 0
        %v1120 = vsel %vm320, %v1057, 0
        %v1123 = vsel %vm320, %v1058, 0
        %v1126 = vsel %vm320, %v1059, 0
        %v1129 = vsel %vm320, %v1060, 0
        %v1132 = vsel %vm320, %v1061, 0
        %v1135 = vsel %vm320, %v1062, 0
        %v1138 = vsel %vm320, %v1063, 0
        %v1141 = vsel %vm320, %v1064, 0
        %v1144 = vsel %vm320, %v1065, 0
        %v1147 = vsel %vm320, %v1066, 0
        %v1150 = vsel %vm320, %v1067, 0
        %v1153 = vsel %vm320, %v1068, 0
        %1155 = vmatprep.subr.mxu0 0.0
        %1156 = vmatpush1.msra.mxu0 %v1070
        %1157 = vmatprep.subr.mxu0 0.0
        %1158 = vmatpush1.msra.mxu0 0.0
        %1159 = vmatprep.subr.mxu0 0.0
        %1160 = vmatpush1.msra.mxu0 0.0
        %1161 = vmatprep.subr.mxu0 0.0
        %1162 = vmatpush1.msra.mxu0 0.0
        %1163 = vmatprep.subr.mxu0 0.0
        %1164 = vmatpush1.msra.mxu0 0.0
        %1165 = vmatprep.subr.mxu0 0.0
        %1166 = vmatpush1.msra.mxu0 0.0
        %1167 = vmatprep.subr.mxu0 0.0
        %1168 = vmatpush1.msra.mxu0 0.0
        %1169 = vmatprep.subr.mxu0 0.0
        %1170 = vmatpush1.msra.mxu0 0.0
        %1171 = vmatprep.subr.mxu0 0.0
        %1172 = vmatpush1.msra.mxu0 0.0
        %1173 = vmatprep.subr.mxu0 0.0
        %1174 = vmatpush1.msra.mxu0 0.0
        %1175 = vmatprep.subr.mxu0 0.0
        %1176 = vmatpush1.msra.mxu0 0.0
        %1177 = vmatprep.subr.mxu0 0.0
        %1178 = vmatpush1.msra.mxu0 0.0
        %1179 = vmatprep.subr.mxu0 0.0
        %1180 = vmatpush1.msra.mxu0 0.0
        %1181 = vmatprep.subr.mxu0 0.0
        %1182 = vmatpush1.msra.mxu0 0.0
        %1183 = vmatprep.subr.mxu0 0.0
        %1184 = vmatpush1.msra.mxu0 0.0
        %1185 = vmatprep.subr.mxu0 0.0
        %1186 = vmatpush1.msra.mxu0 0.0
        %1187 = vmatprep.subr.mxu0 0.0
        %1188 = vmatpush1.msra.mxu0 0.0
        %1189 = vmatprep.subr.mxu0 0.0
        %1190 = vmatpush1.msra.mxu0 0.0
        %1191 = vmatprep.subr.mxu0 0.0
        %1192 = vmatpush1.msra.mxu0 0.0
        %1193 = vmatprep.subr.mxu0 0.0
        %1194 = vmatpush1.msra.mxu0 0.0
        %1195 = vmatprep.subr.mxu0 0.0
        %1196 = vmatpush1.msra.mxu0 0.0
        %1197 = vmatprep.subr.mxu0 0.0
        %1198 = vmatpush1.msra.mxu0 0.0
        %1199 = vmatprep.subr.mxu0 0.0
        %1200 = vmatpush1.msra.mxu0 0.0
        %1201 = vmatprep.subr.mxu0 0.0
        %1202 = vmatpush1.msra.mxu0 0.0
        %1203 = vmatprep.subr.mxu0 0.0
        %1204 = vmatpush1.msra.mxu0 0.0
        %1205 = vmatprep.subr.mxu0 0.0
        %1206 = vmatpush1.msra.mxu0 0.0
        %1207 = vmatprep.subr.mxu0 0.0
        %1208 = vmatpush1.msra.mxu0 0.0
        %1209 = vmatprep.subr.mxu0 0.0
        %1210 = vmatpush1.msra.mxu0 0.0
        %1211 = vmatprep.subr.mxu0 0.0
        %1212 = vmatpush1.msra.mxu0 0.0
        %1213 = vmatprep.subr.mxu0 0.0
        %1214 = vmatpush1.msra.mxu0 0.0
        %1215 = vmatprep.subr.mxu0 0.0
        %1216 = vmatpush1.msra.mxu0 0.0
        %1217 = vmatprep.subr.mxu0 0.0
        %1218 = vmatpush1.msra.mxu0 0.0
        %1219 = vmatprep.mubr.f32.mxu0 0.0
        %1220 = vmatmul.mubr.f32.gmra.mrb[0].mxu0 %v1072
        %v1221 = vpop.f32.mrb[0].mxu0
        %v1222 = vadd.f32 0.0, %v1221
        %v1223 = vpop.f32.mrb[0].mxu0
        %1224 = vmatprep.mubr.f32.mxu0 0.0
        %1225 = vmatmul.mubr.f32.gmra.mrb[0].mxu0 %v1075
        %v1226 = vpop.f32.mrb[0].mxu0
        %v1227 = vadd.f32 0.0, %v1226
        %v1228 = vpop.f32.mrb[0].mxu0
        %1229 = vmatprep.mubr.f32.mxu0 0.0
        %1230 = vmatmul.mubr.f32.gmra.mrb[0].mxu0 %v1078
        %v1231 = vpop.f32.mrb[0].mxu0
        %v1232 = vadd.f32 0.0, %v1231
        %v1233 = vpop.f32.mrb[0].mxu0
        %1234 = vmatprep.mubr.f32.mxu0 0.0
        %1235 = vmatmul.mubr.f32.gmra.mrb[0].mxu0 %v1081
        %v1236 = vpop.f32.mrb[0].mxu0
        %v1237 = vadd.f32 0.0, %v1236
        %v1238 = vpop.f32.mrb[0].mxu0
        %1239 = vmatprep.mubr.f32.mxu0 0.0
        %1240 = vmatmul.mubr.f32.gmra.mrb[0].mxu0 %v1084
        %v1241 = vpop.f32.mrb[0].mxu0
        %v1242 = vadd.f32 0.0, %v1241
        %v1243 = vpop.f32.mrb[0].mxu0
        %1244 = vmatprep.mubr.f32.mxu0 0.0
        %1245 = vmatmul.mubr.f32.gmra.mrb[0].mxu0 %v1087
        %v1246 = vpop.f32.mrb[0].mxu0
        %v1247 = vadd.f32 0.0, %v1246
        %v1248 = vpop.f32.mrb[0].mxu0
        %1249 = vmatprep.mubr.f32.mxu0 0.0
        %1250 = vmatmul.mubr.f32.gmra.mrb[0].mxu0 %v1090
        %v1251 = vpop.f32.mrb[0].mxu0
        %v1252 = vadd.f32 0.0, %v1251
        %v1253 = vpop.f32.mrb[0].mxu0
        %1254 = vmatprep.mubr.f32.mxu0 0.0
        %1255 = vmatmul.mubr.f32.gmra.mrb[0].mxu0 %v1093
        %v1256 = vpop.f32.mrb[0].mxu0
        %v1257 = vadd.f32 0.0, %v1256
        %v1258 = vpop.f32.mrb[0].mxu0
        %1259 = vmatprep.mubr.f32.mxu0 0.0
        %1260 = vmatmul.mubr.f32.gmra.mrb[0].mxu0 %v1096
        %v1261 = vpop.f32.mrb[0].mxu0
        %v1262 = vadd.f32 0.0, %v1261
        %v1263 = vpop.f32.mrb[0].mxu0
        %1264 = vmatprep.mubr.f32.mxu0 0.0
        %1265 = vmatmul.mubr.f32.gmra.mrb[0].mxu0 %v1099
        %v1266 = vpop.f32.mrb[0].mxu0
        %v1267 = vadd.f32 0.0, %v1266
        %v1268 = vpop.f32.mrb[0].mxu0
        %1269 = vmatprep.mubr.f32.mxu0 0.0
        %1270 = vmatmul.mubr.f32.gmra.mrb[0].mxu0 %v1102
        %v1271 = vpop.f32.mrb[0].mxu0
        %v1272 = vadd.f32 0.0, %v1271
        %v1273 = vpop.f32.mrb[0].mxu0
        %1274 = vmatprep.mubr.f32.mxu0 0.0
        %1275 = vmatmul.mubr.f32.gmra.mrb[0].mxu0 %v1105
        %v1276 = vpop.f32.mrb[0].mxu0
        %v1277 = vadd.f32 0.0, %v1276
        %v1278 = vpop.f32.mrb[0].mxu0
        %1279 = vmatprep.mubr.f32.mxu0 0.0
        %1280 = vmatmul.mubr.f32.gmra.mrb[0].mxu0 %v1108
        %v1281 = vpop.f32.mrb[0].mxu0
        %v1282 = vadd.f32 0.0, %v1281
        %v1283 = vpop.f32.mrb[0].mxu0
        %1284 = vmatprep.mubr.f32.mxu0 0.0
        %1285 = vmatmul.mubr.f32.gmra.mrb[0].mxu0 %v1111
        %v1286 = vpop.f32.mrb[0].mxu0
        %v1287 = vadd.f32 0.0, %v1286
        %v1288 = vpop.f32.mrb[0].mxu0
        %1289 = vmatprep.mubr.f32.mxu0 0.0
        %1290 = vmatmul.mubr.f32.gmra.mrb[0].mxu0 %v1114
        %v1291 = vpop.f32.mrb[0].mxu0
        %v1292 = vadd.f32 0.0, %v1291
        %v1293 = vpop.f32.mrb[0].mxu0
        %1294 = vmatprep.mubr.f32.mxu0 0.0
        %1295 = vmatmul.mubr.f32.gmra.mrb[0].mxu0 %v1117
        %v1296 = vpop.f32.mrb[0].mxu0
        %v1297 = vadd.f32 0.0, %v1296
        %v1298 = vpop.f32.mrb[0].mxu0
        %1299 = vmatprep.mubr.f32.mxu0 0.0
        %1300 = vmatmul.mubr.f32.gmra.mrb[0].mxu0 %v1120
        %v1301 = vpop.f32.mrb[0].mxu0
        %v1302 = vadd.f32 0.0, %v1301
        %v1303 = vpop.f32.mrb[0].mxu0
        %1304 = vmatprep.mubr.f32.mxu0 0.0
        %1305 = vmatmul.mubr.f32.gmra.mrb[0].mxu0 %v1123
        %v1306 = vpop.f32.mrb[0].mxu0
        %v1307 = vadd.f32 0.0, %v1306
        %v1308 = vpop.f32.mrb[0].mxu0
        %1309 = vmatprep.mubr.f32.mxu0 0.0
        %1310 = vmatmul.mubr.f32.gmra.mrb[0].mxu0 %v1126
        %v1311 = vpop.f32.mrb[0].mxu0
        %v1312 = vadd.f32 0.0, %v1311
        %v1313 = vpop.f32.mrb[0].mxu0
        %1314 = vmatprep.mubr.f32.mxu0 0.0
        %1315 = vmatmul.mubr.f32.gmra.mrb[0].mxu0 %v1129
        %v1316 = vpop.f32.mrb[0].mxu0
        %v1317 = vadd.f32 0.0, %v1316
        %v1318 = vpop.f32.mrb[0].mxu0
        %1319 = vmatprep.mubr.f32.mxu0 0.0
        %1320 = vmatmul.mubr.f32.gmra.mrb[0].mxu0 %v1132
        %v1321 = vpop.f32.mrb[0].mxu0
        %v1322 = vadd.f32 0.0, %v1321
        %v1323 = vpop.f32.mrb[0].mxu0
        %1324 = vmatprep.mubr.f32.mxu0 0.0
        %1325 = vmatmul.mubr.f32.gmra.mrb[0].mxu0 %v1135
        %v1326 = vpop.f32.mrb[0].mxu0
        %v1327 = vadd.f32 0.0, %v1326
        %v1328 = vpop.f32.mrb[0].mxu0
        %1329 = vmatprep.mubr.f32.mxu0 0.0
        %1330 = vmatmul.mubr.f32.gmra.mrb[0].mxu0 %v1138
        %v1331 = vpop.f32.mrb[0].mxu0
        %v1332 = vadd.f32 0.0, %v1331
        %v1333 = vpop.f32.mrb[0].mxu0
        %1334 = vmatprep.mubr.f32.mxu0 0.0
        %1335 = vmatmul.mubr.f32.gmra.mrb[0].mxu0 %v1141
        %v1336 = vpop.f32.mrb[0].mxu0
        %v1337 = vadd.f32 0.0, %v1336
        %v1338 = vpop.f32.mrb[0].mxu0
        %1339 = vmatprep.mubr.f32.mxu0 0.0
        %1340 = vmatmul.mubr.f32.gmra.mrb[0].mxu0 %v1144
        %v1341 = vpop.f32.mrb[0].mxu0
        %v1342 = vadd.f32 0.0, %v1341
        %v1343 = vpop.f32.mrb[0].mxu0
        %1344 = vmatprep.mubr.f32.mxu0 0.0
        %1345 = vmatmul.mubr.f32.gmra.mrb[0].mxu0 %v1147
        %v1346 = vpop.f32.mrb[0].mxu0
        %v1347 = vadd.f32 0.0, %v1346
        %v1348 = vpop.f32.mrb[0].mxu0
        %1349 = vmatprep.mubr.f32.mxu0 0.0
        %1350 = vmatmul.mubr.f32.gmra.mrb[0].mxu0 %v1150
        %v1351 = vpop.f32.mrb[0].mxu0
        %v1352 = vadd.f32 0.0, %v1351
        %v1353 = vpop.f32.mrb[0].mxu0
        %1354 = vmatprep.mubr.f32.mxu0 0.0
        %1355 = vmatmul.mubr.f32.gmra.mrb[0].mxu0 %v1153
        %v1356 = vpop.f32.mrb[0].mxu0
        %v1357 = vadd.f32 0.0, %v1356
        %v1358 = vpop.f32.mrb[0].mxu0
        %1359 = vdwg.mxu0
        %v1360 = vld [vmem:[#allocation2] sm:$0xff]
        %v1361 = vld [vmem:[#allocation2 + $0x8] sm:$0xff]
        %v1362 = vld [vmem:[#allocation2 + $0x10] sm:$0xff]
        %v1363 = vld [vmem:[#allocation2 + $0x18] sm:$0xff]
        %v1364 = vld [vmem:[#allocation2 + $0x20] sm:$0xff]
        %v1365 = vld [vmem:[#allocation2 + $0x28] sm:$0xff]
        %v1366 = vld [vmem:[#allocation2 + $0x30] sm:$0xff]
        %v1367 = vld [vmem:[#allocation2 + $0x38] sm:$0xff]
        %v1368 = vld [vmem:[#allocation2 + $0x40] sm:$0xff]
        %v1369 = vld [vmem:[#allocation2 + $0x48] sm:$0xff]
        %v1370 = vld [vmem:[#allocation2 + $0x50] sm:$0xff]
        %v1371 = vld [vmem:[#allocation2 + $0x58] sm:$0xff]
        %v1372 = vld [vmem:[#allocation2 + $0x60] sm:$0xff]
        %v1373 = vld [vmem:[#allocation2 + $0x68] sm:$0xff]
        %v1374 = vld [vmem:[#allocation2 + $0x70] sm:$0xff]
        %v1375 = vld [vmem:[#allocation2 + $0x78] sm:$0xff]
        %v1376 = vld [vmem:[#allocation2 + $0x80] sm:$0xff]
        %v1377 = vld [vmem:[#allocation2 + $0x88] sm:$0xff]
        %v1378 = vld [vmem:[#allocation2 + $0x90] sm:$0xff]
        %v1379 = vld [vmem:[#allocation2 + $0x98] sm:$0xff]
        %v1380 = vld [vmem:[#allocation2 + $0xa0] sm:$0xff]
        %v1381 = vld [vmem:[#allocation2 + $0xa8] sm:$0xff]
        %v1382 = vld [vmem:[#allocation2 + $0xb0] sm:$0xff]
        %v1383 = vld [vmem:[#allocation2 + $0xb8] sm:$0xff]
        %v1384 = vld [vmem:[#allocation2 + $0xc0] sm:$0xff]
        %v1385 = vld [vmem:[#allocation2 + $0xc8] sm:$0xff]
        %v1386 = vld [vmem:[#allocation2 + $0xd0] sm:$0xff]
        %v1387 = vld [vmem:[#allocation2 + $0xd8] sm:$0xff]
        %v1388 = vadd.f32 %v1360, %v1222
        %v1389 = vadd.f32 %v1361, %v1227
        %v1390 = vadd.f32 %v1362, %v1232
        %v1391 = vadd.f32 %v1363, %v1237
        %v1392 = vadd.f32 %v1364, %v1242
        %v1393 = vadd.f32 %v1365, %v1247
        %v1394 = vadd.f32 %v1366, %v1252
        %v1395 = vadd.f32 %v1367, %v1257
        %v1396 = vadd.f32 %v1368, %v1262
        %v1397 = vadd.f32 %v1369, %v1267
        %v1398 = vadd.f32 %v1370, %v1272
        %v1399 = vadd.f32 %v1371, %v1277
        %v1400 = vadd.f32 %v1372, %v1282
        %v1401 = vadd.f32 %v1373, %v1287
        %v1402 = vadd.f32 %v1374, %v1292
        %v1403 = vadd.f32 %v1375, %v1297
        %v1404 = vadd.f32 %v1376, %v1302
        %v1405 = vadd.f32 %v1377, %v1307
        %v1406 = vadd.f32 %v1378, %v1312
        %v1407 = vadd.f32 %v1379, %v1317
        %v1408 = vadd.f32 %v1380, %v1322
        %v1409 = vadd.f32 %v1381, %v1327
        %v1410 = vadd.f32 %v1382, %v1332
        %v1411 = vadd.f32 %v1383, %v1337
        %v1412 = vadd.f32 %v1384, %v1342
        %v1413 = vadd.f32 %v1385, %v1347
        %v1414 = vadd.f32 %v1386, %v1352
        %v1415 = vadd.f32 %v1387, %v1357
        %1416 = vst [vmem:[#allocation2] sm:$0xff] %v1388
        %1417 = vst [vmem:[#allocation2 + $0x8] sm:$0xff] %v1389
        %1418 = vst [vmem:[#allocation2 + $0x10] sm:$0xff] %v1390
        %1419 = vst [vmem:[#allocation2 + $0x18] sm:$0xff] %v1391
        %1420 = vst [vmem:[#allocation2 + $0x20] sm:$0xff] %v1392
        %1421 = vst [vmem:[#allocation2 + $0x28] sm:$0xff] %v1393
        %1422 = vst [vmem:[#allocation2 + $0x30] sm:$0xff] %v1394
        %1423 = vst [vmem:[#allocation2 + $0x38] sm:$0xff] %v1395
        %1424 = vst [vmem:[#allocation2 + $0x40] sm:$0xff] %v1396
        %1425 = vst [vmem:[#allocation2 + $0x48] sm:$0xff] %v1397
        %1426 = vst [vmem:[#allocation2 + $0x50] sm:$0xff] %v1398
        %1427 = vst [vmem:[#allocation2 + $0x58] sm:$0xff] %v1399
        %1428 = vst [vmem:[#allocation2 + $0x60] sm:$0xff] %v1400
        %1429 = vst [vmem:[#allocation2 + $0x68] sm:$0xff] %v1401
        %1430 = vst [vmem:[#allocation2 + $0x70] sm:$0xff] %v1402
        %1431 = vst [vmem:[#allocation2 + $0x78] sm:$0xff] %v1403
        %1432 = vst [vmem:[#allocation2 + $0x80] sm:$0xff] %v1404
        %1433 = vst [vmem:[#allocation2 + $0x88] sm:$0xff] %v1405
        %1434 = vst [vmem:[#allocation2 + $0x90] sm:$0xff] %v1406
        %1435 = vst [vmem:[#allocation2 + $0x98] sm:$0xff] %v1407
        %1436 = vst [vmem:[#allocation2 + $0xa0] sm:$0xff] %v1408
        %1437 = vst [vmem:[#allocation2 + $0xa8] sm:$0xff] %v1409
        %1438 = vst [vmem:[#allocation2 + $0xb0] sm:$0xff] %v1410
        %1439 = vst [vmem:[#allocation2 + $0xb8] sm:$0xff] %v1411
        %1440 = vst [vmem:[#allocation2 + $0xc0] sm:$0xff] %v1412
        %1441 = vst [vmem:[#allocation2 + $0xc8] sm:$0xff] %v1413
        %1442 = vst [vmem:[#allocation2 + $0xd0] sm:$0xff] %v1414
        %1443 = vst [vmem:[#allocation2 + $0xd8] sm:$0xff] %v1415
        %v1444 = vld [vmem:[%s290 + $0x10] sm:$0xff]
        %v1445 = vld [vmem:[%s290 + $0x18] sm:$0xff]
        %v1446 = vld [vmem:[%s290 + $0x20] sm:$0xff]
        %v1447 = vld [vmem:[%s290 + $0x28] sm:$0xff]
        %v1448 = vld [vmem:[%s290 + $0x30] sm:$0xff]
        %v1449 = vld [vmem:[%s290 + $0x38] sm:$0xff]
        %v1450 = vld [vmem:[%s290 + $0x40] sm:$0xff]
        %v1451 = vld [vmem:[%s290 + $0x48] sm:$0xff]
        %v1452 = vld [vmem:[%s290 + $0x50] sm:$0xff]
        %v1453 = vld [vmem:[%s290 + $0x58] sm:$0xff]
        %v1454 = vld [vmem:[%s290 + $0x60] sm:$0xff]
        %v1455 = vld [vmem:[%s290 + $0x68] sm:$0xff]
        %v1456 = vld [vmem:[%s290 + $0x70] sm:$0xff]
        %v1457 = vld [vmem:[%s290 + $0x78] sm:$0xff]
        %v1458 = vld [vmem:[%s290 + $0x80] sm:$0xff]
        %v1459 = vld [vmem:[%s290 + $0x88] sm:$0xff]
        %v1460 = vld [vmem:[%s290 + $0x90] sm:$0xff]
        %v1461 = vld [vmem:[%s290 + $0x98] sm:$0xff]
        %v1462 = vld [vmem:[%s290 + $0xa0] sm:$0xff]
        %v1463 = vld [vmem:[%s290 + $0xa8] sm:$0xff]
        %v1464 = vld [vmem:[%s290 + $0xb0] sm:$0xff]
        %v1465 = vld [vmem:[%s290 + $0xb8] sm:$0xff]
        %v1466 = vld [vmem:[%s290 + $0xc0] sm:$0xff]
        %v1467 = vld [vmem:[%s290 + $0xc8] sm:$0xff]
        %v1468 = vld [vmem:[%s290 + $0xd0] sm:$0xff]
        %v1469 = vld [vmem:[%s290 + $0xd8] sm:$0xff]
        %v1470 = vld [vmem:[%s290 + $0xe0] sm:$0xff]
        %v1471 = vld [vmem:[%s290 + $0xe8] sm:$0xff]
        %s1472 = scalar_lea.vmem [#allocation6], 24
        %v1473 = vld [vmem:[%s1472] sm:$0xff]
        %v1475 = vsel %vm320, %v1444, 0
        %v1478 = vsel %vm320, %v1445, 0
        %v1481 = vsel %vm320, %v1446, 0
        %v1484 = vsel %vm320, %v1447, 0
        %v1487 = vsel %vm320, %v1448, 0
        %v1490 = vsel %vm320, %v1449, 0
        %v1493 = vsel %vm320, %v1450, 0
        %v1496 = vsel %vm320, %v1451, 0
        %v1499 = vsel %vm320, %v1452, 0
        %v1502 = vsel %vm320, %v1453, 0
        %v1505 = vsel %vm320, %v1454, 0
        %v1508 = vsel %vm320, %v1455, 0
        %v1511 = vsel %vm320, %v1456, 0
        %v1514 = vsel %vm320, %v1457, 0
        %v1517 = vsel %vm320, %v1458, 0
        %v1520 = vsel %vm320, %v1459, 0
        %v1523 = vsel %vm320, %v1460, 0
        %v1526 = vsel %vm320, %v1461, 0
        %v1529 = vsel %vm320, %v1462, 0
        %v1532 = vsel %vm320, %v1463, 0
        %v1535 = vsel %vm320, %v1464, 0
        %v1538 = vsel %vm320, %v1465, 0
        %v1541 = vsel %vm320, %v1466, 0
        %v1544 = vsel %vm320, %v1467, 0
        %v1547 = vsel %vm320, %v1468, 0
        %v1550 = vsel %vm320, %v1469, 0
        %v1553 = vsel %vm320, %v1470, 0
        %v1556 = vsel %vm320, %v1471, 0
        %1558 = vmatprep.subr.mxu0 0.0
        %1559 = vmatpush1.msra.mxu0 %v1473
        %1560 = vmatprep.subr.mxu0 0.0
        %1561 = vmatpush1.msra.mxu0 0.0
        %1562 = vmatprep.subr.mxu0 0.0
        %1563 = vmatpush1.msra.mxu0 0.0
        %1564 = vmatprep.subr.mxu0 0.0
        %1565 = vmatpush1.msra.mxu0 0.0
        %1566 = vmatprep.subr.mxu0 0.0
        %1567 = vmatpush1.msra.mxu0 0.0
        %1568 = vmatprep.subr.mxu0 0.0
        %1569 = vmatpush1.msra.mxu0 0.0
        %1570 = vmatprep.subr.mxu0 0.0
        %1571 = vmatpush1.msra.mxu0 0.0
        %1572 = vmatprep.subr.mxu0 0.0
        %1573 = vmatpush1.msra.mxu0 0.0
        %1574 = vmatprep.subr.mxu0 0.0
        %1575 = vmatpush1.msra.mxu0 0.0
        %1576 = vmatprep.subr.mxu0 0.0
        %1577 = vmatpush1.msra.mxu0 0.0
        %1578 = vmatprep.subr.mxu0 0.0
        %1579 = vmatpush1.msra.mxu0 0.0
        %1580 = vmatprep.subr.mxu0 0.0
        %1581 = vmatpush1.msra.mxu0 0.0
        %1582 = vmatprep.subr.mxu0 0.0
        %1583 = vmatpush1.msra.mxu0 0.0
        %1584 = vmatprep.subr.mxu0 0.0
        %1585 = vmatpush1.msra.mxu0 0.0
        %1586 = vmatprep.subr.mxu0 0.0
        %1587 = vmatpush1.msra.mxu0 0.0
        %1588 = vmatprep.subr.mxu0 0.0
        %1589 = vmatpush1.msra.mxu0 0.0
        %1590 = vmatprep.subr.mxu0 0.0
        %1591 = vmatpush1.msra.mxu0 0.0
        %1592 = vmatprep.subr.mxu0 0.0
        %1593 = vmatpush1.msra.mxu0 0.0
        %1594 = vmatprep.subr.mxu0 0.0
        %1595 = vmatpush1.msra.mxu0 0.0
        %1596 = vmatprep.subr.mxu0 0.0
        %1597 = vmatpush1.msra.mxu0 0.0
        %1598 = vmatprep.subr.mxu0 0.0
        %1599 = vmatpush1.msra.mxu0 0.0
        %1600 = vmatprep.subr.mxu0 0.0
        %1601 = vmatpush1.msra.mxu0 0.0
        %1602 = vmatprep.subr.mxu0 0.0
        %1603 = vmatpush1.msra.mxu0 0.0
        %1604 = vmatprep.subr.mxu0 0.0
        %1605 = vmatpush1.msra.mxu0 0.0
        %1606 = vmatprep.subr.mxu0 0.0
        %1607 = vmatpush1.msra.mxu0 0.0
        %1608 = vmatprep.subr.mxu0 0.0
        %1609 = vmatpush1.msra.mxu0 0.0
        %1610 = vmatprep.subr.mxu0 0.0
        %1611 = vmatpush1.msra.mxu0 0.0
        %1612 = vmatprep.subr.mxu0 0.0
        %1613 = vmatpush1.msra.mxu0 0.0
        %1614 = vmatprep.subr.mxu0 0.0
        %1615 = vmatpush1.msra.mxu0 0.0
        %1616 = vmatprep.subr.mxu0 0.0
        %1617 = vmatpush1.msra.mxu0 0.0
        %1618 = vmatprep.subr.mxu0 0.0
        %1619 = vmatpush1.msra.mxu0 0.0
        %1620 = vmatprep.subr.mxu0 0.0
        %1621 = vmatpush1.msra.mxu0 0.0
        %1622 = vmatprep.mubr.f32.mxu0 0.0
        %1623 = vmatmul.mubr.f32.gmra.mrb[0].mxu0 %v1475
        %v1624 = vpop.f32.mrb[0].mxu0
        %v1625 = vadd.f32 0.0, %v1624
        %v1626 = vpop.f32.mrb[0].mxu0
        %1627 = vmatprep.mubr.f32.mxu0 0.0
        %1628 = vmatmul.mubr.f32.gmra.mrb[0].mxu0 %v1478
        %v1629 = vpop.f32.mrb[0].mxu0
        %v1630 = vadd.f32 0.0, %v1629
        %v1631 = vpop.f32.mrb[0].mxu0
        %1632 = vmatprep.mubr.f32.mxu0 0.0
        %1633 = vmatmul.mubr.f32.gmra.mrb[0].mxu0 %v1481
        %v1634 = vpop.f32.mrb[0].mxu0
        %v1635 = vadd.f32 0.0, %v1634
        %v1636 = vpop.f32.mrb[0].mxu0
        %1637 = vmatprep.mubr.f32.mxu0 0.0
        %1638 = vmatmul.mubr.f32.gmra.mrb[0].mxu0 %v1484
        %v1639 = vpop.f32.mrb[0].mxu0
        %v1640 = vadd.f32 0.0, %v1639
        %v1641 = vpop.f32.mrb[0].mxu0
        %1642 = vmatprep.mubr.f32.mxu0 0.0
        %1643 = vmatmul.mubr.f32.gmra.mrb[0].mxu0 %v1487
        %v1644 = vpop.f32.mrb[0].mxu0
        %v1645 = vadd.f32 0.0, %v1644
        %v1646 = vpop.f32.mrb[0].mxu0
        %1647 = vmatprep.mubr.f32.mxu0 0.0
        %1648 = vmatmul.mubr.f32.gmra.mrb[0].mxu0 %v1490
        %v1649 = vpop.f32.mrb[0].mxu0
        %v1650 = vadd.f32 0.0, %v1649
        %v1651 = vpop.f32.mrb[0].mxu0
        %1652 = vmatprep.mubr.f32.mxu0 0.0
        %1653 = vmatmul.mubr.f32.gmra.mrb[0].mxu0 %v1493
        %v1654 = vpop.f32.mrb[0].mxu0
        %v1655 = vadd.f32 0.0, %v1654
        %v1656 = vpop.f32.mrb[0].mxu0
        %1657 = vmatprep.mubr.f32.mxu0 0.0
        %1658 = vmatmul.mubr.f32.gmra.mrb[0].mxu0 %v1496
        %v1659 = vpop.f32.mrb[0].mxu0
        %v1660 = vadd.f32 0.0, %v1659
        %v1661 = vpop.f32.mrb[0].mxu0
        %1662 = vmatprep.mubr.f32.mxu0 0.0
        %1663 = vmatmul.mubr.f32.gmra.mrb[0].mxu0 %v1499
        %v1664 = vpop.f32.mrb[0].mxu0
        %v1665 = vadd.f32 0.0, %v1664
        %v1666 = vpop.f32.mrb[0].mxu0
        %1667 = vmatprep.mubr.f32.mxu0 0.0
        %1668 = vmatmul.mubr.f32.gmra.mrb[0].mxu0 %v1502
        %v1669 = vpop.f32.mrb[0].mxu0
        %v1670 = vadd.f32 0.0, %v1669
        %v1671 = vpop.f32.mrb[0].mxu0
        %1672 = vmatprep.mubr.f32.mxu0 0.0
        %1673 = vmatmul.mubr.f32.gmra.mrb[0].mxu0 %v1505
        %v1674 = vpop.f32.mrb[0].mxu0
        %v1675 = vadd.f32 0.0, %v1674
        %v1676 = vpop.f32.mrb[0].mxu0
        %1677 = vmatprep.mubr.f32.mxu0 0.0
        %1678 = vmatmul.mubr.f32.gmra.mrb[0].mxu0 %v1508
        %v1679 = vpop.f32.mrb[0].mxu0
        %v1680 = vadd.f32 0.0, %v1679
        %v1681 = vpop.f32.mrb[0].mxu0
        %1682 = vmatprep.mubr.f32.mxu0 0.0
        %1683 = vmatmul.mubr.f32.gmra.mrb[0].mxu0 %v1511
        %v1684 = vpop.f32.mrb[0].mxu0
        %v1685 = vadd.f32 0.0, %v1684
        %v1686 = vpop.f32.mrb[0].mxu0
        %1687 = vmatprep.mubr.f32.mxu0 0.0
        %1688 = vmatmul.mubr.f32.gmra.mrb[0].mxu0 %v1514
        %v1689 = vpop.f32.mrb[0].mxu0
        %v1690 = vadd.f32 0.0, %v1689
        %v1691 = vpop.f32.mrb[0].mxu0
        %1692 = vmatprep.mubr.f32.mxu0 0.0
        %1693 = vmatmul.mubr.f32.gmra.mrb[0].mxu0 %v1517
        %v1694 = vpop.f32.mrb[0].mxu0
        %v1695 = vadd.f32 0.0, %v1694
        %v1696 = vpop.f32.mrb[0].mxu0
        %1697 = vmatprep.mubr.f32.mxu0 0.0
        %1698 = vmatmul.mubr.f32.gmra.mrb[0].mxu0 %v1520
        %v1699 = vpop.f32.mrb[0].mxu0
        %v1700 = vadd.f32 0.0, %v1699
        %v1701 = vpop.f32.mrb[0].mxu0
        %1702 = vmatprep.mubr.f32.mxu0 0.0
        %1703 = vmatmul.mubr.f32.gmra.mrb[0].mxu0 %v1523
        %v1704 = vpop.f32.mrb[0].mxu0
        %v1705 = vadd.f32 0.0, %v1704
        %v1706 = vpop.f32.mrb[0].mxu0
        %1707 = vmatprep.mubr.f32.mxu0 0.0
        %1708 = vmatmul.mubr.f32.gmra.mrb[0].mxu0 %v1526
        %v1709 = vpop.f32.mrb[0].mxu0
        %v1710 = vadd.f32 0.0, %v1709
        %v1711 = vpop.f32.mrb[0].mxu0
        %1712 = vmatprep.mubr.f32.mxu0 0.0
        %1713 = vmatmul.mubr.f32.gmra.mrb[0].mxu0 %v1529
        %v1714 = vpop.f32.mrb[0].mxu0
        %v1715 = vadd.f32 0.0, %v1714
        %v1716 = vpop.f32.mrb[0].mxu0
        %1717 = vmatprep.mubr.f32.mxu0 0.0
        %1718 = vmatmul.mubr.f32.gmra.mrb[0].mxu0 %v1532
        %v1719 = vpop.f32.mrb[0].mxu0
        %v1720 = vadd.f32 0.0, %v1719
        %v1721 = vpop.f32.mrb[0].mxu0
        %1722 = vmatprep.mubr.f32.mxu0 0.0
        %1723 = vmatmul.mubr.f32.gmra.mrb[0].mxu0 %v1535
        %v1724 = vpop.f32.mrb[0].mxu0
        %v1725 = vadd.f32 0.0, %v1724
        %v1726 = vpop.f32.mrb[0].mxu0
        %1727 = vmatprep.mubr.f32.mxu0 0.0
        %1728 = vmatmul.mubr.f32.gmra.mrb[0].mxu0 %v1538
        %v1729 = vpop.f32.mrb[0].mxu0
        %v1730 = vadd.f32 0.0, %v1729
        %v1731 = vpop.f32.mrb[0].mxu0
        %1732 = vmatprep.mubr.f32.mxu0 0.0
        %1733 = vmatmul.mubr.f32.gmra.mrb[0].mxu0 %v1541
        %v1734 = vpop.f32.mrb[0].mxu0
        %v1735 = vadd.f32 0.0, %v1734
        %v1736 = vpop.f32.mrb[0].mxu0
        %1737 = vmatprep.mubr.f32.mxu0 0.0
        %1738 = vmatmul.mubr.f32.gmra.mrb[0].mxu0 %v1544
        %v1739 = vpop.f32.mrb[0].mxu0
        %v1740 = vadd.f32 0.0, %v1739
        %v1741 = vpop.f32.mrb[0].mxu0
        %1742 = vmatprep.mubr.f32.mxu0 0.0
        %1743 = vmatmul.mubr.f32.gmra.mrb[0].mxu0 %v1547
        %v1744 = vpop.f32.mrb[0].mxu0
        %v1745 = vadd.f32 0.0, %v1744
        %v1746 = vpop.f32.mrb[0].mxu0
        %1747 = vmatprep.mubr.f32.mxu0 0.0
        %1748 = vmatmul.mubr.f32.gmra.mrb[0].mxu0 %v1550
        %v1749 = vpop.f32.mrb[0].mxu0
        %v1750 = vadd.f32 0.0, %v1749
        %v1751 = vpop.f32.mrb[0].mxu0
        %1752 = vmatprep.mubr.f32.mxu0 0.0
        %1753 = vmatmul.mubr.f32.gmra.mrb[0].mxu0 %v1553
        %v1754 = vpop.f32.mrb[0].mxu0
        %v1755 = vadd.f32 0.0, %v1754
        %v1756 = vpop.f32.mrb[0].mxu0
        %1757 = vmatprep.mubr.f32.mxu0 0.0
        %1758 = vmatmul.mubr.f32.gmra.mrb[0].mxu0 %v1556
        %v1759 = vpop.f32.mrb[0].mxu0
        %v1760 = vadd.f32 0.0, %v1759
        %v1761 = vpop.f32.mrb[0].mxu0
        %1762 = vdwg.mxu0
        %v1763 = vld [vmem:[#allocation2] sm:$0xff]
        %v1764 = vld [vmem:[#allocation2 + $0x8] sm:$0xff]
        %v1765 = vld [vmem:[#allocation2 + $0x10] sm:$0xff]
        %v1766 = vld [vmem:[#allocation2 + $0x18] sm:$0xff]
        %v1767 = vld [vmem:[#allocation2 + $0x20] sm:$0xff]
        %v1768 = vld [vmem:[#allocation2 + $0x28] sm:$0xff]
        %v1769 = vld [vmem:[#allocation2 + $0x30] sm:$0xff]
        %v1770 = vld [vmem:[#allocation2 + $0x38] sm:$0xff]
        %v1771 = vld [vmem:[#allocation2 + $0x40] sm:$0xff]
        %v1772 = vld [vmem:[#allocation2 + $0x48] sm:$0xff]
        %v1773 = vld [vmem:[#allocation2 + $0x50] sm:$0xff]
        %v1774 = vld [vmem:[#allocation2 + $0x58] sm:$0xff]
        %v1775 = vld [vmem:[#allocation2 + $0x60] sm:$0xff]
        %v1776 = vld [vmem:[#allocation2 + $0x68] sm:$0xff]
        %v1777 = vld [vmem:[#allocation2 + $0x70] sm:$0xff]
        %v1778 = vld [vmem:[#allocation2 + $0x78] sm:$0xff]
        %v1779 = vld [vmem:[#allocation2 + $0x80] sm:$0xff]
        %v1780 = vld [vmem:[#allocation2 + $0x88] sm:$0xff]
        %v1781 = vld [vmem:[#allocation2 + $0x90] sm:$0xff]
        %v1782 = vld [vmem:[#allocation2 + $0x98] sm:$0xff]
        %v1783 = vld [vmem:[#allocation2 + $0xa0] sm:$0xff]
        %v1784 = vld [vmem:[#allocation2 + $0xa8] sm:$0xff]
        %v1785 = vld [vmem:[#allocation2 + $0xb0] sm:$0xff]
        %v1786 = vld [vmem:[#allocation2 + $0xb8] sm:$0xff]
        %v1787 = vld [vmem:[#allocation2 + $0xc0] sm:$0xff]
        %v1788 = vld [vmem:[#allocation2 + $0xc8] sm:$0xff]
        %v1789 = vld [vmem:[#allocation2 + $0xd0] sm:$0xff]
        %v1790 = vld [vmem:[#allocation2 + $0xd8] sm:$0xff]
        %v1791 = vadd.f32 %v1763, %v1625
        %v1792 = vadd.f32 %v1764, %v1630
        %v1793 = vadd.f32 %v1765, %v1635
        %v1794 = vadd.f32 %v1766, %v1640
        %v1795 = vadd.f32 %v1767, %v1645
        %v1796 = vadd.f32 %v1768, %v1650
        %v1797 = vadd.f32 %v1769, %v1655
        %v1798 = vadd.f32 %v1770, %v1660
        %v1799 = vadd.f32 %v1771, %v1665
        %v1800 = vadd.f32 %v1772, %v1670
        %v1801 = vadd.f32 %v1773, %v1675
        %v1802 = vadd.f32 %v1774, %v1680
        %v1803 = vadd.f32 %v1775, %v1685
        %v1804 = vadd.f32 %v1776, %v1690
        %v1805 = vadd.f32 %v1777, %v1695
        %v1806 = vadd.f32 %v1778, %v1700
        %v1807 = vadd.f32 %v1779, %v1705
        %v1808 = vadd.f32 %v1780, %v1710
        %v1809 = vadd.f32 %v1781, %v1715
        %v1810 = vadd.f32 %v1782, %v1720
        %v1811 = vadd.f32 %v1783, %v1725
        %v1812 = vadd.f32 %v1784, %v1730
        %v1813 = vadd.f32 %v1785, %v1735
        %v1814 = vadd.f32 %v1786, %v1740
        %v1815 = vadd.f32 %v1787, %v1745
        %v1816 = vadd.f32 %v1788, %v1750
        %v1817 = vadd.f32 %v1789, %v1755
        %v1818 = vadd.f32 %v1790, %v1760
        %1819 = vst [vmem:[#allocation2] sm:$0xff] %v1791
        %1820 = vst [vmem:[#allocation2 + $0x8] sm:$0xff] %v1792
        %1821 = vst [vmem:[#allocation2 + $0x10] sm:$0xff] %v1793
        %1822 = vst [vmem:[#allocation2 + $0x18] sm:$0xff] %v1794
        %1823 = vst [vmem:[#allocation2 + $0x20] sm:$0xff] %v1795
        %1824 = vst [vmem:[#allocation2 + $0x28] sm:$0xff] %v1796
        %1825 = vst [vmem:[#allocation2 + $0x30] sm:$0xff] %v1797
        %1826 = vst [vmem:[#allocation2 + $0x38] sm:$0xff] %v1798
        %1827 = vst [vmem:[#allocation2 + $0x40] sm:$0xff] %v1799
        %1828 = vst [vmem:[#allocation2 + $0x48] sm:$0xff] %v1800
        %1829 = vst [vmem:[#allocation2 + $0x50] sm:$0xff] %v1801
        %1830 = vst [vmem:[#allocation2 + $0x58] sm:$0xff] %v1802
        %1831 = vst [vmem:[#allocation2 + $0x60] sm:$0xff] %v1803
        %1832 = vst [vmem:[#allocation2 + $0x68] sm:$0xff] %v1804
        %1833 = vst [vmem:[#allocation2 + $0x70] sm:$0xff] %v1805
        %1834 = vst [vmem:[#allocation2 + $0x78] sm:$0xff] %v1806
        %1835 = vst [vmem:[#allocation2 + $0x80] sm:$0xff] %v1807
        %1836 = vst [vmem:[#allocation2 + $0x88] sm:$0xff] %v1808
        %1837 = vst [vmem:[#allocation2 + $0x90] sm:$0xff] %v1809
        %1838 = vst [vmem:[#allocation2 + $0x98] sm:$0xff] %v1810
        %1839 = vst [vmem:[#allocation2 + $0xa0] sm:$0xff] %v1811
        %1840 = vst [vmem:[#allocation2 + $0xa8] sm:$0xff] %v1812
        %1841 = vst [vmem:[#allocation2 + $0xb0] sm:$0xff] %v1813
        %1842 = vst [vmem:[#allocation2 + $0xb8] sm:$0xff] %v1814
        %1843 = vst [vmem:[#allocation2 + $0xc0] sm:$0xff] %v1815
        %1844 = vst [vmem:[#allocation2 + $0xc8] sm:$0xff] %v1816
        %1845 = vst [vmem:[#allocation2 + $0xd0] sm:$0xff] %v1817
        %1846 = vst [vmem:[#allocation2 + $0xd8] sm:$0xff] %v1818
        %v1847 = vld [vmem:[%s290 + $0x11] sm:$0xff]
        %v1848 = vld [vmem:[%s290 + $0x19] sm:$0xff]
        %v1849 = vld [vmem:[%s290 + $0x21] sm:$0xff]
        %v1850 = vld [vmem:[%s290 + $0x29] sm:$0xff]
        %v1851 = vld [vmem:[%s290 + $0x31] sm:$0xff]
        %v1852 = vld [vmem:[%s290 + $0x39] sm:$0xff]
        %v1853 = vld [vmem:[%s290 + $0x41] sm:$0xff]
        %v1854 = vld [vmem:[%s290 + $0x49] sm:$0xff]
        %v1855 = vld [vmem:[%s290 + $0x51] sm:$0xff]
        %v1856 = vld [vmem:[%s290 + $0x59] sm:$0xff]
        %v1857 = vld [vmem:[%s290 + $0x61] sm:$0xff]
        %v1858 = vld [vmem:[%s290 + $0x69] sm:$0xff]
        %v1859 = vld [vmem:[%s290 + $0x71] sm:$0xff]
        %v1860 = vld [vmem:[%s290 + $0x79] sm:$0xff]
        %v1861 = vld [vmem:[%s290 + $0x81] sm:$0xff]
        %v1862 = vld [vmem:[%s290 + $0x89] sm:$0xff]
        %v1863 = vld [vmem:[%s290 + $0x91] sm:$0xff]
        %v1864 = vld [vmem:[%s290 + $0x99] sm:$0xff]
        %v1865 = vld [vmem:[%s290 + $0xa1] sm:$0xff]
        %v1866 = vld [vmem:[%s290 + $0xa9] sm:$0xff]
        %v1867 = vld [vmem:[%s290 + $0xb1] sm:$0xff]
        %v1868 = vld [vmem:[%s290 + $0xb9] sm:$0xff]
        %v1869 = vld [vmem:[%s290 + $0xc1] sm:$0xff]
        %v1870 = vld [vmem:[%s290 + $0xc9] sm:$0xff]
        %v1871 = vld [vmem:[%s290 + $0xd1] sm:$0xff]
        %v1872 = vld [vmem:[%s290 + $0xd9] sm:$0xff]
        %v1873 = vld [vmem:[%s290 + $0xe1] sm:$0xff]
        %v1874 = vld [vmem:[%s290 + $0xe9] sm:$0xff]
        %s1875 = scalar_lea.vmem [#allocation6], 32
        %v1876 = vld [vmem:[%s1875] sm:$0xff]
        %v1878 = vsel %vm320, %v1847, 0
        %v1881 = vsel %vm320, %v1848, 0
        %v1884 = vsel %vm320, %v1849, 0
        %v1887 = vsel %vm320, %v1850, 0
        %v1890 = vsel %vm320, %v1851, 0
        %v1893 = vsel %vm320, %v1852, 0
        %v1896 = vsel %vm320, %v1853, 0
        %v1899 = vsel %vm320, %v1854, 0
        %v1902 = vsel %vm320, %v1855, 0
        %v1905 = vsel %vm320, %v1856, 0
        %v1908 = vsel %vm320, %v1857, 0
        %v1911 = vsel %vm320, %v1858, 0
        %v1914 = vsel %vm320, %v1859, 0
        %v1917 = vsel %vm320, %v1860, 0
        %v1920 = vsel %vm320, %v1861, 0
        %v1923 = vsel %vm320, %v1862, 0
        %v1926 = vsel %vm320, %v1863, 0
        %v1929 = vsel %vm320, %v1864, 0
        %v1932 = vsel %vm320, %v1865, 0
        %v1935 = vsel %vm320, %v1866, 0
        %v1938 = vsel %vm320, %v1867, 0
        %v1941 = vsel %vm320, %v1868, 0
        %v1944 = vsel %vm320, %v1869, 0
        %v1947 = vsel %vm320, %v1870, 0
        %v1950 = vsel %vm320, %v1871, 0
        %v1953 = vsel %vm320, %v1872, 0
        %v1956 = vsel %vm320, %v1873, 0
        %v1959 = vsel %vm320, %v1874, 0
        %1961 = vmatprep.subr.mxu0 0.0
        %1962 = vmatpush1.msra.mxu0 %v1876
        %1963 = vmatprep.subr.mxu0 0.0
        %1964 = vmatpush1.msra.mxu0 0.0
        %1965 = vmatprep.subr.mxu0 0.0
        %1966 = vmatpush1.msra.mxu0 0.0
        %1967 = vmatprep.subr.mxu0 0.0
        %1968 = vmatpush1.msra.mxu0 0.0
        %1969 = vmatprep.subr.mxu0 0.0
        %1970 = vmatpush1.msra.mxu0 0.0
        %1971 = vmatprep.subr.mxu0 0.0
        %1972 = vmatpush1.msra.mxu0 0.0
        %1973 = vmatprep.subr.mxu0 0.0
        %1974 = vmatpush1.msra.mxu0 0.0
        %1975 = vmatprep.subr.mxu0 0.0
        %1976 = vmatpush1.msra.mxu0 0.0
        %1977 = vmatprep.subr.mxu0 0.0
        %1978 = vmatpush1.msra.mxu0 0.0
        %1979 = vmatprep.subr.mxu0 0.0
        %1980 = vmatpush1.msra.mxu0 0.0
        %1981 = vmatprep.subr.mxu0 0.0
        %1982 = vmatpush1.msra.mxu0 0.0
        %1983 = vmatprep.subr.mxu0 0.0
        %1984 = vmatpush1.msra.mxu0 0.0
        %1985 = vmatprep.subr.mxu0 0.0
        %1986 = vmatpush1.msra.mxu0 0.0
        %1987 = vmatprep.subr.mxu0 0.0
        %1988 = vmatpush1.msra.mxu0 0.0
        %1989 = vmatprep.subr.mxu0 0.0
        %1990 = vmatpush1.msra.mxu0 0.0
        %1991 = vmatprep.subr.mxu0 0.0
        %1992 = vmatpush1.msra.mxu0 0.0
        %1993 = vmatprep.subr.mxu0 0.0
        %1994 = vmatpush1.msra.mxu0 0.0
        %1995 = vmatprep.subr.mxu0 0.0
        %1996 = vmatpush1.msra.mxu0 0.0
        %1997 = vmatprep.subr.mxu0 0.0
        %1998 = vmatpush1.msra.mxu0 0.0
        %1999 = vmatprep.subr.mxu0 0.0
        %2000 = vmatpush1.msra.mxu0 0.0
        %2001 = vmatprep.subr.mxu0 0.0
        %2002 = vmatpush1.msra.mxu0 0.0
        %2003 = vmatprep.subr.mxu0 0.0
        %2004 = vmatpush1.msra.mxu0 0.0
        %2005 = vmatprep.subr.mxu0 0.0
        %2006 = vmatpush1.msra.mxu0 0.0
        %2007 = vmatprep.subr.mxu0 0.0
        %2008 = vmatpush1.msra.mxu0 0.0
        %2009 = vmatprep.subr.mxu0 0.0
        %2010 = vmatpush1.msra.mxu0 0.0
        %2011 = vmatprep.subr.mxu0 0.0
        %2012 = vmatpush1.msra.mxu0 0.0
        %2013 = vmatprep.subr.mxu0 0.0
        %2014 = vmatpush1.msra.mxu0 0.0
        %2015 = vmatprep.subr.mxu0 0.0
        %2016 = vmatpush1.msra.mxu0 0.0
        %2017 = vmatprep.subr.mxu0 0.0
        %2018 = vmatpush1.msra.mxu0 0.0
        %2019 = vmatprep.subr.mxu0 0.0
        %2020 = vmatpush1.msra.mxu0 0.0
        %2021 = vmatprep.subr.mxu0 0.0
        %2022 = vmatpush1.msra.mxu0 0.0
        %2023 = vmatprep.subr.mxu0 0.0
        %2024 = vmatpush1.msra.mxu0 0.0
        %2025 = vmatprep.mubr.f32.mxu0 0.0
        %2026 = vmatmul.mubr.f32.gmra.mrb[0].mxu0 %v1878
        %v2027 = vpop.f32.mrb[0].mxu0
        %v2028 = vadd.f32 0.0, %v2027
        %v2029 = vpop.f32.mrb[0].mxu0
        %2030 = vmatprep.mubr.f32.mxu0 0.0
        %2031 = vmatmul.mubr.f32.gmra.mrb[0].mxu0 %v1881
        %v2032 = vpop.f32.mrb[0].mxu0
        %v2033 = vadd.f32 0.0, %v2032
        %v2034 = vpop.f32.mrb[0].mxu0
        %2035 = vmatprep.mubr.f32.mxu0 0.0
        %2036 = vmatmul.mubr.f32.gmra.mrb[0].mxu0 %v1884
        %v2037 = vpop.f32.mrb[0].mxu0
        %v2038 = vadd.f32 0.0, %v2037
        %v2039 = vpop.f32.mrb[0].mxu0
        %2040 = vmatprep.mubr.f32.mxu0 0.0
        %2041 = vmatmul.mubr.f32.gmra.mrb[0].mxu0 %v1887
        %v2042 = vpop.f32.mrb[0].mxu0
        %v2043 = vadd.f32 0.0, %v2042
        %v2044 = vpop.f32.mrb[0].mxu0
        %2045 = vmatprep.mubr.f32.mxu0 0.0
        %2046 = vmatmul.mubr.f32.gmra.mrb[0].mxu0 %v1890
        %v2047 = vpop.f32.mrb[0].mxu0
        %v2048 = vadd.f32 0.0, %v2047
        %v2049 = vpop.f32.mrb[0].mxu0
        %2050 = vmatprep.mubr.f32.mxu0 0.0
        %2051 = vmatmul.mubr.f32.gmra.mrb[0].mxu0 %v1893
        %v2052 = vpop.f32.mrb[0].mxu0
        %v2053 = vadd.f32 0.0, %v2052
        %v2054 = vpop.f32.mrb[0].mxu0
        %2055 = vmatprep.mubr.f32.mxu0 0.0
        %2056 = vmatmul.mubr.f32.gmra.mrb[0].mxu0 %v1896
        %v2057 = vpop.f32.mrb[0].mxu0
        %v2058 = vadd.f32 0.0, %v2057
        %v2059 = vpop.f32.mrb[0].mxu0
        %2060 = vmatprep.mubr.f32.mxu0 0.0
        %2061 = vmatmul.mubr.f32.gmra.mrb[0].mxu0 %v1899
        %v2062 = vpop.f32.mrb[0].mxu0
        %v2063 = vadd.f32 0.0, %v2062
        %v2064 = vpop.f32.mrb[0].mxu0
        %2065 = vmatprep.mubr.f32.mxu0 0.0
        %2066 = vmatmul.mubr.f32.gmra.mrb[0].mxu0 %v1902
        %v2067 = vpop.f32.mrb[0].mxu0
        %v2068 = vadd.f32 0.0, %v2067
        %v2069 = vpop.f32.mrb[0].mxu0
        %2070 = vmatprep.mubr.f32.mxu0 0.0
        %2071 = vmatmul.mubr.f32.gmra.mrb[0].mxu0 %v1905
        %v2072 = vpop.f32.mrb[0].mxu0
        %v2073 = vadd.f32 0.0, %v2072
        %v2074 = vpop.f32.mrb[0].mxu0
        %2075 = vmatprep.mubr.f32.mxu0 0.0
        %2076 = vmatmul.mubr.f32.gmra.mrb[0].mxu0 %v1908
        %v2077 = vpop.f32.mrb[0].mxu0
        %v2078 = vadd.f32 0.0, %v2077
        %v2079 = vpop.f32.mrb[0].mxu0
        %2080 = vmatprep.mubr.f32.mxu0 0.0
        %2081 = vmatmul.mubr.f32.gmra.mrb[0].mxu0 %v1911
        %v2082 = vpop.f32.mrb[0].mxu0
        %v2083 = vadd.f32 0.0, %v2082
        %v2084 = vpop.f32.mrb[0].mxu0
        %2085 = vmatprep.mubr.f32.mxu0 0.0
        %2086 = vmatmul.mubr.f32.gmra.mrb[0].mxu0 %v1914
        %v2087 = vpop.f32.mrb[0].mxu0
        %v2088 = vadd.f32 0.0, %v2087
        %v2089 = vpop.f32.mrb[0].mxu0
        %2090 = vmatprep.mubr.f32.mxu0 0.0
        %2091 = vmatmul.mubr.f32.gmra.mrb[0].mxu0 %v1917
        %v2092 = vpop.f32.mrb[0].mxu0
        %v2093 = vadd.f32 0.0, %v2092
        %v2094 = vpop.f32.mrb[0].mxu0
        %2095 = vmatprep.mubr.f32.mxu0 0.0
        %2096 = vmatmul.mubr.f32.gmra.mrb[0].mxu0 %v1920
        %v2097 = vpop.f32.mrb[0].mxu0
        %v2098 = vadd.f32 0.0, %v2097
        %v2099 = vpop.f32.mrb[0].mxu0
        %2100 = vmatprep.mubr.f32.mxu0 0.0
        %2101 = vmatmul.mubr.f32.gmra.mrb[0].mxu0 %v1923
        %v2102 = vpop.f32.mrb[0].mxu0
        %v2103 = vadd.f32 0.0, %v2102
        %v2104 = vpop.f32.mrb[0].mxu0
        %2105 = vmatprep.mubr.f32.mxu0 0.0
        %2106 = vmatmul.mubr.f32.gmra.mrb[0].mxu0 %v1926
        %v2107 = vpop.f32.mrb[0].mxu0
        %v2108 = vadd.f32 0.0, %v2107
        %v2109 = vpop.f32.mrb[0].mxu0
        %2110 = vmatprep.mubr.f32.mxu0 0.0
        %2111 = vmatmul.mubr.f32.gmra.mrb[0].mxu0 %v1929
        %v2112 = vpop.f32.mrb[0].mxu0
        %v2113 = vadd.f32 0.0, %v2112
        %v2114 = vpop.f32.mrb[0].mxu0
        %2115 = vmatprep.mubr.f32.mxu0 0.0
        %2116 = vmatmul.mubr.f32.gmra.mrb[0].mxu0 %v1932
        %v2117 = vpop.f32.mrb[0].mxu0
        %v2118 = vadd.f32 0.0, %v2117
        %v2119 = vpop.f32.mrb[0].mxu0
        %2120 = vmatprep.mubr.f32.mxu0 0.0
        %2121 = vmatmul.mubr.f32.gmra.mrb[0].mxu0 %v1935
        %v2122 = vpop.f32.mrb[0].mxu0
        %v2123 = vadd.f32 0.0, %v2122
        %v2124 = vpop.f32.mrb[0].mxu0
        %2125 = vmatprep.mubr.f32.mxu0 0.0
        %2126 = vmatmul.mubr.f32.gmra.mrb[0].mxu0 %v1938
        %v2127 = vpop.f32.mrb[0].mxu0
        %v2128 = vadd.f32 0.0, %v2127
        %v2129 = vpop.f32.mrb[0].mxu0
        %2130 = vmatprep.mubr.f32.mxu0 0.0
        %2131 = vmatmul.mubr.f32.gmra.mrb[0].mxu0 %v1941
        %v2132 = vpop.f32.mrb[0].mxu0
        %v2133 = vadd.f32 0.0, %v2132
        %v2134 = vpop.f32.mrb[0].mxu0
        %2135 = vmatprep.mubr.f32.mxu0 0.0
        %2136 = vmatmul.mubr.f32.gmra.mrb[0].mxu0 %v1944
        %v2137 = vpop.f32.mrb[0].mxu0
        %v2138 = vadd.f32 0.0, %v2137
        %v2139 = vpop.f32.mrb[0].mxu0
        %2140 = vmatprep.mubr.f32.mxu0 0.0
        %2141 = vmatmul.mubr.f32.gmra.mrb[0].mxu0 %v1947
        %v2142 = vpop.f32.mrb[0].mxu0
        %v2143 = vadd.f32 0.0, %v2142
        %v2144 = vpop.f32.mrb[0].mxu0
        %2145 = vmatprep.mubr.f32.mxu0 0.0
        %2146 = vmatmul.mubr.f32.gmra.mrb[0].mxu0 %v1950
        %v2147 = vpop.f32.mrb[0].mxu0
        %v2148 = vadd.f32 0.0, %v2147
        %v2149 = vpop.f32.mrb[0].mxu0
        %2150 = vmatprep.mubr.f32.mxu0 0.0
        %2151 = vmatmul.mubr.f32.gmra.mrb[0].mxu0 %v1953
        %v2152 = vpop.f32.mrb[0].mxu0
        %v2153 = vadd.f32 0.0, %v2152
        %v2154 = vpop.f32.mrb[0].mxu0
        %2155 = vmatprep.mubr.f32.mxu0 0.0
        %2156 = vmatmul.mubr.f32.gmra.mrb[0].mxu0 %v1956
        %v2157 = vpop.f32.mrb[0].mxu0
        %v2158 = vadd.f32 0.0, %v2157
        %v2159 = vpop.f32.mrb[0].mxu0
        %2160 = vmatprep.mubr.f32.mxu0 0.0
        %2161 = vmatmul.mubr.f32.gmra.mrb[0].mxu0 %v1959
        %v2162 = vpop.f32.mrb[0].mxu0
        %v2163 = vadd.f32 0.0, %v2162
        %v2164 = vpop.f32.mrb[0].mxu0
        %2165 = vdwg.mxu0
        %v2166 = vld [vmem:[#allocation2] sm:$0xff]
        %v2167 = vld [vmem:[#allocation2 + $0x8] sm:$0xff]
        %v2168 = vld [vmem:[#allocation2 + $0x10] sm:$0xff]
        %v2169 = vld [vmem:[#allocation2 + $0x18] sm:$0xff]
        %v2170 = vld [vmem:[#allocation2 + $0x20] sm:$0xff]
        %v2171 = vld [vmem:[#allocation2 + $0x28] sm:$0xff]
        %v2172 = vld [vmem:[#allocation2 + $0x30] sm:$0xff]
        %v2173 = vld [vmem:[#allocation2 + $0x38] sm:$0xff]
        %v2174 = vld [vmem:[#allocation2 + $0x40] sm:$0xff]
        %v2175 = vld [vmem:[#allocation2 + $0x48] sm:$0xff]
        %v2176 = vld [vmem:[#allocation2 + $0x50] sm:$0xff]
        %v2177 = vld [vmem:[#allocation2 + $0x58] sm:$0xff]
        %v2178 = vld [vmem:[#allocation2 + $0x60] sm:$0xff]
        %v2179 = vld [vmem:[#allocation2 + $0x68] sm:$0xff]
        %v2180 = vld [vmem:[#allocation2 + $0x70] sm:$0xff]
        %v2181 = vld [vmem:[#allocation2 + $0x78] sm:$0xff]
        %v2182 = vld [vmem:[#allocation2 + $0x80] sm:$0xff]
        %v2183 = vld [vmem:[#allocation2 + $0x88] sm:$0xff]
        %v2184 = vld [vmem:[#allocation2 + $0x90] sm:$0xff]
        %v2185 = vld [vmem:[#allocation2 + $0x98] sm:$0xff]
        %v2186 = vld [vmem:[#allocation2 + $0xa0] sm:$0xff]
        %v2187 = vld [vmem:[#allocation2 + $0xa8] sm:$0xff]
        %v2188 = vld [vmem:[#allocation2 + $0xb0] sm:$0xff]
        %v2189 = vld [vmem:[#allocation2 + $0xb8] sm:$0xff]
        %v2190 = vld [vmem:[#allocation2 + $0xc0] sm:$0xff]
        %v2191 = vld [vmem:[#allocation2 + $0xc8] sm:$0xff]
        %v2192 = vld [vmem:[#allocation2 + $0xd0] sm:$0xff]
        %v2193 = vld [vmem:[#allocation2 + $0xd8] sm:$0xff]
        %v2194 = vadd.f32 %v2166, %v2028
        %v2195 = vadd.f32 %v2167, %v2033
        %v2196 = vadd.f32 %v2168, %v2038
        %v2197 = vadd.f32 %v2169, %v2043
        %v2198 = vadd.f32 %v2170, %v2048
        %v2199 = vadd.f32 %v2171, %v2053
        %v2200 = vadd.f32 %v2172, %v2058
        %v2201 = vadd.f32 %v2173, %v2063
        %v2202 = vadd.f32 %v2174, %v2068
        %v2203 = vadd.f32 %v2175, %v2073
        %v2204 = vadd.f32 %v2176, %v2078
        %v2205 = vadd.f32 %v2177, %v2083
        %v2206 = vadd.f32 %v2178, %v2088
        %v2207 = vadd.f32 %v2179, %v2093
        %v2208 = vadd.f32 %v2180, %v2098
        %v2209 = vadd.f32 %v2181, %v2103
        %v2210 = vadd.f32 %v2182, %v2108
        %v2211 = vadd.f32 %v2183, %v2113
        %v2212 = vadd.f32 %v2184, %v2118
        %v2213 = vadd.f32 %v2185, %v2123
        %v2214 = vadd.f32 %v2186, %v2128
        %v2215 = vadd.f32 %v2187, %v2133
        %v2216 = vadd.f32 %v2188, %v2138
        %v2217 = vadd.f32 %v2189, %v2143
        %v2218 = vadd.f32 %v2190, %v2148
        %v2219 = vadd.f32 %v2191, %v2153
        %v2220 = vadd.f32 %v2192, %v2158
        %v2221 = vadd.f32 %v2193, %v2163
        %2222 = vst [vmem:[#allocation2] sm:$0xff] %v2194
        %2223 = vst [vmem:[#allocation2 + $0x8] sm:$0xff] %v2195
        %2224 = vst [vmem:[#allocation2 + $0x10] sm:$0xff] %v2196
        %2225 = vst [vmem:[#allocation2 + $0x18] sm:$0xff] %v2197
        %2226 = vst [vmem:[#allocation2 + $0x20] sm:$0xff] %v2198
        %2227 = vst [vmem:[#allocation2 + $0x28] sm:$0xff] %v2199
        %2228 = vst [vmem:[#allocation2 + $0x30] sm:$0xff] %v2200
        %2229 = vst [vmem:[#allocation2 + $0x38] sm:$0xff] %v2201
        %2230 = vst [vmem:[#allocation2 + $0x40] sm:$0xff] %v2202
        %2231 = vst [vmem:[#allocation2 + $0x48] sm:$0xff] %v2203
        %2232 = vst [vmem:[#allocation2 + $0x50] sm:$0xff] %v2204
        %2233 = vst [vmem:[#allocation2 + $0x58] sm:$0xff] %v2205
        %2234 = vst [vmem:[#allocation2 + $0x60] sm:$0xff] %v2206
        %2235 = vst [vmem:[#allocation2 + $0x68] sm:$0xff] %v2207
        %2236 = vst [vmem:[#allocation2 + $0x70] sm:$0xff] %v2208
        %2237 = vst [vmem:[#allocation2 + $0x78] sm:$0xff] %v2209
        %2238 = vst [vmem:[#allocation2 + $0x80] sm:$0xff] %v2210
        %2239 = vst [vmem:[#allocation2 + $0x88] sm:$0xff] %v2211
        %2240 = vst [vmem:[#allocation2 + $0x90] sm:$0xff] %v2212
        %2241 = vst [vmem:[#allocation2 + $0x98] sm:$0xff] %v2213
        %2242 = vst [vmem:[#allocation2 + $0xa0] sm:$0xff] %v2214
        %2243 = vst [vmem:[#allocation2 + $0xa8] sm:$0xff] %v2215
        %2244 = vst [vmem:[#allocation2 + $0xb0] sm:$0xff] %v2216
        %2245 = vst [vmem:[#allocation2 + $0xb8] sm:$0xff] %v2217
        %2246 = vst [vmem:[#allocation2 + $0xc0] sm:$0xff] %v2218
        %2247 = vst [vmem:[#allocation2 + $0xc8] sm:$0xff] %v2219
        %2248 = vst [vmem:[#allocation2 + $0xd0] sm:$0xff] %v2220
        %2249 = vst [vmem:[#allocation2 + $0xd8] sm:$0xff] %v2221
        %v2250 = vld [vmem:[%s290 + $0x12] sm:$0xff]
        %v2251 = vld [vmem:[%s290 + $0x1a] sm:$0xff]
        %v2252 = vld [vmem:[%s290 + $0x22] sm:$0xff]
        %v2253 = vld [vmem:[%s290 + $0x2a] sm:$0xff]
        %v2254 = vld [vmem:[%s290 + $0x32] sm:$0xff]
        %v2255 = vld [vmem:[%s290 + $0x3a] sm:$0xff]
        %v2256 = vld [vmem:[%s290 + $0x42] sm:$0xff]
        %v2257 = vld [vmem:[%s290 + $0x4a] sm:$0xff]
        %v2258 = vld [vmem:[%s290 + $0x52] sm:$0xff]
        %v2259 = vld [vmem:[%s290 + $0x5a] sm:$0xff]
        %v2260 = vld [vmem:[%s290 + $0x62] sm:$0xff]
        %v2261 = vld [vmem:[%s290 + $0x6a] sm:$0xff]
        %v2262 = vld [vmem:[%s290 + $0x72] sm:$0xff]
        %v2263 = vld [vmem:[%s290 + $0x7a] sm:$0xff]
        %v2264 = vld [vmem:[%s290 + $0x82] sm:$0xff]
        %v2265 = vld [vmem:[%s290 + $0x8a] sm:$0xff]
        %v2266 = vld [vmem:[%s290 + $0x92] sm:$0xff]
        %v2267 = vld [vmem:[%s290 + $0x9a] sm:$0xff]
        %v2268 = vld [vmem:[%s290 + $0xa2] sm:$0xff]
        %v2269 = vld [vmem:[%s290 + $0xaa] sm:$0xff]
        %v2270 = vld [vmem:[%s290 + $0xb2] sm:$0xff]
        %v2271 = vld [vmem:[%s290 + $0xba] sm:$0xff]
        %v2272 = vld [vmem:[%s290 + $0xc2] sm:$0xff]
        %v2273 = vld [vmem:[%s290 + $0xca] sm:$0xff]
        %v2274 = vld [vmem:[%s290 + $0xd2] sm:$0xff]
        %v2275 = vld [vmem:[%s290 + $0xda] sm:$0xff]
        %v2276 = vld [vmem:[%s290 + $0xe2] sm:$0xff]
        %v2277 = vld [vmem:[%s290 + $0xea] sm:$0xff]
        %s2278 = scalar_lea.vmem [#allocation6], 40
        %v2279 = vld [vmem:[%s2278] sm:$0xff]
        %v2281 = vsel %vm320, %v2250, 0
        %v2284 = vsel %vm320, %v2251, 0
        %v2287 = vsel %vm320, %v2252, 0
        %v2290 = vsel %vm320, %v2253, 0
        %v2293 = vsel %vm320, %v2254, 0
        %v2296 = vsel %vm320, %v2255, 0
        %v2299 = vsel %vm320, %v2256, 0
        %v2302 = vsel %vm320, %v2257, 0
        %v2305 = vsel %vm320, %v2258, 0
        %v2308 = vsel %vm320, %v2259, 0
        %v2311 = vsel %vm320, %v2260, 0
        %v2314 = vsel %vm320, %v2261, 0
        %v2317 = vsel %vm320, %v2262, 0
        %v2320 = vsel %vm320, %v2263, 0
        %v2323 = vsel %vm320, %v2264, 0
        %v2326 = vsel %vm320, %v2265, 0
        %v2329 = vsel %vm320, %v2266, 0
        %v2332 = vsel %vm320, %v2267, 0
        %v2335 = vsel %vm320, %v2268, 0
        %v2338 = vsel %vm320, %v2269, 0
        %v2341 = vsel %vm320, %v2270, 0
        %v2344 = vsel %vm320, %v2271, 0
        %v2347 = vsel %vm320, %v2272, 0
        %v2350 = vsel %vm320, %v2273, 0
        %v2353 = vsel %vm320, %v2274, 0
        %v2356 = vsel %vm320, %v2275, 0
        %v2359 = vsel %vm320, %v2276, 0
        %v2362 = vsel %vm320, %v2277, 0
        %2364 = vmatprep.subr.mxu0 0.0
        %2365 = vmatpush1.msra.mxu0 %v2279
        %2366 = vmatprep.subr.mxu0 0.0
        %2367 = vmatpush1.msra.mxu0 0.0
        %2368 = vmatprep.subr.mxu0 0.0
        %2369 = vmatpush1.msra.mxu0 0.0
        %2370 = vmatprep.subr.mxu0 0.0
        %2371 = vmatpush1.msra.mxu0 0.0
        %2372 = vmatprep.subr.mxu0 0.0
        %2373 = vmatpush1.msra.mxu0 0.0
        %2374 = vmatprep.subr.mxu0 0.0
        %2375 = vmatpush1.msra.mxu0 0.0
        %2376 = vmatprep.subr.mxu0 0.0
        %2377 = vmatpush1.msra.mxu0 0.0
        %2378 = vmatprep.subr.mxu0 0.0
        %2379 = vmatpush1.msra.mxu0 0.0
        %2380 = vmatprep.subr.mxu0 0.0
        %2381 = vmatpush1.msra.mxu0 0.0
        %2382 = vmatprep.subr.mxu0 0.0
        %2383 = vmatpush1.msra.mxu0 0.0
        %2384 = vmatprep.subr.mxu0 0.0
        %2385 = vmatpush1.msra.mxu0 0.0
        %2386 = vmatprep.subr.mxu0 0.0
        %2387 = vmatpush1.msra.mxu0 0.0
        %2388 = vmatprep.subr.mxu0 0.0
        %2389 = vmatpush1.msra.mxu0 0.0
        %2390 = vmatprep.subr.mxu0 0.0
        %2391 = vmatpush1.msra.mxu0 0.0
        %2392 = vmatprep.subr.mxu0 0.0
        %2393 = vmatpush1.msra.mxu0 0.0
        %2394 = vmatprep.subr.mxu0 0.0
        %2395 = vmatpush1.msra.mxu0 0.0
        %2396 = vmatprep.subr.mxu0 0.0
        %2397 = vmatpush1.msra.mxu0 0.0
        %2398 = vmatprep.subr.mxu0 0.0
        %2399 = vmatpush1.msra.mxu0 0.0
        %2400 = vmatprep.subr.mxu0 0.0
        %2401 = vmatpush1.msra.mxu0 0.0
        %2402 = vmatprep.subr.mxu0 0.0
        %2403 = vmatpush1.msra.mxu0 0.0
        %2404 = vmatprep.subr.mxu0 0.0
        %2405 = vmatpush1.msra.mxu0 0.0
        %2406 = vmatprep.subr.mxu0 0.0
        %2407 = vmatpush1.msra.mxu0 0.0
        %2408 = vmatprep.subr.mxu0 0.0
        %2409 = vmatpush1.msra.mxu0 0.0
        %2410 = vmatprep.subr.mxu0 0.0
        %2411 = vmatpush1.msra.mxu0 0.0
        %2412 = vmatprep.subr.mxu0 0.0
        %2413 = vmatpush1.msra.mxu0 0.0
        %2414 = vmatprep.subr.mxu0 0.0
        %2415 = vmatpush1.msra.mxu0 0.0
        %2416 = vmatprep.subr.mxu0 0.0
        %2417 = vmatpush1.msra.mxu0 0.0
        %2418 = vmatprep.subr.mxu0 0.0
        %2419 = vmatpush1.msra.mxu0 0.0
        %2420 = vmatprep.subr.mxu0 0.0
        %2421 = vmatpush1.msra.mxu0 0.0
        %2422 = vmatprep.subr.mxu0 0.0
        %2423 = vmatpush1.msra.mxu0 0.0
        %2424 = vmatprep.subr.mxu0 0.0
        %2425 = vmatpush1.msra.mxu0 0.0
        %2426 = vmatprep.subr.mxu0 0.0
        %2427 = vmatpush1.msra.mxu0 0.0
        %2428 = vmatprep.mubr.f32.mxu0 0.0
        %2429 = vmatmul.mubr.f32.gmra.mrb[0].mxu0 %v2281
        %v2430 = vpop.f32.mrb[0].mxu0
        %v2431 = vadd.f32 0.0, %v2430
        %v2432 = vpop.f32.mrb[0].mxu0
        %2433 = vmatprep.mubr.f32.mxu0 0.0
        %2434 = vmatmul.mubr.f32.gmra.mrb[0].mxu0 %v2284
        %v2435 = vpop.f32.mrb[0].mxu0
        %v2436 = vadd.f32 0.0, %v2435
        %v2437 = vpop.f32.mrb[0].mxu0
        %2438 = vmatprep.mubr.f32.mxu0 0.0
        %2439 = vmatmul.mubr.f32.gmra.mrb[0].mxu0 %v2287
        %v2440 = vpop.f32.mrb[0].mxu0
        %v2441 = vadd.f32 0.0, %v2440
        %v2442 = vpop.f32.mrb[0].mxu0
        %2443 = vmatprep.mubr.f32.mxu0 0.0
        %2444 = vmatmul.mubr.f32.gmra.mrb[0].mxu0 %v2290
        %v2445 = vpop.f32.mrb[0].mxu0
        %v2446 = vadd.f32 0.0, %v2445
        %v2447 = vpop.f32.mrb[0].mxu0
        %2448 = vmatprep.mubr.f32.mxu0 0.0
        %2449 = vmatmul.mubr.f32.gmra.mrb[0].mxu0 %v2293
        %v2450 = vpop.f32.mrb[0].mxu0
        %v2451 = vadd.f32 0.0, %v2450
        %v2452 = vpop.f32.mrb[0].mxu0
        %2453 = vmatprep.mubr.f32.mxu0 0.0
        %2454 = vmatmul.mubr.f32.gmra.mrb[0].mxu0 %v2296
        %v2455 = vpop.f32.mrb[0].mxu0
        %v2456 = vadd.f32 0.0, %v2455
        %v2457 = vpop.f32.mrb[0].mxu0
        %2458 = vmatprep.mubr.f32.mxu0 0.0
        %2459 = vmatmul.mubr.f32.gmra.mrb[0].mxu0 %v2299
        %v2460 = vpop.f32.mrb[0].mxu0
        %v2461 = vadd.f32 0.0, %v2460
        %v2462 = vpop.f32.mrb[0].mxu0
        %2463 = vmatprep.mubr.f32.mxu0 0.0
        %2464 = vmatmul.mubr.f32.gmra.mrb[0].mxu0 %v2302
        %v2465 = vpop.f32.mrb[0].mxu0
        %v2466 = vadd.f32 0.0, %v2465
        %v2467 = vpop.f32.mrb[0].mxu0
        %2468 = vmatprep.mubr.f32.mxu0 0.0
        %2469 = vmatmul.mubr.f32.gmra.mrb[0].mxu0 %v2305
        %v2470 = vpop.f32.mrb[0].mxu0
        %v2471 = vadd.f32 0.0, %v2470
        %v2472 = vpop.f32.mrb[0].mxu0
        %2473 = vmatprep.mubr.f32.mxu0 0.0
        %2474 = vmatmul.mubr.f32.gmra.mrb[0].mxu0 %v2308
        %v2475 = vpop.f32.mrb[0].mxu0
        %v2476 = vadd.f32 0.0, %v2475
        %v2477 = vpop.f32.mrb[0].mxu0
        %2478 = vmatprep.mubr.f32.mxu0 0.0
        %2479 = vmatmul.mubr.f32.gmra.mrb[0].mxu0 %v2311
        %v2480 = vpop.f32.mrb[0].mxu0
        %v2481 = vadd.f32 0.0, %v2480
        %v2482 = vpop.f32.mrb[0].mxu0
        %2483 = vmatprep.mubr.f32.mxu0 0.0
        %2484 = vmatmul.mubr.f32.gmra.mrb[0].mxu0 %v2314
        %v2485 = vpop.f32.mrb[0].mxu0
        %v2486 = vadd.f32 0.0, %v2485
        %v2487 = vpop.f32.mrb[0].mxu0
        %2488 = vmatprep.mubr.f32.mxu0 0.0
        %2489 = vmatmul.mubr.f32.gmra.mrb[0].mxu0 %v2317
        %v2490 = vpop.f32.mrb[0].mxu0
        %v2491 = vadd.f32 0.0, %v2490
        %v2492 = vpop.f32.mrb[0].mxu0
        %2493 = vmatprep.mubr.f32.mxu0 0.0
        %2494 = vmatmul.mubr.f32.gmra.mrb[0].mxu0 %v2320
        %v2495 = vpop.f32.mrb[0].mxu0
        %v2496 = vadd.f32 0.0, %v2495
        %v2497 = vpop.f32.mrb[0].mxu0
        %2498 = vmatprep.mubr.f32.mxu0 0.0
        %2499 = vmatmul.mubr.f32.gmra.mrb[0].mxu0 %v2323
        %v2500 = vpop.f32.mrb[0].mxu0
        %v2501 = vadd.f32 0.0, %v2500
        %v2502 = vpop.f32.mrb[0].mxu0
        %2503 = vmatprep.mubr.f32.mxu0 0.0
        %2504 = vmatmul.mubr.f32.gmra.mrb[0].mxu0 %v2326
        %v2505 = vpop.f32.mrb[0].mxu0
        %v2506 = vadd.f32 0.0, %v2505
        %v2507 = vpop.f32.mrb[0].mxu0
        %2508 = vmatprep.mubr.f32.mxu0 0.0
        %2509 = vmatmul.mubr.f32.gmra.mrb[0].mxu0 %v2329
        %v2510 = vpop.f32.mrb[0].mxu0
        %v2511 = vadd.f32 0.0, %v2510
        %v2512 = vpop.f32.mrb[0].mxu0
        %2513 = vmatprep.mubr.f32.mxu0 0.0
        %2514 = vmatmul.mubr.f32.gmra.mrb[0].mxu0 %v2332
        %v2515 = vpop.f32.mrb[0].mxu0
        %v2516 = vadd.f32 0.0, %v2515
        %v2517 = vpop.f32.mrb[0].mxu0
        %2518 = vmatprep.mubr.f32.mxu0 0.0
        %2519 = vmatmul.mubr.f32.gmra.mrb[0].mxu0 %v2335
        %v2520 = vpop.f32.mrb[0].mxu0
        %v2521 = vadd.f32 0.0, %v2520
        %v2522 = vpop.f32.mrb[0].mxu0
        %2523 = vmatprep.mubr.f32.mxu0 0.0
        %2524 = vmatmul.mubr.f32.gmra.mrb[0].mxu0 %v2338
        %v2525 = vpop.f32.mrb[0].mxu0
        %v2526 = vadd.f32 0.0, %v2525
        %v2527 = vpop.f32.mrb[0].mxu0
        %2528 = vmatprep.mubr.f32.mxu0 0.0
        %2529 = vmatmul.mubr.f32.gmra.mrb[0].mxu0 %v2341
        %v2530 = vpop.f32.mrb[0].mxu0
        %v2531 = vadd.f32 0.0, %v2530
        %v2532 = vpop.f32.mrb[0].mxu0
        %2533 = vmatprep.mubr.f32.mxu0 0.0
        %2534 = vmatmul.mubr.f32.gmra.mrb[0].mxu0 %v2344
        %v2535 = vpop.f32.mrb[0].mxu0
        %v2536 = vadd.f32 0.0, %v2535
        %v2537 = vpop.f32.mrb[0].mxu0
        %2538 = vmatprep.mubr.f32.mxu0 0.0
        %2539 = vmatmul.mubr.f32.gmra.mrb[0].mxu0 %v2347
        %v2540 = vpop.f32.mrb[0].mxu0
        %v2541 = vadd.f32 0.0, %v2540
        %v2542 = vpop.f32.mrb[0].mxu0
        %2543 = vmatprep.mubr.f32.mxu0 0.0
        %2544 = vmatmul.mubr.f32.gmra.mrb[0].mxu0 %v2350
        %v2545 = vpop.f32.mrb[0].mxu0
        %v2546 = vadd.f32 0.0, %v2545
        %v2547 = vpop.f32.mrb[0].mxu0
        %2548 = vmatprep.mubr.f32.mxu0 0.0
        %2549 = vmatmul.mubr.f32.gmra.mrb[0].mxu0 %v2353
        %v2550 = vpop.f32.mrb[0].mxu0
        %v2551 = vadd.f32 0.0, %v2550
        %v2552 = vpop.f32.mrb[0].mxu0
        %2553 = vmatprep.mubr.f32.mxu0 0.0
        %2554 = vmatmul.mubr.f32.gmra.mrb[0].mxu0 %v2356
        %v2555 = vpop.f32.mrb[0].mxu0
        %v2556 = vadd.f32 0.0, %v2555
        %v2557 = vpop.f32.mrb[0].mxu0
        %2558 = vmatprep.mubr.f32.mxu0 0.0
        %2559 = vmatmul.mubr.f32.gmra.mrb[0].mxu0 %v2359
        %v2560 = vpop.f32.mrb[0].mxu0
        %v2561 = vadd.f32 0.0, %v2560
        %v2562 = vpop.f32.mrb[0].mxu0
        %2563 = vmatprep.mubr.f32.mxu0 0.0
        %2564 = vmatmul.mubr.f32.gmra.mrb[0].mxu0 %v2362
        %v2565 = vpop.f32.mrb[0].mxu0
        %v2566 = vadd.f32 0.0, %v2565
        %v2567 = vpop.f32.mrb[0].mxu0
        %2568 = vdwg.mxu0
        %v2569 = vld [vmem:[#allocation2] sm:$0xff]
        %v2570 = vld [vmem:[#allocation2 + $0x8] sm:$0xff]
        %v2571 = vld [vmem:[#allocation2 + $0x10] sm:$0xff]
        %v2572 = vld [vmem:[#allocation2 + $0x18] sm:$0xff]
        %v2573 = vld [vmem:[#allocation2 + $0x20] sm:$0xff]
        %v2574 = vld [vmem:[#allocation2 + $0x28] sm:$0xff]
        %v2575 = vld [vmem:[#allocation2 + $0x30] sm:$0xff]
        %v2576 = vld [vmem:[#allocation2 + $0x38] sm:$0xff]
        %v2577 = vld [vmem:[#allocation2 + $0x40] sm:$0xff]
        %v2578 = vld [vmem:[#allocation2 + $0x48] sm:$0xff]
        %v2579 = vld [vmem:[#allocation2 + $0x50] sm:$0xff]
        %v2580 = vld [vmem:[#allocation2 + $0x58] sm:$0xff]
        %v2581 = vld [vmem:[#allocation2 + $0x60] sm:$0xff]
        %v2582 = vld [vmem:[#allocation2 + $0x68] sm:$0xff]
        %v2583 = vld [vmem:[#allocation2 + $0x70] sm:$0xff]
        %v2584 = vld [vmem:[#allocation2 + $0x78] sm:$0xff]
        %v2585 = vld [vmem:[#allocation2 + $0x80] sm:$0xff]
        %v2586 = vld [vmem:[#allocation2 + $0x88] sm:$0xff]
        %v2587 = vld [vmem:[#allocation2 + $0x90] sm:$0xff]
        %v2588 = vld [vmem:[#allocation2 + $0x98] sm:$0xff]
        %v2589 = vld [vmem:[#allocation2 + $0xa0] sm:$0xff]
        %v2590 = vld [vmem:[#allocation2 + $0xa8] sm:$0xff]
        %v2591 = vld [vmem:[#allocation2 + $0xb0] sm:$0xff]
        %v2592 = vld [vmem:[#allocation2 + $0xb8] sm:$0xff]
        %v2593 = vld [vmem:[#allocation2 + $0xc0] sm:$0xff]
        %v2594 = vld [vmem:[#allocation2 + $0xc8] sm:$0xff]
        %v2595 = vld [vmem:[#allocation2 + $0xd0] sm:$0xff]
        %v2596 = vld [vmem:[#allocation2 + $0xd8] sm:$0xff]
        %v2597 = vadd.f32 %v2569, %v2431
        %v2598 = vadd.f32 %v2570, %v2436
        %v2599 = vadd.f32 %v2571, %v2441
        %v2600 = vadd.f32 %v2572, %v2446
        %v2601 = vadd.f32 %v2573, %v2451
        %v2602 = vadd.f32 %v2574, %v2456
        %v2603 = vadd.f32 %v2575, %v2461
        %v2604 = vadd.f32 %v2576, %v2466
        %v2605 = vadd.f32 %v2577, %v2471
        %v2606 = vadd.f32 %v2578, %v2476
        %v2607 = vadd.f32 %v2579, %v2481
        %v2608 = vadd.f32 %v2580, %v2486
        %v2609 = vadd.f32 %v2581, %v2491
        %v2610 = vadd.f32 %v2582, %v2496
        %v2611 = vadd.f32 %v2583, %v2501
        %v2612 = vadd.f32 %v2584, %v2506
        %v2613 = vadd.f32 %v2585, %v2511
        %v2614 = vadd.f32 %v2586, %v2516
        %v2615 = vadd.f32 %v2587, %v2521
        %v2616 = vadd.f32 %v2588, %v2526
        %v2617 = vadd.f32 %v2589, %v2531
        %v2618 = vadd.f32 %v2590, %v2536
        %v2619 = vadd.f32 %v2591, %v2541
        %v2620 = vadd.f32 %v2592, %v2546
        %v2621 = vadd.f32 %v2593, %v2551
        %v2622 = vadd.f32 %v2594, %v2556
        %v2623 = vadd.f32 %v2595, %v2561
        %v2624 = vadd.f32 %v2596, %v2566
        %2625 = vst [vmem:[#allocation2] sm:$0xff] %v2597
        %2626 = vst [vmem:[#allocation2 + $0x8] sm:$0xff] %v2598
        %2627 = vst [vmem:[#allocation2 + $0x10] sm:$0xff] %v2599
        %2628 = vst [vmem:[#allocation2 + $0x18] sm:$0xff] %v2600
        %2629 = vst [vmem:[#allocation2 + $0x20] sm:$0xff] %v2601
        %2630 = vst [vmem:[#allocation2 + $0x28] sm:$0xff] %v2602
        %2631 = vst [vmem:[#allocation2 + $0x30] sm:$0xff] %v2603
        %2632 = vst [vmem:[#allocation2 + $0x38] sm:$0xff] %v2604
        %2633 = vst [vmem:[#allocation2 + $0x40] sm:$0xff] %v2605
        %2634 = vst [vmem:[#allocation2 + $0x48] sm:$0xff] %v2606
        %2635 = vst [vmem:[#allocation2 + $0x50] sm:$0xff] %v2607
        %2636 = vst [vmem:[#allocation2 + $0x58] sm:$0xff] %v2608
        %2637 = vst [vmem:[#allocation2 + $0x60] sm:$0xff] %v2609
        %2638 = vst [vmem:[#allocation2 + $0x68] sm:$0xff] %v2610
        %2639 = vst [vmem:[#allocation2 + $0x70] sm:$0xff] %v2611
        %2640 = vst [vmem:[#allocation2 + $0x78] sm:$0xff] %v2612
        %2641 = vst [vmem:[#allocation2 + $0x80] sm:$0xff] %v2613
        %2642 = vst [vmem:[#allocation2 + $0x88] sm:$0xff] %v2614
        %2643 = vst [vmem:[#allocation2 + $0x90] sm:$0xff] %v2615
        %2644 = vst [vmem:[#allocation2 + $0x98] sm:$0xff] %v2616
        %2645 = vst [vmem:[#allocation2 + $0xa0] sm:$0xff] %v2617
        %2646 = vst [vmem:[#allocation2 + $0xa8] sm:$0xff] %v2618
        %2647 = vst [vmem:[#allocation2 + $0xb0] sm:$0xff] %v2619
        %2648 = vst [vmem:[#allocation2 + $0xb8] sm:$0xff] %v2620
        %2649 = vst [vmem:[#allocation2 + $0xc0] sm:$0xff] %v2621
        %2650 = vst [vmem:[#allocation2 + $0xc8] sm:$0xff] %v2622
        %2651 = vst [vmem:[#allocation2 + $0xd0] sm:$0xff] %v2623
        %2652 = vst [vmem:[#allocation2 + $0xd8] sm:$0xff] %v2624
        %v2653 = vld [vmem:[%s290 + $0x20] sm:$0xff]
        %v2654 = vld [vmem:[%s290 + $0x28] sm:$0xff]
        %v2655 = vld [vmem:[%s290 + $0x30] sm:$0xff]
        %v2656 = vld [vmem:[%s290 + $0x38] sm:$0xff]
        %v2657 = vld [vmem:[%s290 + $0x40] sm:$0xff]
        %v2658 = vld [vmem:[%s290 + $0x48] sm:$0xff]
        %v2659 = vld [vmem:[%s290 + $0x50] sm:$0xff]
        %v2660 = vld [vmem:[%s290 + $0x58] sm:$0xff]
        %v2661 = vld [vmem:[%s290 + $0x60] sm:$0xff]
        %v2662 = vld [vmem:[%s290 + $0x68] sm:$0xff]
        %v2663 = vld [vmem:[%s290 + $0x70] sm:$0xff]
        %v2664 = vld [vmem:[%s290 + $0x78] sm:$0xff]
        %v2665 = vld [vmem:[%s290 + $0x80] sm:$0xff]
        %v2666 = vld [vmem:[%s290 + $0x88] sm:$0xff]
        %v2667 = vld [vmem:[%s290 + $0x90] sm:$0xff]
        %v2668 = vld [vmem:[%s290 + $0x98] sm:$0xff]
        %v2669 = vld [vmem:[%s290 + $0xa0] sm:$0xff]
        %v2670 = vld [vmem:[%s290 + $0xa8] sm:$0xff]
        %v2671 = vld [vmem:[%s290 + $0xb0] sm:$0xff]
        %v2672 = vld [vmem:[%s290 + $0xb8] sm:$0xff]
        %v2673 = vld [vmem:[%s290 + $0xc0] sm:$0xff]
        %v2674 = vld [vmem:[%s290 + $0xc8] sm:$0xff]
        %v2675 = vld [vmem:[%s290 + $0xd0] sm:$0xff]
        %v2676 = vld [vmem:[%s290 + $0xd8] sm:$0xff]
        %v2677 = vld [vmem:[%s290 + $0xe0] sm:$0xff]
        %v2678 = vld [vmem:[%s290 + $0xe8] sm:$0xff]
        %v2679 = vld [vmem:[%s290 + $0xf0] sm:$0xff]
        %v2680 = vld [vmem:[%s290 + $0xf8] sm:$0xff]
        %s2681 = scalar_lea.vmem [#allocation6], 48
        %v2682 = vld [vmem:[%s2681] sm:$0xff]
        %v2684 = vsel %vm320, %v2653, 0
        %v2687 = vsel %vm320, %v2654, 0
        %v2690 = vsel %vm320, %v2655, 0
        %v2693 = vsel %vm320, %v2656, 0
        %v2696 = vsel %vm320, %v2657, 0
        %v2699 = vsel %vm320, %v2658, 0
        %v2702 = vsel %vm320, %v2659, 0
        %v2705 = vsel %vm320, %v2660, 0
        %v2708 = vsel %vm320, %v2661, 0
        %v2711 = vsel %vm320, %v2662, 0
        %v2714 = vsel %vm320, %v2663, 0
        %v2717 = vsel %vm320, %v2664, 0
        %v2720 = vsel %vm320, %v2665, 0
        %v2723 = vsel %vm320, %v2666, 0
        %v2726 = vsel %vm320, %v2667, 0
        %v2729 = vsel %vm320, %v2668, 0
        %v2732 = vsel %vm320, %v2669, 0
        %v2735 = vsel %vm320, %v2670, 0
        %v2738 = vsel %vm320, %v2671, 0
        %v2741 = vsel %vm320, %v2672, 0
        %v2744 = vsel %vm320, %v2673, 0
        %v2747 = vsel %vm320, %v2674, 0
        %v2750 = vsel %vm320, %v2675, 0
        %v2753 = vsel %vm320, %v2676, 0
        %v2756 = vsel %vm320, %v2677, 0
        %v2759 = vsel %vm320, %v2678, 0
        %v2762 = vsel %vm320, %v2679, 0
        %v2765 = vsel %vm320, %v2680, 0
        %2767 = vmatprep.subr.mxu0 0.0
        %2768 = vmatpush1.msra.mxu0 %v2682
        %2769 = vmatprep.subr.mxu0 0.0
        %2770 = vmatpush1.msra.mxu0 0.0
        %2771 = vmatprep.subr.mxu0 0.0
        %2772 = vmatpush1.msra.mxu0 0.0
        %2773 = vmatprep.subr.mxu0 0.0
        %2774 = vmatpush1.msra.mxu0 0.0
        %2775 = vmatprep.subr.mxu0 0.0
        %2776 = vmatpush1.msra.mxu0 0.0
        %2777 = vmatprep.subr.mxu0 0.0
        %2778 = vmatpush1.msra.mxu0 0.0
        %2779 = vmatprep.subr.mxu0 0.0
        %2780 = vmatpush1.msra.mxu0 0.0
        %2781 = vmatprep.subr.mxu0 0.0
        %2782 = vmatpush1.msra.mxu0 0.0
        %2783 = vmatprep.subr.mxu0 0.0
        %2784 = vmatpush1.msra.mxu0 0.0
        %2785 = vmatprep.subr.mxu0 0.0
        %2786 = vmatpush1.msra.mxu0 0.0
        %2787 = vmatprep.subr.mxu0 0.0
        %2788 = vmatpush1.msra.mxu0 0.0
        %2789 = vmatprep.subr.mxu0 0.0
        %2790 = vmatpush1.msra.mxu0 0.0
        %2791 = vmatprep.subr.mxu0 0.0
        %2792 = vmatpush1.msra.mxu0 0.0
        %2793 = vmatprep.subr.mxu0 0.0
        %2794 = vmatpush1.msra.mxu0 0.0
        %2795 = vmatprep.subr.mxu0 0.0
        %2796 = vmatpush1.msra.mxu0 0.0
        %2797 = vmatprep.subr.mxu0 0.0
        %2798 = vmatpush1.msra.mxu0 0.0
        %2799 = vmatprep.subr.mxu0 0.0
        %2800 = vmatpush1.msra.mxu0 0.0
        %2801 = vmatprep.subr.mxu0 0.0
        %2802 = vmatpush1.msra.mxu0 0.0
        %2803 = vmatprep.subr.mxu0 0.0
        %2804 = vmatpush1.msra.mxu0 0.0
        %2805 = vmatprep.subr.mxu0 0.0
        %2806 = vmatpush1.msra.mxu0 0.0
        %2807 = vmatprep.subr.mxu0 0.0
        %2808 = vmatpush1.msra.mxu0 0.0
        %2809 = vmatprep.subr.mxu0 0.0
        %2810 = vmatpush1.msra.mxu0 0.0
        %2811 = vmatprep.subr.mxu0 0.0
        %2812 = vmatpush1.msra.mxu0 0.0
        %2813 = vmatprep.subr.mxu0 0.0
        %2814 = vmatpush1.msra.mxu0 0.0
        %2815 = vmatprep.subr.mxu0 0.0
        %2816 = vmatpush1.msra.mxu0 0.0
        %2817 = vmatprep.subr.mxu0 0.0
        %2818 = vmatpush1.msra.mxu0 0.0
        %2819 = vmatprep.subr.mxu0 0.0
        %2820 = vmatpush1.msra.mxu0 0.0
        %2821 = vmatprep.subr.mxu0 0.0
        %2822 = vmatpush1.msra.mxu0 0.0
        %2823 = vmatprep.subr.mxu0 0.0
        %2824 = vmatpush1.msra.mxu0 0.0
        %2825 = vmatprep.subr.mxu0 0.0
        %2826 = vmatpush1.msra.mxu0 0.0
        %2827 = vmatprep.subr.mxu0 0.0
        %2828 = vmatpush1.msra.mxu0 0.0
        %2829 = vmatprep.subr.mxu0 0.0
        %2830 = vmatpush1.msra.mxu0 0.0
        %2831 = vmatprep.mubr.f32.mxu0 0.0
        %2832 = vmatmul.mubr.f32.gmra.mrb[0].mxu0 %v2684
        %v2833 = vpop.f32.mrb[0].mxu0
        %v2834 = vadd.f32 0.0, %v2833
        %v2835 = vpop.f32.mrb[0].mxu0
        %2836 = vmatprep.mubr.f32.mxu0 0.0
        %2837 = vmatmul.mubr.f32.gmra.mrb[0].mxu0 %v2687
        %v2838 = vpop.f32.mrb[0].mxu0
        %v2839 = vadd.f32 0.0, %v2838
        %v2840 = vpop.f32.mrb[0].mxu0
        %2841 = vmatprep.mubr.f32.mxu0 0.0
        %2842 = vmatmul.mubr.f32.gmra.mrb[0].mxu0 %v2690
        %v2843 = vpop.f32.mrb[0].mxu0
        %v2844 = vadd.f32 0.0, %v2843
        %v2845 = vpop.f32.mrb[0].mxu0
        %2846 = vmatprep.mubr.f32.mxu0 0.0
        %2847 = vmatmul.mubr.f32.gmra.mrb[0].mxu0 %v2693
        %v2848 = vpop.f32.mrb[0].mxu0
        %v2849 = vadd.f32 0.0, %v2848
        %v2850 = vpop.f32.mrb[0].mxu0
        %2851 = vmatprep.mubr.f32.mxu0 0.0
        %2852 = vmatmul.mubr.f32.gmra.mrb[0].mxu0 %v2696
        %v2853 = vpop.f32.mrb[0].mxu0
        %v2854 = vadd.f32 0.0, %v2853
        %v2855 = vpop.f32.mrb[0].mxu0
        %2856 = vmatprep.mubr.f32.mxu0 0.0
        %2857 = vmatmul.mubr.f32.gmra.mrb[0].mxu0 %v2699
        %v2858 = vpop.f32.mrb[0].mxu0
        %v2859 = vadd.f32 0.0, %v2858
        %v2860 = vpop.f32.mrb[0].mxu0
        %2861 = vmatprep.mubr.f32.mxu0 0.0
        %2862 = vmatmul.mubr.f32.gmra.mrb[0].mxu0 %v2702
        %v2863 = vpop.f32.mrb[0].mxu0
        %v2864 = vadd.f32 0.0, %v2863
        %v2865 = vpop.f32.mrb[0].mxu0
        %2866 = vmatprep.mubr.f32.mxu0 0.0
        %2867 = vmatmul.mubr.f32.gmra.mrb[0].mxu0 %v2705
        %v2868 = vpop.f32.mrb[0].mxu0
        %v2869 = vadd.f32 0.0, %v2868
        %v2870 = vpop.f32.mrb[0].mxu0
        %2871 = vmatprep.mubr.f32.mxu0 0.0
        %2872 = vmatmul.mubr.f32.gmra.mrb[0].mxu0 %v2708
        %v2873 = vpop.f32.mrb[0].mxu0
        %v2874 = vadd.f32 0.0, %v2873
        %v2875 = vpop.f32.mrb[0].mxu0
        %2876 = vmatprep.mubr.f32.mxu0 0.0
        %2877 = vmatmul.mubr.f32.gmra.mrb[0].mxu0 %v2711
        %v2878 = vpop.f32.mrb[0].mxu0
        %v2879 = vadd.f32 0.0, %v2878
        %v2880 = vpop.f32.mrb[0].mxu0
        %2881 = vmatprep.mubr.f32.mxu0 0.0
        %2882 = vmatmul.mubr.f32.gmra.mrb[0].mxu0 %v2714
        %v2883 = vpop.f32.mrb[0].mxu0
        %v2884 = vadd.f32 0.0, %v2883
        %v2885 = vpop.f32.mrb[0].mxu0
        %2886 = vmatprep.mubr.f32.mxu0 0.0
        %2887 = vmatmul.mubr.f32.gmra.mrb[0].mxu0 %v2717
        %v2888 = vpop.f32.mrb[0].mxu0
        %v2889 = vadd.f32 0.0, %v2888
        %v2890 = vpop.f32.mrb[0].mxu0
        %2891 = vmatprep.mubr.f32.mxu0 0.0
        %2892 = vmatmul.mubr.f32.gmra.mrb[0].mxu0 %v2720
        %v2893 = vpop.f32.mrb[0].mxu0
        %v2894 = vadd.f32 0.0, %v2893
        %v2895 = vpop.f32.mrb[0].mxu0
        %2896 = vmatprep.mubr.f32.mxu0 0.0
        %2897 = vmatmul.mubr.f32.gmra.mrb[0].mxu0 %v2723
        %v2898 = vpop.f32.mrb[0].mxu0
        %v2899 = vadd.f32 0.0, %v2898
        %v2900 = vpop.f32.mrb[0].mxu0
        %2901 = vmatprep.mubr.f32.mxu0 0.0
        %2902 = vmatmul.mubr.f32.gmra.mrb[0].mxu0 %v2726
        %v2903 = vpop.f32.mrb[0].mxu0
        %v2904 = vadd.f32 0.0, %v2903
        %v2905 = vpop.f32.mrb[0].mxu0
        %2906 = vmatprep.mubr.f32.mxu0 0.0
        %2907 = vmatmul.mubr.f32.gmra.mrb[0].mxu0 %v2729
        %v2908 = vpop.f32.mrb[0].mxu0
        %v2909 = vadd.f32 0.0, %v2908
        %v2910 = vpop.f32.mrb[0].mxu0
        %2911 = vmatprep.mubr.f32.mxu0 0.0
        %2912 = vmatmul.mubr.f32.gmra.mrb[0].mxu0 %v2732
        %v2913 = vpop.f32.mrb[0].mxu0
        %v2914 = vadd.f32 0.0, %v2913
        %v2915 = vpop.f32.mrb[0].mxu0
        %2916 = vmatprep.mubr.f32.mxu0 0.0
        %2917 = vmatmul.mubr.f32.gmra.mrb[0].mxu0 %v2735
        %v2918 = vpop.f32.mrb[0].mxu0
        %v2919 = vadd.f32 0.0, %v2918
        %v2920 = vpop.f32.mrb[0].mxu0
        %2921 = vmatprep.mubr.f32.mxu0 0.0
        %2922 = vmatmul.mubr.f32.gmra.mrb[0].mxu0 %v2738
        %v2923 = vpop.f32.mrb[0].mxu0
        %v2924 = vadd.f32 0.0, %v2923
        %v2925 = vpop.f32.mrb[0].mxu0
        %2926 = vmatprep.mubr.f32.mxu0 0.0
        %2927 = vmatmul.mubr.f32.gmra.mrb[0].mxu0 %v2741
        %v2928 = vpop.f32.mrb[0].mxu0
        %v2929 = vadd.f32 0.0, %v2928
        %v2930 = vpop.f32.mrb[0].mxu0
        %2931 = vmatprep.mubr.f32.mxu0 0.0
        %2932 = vmatmul.mubr.f32.gmra.mrb[0].mxu0 %v2744
        %v2933 = vpop.f32.mrb[0].mxu0
        %v2934 = vadd.f32 0.0, %v2933
        %v2935 = vpop.f32.mrb[0].mxu0
        %2936 = vmatprep.mubr.f32.mxu0 0.0
        %2937 = vmatmul.mubr.f32.gmra.mrb[0].mxu0 %v2747
        %v2938 = vpop.f32.mrb[0].mxu0
        %v2939 = vadd.f32 0.0, %v2938
        %v2940 = vpop.f32.mrb[0].mxu0
        %2941 = vmatprep.mubr.f32.mxu0 0.0
        %2942 = vmatmul.mubr.f32.gmra.mrb[0].mxu0 %v2750
        %v2943 = vpop.f32.mrb[0].mxu0
        %v2944 = vadd.f32 0.0, %v2943
        %v2945 = vpop.f32.mrb[0].mxu0
        %2946 = vmatprep.mubr.f32.mxu0 0.0
        %2947 = vmatmul.mubr.f32.gmra.mrb[0].mxu0 %v2753
        %v2948 = vpop.f32.mrb[0].mxu0
        %v2949 = vadd.f32 0.0, %v2948
        %v2950 = vpop.f32.mrb[0].mxu0
        %2951 = vmatprep.mubr.f32.mxu0 0.0
        %2952 = vmatmul.mubr.f32.gmra.mrb[0].mxu0 %v2756
        %v2953 = vpop.f32.mrb[0].mxu0
        %v2954 = vadd.f32 0.0, %v2953
        %v2955 = vpop.f32.mrb[0].mxu0
        %2956 = vmatprep.mubr.f32.mxu0 0.0
        %2957 = vmatmul.mubr.f32.gmra.mrb[0].mxu0 %v2759
        %v2958 = vpop.f32.mrb[0].mxu0
        %v2959 = vadd.f32 0.0, %v2958
        %v2960 = vpop.f32.mrb[0].mxu0
        %2961 = vmatprep.mubr.f32.mxu0 0.0
        %2962 = vmatmul.mubr.f32.gmra.mrb[0].mxu0 %v2762
        %v2963 = vpop.f32.mrb[0].mxu0
        %v2964 = vadd.f32 0.0, %v2963
        %v2965 = vpop.f32.mrb[0].mxu0
        %2966 = vmatprep.mubr.f32.mxu0 0.0
        %2967 = vmatmul.mubr.f32.gmra.mrb[0].mxu0 %v2765
        %v2968 = vpop.f32.mrb[0].mxu0
        %v2969 = vadd.f32 0.0, %v2968
        %v2970 = vpop.f32.mrb[0].mxu0
        %2971 = vdwg.mxu0
        %v2972 = vld [vmem:[#allocation2] sm:$0xff]
        %v2973 = vld [vmem:[#allocation2 + $0x8] sm:$0xff]
        %v2974 = vld [vmem:[#allocation2 + $0x10] sm:$0xff]
        %v2975 = vld [vmem:[#allocation2 + $0x18] sm:$0xff]
        %v2976 = vld [vmem:[#allocation2 + $0x20] sm:$0xff]
        %v2977 = vld [vmem:[#allocation2 + $0x28] sm:$0xff]
        %v2978 = vld [vmem:[#allocation2 + $0x30] sm:$0xff]
        %v2979 = vld [vmem:[#allocation2 + $0x38] sm:$0xff]
        %v2980 = vld [vmem:[#allocation2 + $0x40] sm:$0xff]
        %v2981 = vld [vmem:[#allocation2 + $0x48] sm:$0xff]
        %v2982 = vld [vmem:[#allocation2 + $0x50] sm:$0xff]
        %v2983 = vld [vmem:[#allocation2 + $0x58] sm:$0xff]
        %v2984 = vld [vmem:[#allocation2 + $0x60] sm:$0xff]
        %v2985 = vld [vmem:[#allocation2 + $0x68] sm:$0xff]
        %v2986 = vld [vmem:[#allocation2 + $0x70] sm:$0xff]
        %v2987 = vld [vmem:[#allocation2 + $0x78] sm:$0xff]
        %v2988 = vld [vmem:[#allocation2 + $0x80] sm:$0xff]
        %v2989 = vld [vmem:[#allocation2 + $0x88] sm:$0xff]
        %v2990 = vld [vmem:[#allocation2 + $0x90] sm:$0xff]
        %v2991 = vld [vmem:[#allocation2 + $0x98] sm:$0xff]
        %v2992 = vld [vmem:[#allocation2 + $0xa0] sm:$0xff]
        %v2993 = vld [vmem:[#allocation2 + $0xa8] sm:$0xff]
        %v2994 = vld [vmem:[#allocation2 + $0xb0] sm:$0xff]
        %v2995 = vld [vmem:[#allocation2 + $0xb8] sm:$0xff]
        %v2996 = vld [vmem:[#allocation2 + $0xc0] sm:$0xff]
        %v2997 = vld [vmem:[#allocation2 + $0xc8] sm:$0xff]
        %v2998 = vld [vmem:[#allocation2 + $0xd0] sm:$0xff]
        %v2999 = vld [vmem:[#allocation2 + $0xd8] sm:$0xff]
        %v3000 = vadd.f32 %v2972, %v2834
        %v3001 = vadd.f32 %v2973, %v2839
        %v3002 = vadd.f32 %v2974, %v2844
        %v3003 = vadd.f32 %v2975, %v2849
        %v3004 = vadd.f32 %v2976, %v2854
        %v3005 = vadd.f32 %v2977, %v2859
        %v3006 = vadd.f32 %v2978, %v2864
        %v3007 = vadd.f32 %v2979, %v2869
        %v3008 = vadd.f32 %v2980, %v2874
        %v3009 = vadd.f32 %v2981, %v2879
        %v3010 = vadd.f32 %v2982, %v2884
        %v3011 = vadd.f32 %v2983, %v2889
        %v3012 = vadd.f32 %v2984, %v2894
        %v3013 = vadd.f32 %v2985, %v2899
        %v3014 = vadd.f32 %v2986, %v2904
        %v3015 = vadd.f32 %v2987, %v2909
        %v3016 = vadd.f32 %v2988, %v2914
        %v3017 = vadd.f32 %v2989, %v2919
        %v3018 = vadd.f32 %v2990, %v2924
        %v3019 = vadd.f32 %v2991, %v2929
        %v3020 = vadd.f32 %v2992, %v2934
        %v3021 = vadd.f32 %v2993, %v2939
        %v3022 = vadd.f32 %v2994, %v2944
        %v3023 = vadd.f32 %v2995, %v2949
        %v3024 = vadd.f32 %v2996, %v2954
        %v3025 = vadd.f32 %v2997, %v2959
        %v3026 = vadd.f32 %v2998, %v2964
        %v3027 = vadd.f32 %v2999, %v2969
        %3028 = vst [vmem:[#allocation2] sm:$0xff] %v3000
        %3029 = vst [vmem:[#allocation2 + $0x8] sm:$0xff] %v3001
        %3030 = vst [vmem:[#allocation2 + $0x10] sm:$0xff] %v3002
        %3031 = vst [vmem:[#allocation2 + $0x18] sm:$0xff] %v3003
        %3032 = vst [vmem:[#allocation2 + $0x20] sm:$0xff] %v3004
        %3033 = vst [vmem:[#allocation2 + $0x28] sm:$0xff] %v3005
        %3034 = vst [vmem:[#allocation2 + $0x30] sm:$0xff] %v3006
        %3035 = vst [vmem:[#allocation2 + $0x38] sm:$0xff] %v3007
        %3036 = vst [vmem:[#allocation2 + $0x40] sm:$0xff] %v3008
        %3037 = vst [vmem:[#allocation2 + $0x48] sm:$0xff] %v3009
        %3038 = vst [vmem:[#allocation2 + $0x50] sm:$0xff] %v3010
        %3039 = vst [vmem:[#allocation2 + $0x58] sm:$0xff] %v3011
        %3040 = vst [vmem:[#allocation2 + $0x60] sm:$0xff] %v3012
        %3041 = vst [vmem:[#allocation2 + $0x68] sm:$0xff] %v3013
        %3042 = vst [vmem:[#allocation2 + $0x70] sm:$0xff] %v3014
        %3043 = vst [vmem:[#allocation2 + $0x78] sm:$0xff] %v3015
        %3044 = vst [vmem:[#allocation2 + $0x80] sm:$0xff] %v3016
        %3045 = vst [vmem:[#allocation2 + $0x88] sm:$0xff] %v3017
        %3046 = vst [vmem:[#allocation2 + $0x90] sm:$0xff] %v3018
        %3047 = vst [vmem:[#allocation2 + $0x98] sm:$0xff] %v3019
        %3048 = vst [vmem:[#allocation2 + $0xa0] sm:$0xff] %v3020
        %3049 = vst [vmem:[#allocation2 + $0xa8] sm:$0xff] %v3021
        %3050 = vst [vmem:[#allocation2 + $0xb0] sm:$0xff] %v3022
        %3051 = vst [vmem:[#allocation2 + $0xb8] sm:$0xff] %v3023
        %3052 = vst [vmem:[#allocation2 + $0xc0] sm:$0xff] %v3024
        %3053 = vst [vmem:[#allocation2 + $0xc8] sm:$0xff] %v3025
        %3054 = vst [vmem:[#allocation2 + $0xd0] sm:$0xff] %v3026
        %3055 = vst [vmem:[#allocation2 + $0xd8] sm:$0xff] %v3027
        %v3056 = vld [vmem:[%s290 + $0x21] sm:$0xff]
        %v3057 = vld [vmem:[%s290 + $0x29] sm:$0xff]
        %v3058 = vld [vmem:[%s290 + $0x31] sm:$0xff]
        %v3059 = vld [vmem:[%s290 + $0x39] sm:$0xff]
        %v3060 = vld [vmem:[%s290 + $0x41] sm:$0xff]
        %v3061 = vld [vmem:[%s290 + $0x49] sm:$0xff]
        %v3062 = vld [vmem:[%s290 + $0x51] sm:$0xff]
        %v3063 = vld [vmem:[%s290 + $0x59] sm:$0xff]
        %v3064 = vld [vmem:[%s290 + $0x61] sm:$0xff]
        %v3065 = vld [vmem:[%s290 + $0x69] sm:$0xff]
        %v3066 = vld [vmem:[%s290 + $0x71] sm:$0xff]
        %v3067 = vld [vmem:[%s290 + $0x79] sm:$0xff]
        %v3068 = vld [vmem:[%s290 + $0x81] sm:$0xff]
        %v3069 = vld [vmem:[%s290 + $0x89] sm:$0xff]
        %v3070 = vld [vmem:[%s290 + $0x91] sm:$0xff]
        %v3071 = vld [vmem:[%s290 + $0x99] sm:$0xff]
        %v3072 = vld [vmem:[%s290 + $0xa1] sm:$0xff]
        %v3073 = vld [vmem:[%s290 + $0xa9] sm:$0xff]
        %v3074 = vld [vmem:[%s290 + $0xb1] sm:$0xff]
        %v3075 = vld [vmem:[%s290 + $0xb9] sm:$0xff]
        %v3076 = vld [vmem:[%s290 + $0xc1] sm:$0xff]
        %v3077 = vld [vmem:[%s290 + $0xc9] sm:$0xff]
        %v3078 = vld [vmem:[%s290 + $0xd1] sm:$0xff]
        %v3079 = vld [vmem:[%s290 + $0xd9] sm:$0xff]
        %v3080 = vld [vmem:[%s290 + $0xe1] sm:$0xff]
        %v3081 = vld [vmem:[%s290 + $0xe9] sm:$0xff]
        %v3082 = vld [vmem:[%s290 + $0xf1] sm:$0xff]
        %v3083 = vld [vmem:[%s290 + $0xf9] sm:$0xff]
        %s3084 = scalar_lea.vmem [#allocation6], 56
        %v3085 = vld [vmem:[%s3084] sm:$0xff]
        %v3087 = vsel %vm320, %v3056, 0
        %v3090 = vsel %vm320, %v3057, 0
        %v3093 = vsel %vm320, %v3058, 0
        %v3096 = vsel %vm320, %v3059, 0
        %v3099 = vsel %vm320, %v3060, 0
        %v3102 = vsel %vm320, %v3061, 0
        %v3105 = vsel %vm320, %v3062, 0
        %v3108 = vsel %vm320, %v3063, 0
        %v3111 = vsel %vm320, %v3064, 0
        %v3114 = vsel %vm320, %v3065, 0
        %v3117 = vsel %vm320, %v3066, 0
        %v3120 = vsel %vm320, %v3067, 0
        %v3123 = vsel %vm320, %v3068, 0
        %v3126 = vsel %vm320, %v3069, 0
        %v3129 = vsel %vm320, %v3070, 0
        %v3132 = vsel %vm320, %v3071, 0
        %v3135 = vsel %vm320, %v3072, 0
        %v3138 = vsel %vm320, %v3073, 0
        %v3141 = vsel %vm320, %v3074, 0
        %v3144 = vsel %vm320, %v3075, 0
        %v3147 = vsel %vm320, %v3076, 0
        %v3150 = vsel %vm320, %v3077, 0
        %v3153 = vsel %vm320, %v3078, 0
        %v3156 = vsel %vm320, %v3079, 0
        %v3159 = vsel %vm320, %v3080, 0
        %v3162 = vsel %vm320, %v3081, 0
        %v3165 = vsel %vm320, %v3082, 0
        %v3168 = vsel %vm320, %v3083, 0
        %3170 = vmatprep.subr.mxu0 0.0
        %3171 = vmatpush1.msra.mxu0 %v3085
        %3172 = vmatprep.subr.mxu0 0.0
        %3173 = vmatpush1.msra.mxu0 0.0
        %3174 = vmatprep.subr.mxu0 0.0
        %3175 = vmatpush1.msra.mxu0 0.0
        %3176 = vmatprep.subr.mxu0 0.0
        %3177 = vmatpush1.msra.mxu0 0.0
        %3178 = vmatprep.subr.mxu0 0.0
        %3179 = vmatpush1.msra.mxu0 0.0
        %3180 = vmatprep.subr.mxu0 0.0
        %3181 = vmatpush1.msra.mxu0 0.0
        %3182 = vmatprep.subr.mxu0 0.0
        %3183 = vmatpush1.msra.mxu0 0.0
        %3184 = vmatprep.subr.mxu0 0.0
        %3185 = vmatpush1.msra.mxu0 0.0
        %3186 = vmatprep.subr.mxu0 0.0
        %3187 = vmatpush1.msra.mxu0 0.0
        %3188 = vmatprep.subr.mxu0 0.0
        %3189 = vmatpush1.msra.mxu0 0.0
        %3190 = vmatprep.subr.mxu0 0.0
        %3191 = vmatpush1.msra.mxu0 0.0
        %3192 = vmatprep.subr.mxu0 0.0
        %3193 = vmatpush1.msra.mxu0 0.0
        %3194 = vmatprep.subr.mxu0 0.0
        %3195 = vmatpush1.msra.mxu0 0.0
        %3196 = vmatprep.subr.mxu0 0.0
        %3197 = vmatpush1.msra.mxu0 0.0
        %3198 = vmatprep.subr.mxu0 0.0
        %3199 = vmatpush1.msra.mxu0 0.0
        %3200 = vmatprep.subr.mxu0 0.0
        %3201 = vmatpush1.msra.mxu0 0.0
        %3202 = vmatprep.subr.mxu0 0.0
        %3203 = vmatpush1.msra.mxu0 0.0
        %3204 = vmatprep.subr.mxu0 0.0
        %3205 = vmatpush1.msra.mxu0 0.0
        %3206 = vmatprep.subr.mxu0 0.0
        %3207 = vmatpush1.msra.mxu0 0.0
        %3208 = vmatprep.subr.mxu0 0.0
        %3209 = vmatpush1.msra.mxu0 0.0
        %3210 = vmatprep.subr.mxu0 0.0
        %3211 = vmatpush1.msra.mxu0 0.0
        %3212 = vmatprep.subr.mxu0 0.0
        %3213 = vmatpush1.msra.mxu0 0.0
        %3214 = vmatprep.subr.mxu0 0.0
        %3215 = vmatpush1.msra.mxu0 0.0
        %3216 = vmatprep.subr.mxu0 0.0
        %3217 = vmatpush1.msra.mxu0 0.0
        %3218 = vmatprep.subr.mxu0 0.0
        %3219 = vmatpush1.msra.mxu0 0.0
        %3220 = vmatprep.subr.mxu0 0.0
        %3221 = vmatpush1.msra.mxu0 0.0
        %3222 = vmatprep.subr.mxu0 0.0
        %3223 = vmatpush1.msra.mxu0 0.0
        %3224 = vmatprep.subr.mxu0 0.0
        %3225 = vmatpush1.msra.mxu0 0.0
        %3226 = vmatprep.subr.mxu0 0.0
        %3227 = vmatpush1.msra.mxu0 0.0
        %3228 = vmatprep.subr.mxu0 0.0
        %3229 = vmatpush1.msra.mxu0 0.0
        %3230 = vmatprep.subr.mxu0 0.0
        %3231 = vmatpush1.msra.mxu0 0.0
        %3232 = vmatprep.subr.mxu0 0.0
        %3233 = vmatpush1.msra.mxu0 0.0
        %3234 = vmatprep.mubr.f32.mxu0 0.0
        %3235 = vmatmul.mubr.f32.gmra.mrb[0].mxu0 %v3087
        %v3236 = vpop.f32.mrb[0].mxu0
        %v3237 = vadd.f32 0.0, %v3236
        %v3238 = vpop.f32.mrb[0].mxu0
        %3239 = vmatprep.mubr.f32.mxu0 0.0
        %3240 = vmatmul.mubr.f32.gmra.mrb[0].mxu0 %v3090
        %v3241 = vpop.f32.mrb[0].mxu0
        %v3242 = vadd.f32 0.0, %v3241
        %v3243 = vpop.f32.mrb[0].mxu0
        %3244 = vmatprep.mubr.f32.mxu0 0.0
        %3245 = vmatmul.mubr.f32.gmra.mrb[0].mxu0 %v3093
        %v3246 = vpop.f32.mrb[0].mxu0
        %v3247 = vadd.f32 0.0, %v3246
        %v3248 = vpop.f32.mrb[0].mxu0
        %3249 = vmatprep.mubr.f32.mxu0 0.0
        %3250 = vmatmul.mubr.f32.gmra.mrb[0].mxu0 %v3096
        %v3251 = vpop.f32.mrb[0].mxu0
        %v3252 = vadd.f32 0.0, %v3251
        %v3253 = vpop.f32.mrb[0].mxu0
        %3254 = vmatprep.mubr.f32.mxu0 0.0
        %3255 = vmatmul.mubr.f32.gmra.mrb[0].mxu0 %v3099
        %v3256 = vpop.f32.mrb[0].mxu0
        %v3257 = vadd.f32 0.0, %v3256
        %v3258 = vpop.f32.mrb[0].mxu0
        %3259 = vmatprep.mubr.f32.mxu0 0.0
        %3260 = vmatmul.mubr.f32.gmra.mrb[0].mxu0 %v3102
        %v3261 = vpop.f32.mrb[0].mxu0
        %v3262 = vadd.f32 0.0, %v3261
        %v3263 = vpop.f32.mrb[0].mxu0
        %3264 = vmatprep.mubr.f32.mxu0 0.0
        %3265 = vmatmul.mubr.f32.gmra.mrb[0].mxu0 %v3105
        %v3266 = vpop.f32.mrb[0].mxu0
        %v3267 = vadd.f32 0.0, %v3266
        %v3268 = vpop.f32.mrb[0].mxu0
        %3269 = vmatprep.mubr.f32.mxu0 0.0
        %3270 = vmatmul.mubr.f32.gmra.mrb[0].mxu0 %v3108
        %v3271 = vpop.f32.mrb[0].mxu0
        %v3272 = vadd.f32 0.0, %v3271
        %v3273 = vpop.f32.mrb[0].mxu0
        %3274 = vmatprep.mubr.f32.mxu0 0.0
        %3275 = vmatmul.mubr.f32.gmra.mrb[0].mxu0 %v3111
        %v3276 = vpop.f32.mrb[0].mxu0
        %v3277 = vadd.f32 0.0, %v3276
        %v3278 = vpop.f32.mrb[0].mxu0
        %3279 = vmatprep.mubr.f32.mxu0 0.0
        %3280 = vmatmul.mubr.f32.gmra.mrb[0].mxu0 %v3114
        %v3281 = vpop.f32.mrb[0].mxu0
        %v3282 = vadd.f32 0.0, %v3281
        %v3283 = vpop.f32.mrb[0].mxu0
        %3284 = vmatprep.mubr.f32.mxu0 0.0
        %3285 = vmatmul.mubr.f32.gmra.mrb[0].mxu0 %v3117
        %v3286 = vpop.f32.mrb[0].mxu0
        %v3287 = vadd.f32 0.0, %v3286
        %v3288 = vpop.f32.mrb[0].mxu0
        %3289 = vmatprep.mubr.f32.mxu0 0.0
        %3290 = vmatmul.mubr.f32.gmra.mrb[0].mxu0 %v3120
        %v3291 = vpop.f32.mrb[0].mxu0
        %v3292 = vadd.f32 0.0, %v3291
        %v3293 = vpop.f32.mrb[0].mxu0
        %3294 = vmatprep.mubr.f32.mxu0 0.0
        %3295 = vmatmul.mubr.f32.gmra.mrb[0].mxu0 %v3123
        %v3296 = vpop.f32.mrb[0].mxu0
        %v3297 = vadd.f32 0.0, %v3296
        %v3298 = vpop.f32.mrb[0].mxu0
        %3299 = vmatprep.mubr.f32.mxu0 0.0
        %3300 = vmatmul.mubr.f32.gmra.mrb[0].mxu0 %v3126
        %v3301 = vpop.f32.mrb[0].mxu0
        %v3302 = vadd.f32 0.0, %v3301
        %v3303 = vpop.f32.mrb[0].mxu0
        %3304 = vmatprep.mubr.f32.mxu0 0.0
        %3305 = vmatmul.mubr.f32.gmra.mrb[0].mxu0 %v3129
        %v3306 = vpop.f32.mrb[0].mxu0
        %v3307 = vadd.f32 0.0, %v3306
        %v3308 = vpop.f32.mrb[0].mxu0
        %3309 = vmatprep.mubr.f32.mxu0 0.0
        %3310 = vmatmul.mubr.f32.gmra.mrb[0].mxu0 %v3132
        %v3311 = vpop.f32.mrb[0].mxu0
        %v3312 = vadd.f32 0.0, %v3311
        %v3313 = vpop.f32.mrb[0].mxu0
        %3314 = vmatprep.mubr.f32.mxu0 0.0
        %3315 = vmatmul.mubr.f32.gmra.mrb[0].mxu0 %v3135
        %v3316 = vpop.f32.mrb[0].mxu0
        %v3317 = vadd.f32 0.0, %v3316
        %v3318 = vpop.f32.mrb[0].mxu0
        %3319 = vmatprep.mubr.f32.mxu0 0.0
        %3320 = vmatmul.mubr.f32.gmra.mrb[0].mxu0 %v3138
        %v3321 = vpop.f32.mrb[0].mxu0
        %v3322 = vadd.f32 0.0, %v3321
        %v3323 = vpop.f32.mrb[0].mxu0
        %3324 = vmatprep.mubr.f32.mxu0 0.0
        %3325 = vmatmul.mubr.f32.gmra.mrb[0].mxu0 %v3141
        %v3326 = vpop.f32.mrb[0].mxu0
        %v3327 = vadd.f32 0.0, %v3326
        %v3328 = vpop.f32.mrb[0].mxu0
        %3329 = vmatprep.mubr.f32.mxu0 0.0
        %3330 = vmatmul.mubr.f32.gmra.mrb[0].mxu0 %v3144
        %v3331 = vpop.f32.mrb[0].mxu0
        %v3332 = vadd.f32 0.0, %v3331
        %v3333 = vpop.f32.mrb[0].mxu0
        %3334 = vmatprep.mubr.f32.mxu0 0.0
        %3335 = vmatmul.mubr.f32.gmra.mrb[0].mxu0 %v3147
        %v3336 = vpop.f32.mrb[0].mxu0
        %v3337 = vadd.f32 0.0, %v3336
        %v3338 = vpop.f32.mrb[0].mxu0
        %3339 = vmatprep.mubr.f32.mxu0 0.0
        %3340 = vmatmul.mubr.f32.gmra.mrb[0].mxu0 %v3150
        %v3341 = vpop.f32.mrb[0].mxu0
        %v3342 = vadd.f32 0.0, %v3341
        %v3343 = vpop.f32.mrb[0].mxu0
        %3344 = vmatprep.mubr.f32.mxu0 0.0
        %3345 = vmatmul.mubr.f32.gmra.mrb[0].mxu0 %v3153
        %v3346 = vpop.f32.mrb[0].mxu0
        %v3347 = vadd.f32 0.0, %v3346
        %v3348 = vpop.f32.mrb[0].mxu0
        %3349 = vmatprep.mubr.f32.mxu0 0.0
        %3350 = vmatmul.mubr.f32.gmra.mrb[0].mxu0 %v3156
        %v3351 = vpop.f32.mrb[0].mxu0
        %v3352 = vadd.f32 0.0, %v3351
        %v3353 = vpop.f32.mrb[0].mxu0
        %3354 = vmatprep.mubr.f32.mxu0 0.0
        %3355 = vmatmul.mubr.f32.gmra.mrb[0].mxu0 %v3159
        %v3356 = vpop.f32.mrb[0].mxu0
        %v3357 = vadd.f32 0.0, %v3356
        %v3358 = vpop.f32.mrb[0].mxu0
        %3359 = vmatprep.mubr.f32.mxu0 0.0
        %3360 = vmatmul.mubr.f32.gmra.mrb[0].mxu0 %v3162
        %v3361 = vpop.f32.mrb[0].mxu0
        %v3362 = vadd.f32 0.0, %v3361
        %v3363 = vpop.f32.mrb[0].mxu0
        %3364 = vmatprep.mubr.f32.mxu0 0.0
        %3365 = vmatmul.mubr.f32.gmra.mrb[0].mxu0 %v3165
        %v3366 = vpop.f32.mrb[0].mxu0
        %v3367 = vadd.f32 0.0, %v3366
        %v3368 = vpop.f32.mrb[0].mxu0
        %3369 = vmatprep.mubr.f32.mxu0 0.0
        %3370 = vmatmul.mubr.f32.gmra.mrb[0].mxu0 %v3168
        %v3371 = vpop.f32.mrb[0].mxu0
        %v3372 = vadd.f32 0.0, %v3371
        %v3373 = vpop.f32.mrb[0].mxu0
        %3374 = vdwg.mxu0
        %v3375 = vld [vmem:[#allocation2] sm:$0xff]
        %v3376 = vld [vmem:[#allocation2 + $0x8] sm:$0xff]
        %v3377 = vld [vmem:[#allocation2 + $0x10] sm:$0xff]
        %v3378 = vld [vmem:[#allocation2 + $0x18] sm:$0xff]
        %v3379 = vld [vmem:[#allocation2 + $0x20] sm:$0xff]
        %v3380 = vld [vmem:[#allocation2 + $0x28] sm:$0xff]
        %v3381 = vld [vmem:[#allocation2 + $0x30] sm:$0xff]
        %v3382 = vld [vmem:[#allocation2 + $0x38] sm:$0xff]
        %v3383 = vld [vmem:[#allocation2 + $0x40] sm:$0xff]
        %v3384 = vld [vmem:[#allocation2 + $0x48] sm:$0xff]
        %v3385 = vld [vmem:[#allocation2 + $0x50] sm:$0xff]
        %v3386 = vld [vmem:[#allocation2 + $0x58] sm:$0xff]
        %v3387 = vld [vmem:[#allocation2 + $0x60] sm:$0xff]
        %v3388 = vld [vmem:[#allocation2 + $0x68] sm:$0xff]
        %v3389 = vld [vmem:[#allocation2 + $0x70] sm:$0xff]
        %v3390 = vld [vmem:[#allocation2 + $0x78] sm:$0xff]
        %v3391 = vld [vmem:[#allocation2 + $0x80] sm:$0xff]
        %v3392 = vld [vmem:[#allocation2 + $0x88] sm:$0xff]
        %v3393 = vld [vmem:[#allocation2 + $0x90] sm:$0xff]
        %v3394 = vld [vmem:[#allocation2 + $0x98] sm:$0xff]
        %v3395 = vld [vmem:[#allocation2 + $0xa0] sm:$0xff]
        %v3396 = vld [vmem:[#allocation2 + $0xa8] sm:$0xff]
        %v3397 = vld [vmem:[#allocation2 + $0xb0] sm:$0xff]
        %v3398 = vld [vmem:[#allocation2 + $0xb8] sm:$0xff]
        %v3399 = vld [vmem:[#allocation2 + $0xc0] sm:$0xff]
        %v3400 = vld [vmem:[#allocation2 + $0xc8] sm:$0xff]
        %v3401 = vld [vmem:[#allocation2 + $0xd0] sm:$0xff]
        %v3402 = vld [vmem:[#allocation2 + $0xd8] sm:$0xff]
        %v3403 = vadd.f32 %v3375, %v3237
        %v3404 = vadd.f32 %v3376, %v3242
        %v3405 = vadd.f32 %v3377, %v3247
        %v3406 = vadd.f32 %v3378, %v3252
        %v3407 = vadd.f32 %v3379, %v3257
        %v3408 = vadd.f32 %v3380, %v3262
        %v3409 = vadd.f32 %v3381, %v3267
        %v3410 = vadd.f32 %v3382, %v3272
        %v3411 = vadd.f32 %v3383, %v3277
        %v3412 = vadd.f32 %v3384, %v3282
        %v3413 = vadd.f32 %v3385, %v3287
        %v3414 = vadd.f32 %v3386, %v3292
        %v3415 = vadd.f32 %v3387, %v3297
        %v3416 = vadd.f32 %v3388, %v3302
        %v3417 = vadd.f32 %v3389, %v3307
        %v3418 = vadd.f32 %v3390, %v3312
        %v3419 = vadd.f32 %v3391, %v3317
        %v3420 = vadd.f32 %v3392, %v3322
        %v3421 = vadd.f32 %v3393, %v3327
        %v3422 = vadd.f32 %v3394, %v3332
        %v3423 = vadd.f32 %v3395, %v3337
        %v3424 = vadd.f32 %v3396, %v3342
        %v3425 = vadd.f32 %v3397, %v3347
        %v3426 = vadd.f32 %v3398, %v3352
        %v3427 = vadd.f32 %v3399, %v3357
        %v3428 = vadd.f32 %v3400, %v3362
        %v3429 = vadd.f32 %v3401, %v3367
        %v3430 = vadd.f32 %v3402, %v3372
        %3431 = vst [vmem:[#allocation2] sm:$0xff] %v3403
        %3432 = vst [vmem:[#allocation2 + $0x8] sm:$0xff] %v3404
        %3433 = vst [vmem:[#allocation2 + $0x10] sm:$0xff] %v3405
        %3434 = vst [vmem:[#allocation2 + $0x18] sm:$0xff] %v3406
        %3435 = vst [vmem:[#allocation2 + $0x20] sm:$0xff] %v3407
        %3436 = vst [vmem:[#allocation2 + $0x28] sm:$0xff] %v3408
        %3437 = vst [vmem:[#allocation2 + $0x30] sm:$0xff] %v3409
        %3438 = vst [vmem:[#allocation2 + $0x38] sm:$0xff] %v3410
        %3439 = vst [vmem:[#allocation2 + $0x40] sm:$0xff] %v3411
        %3440 = vst [vmem:[#allocation2 + $0x48] sm:$0xff] %v3412
        %3441 = vst [vmem:[#allocation2 + $0x50] sm:$0xff] %v3413
        %3442 = vst [vmem:[#allocation2 + $0x58] sm:$0xff] %v3414
        %3443 = vst [vmem:[#allocation2 + $0x60] sm:$0xff] %v3415
        %3444 = vst [vmem:[#allocation2 + $0x68] sm:$0xff] %v3416
        %3445 = vst [vmem:[#allocation2 + $0x70] sm:$0xff] %v3417
        %3446 = vst [vmem:[#allocation2 + $0x78] sm:$0xff] %v3418
        %3447 = vst [vmem:[#allocation2 + $0x80] sm:$0xff] %v3419
        %3448 = vst [vmem:[#allocation2 + $0x88] sm:$0xff] %v3420
        %3449 = vst [vmem:[#allocation2 + $0x90] sm:$0xff] %v3421
        %3450 = vst [vmem:[#allocation2 + $0x98] sm:$0xff] %v3422
        %3451 = vst [vmem:[#allocation2 + $0xa0] sm:$0xff] %v3423
        %3452 = vst [vmem:[#allocation2 + $0xa8] sm:$0xff] %v3424
        %3453 = vst [vmem:[#allocation2 + $0xb0] sm:$0xff] %v3425
        %3454 = vst [vmem:[#allocation2 + $0xb8] sm:$0xff] %v3426
        %3455 = vst [vmem:[#allocation2 + $0xc0] sm:$0xff] %v3427
        %3456 = vst [vmem:[#allocation2 + $0xc8] sm:$0xff] %v3428
        %3457 = vst [vmem:[#allocation2 + $0xd0] sm:$0xff] %v3429
        %3458 = vst [vmem:[#allocation2 + $0xd8] sm:$0xff] %v3430
        %v3459 = vld [vmem:[%s290 + $0x22] sm:$0xff]
        %v3460 = vld [vmem:[%s290 + $0x2a] sm:$0xff]
        %v3461 = vld [vmem:[%s290 + $0x32] sm:$0xff]
        %v3462 = vld [vmem:[%s290 + $0x3a] sm:$0xff]
        %v3463 = vld [vmem:[%s290 + $0x42] sm:$0xff]
        %v3464 = vld [vmem:[%s290 + $0x4a] sm:$0xff]
        %v3465 = vld [vmem:[%s290 + $0x52] sm:$0xff]
        %v3466 = vld [vmem:[%s290 + $0x5a] sm:$0xff]
        %v3467 = vld [vmem:[%s290 + $0x62] sm:$0xff]
        %v3468 = vld [vmem:[%s290 + $0x6a] sm:$0xff]
        %v3469 = vld [vmem:[%s290 + $0x72] sm:$0xff]
        %v3470 = vld [vmem:[%s290 + $0x7a] sm:$0xff]
        %v3471 = vld [vmem:[%s290 + $0x82] sm:$0xff]
        %v3472 = vld [vmem:[%s290 + $0x8a] sm:$0xff]
        %v3473 = vld [vmem:[%s290 + $0x92] sm:$0xff]
        %v3474 = vld [vmem:[%s290 + $0x9a] sm:$0xff]
        %v3475 = vld [vmem:[%s290 + $0xa2] sm:$0xff]
        %v3476 = vld [vmem:[%s290 + $0xaa] sm:$0xff]
        %v3477 = vld [vmem:[%s290 + $0xb2] sm:$0xff]
        %v3478 = vld [vmem:[%s290 + $0xba] sm:$0xff]
        %v3479 = vld [vmem:[%s290 + $0xc2] sm:$0xff]
        %v3480 = vld [vmem:[%s290 + $0xca] sm:$0xff]
        %v3481 = vld [vmem:[%s290 + $0xd2] sm:$0xff]
        %v3482 = vld [vmem:[%s290 + $0xda] sm:$0xff]
        %v3483 = vld [vmem:[%s290 + $0xe2] sm:$0xff]
        %v3484 = vld [vmem:[%s290 + $0xea] sm:$0xff]
        %v3485 = vld [vmem:[%s290 + $0xf2] sm:$0xff]
        %v3486 = vld [vmem:[%s290 + $0xfa] sm:$0xff]
        %s3487 = scalar_lea.vmem [#allocation6], 64
        %v3488 = vld [vmem:[%s3487] sm:$0xff]
        %v3490 = vsel %vm320, %v3459, 0
        %v3493 = vsel %vm320, %v3460, 0
        %v3496 = vsel %vm320, %v3461, 0
        %v3499 = vsel %vm320, %v3462, 0
        %v3502 = vsel %vm320, %v3463, 0
        %v3505 = vsel %vm320, %v3464, 0
        %v3508 = vsel %vm320, %v3465, 0
        %v3511 = vsel %vm320, %v3466, 0
        %v3514 = vsel %vm320, %v3467, 0
        %v3517 = vsel %vm320, %v3468, 0
        %v3520 = vsel %vm320, %v3469, 0
        %v3523 = vsel %vm320, %v3470, 0
        %v3526 = vsel %vm320, %v3471, 0
        %v3529 = vsel %vm320, %v3472, 0
        %v3532 = vsel %vm320, %v3473, 0
        %v3535 = vsel %vm320, %v3474, 0
        %v3538 = vsel %vm320, %v3475, 0
        %v3541 = vsel %vm320, %v3476, 0
        %v3544 = vsel %vm320, %v3477, 0
        %v3547 = vsel %vm320, %v3478, 0
        %v3550 = vsel %vm320, %v3479, 0
        %v3553 = vsel %vm320, %v3480, 0
        %v3556 = vsel %vm320, %v3481, 0
        %v3559 = vsel %vm320, %v3482, 0
        %v3562 = vsel %vm320, %v3483, 0
        %v3565 = vsel %vm320, %v3484, 0
        %v3568 = vsel %vm320, %v3485, 0
        %v3571 = vsel %vm320, %v3486, 0
        %3573 = vmatprep.subr.mxu0 0.0
        %3574 = vmatpush1.msra.mxu0 %v3488
        %3575 = vmatprep.subr.mxu0 0.0
        %3576 = vmatpush1.msra.mxu0 0.0
        %3577 = vmatprep.subr.mxu0 0.0
        %3578 = vmatpush1.msra.mxu0 0.0
        %3579 = vmatprep.subr.mxu0 0.0
        %3580 = vmatpush1.msra.mxu0 0.0
        %3581 = vmatprep.subr.mxu0 0.0
        %3582 = vmatpush1.msra.mxu0 0.0
        %3583 = vmatprep.subr.mxu0 0.0
        %3584 = vmatpush1.msra.mxu0 0.0
        %3585 = vmatprep.subr.mxu0 0.0
        %3586 = vmatpush1.msra.mxu0 0.0
        %3587 = vmatprep.subr.mxu0 0.0
        %3588 = vmatpush1.msra.mxu0 0.0
        %3589 = vmatprep.subr.mxu0 0.0
        %3590 = vmatpush1.msra.mxu0 0.0
        %3591 = vmatprep.subr.mxu0 0.0
        %3592 = vmatpush1.msra.mxu0 0.0
        %3593 = vmatprep.subr.mxu0 0.0
        %3594 = vmatpush1.msra.mxu0 0.0
        %3595 = vmatprep.subr.mxu0 0.0
        %3596 = vmatpush1.msra.mxu0 0.0
        %3597 = vmatprep.subr.mxu0 0.0
        %3598 = vmatpush1.msra.mxu0 0.0
        %3599 = vmatprep.subr.mxu0 0.0
        %3600 = vmatpush1.msra.mxu0 0.0
        %3601 = vmatprep.subr.mxu0 0.0
        %3602 = vmatpush1.msra.mxu0 0.0
        %3603 = vmatprep.subr.mxu0 0.0
        %3604 = vmatpush1.msra.mxu0 0.0
        %3605 = vmatprep.subr.mxu0 0.0
        %3606 = vmatpush1.msra.mxu0 0.0
        %3607 = vmatprep.subr.mxu0 0.0
        %3608 = vmatpush1.msra.mxu0 0.0
        %3609 = vmatprep.subr.mxu0 0.0
        %3610 = vmatpush1.msra.mxu0 0.0
        %3611 = vmatprep.subr.mxu0 0.0
        %3612 = vmatpush1.msra.mxu0 0.0
        %3613 = vmatprep.subr.mxu0 0.0
        %3614 = vmatpush1.msra.mxu0 0.0
        %3615 = vmatprep.subr.mxu0 0.0
        %3616 = vmatpush1.msra.mxu0 0.0
        %3617 = vmatprep.subr.mxu0 0.0
        %3618 = vmatpush1.msra.mxu0 0.0
        %3619 = vmatprep.subr.mxu0 0.0
        %3620 = vmatpush1.msra.mxu0 0.0
        %3621 = vmatprep.subr.mxu0 0.0
        %3622 = vmatpush1.msra.mxu0 0.0
        %3623 = vmatprep.subr.mxu0 0.0
        %3624 = vmatpush1.msra.mxu0 0.0
        %3625 = vmatprep.subr.mxu0 0.0
        %3626 = vmatpush1.msra.mxu0 0.0
        %3627 = vmatprep.subr.mxu0 0.0
        %3628 = vmatpush1.msra.mxu0 0.0
        %3629 = vmatprep.subr.mxu0 0.0
        %3630 = vmatpush1.msra.mxu0 0.0
        %3631 = vmatprep.subr.mxu0 0.0
        %3632 = vmatpush1.msra.mxu0 0.0
        %3633 = vmatprep.subr.mxu0 0.0
        %3634 = vmatpush1.msra.mxu0 0.0
        %3635 = vmatprep.subr.mxu0 0.0
        %3636 = vmatpush1.msra.mxu0 0.0
        %3637 = vmatprep.mubr.f32.mxu0 0.0
        %3638 = vmatmul.mubr.f32.gmra.mrb[0].mxu0 %v3490
        %v3639 = vpop.f32.mrb[0].mxu0
        %v3640 = vadd.f32 0.0, %v3639
        %v3641 = vpop.f32.mrb[0].mxu0
        %3642 = vmatprep.mubr.f32.mxu0 0.0
        %3643 = vmatmul.mubr.f32.gmra.mrb[0].mxu0 %v3493
        %v3644 = vpop.f32.mrb[0].mxu0
        %v3645 = vadd.f32 0.0, %v3644
        %v3646 = vpop.f32.mrb[0].mxu0
        %3647 = vmatprep.mubr.f32.mxu0 0.0
        %3648 = vmatmul.mubr.f32.gmra.mrb[0].mxu0 %v3496
        %v3649 = vpop.f32.mrb[0].mxu0
        %v3650 = vadd.f32 0.0, %v3649
        %v3651 = vpop.f32.mrb[0].mxu0
        %3652 = vmatprep.mubr.f32.mxu0 0.0
        %3653 = vmatmul.mubr.f32.gmra.mrb[0].mxu0 %v3499
        %v3654 = vpop.f32.mrb[0].mxu0
        %v3655 = vadd.f32 0.0, %v3654
        %v3656 = vpop.f32.mrb[0].mxu0
        %3657 = vmatprep.mubr.f32.mxu0 0.0
        %3658 = vmatmul.mubr.f32.gmra.mrb[0].mxu0 %v3502
        %v3659 = vpop.f32.mrb[0].mxu0
        %v3660 = vadd.f32 0.0, %v3659
        %v3661 = vpop.f32.mrb[0].mxu0
        %3662 = vmatprep.mubr.f32.mxu0 0.0
        %3663 = vmatmul.mubr.f32.gmra.mrb[0].mxu0 %v3505
        %v3664 = vpop.f32.mrb[0].mxu0
        %v3665 = vadd.f32 0.0, %v3664
        %v3666 = vpop.f32.mrb[0].mxu0
        %3667 = vmatprep.mubr.f32.mxu0 0.0
        %3668 = vmatmul.mubr.f32.gmra.mrb[0].mxu0 %v3508
        %v3669 = vpop.f32.mrb[0].mxu0
        %v3670 = vadd.f32 0.0, %v3669
        %v3671 = vpop.f32.mrb[0].mxu0
        %3672 = vmatprep.mubr.f32.mxu0 0.0
        %3673 = vmatmul.mubr.f32.gmra.mrb[0].mxu0 %v3511
        %v3674 = vpop.f32.mrb[0].mxu0
        %v3675 = vadd.f32 0.0, %v3674
        %v3676 = vpop.f32.mrb[0].mxu0
        %3677 = vmatprep.mubr.f32.mxu0 0.0
        %3678 = vmatmul.mubr.f32.gmra.mrb[0].mxu0 %v3514
        %v3679 = vpop.f32.mrb[0].mxu0
        %v3680 = vadd.f32 0.0, %v3679
        %v3681 = vpop.f32.mrb[0].mxu0
        %3682 = vmatprep.mubr.f32.mxu0 0.0
        %3683 = vmatmul.mubr.f32.gmra.mrb[0].mxu0 %v3517
        %v3684 = vpop.f32.mrb[0].mxu0
        %v3685 = vadd.f32 0.0, %v3684
        %v3686 = vpop.f32.mrb[0].mxu0
        %3687 = vmatprep.mubr.f32.mxu0 0.0
        %3688 = vmatmul.mubr.f32.gmra.mrb[0].mxu0 %v3520
        %v3689 = vpop.f32.mrb[0].mxu0
        %v3690 = vadd.f32 0.0, %v3689
        %v3691 = vpop.f32.mrb[0].mxu0
        %3692 = vmatprep.mubr.f32.mxu0 0.0
        %3693 = vmatmul.mubr.f32.gmra.mrb[0].mxu0 %v3523
        %v3694 = vpop.f32.mrb[0].mxu0
        %v3695 = vadd.f32 0.0, %v3694
        %v3696 = vpop.f32.mrb[0].mxu0
        %3697 = vmatprep.mubr.f32.mxu0 0.0
        %3698 = vmatmul.mubr.f32.gmra.mrb[0].mxu0 %v3526
        %v3699 = vpop.f32.mrb[0].mxu0
        %v3700 = vadd.f32 0.0, %v3699
        %v3701 = vpop.f32.mrb[0].mxu0
        %3702 = vmatprep.mubr.f32.mxu0 0.0
        %3703 = vmatmul.mubr.f32.gmra.mrb[0].mxu0 %v3529
        %v3704 = vpop.f32.mrb[0].mxu0
        %v3705 = vadd.f32 0.0, %v3704
        %v3706 = vpop.f32.mrb[0].mxu0
        %3707 = vmatprep.mubr.f32.mxu0 0.0
        %3708 = vmatmul.mubr.f32.gmra.mrb[0].mxu0 %v3532
        %v3709 = vpop.f32.mrb[0].mxu0
        %v3710 = vadd.f32 0.0, %v3709
        %v3711 = vpop.f32.mrb[0].mxu0
        %3712 = vmatprep.mubr.f32.mxu0 0.0
        %3713 = vmatmul.mubr.f32.gmra.mrb[0].mxu0 %v3535
        %v3714 = vpop.f32.mrb[0].mxu0
        %v3715 = vadd.f32 0.0, %v3714
        %v3716 = vpop.f32.mrb[0].mxu0
        %3717 = vmatprep.mubr.f32.mxu0 0.0
        %3718 = vmatmul.mubr.f32.gmra.mrb[0].mxu0 %v3538
        %v3719 = vpop.f32.mrb[0].mxu0
        %v3720 = vadd.f32 0.0, %v3719
        %v3721 = vpop.f32.mrb[0].mxu0
        %3722 = vmatprep.mubr.f32.mxu0 0.0
        %3723 = vmatmul.mubr.f32.gmra.mrb[0].mxu0 %v3541
        %v3724 = vpop.f32.mrb[0].mxu0
        %v3725 = vadd.f32 0.0, %v3724
        %v3726 = vpop.f32.mrb[0].mxu0
        %3727 = vmatprep.mubr.f32.mxu0 0.0
        %3728 = vmatmul.mubr.f32.gmra.mrb[0].mxu0 %v3544
        %v3729 = vpop.f32.mrb[0].mxu0
        %v3730 = vadd.f32 0.0, %v3729
        %v3731 = vpop.f32.mrb[0].mxu0
        %3732 = vmatprep.mubr.f32.mxu0 0.0
        %3733 = vmatmul.mubr.f32.gmra.mrb[0].mxu0 %v3547
        %v3734 = vpop.f32.mrb[0].mxu0
        %v3735 = vadd.f32 0.0, %v3734
        %v3736 = vpop.f32.mrb[0].mxu0
        %3737 = vmatprep.mubr.f32.mxu0 0.0
        %3738 = vmatmul.mubr.f32.gmra.mrb[0].mxu0 %v3550
        %v3739 = vpop.f32.mrb[0].mxu0
        %v3740 = vadd.f32 0.0, %v3739
        %v3741 = vpop.f32.mrb[0].mxu0
        %3742 = vmatprep.mubr.f32.mxu0 0.0
        %3743 = vmatmul.mubr.f32.gmra.mrb[0].mxu0 %v3553
        %v3744 = vpop.f32.mrb[0].mxu0
        %v3745 = vadd.f32 0.0, %v3744
        %v3746 = vpop.f32.mrb[0].mxu0
        %3747 = vmatprep.mubr.f32.mxu0 0.0
        %3748 = vmatmul.mubr.f32.gmra.mrb[0].mxu0 %v3556
        %v3749 = vpop.f32.mrb[0].mxu0
        %v3750 = vadd.f32 0.0, %v3749
        %v3751 = vpop.f32.mrb[0].mxu0
        %3752 = vmatprep.mubr.f32.mxu0 0.0
        %3753 = vmatmul.mubr.f32.gmra.mrb[0].mxu0 %v3559
        %v3754 = vpop.f32.mrb[0].mxu0
        %v3755 = vadd.f32 0.0, %v3754
        %v3756 = vpop.f32.mrb[0].mxu0
        %3757 = vmatprep.mubr.f32.mxu0 0.0
        %3758 = vmatmul.mubr.f32.gmra.mrb[0].mxu0 %v3562
        %v3759 = vpop.f32.mrb[0].mxu0
        %v3760 = vadd.f32 0.0, %v3759
        %v3761 = vpop.f32.mrb[0].mxu0
        %3762 = vmatprep.mubr.f32.mxu0 0.0
        %3763 = vmatmul.mubr.f32.gmra.mrb[0].mxu0 %v3565
        %v3764 = vpop.f32.mrb[0].mxu0
        %v3765 = vadd.f32 0.0, %v3764
        %v3766 = vpop.f32.mrb[0].mxu0
        %3767 = vmatprep.mubr.f32.mxu0 0.0
        %3768 = vmatmul.mubr.f32.gmra.mrb[0].mxu0 %v3568
        %v3769 = vpop.f32.mrb[0].mxu0
        %v3770 = vadd.f32 0.0, %v3769
        %v3771 = vpop.f32.mrb[0].mxu0
        %3772 = vmatprep.mubr.f32.mxu0 0.0
        %3773 = vmatmul.mubr.f32.gmra.mrb[0].mxu0 %v3571
        %v3774 = vpop.f32.mrb[0].mxu0
        %v3775 = vadd.f32 0.0, %v3774
        %v3776 = vpop.f32.mrb[0].mxu0
        %3777 = vdwg.mxu0
        %v3778 = vld [vmem:[#allocation2] sm:$0xff]
        %v3779 = vld [vmem:[#allocation2 + $0x8] sm:$0xff]
        %v3780 = vld [vmem:[#allocation2 + $0x10] sm:$0xff]
        %v3781 = vld [vmem:[#allocation2 + $0x18] sm:$0xff]
        %v3782 = vld [vmem:[#allocation2 + $0x20] sm:$0xff]
        %v3783 = vld [vmem:[#allocation2 + $0x28] sm:$0xff]
        %v3784 = vld [vmem:[#allocation2 + $0x30] sm:$0xff]
        %v3785 = vld [vmem:[#allocation2 + $0x38] sm:$0xff]
        %v3786 = vld [vmem:[#allocation2 + $0x40] sm:$0xff]
        %v3787 = vld [vmem:[#allocation2 + $0x48] sm:$0xff]
        %v3788 = vld [vmem:[#allocation2 + $0x50] sm:$0xff]
        %v3789 = vld [vmem:[#allocation2 + $0x58] sm:$0xff]
        %v3790 = vld [vmem:[#allocation2 + $0x60] sm:$0xff]
        %v3791 = vld [vmem:[#allocation2 + $0x68] sm:$0xff]
        %v3792 = vld [vmem:[#allocation2 + $0x70] sm:$0xff]
        %v3793 = vld [vmem:[#allocation2 + $0x78] sm:$0xff]
        %v3794 = vld [vmem:[#allocation2 + $0x80] sm:$0xff]
        %v3795 = vld [vmem:[#allocation2 + $0x88] sm:$0xff]
        %v3796 = vld [vmem:[#allocation2 + $0x90] sm:$0xff]
        %v3797 = vld [vmem:[#allocation2 + $0x98] sm:$0xff]
        %v3798 = vld [vmem:[#allocation2 + $0xa0] sm:$0xff]
        %v3799 = vld [vmem:[#allocation2 + $0xa8] sm:$0xff]
        %v3800 = vld [vmem:[#allocation2 + $0xb0] sm:$0xff]
        %v3801 = vld [vmem:[#allocation2 + $0xb8] sm:$0xff]
        %v3802 = vld [vmem:[#allocation2 + $0xc0] sm:$0xff]
        %v3803 = vld [vmem:[#allocation2 + $0xc8] sm:$0xff]
        %v3804 = vld [vmem:[#allocation2 + $0xd0] sm:$0xff]
        %v3805 = vld [vmem:[#allocation2 + $0xd8] sm:$0xff]
        %v3806 = vadd.f32 %v3778, %v3640
        %v3807 = vadd.f32 %v3779, %v3645
        %v3808 = vadd.f32 %v3780, %v3650
        %v3809 = vadd.f32 %v3781, %v3655
        %v3810 = vadd.f32 %v3782, %v3660
        %v3811 = vadd.f32 %v3783, %v3665
        %v3812 = vadd.f32 %v3784, %v3670
        %v3813 = vadd.f32 %v3785, %v3675
        %v3814 = vadd.f32 %v3786, %v3680
        %v3815 = vadd.f32 %v3787, %v3685
        %v3816 = vadd.f32 %v3788, %v3690
        %v3817 = vadd.f32 %v3789, %v3695
        %v3818 = vadd.f32 %v3790, %v3700
        %v3819 = vadd.f32 %v3791, %v3705
        %v3820 = vadd.f32 %v3792, %v3710
        %v3821 = vadd.f32 %v3793, %v3715
        %v3822 = vadd.f32 %v3794, %v3720
        %v3823 = vadd.f32 %v3795, %v3725
        %v3824 = vadd.f32 %v3796, %v3730
        %v3825 = vadd.f32 %v3797, %v3735
        %v3826 = vadd.f32 %v3798, %v3740
        %v3827 = vadd.f32 %v3799, %v3745
        %v3828 = vadd.f32 %v3800, %v3750
        %v3829 = vadd.f32 %v3801, %v3755
        %v3830 = vadd.f32 %v3802, %v3760
        %v3831 = vadd.f32 %v3803, %v3765
        %v3832 = vadd.f32 %v3804, %v3770
        %v3833 = vadd.f32 %v3805, %v3775
        %3834 = vst [vmem:[#allocation2] sm:$0xff] %v3806
        %3835 = vst [vmem:[#allocation2 + $0x8] sm:$0xff] %v3807
        %3836 = vst [vmem:[#allocation2 + $0x10] sm:$0xff] %v3808
        %3837 = vst [vmem:[#allocation2 + $0x18] sm:$0xff] %v3809
        %3838 = vst [vmem:[#allocation2 + $0x20] sm:$0xff] %v3810
        %3839 = vst [vmem:[#allocation2 + $0x28] sm:$0xff] %v3811
        %3840 = vst [vmem:[#allocation2 + $0x30] sm:$0xff] %v3812
        %3841 = vst [vmem:[#allocation2 + $0x38] sm:$0xff] %v3813
        %3842 = vst [vmem:[#allocation2 + $0x40] sm:$0xff] %v3814
        %3843 = vst [vmem:[#allocation2 + $0x48] sm:$0xff] %v3815
        %3844 = vst [vmem:[#allocation2 + $0x50] sm:$0xff] %v3816
        %3845 = vst [vmem:[#allocation2 + $0x58] sm:$0xff] %v3817
        %3846 = vst [vmem:[#allocation2 + $0x60] sm:$0xff] %v3818
        %3847 = vst [vmem:[#allocation2 + $0x68] sm:$0xff] %v3819
        %3848 = vst [vmem:[#allocation2 + $0x70] sm:$0xff] %v3820
        %3849 = vst [vmem:[#allocation2 + $0x78] sm:$0xff] %v3821
        %3850 = vst [vmem:[#allocation2 + $0x80] sm:$0xff] %v3822
        %3851 = vst [vmem:[#allocation2 + $0x88] sm:$0xff] %v3823
        %3852 = vst [vmem:[#allocation2 + $0x90] sm:$0xff] %v3824
        %3853 = vst [vmem:[#allocation2 + $0x98] sm:$0xff] %v3825
        %3854 = vst [vmem:[#allocation2 + $0xa0] sm:$0xff] %v3826
        %3855 = vst [vmem:[#allocation2 + $0xa8] sm:$0xff] %v3827
        %3856 = vst [vmem:[#allocation2 + $0xb0] sm:$0xff] %v3828
        %3857 = vst [vmem:[#allocation2 + $0xb8] sm:$0xff] %v3829
        %3858 = vst [vmem:[#allocation2 + $0xc0] sm:$0xff] %v3830
        %3859 = vst [vmem:[#allocation2 + $0xc8] sm:$0xff] %v3831
        %3860 = vst [vmem:[#allocation2 + $0xd0] sm:$0xff] %v3832
        %3861 = vst [vmem:[#allocation2 + $0xd8] sm:$0xff] %v3833
        %v3862 = vld [vmem:[#allocation2] sm:$0xff]
        %v3863 = vld [vmem:[#allocation2 + $0x8] sm:$0xff]
        %v3864 = vld [vmem:[#allocation2 + $0x10] sm:$0xff]
        %v3865 = vld [vmem:[#allocation2 + $0x18] sm:$0xff]
        %v3866 = vld [vmem:[#allocation2 + $0x20] sm:$0xff]
        %v3867 = vld [vmem:[#allocation2 + $0x28] sm:$0xff]
        %v3868 = vld [vmem:[#allocation2 + $0x30] sm:$0xff]
        %v3869 = vld [vmem:[#allocation2 + $0x38] sm:$0xff]
        %v3870 = vld [vmem:[#allocation2 + $0x40] sm:$0xff]
        %v3871 = vld [vmem:[#allocation2 + $0x48] sm:$0xff]
        %v3872 = vld [vmem:[#allocation2 + $0x50] sm:$0xff]
        %v3873 = vld [vmem:[#allocation2 + $0x58] sm:$0xff]
        %v3874 = vld [vmem:[#allocation2 + $0x60] sm:$0xff]
        %v3875 = vld [vmem:[#allocation2 + $0x68] sm:$0xff]
        %v3876 = vld [vmem:[#allocation2 + $0x70] sm:$0xff]
        %v3877 = vld [vmem:[#allocation2 + $0x78] sm:$0xff]
        %v3878 = vld [vmem:[#allocation2 + $0x80] sm:$0xff]
        %v3879 = vld [vmem:[#allocation2 + $0x88] sm:$0xff]
        %v3880 = vld [vmem:[#allocation2 + $0x90] sm:$0xff]
        %v3881 = vld [vmem:[#allocation2 + $0x98] sm:$0xff]
        %v3882 = vld [vmem:[#allocation2 + $0xa0] sm:$0xff]
        %v3883 = vld [vmem:[#allocation2 + $0xa8] sm:$0xff]
        %v3884 = vld [vmem:[#allocation2 + $0xb0] sm:$0xff]
        %v3885 = vld [vmem:[#allocation2 + $0xb8] sm:$0xff]
        %v3886 = vld [vmem:[#allocation2 + $0xc0] sm:$0xff]
        %v3887 = vld [vmem:[#allocation2 + $0xc8] sm:$0xff]
        %v3888 = vld [vmem:[#allocation2 + $0xd0] sm:$0xff]
        %v3889 = vld [vmem:[#allocation2 + $0xd8] sm:$0xff]
        %v3890 = vld [vmem:[%s2] sm:$0x1]
        %v3892 = vlaneseq
        %v3893 = vshrl.u32 %v3892, 7
        %v3894 = vsub.s32 0, %v3893
        %v3895 = vrot.slane %v3890, %v3894
        %v3897 = vadd.f32 %v3862, %v3895
        %v3898 = vadd.f32 %v3863, %v3895
        %v3899 = vadd.f32 %v3864, %v3895
        %v3900 = vadd.f32 %v3865, %v3895
        %v3901 = vadd.f32 %v3866, %v3895
        %v3902 = vadd.f32 %v3867, %v3895
        %v3903 = vadd.f32 %v3868, %v3895
        %v3904 = vadd.f32 %v3869, %v3895
        %v3905 = vadd.f32 %v3870, %v3895
        %v3906 = vadd.f32 %v3871, %v3895
        %v3907 = vadd.f32 %v3872, %v3895
        %v3908 = vadd.f32 %v3873, %v3895
        %v3909 = vadd.f32 %v3874, %v3895
        %v3910 = vadd.f32 %v3875, %v3895
        %v3911 = vadd.f32 %v3876, %v3895
        %v3912 = vadd.f32 %v3877, %v3895
        %v3913 = vadd.f32 %v3878, %v3895
        %v3914 = vadd.f32 %v3879, %v3895
        %v3915 = vadd.f32 %v3880, %v3895
        %v3916 = vadd.f32 %v3881, %v3895
        %v3917 = vadd.f32 %v3882, %v3895
        %v3918 = vadd.f32 %v3883, %v3895
        %v3919 = vadd.f32 %v3884, %v3895
        %v3920 = vadd.f32 %v3885, %v3895
        %v3921 = vadd.f32 %v3886, %v3895
        %v3922 = vadd.f32 %v3887, %v3895
        %v3923 = vadd.f32 %v3888, %v3895
        %v3924 = vadd.f32 %v3889, %v3895
        %v3925 = vmax.f32 %v3897, 0.0
        %v3926 = vmax.f32 %v3898, 0.0
        %v3927 = vmax.f32 %v3899, 0.0
        %v3928 = vmax.f32 %v3900, 0.0
        %v3929 = vmax.f32 %v3901, 0.0
        %v3930 = vmax.f32 %v3902, 0.0
        %v3931 = vmax.f32 %v3903, 0.0
        %v3932 = vmax.f32 %v3904, 0.0
        %v3933 = vmax.f32 %v3905, 0.0
        %v3934 = vmax.f32 %v3906, 0.0
        %v3935 = vmax.f32 %v3907, 0.0
        %v3936 = vmax.f32 %v3908, 0.0
        %v3937 = vmax.f32 %v3909, 0.0
        %v3938 = vmax.f32 %v3910, 0.0
        %v3939 = vmax.f32 %v3911, 0.0
        %v3940 = vmax.f32 %v3912, 0.0
        %v3941 = vmax.f32 %v3913, 0.0
        %v3942 = vmax.f32 %v3914, 0.0
        %v3943 = vmax.f32 %v3915, 0.0
        %v3944 = vmax.f32 %v3916, 0.0
        %v3945 = vmax.f32 %v3917, 0.0
        %v3946 = vmax.f32 %v3918, 0.0
        %v3947 = vmax.f32 %v3919, 0.0
        %v3948 = vmax.f32 %v3920, 0.0
        %v3949 = vmax.f32 %v3921, 0.0
        %v3950 = vmax.f32 %v3922, 0.0
        %v3951 = vmax.f32 %v3923, 0.0
        %v3952 = vmax.f32 %v3924, 0.0
        %3953 = vst [vmem:[#allocation2] sm:$0xff] %v3925
        %3954 = vst [vmem:[#allocation2 + $0x8] sm:$0xff] %v3926
        %3955 = vst [vmem:[#allocation2 + $0x10] sm:$0xff] %v3927
        %3956 = vst [vmem:[#allocation2 + $0x18] sm:$0xff] %v3928
        %3957 = vst [vmem:[#allocation2 + $0x20] sm:$0xff] %v3929
        %3958 = vst [vmem:[#allocation2 + $0x28] sm:$0xff] %v3930
        %3959 = vst [vmem:[#allocation2 + $0x30] sm:$0xff] %v3931
        %3960 = vst [vmem:[#allocation2 + $0x38] sm:$0xff] %v3932
        %3961 = vst [vmem:[#allocation2 + $0x40] sm:$0xff] %v3933
        %3962 = vst [vmem:[#allocation2 + $0x48] sm:$0xff] %v3934
        %3963 = vst [vmem:[#allocation2 + $0x50] sm:$0xff] %v3935
        %3964 = vst [vmem:[#allocation2 + $0x58] sm:$0xff] %v3936
        %3965 = vst [vmem:[#allocation2 + $0x60] sm:$0xff] %v3937
        %3966 = vst [vmem:[#allocation2 + $0x68] sm:$0xff] %v3938
        %3967 = vst [vmem:[#allocation2 + $0x70] sm:$0xff] %v3939
        %3968 = vst [vmem:[#allocation2 + $0x78] sm:$0xff] %v3940
        %3969 = vst [vmem:[#allocation2 + $0x80] sm:$0xff] %v3941
        %3970 = vst [vmem:[#allocation2 + $0x88] sm:$0xff] %v3942
        %3971 = vst [vmem:[#allocation2 + $0x90] sm:$0xff] %v3943
        %3972 = vst [vmem:[#allocation2 + $0x98] sm:$0xff] %v3944
        %3973 = vst [vmem:[#allocation2 + $0xa0] sm:$0xff] %v3945
        %3974 = vst [vmem:[#allocation2 + $0xa8] sm:$0xff] %v3946
        %3975 = vst [vmem:[#allocation2 + $0xb0] sm:$0xff] %v3947
        %3976 = vst [vmem:[#allocation2 + $0xb8] sm:$0xff] %v3948
        %3977 = vst [vmem:[#allocation2 + $0xc0] sm:$0xff] %v3949
        %3978 = vst [vmem:[#allocation2 + $0xc8] sm:$0xff] %v3950
        %3979 = vst [vmem:[#allocation2 + $0xd0] sm:$0xff] %v3951
        %3980 = vst [vmem:[#allocation2 + $0xd8] sm:$0xff] %v3952
        %3981 = vst [vmem:[#allocation4] sm:$0xff] 0.0
        %3982 = vst [vmem:[#allocation4 + $0x8] sm:$0xff] 0.0
        %3983 = vst [vmem:[#allocation4 + $0x10] sm:$0xff] 0.0
        %3984 = vst [vmem:[#allocation4 + $0x18] sm:$0xff] 0.0
        %3985 = vst [vmem:[#allocation4 + $0x20] sm:$0xff] 0.0
        %3986 = vst [vmem:[#allocation4 + $0x28] sm:$0xff] 0.0
        %3987 = vst [vmem:[#allocation4 + $0x30] sm:$0xff] 0.0
        %v3988 = vld [vmem:[#allocation2] sm:$0xff]
        %v3989 = vld [vmem:[#allocation2 + $0x8] sm:$0x3f]
        %v3990 = vld [vmem:[#allocation2 + $0x10] sm:$0xff]
        %v3991 = vld [vmem:[#allocation2 + $0x18] sm:$0x3f]
        %v3992 = vmax.f32 %v3988, %v3990
        %v3993 = vmax.f32 %v3989, %v3991
        %v3995 = vrot.slane %v3992, 1
        %v3997 = vmax.f32 %v3992, %v3995
        %3998 = vst [vmem:[#allocation4] sm:$0x1] %v3997
        %3999 = vst [vmem:[#allocation4 - $0x1] sm:$0x4] %v3997
        %4000 = vst [vmem:[#allocation4 - $0x2] sm:$0x10] %v3997
        %4001 = vst [vmem:[#allocation4 - $0x3] sm:$0x40] %v3997
        %v4003 = vrot.slane %v3993, 1
        %v4005 = vmax.f32 %v3993, %v4003
        %4006 = vst [vmem:[#allocation4 + $0x4] sm:$0x1] %v4005
        %4007 = vst [vmem:[#allocation4 + $0x3] sm:$0x4] %v4005
        %4008 = vst [vmem:[#allocation4 + $0x2] sm:$0x10] %v4005
        %v4009 = vld [vmem:[#allocation2 + $0x20] sm:$0xff]
        %v4010 = vld [vmem:[#allocation2 + $0x28] sm:$0x3f]
        %v4011 = vld [vmem:[#allocation2 + $0x30] sm:$0xff]
        %v4012 = vld [vmem:[#allocation2 + $0x38] sm:$0x3f]
        %v4013 = vmax.f32 %v4009, %v4011
        %v4014 = vmax.f32 %v4010, %v4012
        %v4016 = vrot.slane %v4013, 1
        %v4018 = vmax.f32 %v4013, %v4016
        %4019 = vst [vmem:[#allocation4 + $0x7] sm:$0x1] %v4018
        %4020 = vst [vmem:[#allocation4 + $0x6] sm:$0x4] %v4018
        %4021 = vst [vmem:[#allocation4 + $0x5] sm:$0x10] %v4018
        %4022 = vst [vmem:[#allocation4 + $0x4] sm:$0x40] %v4018
        %v4024 = vrot.slane %v4014, 1
        %v4026 = vmax.f32 %v4014, %v4024
        %4027 = vst [vmem:[#allocation4 + $0xb] sm:$0x1] %v4026
        %4028 = vst [vmem:[#allocation4 + $0xa] sm:$0x4] %v4026
        %4029 = vst [vmem:[#allocation4 + $0x9] sm:$0x10] %v4026
        %v4030 = vld [vmem:[#allocation2 + $0x40] sm:$0xff]
        %v4031 = vld [vmem:[#allocation2 + $0x48] sm:$0x3f]
        %v4032 = vld [vmem:[#allocation2 + $0x50] sm:$0xff]
        %v4033 = vld [vmem:[#allocation2 + $0x58] sm:$0x3f]
        %v4034 = vmax.f32 %v4030, %v4032
        %v4035 = vmax.f32 %v4031, %v4033
        %v4037 = vrot.slane %v4034, 1
        %v4039 = vmax.f32 %v4034, %v4037
        %4040 = vst [vmem:[#allocation4 + $0xe] sm:$0x1] %v4039
        %4041 = vst [vmem:[#allocation4 + $0xd] sm:$0x4] %v4039
        %4042 = vst [vmem:[#allocation4 + $0xc] sm:$0x10] %v4039
        %4043 = vst [vmem:[#allocation4 + $0xb] sm:$0x40] %v4039
        %v4045 = vrot.slane %v4035, 1
        %v4047 = vmax.f32 %v4035, %v4045
        %4048 = vst [vmem:[#allocation4 + $0x12] sm:$0x1] %v4047
        %4049 = vst [vmem:[#allocation4 + $0x11] sm:$0x4] %v4047
        %4050 = vst [vmem:[#allocation4 + $0x10] sm:$0x10] %v4047
        %v4051 = vld [vmem:[#allocation2 + $0x60] sm:$0xff]
        %v4052 = vld [vmem:[#allocation2 + $0x68] sm:$0x3f]
        %v4053 = vld [vmem:[#allocation2 + $0x70] sm:$0xff]
        %v4054 = vld [vmem:[#allocation2 + $0x78] sm:$0x3f]
        %v4055 = vmax.f32 %v4051, %v4053
        %v4056 = vmax.f32 %v4052, %v4054
        %v4058 = vrot.slane %v4055, 1
        %v4060 = vmax.f32 %v4055, %v4058
        %4061 = vst [vmem:[#allocation4 + $0x15] sm:$0x1] %v4060
        %4062 = vst [vmem:[#allocation4 + $0x14] sm:$0x4] %v4060
        %4063 = vst [vmem:[#allocation4 + $0x13] sm:$0x10] %v4060
        %4064 = vst [vmem:[#allocation4 + $0x12] sm:$0x40] %v4060
        %v4066 = vrot.slane %v4056, 1
        %v4068 = vmax.f32 %v4056, %v4066
        %4069 = vst [vmem:[#allocation4 + $0x19] sm:$0x1] %v4068
        %4070 = vst [vmem:[#allocation4 + $0x18] sm:$0x4] %v4068
        %4071 = vst [vmem:[#allocation4 + $0x17] sm:$0x10] %v4068
        %v4072 = vld [vmem:[#allocation2 + $0x80] sm:$0xff]
        %v4073 = vld [vmem:[#allocation2 + $0x88] sm:$0x3f]
        %v4074 = vld [vmem:[#allocation2 + $0x90] sm:$0xff]
        %v4075 = vld [vmem:[#allocation2 + $0x98] sm:$0x3f]
        %v4076 = vmax.f32 %v4072, %v4074
        %v4077 = vmax.f32 %v4073, %v4075
        %v4079 = vrot.slane %v4076, 1
        %v4081 = vmax.f32 %v4076, %v4079
        %4082 = vst [vmem:[#allocation4 + $0x1c] sm:$0x1] %v4081
        %4083 = vst [vmem:[#allocation4 + $0x1b] sm:$0x4] %v4081
        %4084 = vst [vmem:[#allocation4 + $0x1a] sm:$0x10] %v4081
        %4085 = vst [vmem:[#allocation4 + $0x19] sm:$0x40] %v4081
        %v4087 = vrot.slane %v4077, 1
        %v4089 = vmax.f32 %v4077, %v4087
        %4090 = vst [vmem:[#allocation4 + $0x20] sm:$0x1] %v4089
        %4091 = vst [vmem:[#allocation4 + $0x1f] sm:$0x4] %v4089
        %4092 = vst [vmem:[#allocation4 + $0x1e] sm:$0x10] %v4089
        %v4093 = vld [vmem:[#allocation2 + $0xa0] sm:$0xff]
        %v4094 = vld [vmem:[#allocation2 + $0xa8] sm:$0x3f]
        %v4095 = vld [vmem:[#allocation2 + $0xb0] sm:$0xff]
        %v4096 = vld [vmem:[#allocation2 + $0xb8] sm:$0x3f]
        %v4097 = vmax.f32 %v4093, %v4095
        %v4098 = vmax.f32 %v4094, %v4096
        %v4100 = vrot.slane %v4097, 1
        %v4102 = vmax.f32 %v4097, %v4100
        %4103 = vst [vmem:[#allocation4 + $0x23] sm:$0x1] %v4102
        %4104 = vst [vmem:[#allocation4 + $0x22] sm:$0x4] %v4102
        %4105 = vst [vmem:[#allocation4 + $0x21] sm:$0x10] %v4102
        %4106 = vst [vmem:[#allocation4 + $0x20] sm:$0x40] %v4102
        %v4108 = vrot.slane %v4098, 1
        %v4110 = vmax.f32 %v4098, %v4108
        %4111 = vst [vmem:[#allocation4 + $0x27] sm:$0x1] %v4110
        %4112 = vst [vmem:[#allocation4 + $0x26] sm:$0x4] %v4110
        %4113 = vst [vmem:[#allocation4 + $0x25] sm:$0x10] %v4110
        %v4114 = vld [vmem:[#allocation2 + $0xc0] sm:$0xff]
        %v4115 = vld [vmem:[#allocation2 + $0xc8] sm:$0x3f]
        %v4116 = vld [vmem:[#allocation2 + $0xd0] sm:$0xff]
        %v4117 = vld [vmem:[#allocation2 + $0xd8] sm:$0x3f]
        %v4118 = vmax.f32 %v4114, %v4116
        %v4119 = vmax.f32 %v4115, %v4117
        %v4121 = vrot.slane %v4118, 1
        %v4123 = vmax.f32 %v4118, %v4121
        %4124 = vst [vmem:[#allocation4 + $0x2a] sm:$0x1] %v4123
        %4125 = vst [vmem:[#allocation4 + $0x29] sm:$0x4] %v4123
        %4126 = vst [vmem:[#allocation4 + $0x28] sm:$0x10] %v4123
        %4127 = vst [vmem:[#allocation4 + $0x27] sm:$0x40] %v4123
        %v4129 = vrot.slane %v4119, 1
        %v4131 = vmax.f32 %v4119, %v4129
        %4132 = vst [vmem:[#allocation4 + $0x2e] sm:$0x1] %v4131
        %4133 = vst [vmem:[#allocation4 + $0x2d] sm:$0x4] %v4131
        %4134 = vst [vmem:[#allocation4 + $0x2c] sm:$0x10] %v4131
        %v4135 = vld [vmem:[#allocation4] sm:$0xff]
        %v4136 = vld [vmem:[#allocation4 + $0x8] sm:$0xff]
        %v4137 = vld [vmem:[#allocation4 + $0x10] sm:$0xff]
        %v4138 = vld [vmem:[#allocation4 + $0x18] sm:$0xff]
        %v4139 = vld [vmem:[#allocation4 + $0x20] sm:$0x7]
        %v4140 = vld [vmem:[%s3] sm:$0xff]
        %v4141 = vld [vmem:[%s3 + $0x8] sm:$0xff]
        %v4142 = vld [vmem:[%s3 + $0x10] sm:$0xff]
        %v4143 = vld [vmem:[%s3 + $0x18] sm:$0xff]
        %v4144 = vld [vmem:[%s3 + $0x20] sm:$0xff]
        %v4145 = vld [vmem:[%s3 + $0x28] sm:$0xff]
        %v4146 = vld [vmem:[%s3 + $0x30] sm:$0xff]
        %v4147 = vld [vmem:[%s3 + $0x38] sm:$0xff]
        %v4148 = vld [vmem:[%s3 + $0x40] sm:$0xff]
        %v4149 = vld [vmem:[%s3 + $0x48] sm:$0xff]
        %v4150 = vld [vmem:[%s3 + $0x50] sm:$0xff]
        %v4151 = vld [vmem:[%s3 + $0x58] sm:$0xff]
        %v4152 = vld [vmem:[%s3 + $0x60] sm:$0xff]
        %v4153 = vld [vmem:[%s3 + $0x68] sm:$0xff]
        %v4154 = vld [vmem:[%s3 + $0x70] sm:$0xff]
        %v4155 = vld [vmem:[%s3 + $0x78] sm:$0xff]
        %4156 = vmatprep.subr.mxu0 0.0
        %4157 = vmatpush1.msra.mxu0 %v4140
        %4158 = vmatprep.subr.mxu0 0.0
        %4159 = vmatpush1.msra.mxu0 %v4141
        %4160 = vmatprep.subr.mxu0 0.0
        %4161 = vmatpush1.msra.mxu0 %v4142
        %4162 = vmatprep.subr.mxu0 0.0
        %4163 = vmatpush1.msra.mxu0 %v4143
        %4164 = vmatprep.subr.mxu0 0.0
        %4165 = vmatpush1.msra.mxu0 %v4144
        %4166 = vmatprep.subr.mxu0 0.0
        %4167 = vmatpush1.msra.mxu0 %v4145
        %4168 = vmatprep.subr.mxu0 0.0
        %4169 = vmatpush1.msra.mxu0 %v4146
        %4170 = vmatprep.subr.mxu0 0.0
        %4171 = vmatpush1.msra.mxu0 %v4147
        %4172 = vmatprep.subr.mxu0 0.0
        %4173 = vmatpush1.msra.mxu0 %v4148
        %4174 = vmatprep.subr.mxu0 0.0
        %4175 = vmatpush1.msra.mxu0 %v4149
        %4176 = vmatprep.subr.mxu0 0.0
        %4177 = vmatpush1.msra.mxu0 %v4150
        %4178 = vmatprep.subr.mxu0 0.0
        %4179 = vmatpush1.msra.mxu0 %v4151
        %4180 = vmatprep.subr.mxu0 0.0
        %4181 = vmatpush1.msra.mxu0 %v4152
        %4182 = vmatprep.subr.mxu0 0.0
        %4183 = vmatpush1.msra.mxu0 %v4153
        %4184 = vmatprep.subr.mxu0 0.0
        %4185 = vmatpush1.msra.mxu0 %v4154
        %4186 = vmatprep.subr.mxu0 0.0
        %4187 = vmatpush1.msra.mxu0 %v4155
        %4188 = vmatprep.subr.mxu0 0.0
        %4189 = vmatpush1.msra.mxu0 0.0
        %4190 = vmatprep.subr.mxu0 0.0
        %4191 = vmatpush1.msra.mxu0 0.0
        %4192 = vmatprep.subr.mxu0 0.0
        %4193 = vmatpush1.msra.mxu0 0.0
        %4194 = vmatprep.subr.mxu0 0.0
        %4195 = vmatpush1.msra.mxu0 0.0
        %4196 = vmatprep.subr.mxu0 0.0
        %4197 = vmatpush1.msra.mxu0 0.0
        %4198 = vmatprep.subr.mxu0 0.0
        %4199 = vmatpush1.msra.mxu0 0.0
        %4200 = vmatprep.subr.mxu0 0.0
        %4201 = vmatpush1.msra.mxu0 0.0
        %4202 = vmatprep.subr.mxu0 0.0
        %4203 = vmatpush1.msra.mxu0 0.0
        %4204 = vmatprep.subr.mxu0 0.0
        %4205 = vmatpush1.msra.mxu0 0.0
        %4206 = vmatprep.subr.mxu0 0.0
        %4207 = vmatpush1.msra.mxu0 0.0
        %4208 = vmatprep.subr.mxu0 0.0
        %4209 = vmatpush1.msra.mxu0 0.0
        %4210 = vmatprep.subr.mxu0 0.0
        %4211 = vmatpush1.msra.mxu0 0.0
        %4212 = vmatprep.subr.mxu0 0.0
        %4213 = vmatpush1.msra.mxu0 0.0
        %4214 = vmatprep.subr.mxu0 0.0
        %4215 = vmatpush1.msra.mxu0 0.0
        %4216 = vmatprep.subr.mxu0 0.0
        %4217 = vmatpush1.msra.mxu0 0.0
        %4218 = vmatprep.subr.mxu0 0.0
        %4219 = vmatpush1.msra.mxu0 0.0
        %4220 = vmatprep.mubr.f32.mxu0 0.0
        %4221 = vmatmul.mubr.f32.gmra.mrb[0].mxu0 %v4135
        %v4222 = vpop.f32.mrb[0].mxu0
        %v4223 = vadd.f32 0.0, %v4222
        %v4224 = vpop.f32.mrb[0].mxu0
        %4225 = vmatprep.mubr.f32.mxu0 0.0
        %4226 = vmatmul.mubr.f32.gmra.mrb[0].mxu0 %v4136
        %v4227 = vpop.f32.mrb[0].mxu0
        %v4228 = vadd.f32 0.0, %v4227
        %v4229 = vpop.f32.mrb[0].mxu0
        %4230 = vmatprep.mubr.f32.mxu0 0.0
        %4231 = vmatmul.mubr.f32.gmra.mrb[0].mxu0 %v4137
        %v4232 = vpop.f32.mrb[0].mxu0
        %v4233 = vadd.f32 0.0, %v4232
        %v4234 = vpop.f32.mrb[0].mxu0
        %4235 = vmatprep.mubr.f32.mxu0 0.0
        %4236 = vmatmul.mubr.f32.gmra.mrb[0].mxu0 %v4138
        %v4237 = vpop.f32.mrb[0].mxu0
        %v4238 = vadd.f32 0.0, %v4237
        %v4239 = vpop.f32.mrb[0].mxu0
        %4240 = vmatprep.mubr.f32.mxu0 0.0
        %4241 = vmatmul.mubr.f32.gmra.mrb[0].mxu0 %v4139
        %v4242 = vpop.f32.mrb[0].mxu0
        %v4243 = vadd.f32 0.0, %v4242
        %v4244 = vpop.f32.mrb[0].mxu0
        %4245 = vdwg.mxu0
        %4246 = vst [vmem:[#allocation3] sm:$0xff] %v4223
        %4247 = vst [vmem:[#allocation3 + $0x8] sm:$0xff] %v4228
        %4248 = vst [vmem:[#allocation3 + $0x10] sm:$0xff] %v4233
        %4249 = vst [vmem:[#allocation3 + $0x18] sm:$0xff] %v4238
        %4250 = vst [vmem:[#allocation3 + $0x20] sm:$0x7] %v4243
        %v4251 = vld [vmem:[#allocation4 + $0x1] sm:$0xff]
        %v4252 = vld [vmem:[#allocation4 + $0x9] sm:$0xff]
        %v4253 = vld [vmem:[#allocation4 + $0x11] sm:$0xff]
        %v4254 = vld [vmem:[#allocation4 + $0x19] sm:$0xff]
        %v4255 = vld [vmem:[#allocation4 + $0x21] sm:$0x7]
        %s4256 = scalar_lea.vmem %s3, 128
        %v4257 = vld [vmem:[%s4256] sm:$0xff]
        %v4258 = vld [vmem:[%s4256 + $0x8] sm:$0xff]
        %v4259 = vld [vmem:[%s4256 + $0x10] sm:$0xff]
        %v4260 = vld [vmem:[%s4256 + $0x18] sm:$0xff]
        %v4261 = vld [vmem:[%s4256 + $0x20] sm:$0xff]
        %v4262 = vld [vmem:[%s4256 + $0x28] sm:$0xff]
        %v4263 = vld [vmem:[%s4256 + $0x30] sm:$0xff]
        %v4264 = vld [vmem:[%s4256 + $0x38] sm:$0xff]
        %v4265 = vld [vmem:[%s4256 + $0x40] sm:$0xff]
        %v4266 = vld [vmem:[%s4256 + $0x48] sm:$0xff]
        %v4267 = vld [vmem:[%s4256 + $0x50] sm:$0xff]
        %v4268 = vld [vmem:[%s4256 + $0x58] sm:$0xff]
        %v4269 = vld [vmem:[%s4256 + $0x60] sm:$0xff]
        %v4270 = vld [vmem:[%s4256 + $0x68] sm:$0xff]
        %v4271 = vld [vmem:[%s4256 + $0x70] sm:$0xff]
        %v4272 = vld [vmem:[%s4256 + $0x78] sm:$0xff]
        %4273 = vmatprep.subr.mxu0 0.0
        %4274 = vmatpush1.msra.mxu0 %v4257
        %4275 = vmatprep.subr.mxu0 0.0
        %4276 = vmatpush1.msra.mxu0 %v4258
        %4277 = vmatprep.subr.mxu0 0.0
        %4278 = vmatpush1.msra.mxu0 %v4259
        %4279 = vmatprep.subr.mxu0 0.0
        %4280 = vmatpush1.msra.mxu0 %v4260
        %4281 = vmatprep.subr.mxu0 0.0
        %4282 = vmatpush1.msra.mxu0 %v4261
        %4283 = vmatprep.subr.mxu0 0.0
        %4284 = vmatpush1.msra.mxu0 %v4262
        %4285 = vmatprep.subr.mxu0 0.0
        %4286 = vmatpush1.msra.mxu0 %v4263
        %4287 = vmatprep.subr.mxu0 0.0
        %4288 = vmatpush1.msra.mxu0 %v4264
        %4289 = vmatprep.subr.mxu0 0.0
        %4290 = vmatpush1.msra.mxu0 %v4265
        %4291 = vmatprep.subr.mxu0 0.0
        %4292 = vmatpush1.msra.mxu0 %v4266
        %4293 = vmatprep.subr.mxu0 0.0
        %4294 = vmatpush1.msra.mxu0 %v4267
        %4295 = vmatprep.subr.mxu0 0.0
        %4296 = vmatpush1.msra.mxu0 %v4268
        %4297 = vmatprep.subr.mxu0 0.0
        %4298 = vmatpush1.msra.mxu0 %v4269
        %4299 = vmatprep.subr.mxu0 0.0
        %4300 = vmatpush1.msra.mxu0 %v4270
        %4301 = vmatprep.subr.mxu0 0.0
        %4302 = vmatpush1.msra.mxu0 %v4271
        %4303 = vmatprep.subr.mxu0 0.0
        %4304 = vmatpush1.msra.mxu0 %v4272
        %4305 = vmatprep.subr.mxu0 0.0
        %4306 = vmatpush1.msra.mxu0 0.0
        %4307 = vmatprep.subr.mxu0 0.0
        %4308 = vmatpush1.msra.mxu0 0.0
        %4309 = vmatprep.subr.mxu0 0.0
        %4310 = vmatpush1.msra.mxu0 0.0
        %4311 = vmatprep.subr.mxu0 0.0
        %4312 = vmatpush1.msra.mxu0 0.0
        %4313 = vmatprep.subr.mxu0 0.0
        %4314 = vmatpush1.msra.mxu0 0.0
        %4315 = vmatprep.subr.mxu0 0.0
        %4316 = vmatpush1.msra.mxu0 0.0
        %4317 = vmatprep.subr.mxu0 0.0
        %4318 = vmatpush1.msra.mxu0 0.0
        %4319 = vmatprep.subr.mxu0 0.0
        %4320 = vmatpush1.msra.mxu0 0.0
        %4321 = vmatprep.subr.mxu0 0.0
        %4322 = vmatpush1.msra.mxu0 0.0
        %4323 = vmatprep.subr.mxu0 0.0
        %4324 = vmatpush1.msra.mxu0 0.0
        %4325 = vmatprep.subr.mxu0 0.0
        %4326 = vmatpush1.msra.mxu0 0.0
        %4327 = vmatprep.subr.mxu0 0.0
        %4328 = vmatpush1.msra.mxu0 0.0
        %4329 = vmatprep.subr.mxu0 0.0
        %4330 = vmatpush1.msra.mxu0 0.0
        %4331 = vmatprep.subr.mxu0 0.0
        %4332 = vmatpush1.msra.mxu0 0.0
        %4333 = vmatprep.subr.mxu0 0.0
        %4334 = vmatpush1.msra.mxu0 0.0
        %4335 = vmatprep.subr.mxu0 0.0
        %4336 = vmatpush1.msra.mxu0 0.0
        %4337 = vmatprep.mubr.f32.mxu0 0.0
        %4338 = vmatmul.mubr.f32.gmra.mrb[0].mxu0 %v4251
        %v4339 = vpop.f32.mrb[0].mxu0
        %v4340 = vadd.f32 0.0, %v4339
        %v4341 = vpop.f32.mrb[0].mxu0
        %4342 = vmatprep.mubr.f32.mxu0 0.0
        %4343 = vmatmul.mubr.f32.gmra.mrb[0].mxu0 %v4252
        %v4344 = vpop.f32.mrb[0].mxu0
        %v4345 = vadd.f32 0.0, %v4344
        %v4346 = vpop.f32.mrb[0].mxu0
        %4347 = vmatprep.mubr.f32.mxu0 0.0
        %4348 = vmatmul.mubr.f32.gmra.mrb[0].mxu0 %v4253
        %v4349 = vpop.f32.mrb[0].mxu0
        %v4350 = vadd.f32 0.0, %v4349
        %v4351 = vpop.f32.mrb[0].mxu0
        %4352 = vmatprep.mubr.f32.mxu0 0.0
        %4353 = vmatmul.mubr.f32.gmra.mrb[0].mxu0 %v4254
        %v4354 = vpop.f32.mrb[0].mxu0
        %v4355 = vadd.f32 0.0, %v4354
        %v4356 = vpop.f32.mrb[0].mxu0
        %4357 = vmatprep.mubr.f32.mxu0 0.0
        %4358 = vmatmul.mubr.f32.gmra.mrb[0].mxu0 %v4255
        %v4359 = vpop.f32.mrb[0].mxu0
        %v4360 = vadd.f32 0.0, %v4359
        %v4361 = vpop.f32.mrb[0].mxu0
        %4362 = vdwg.mxu0
        %v4363 = vld [vmem:[#allocation3] sm:$0xff]
        %v4364 = vld [vmem:[#allocation3 + $0x8] sm:$0xff]
        %v4365 = vld [vmem:[#allocation3 + $0x10] sm:$0xff]
        %v4366 = vld [vmem:[#allocation3 + $0x18] sm:$0xff]
        %v4367 = vld [vmem:[#allocation3 + $0x20] sm:$0x7]
        %v4368 = vadd.f32 %v4363, %v4340
        %v4369 = vadd.f32 %v4364, %v4345
        %v4370 = vadd.f32 %v4365, %v4350
        %v4371 = vadd.f32 %v4366, %v4355
        %v4372 = vadd.f32 %v4367, %v4360
        %4373 = vst [vmem:[#allocation3] sm:$0xff] %v4368
        %4374 = vst [vmem:[#allocation3 + $0x8] sm:$0xff] %v4369
        %4375 = vst [vmem:[#allocation3 + $0x10] sm:$0xff] %v4370
        %4376 = vst [vmem:[#allocation3 + $0x18] sm:$0xff] %v4371
        %4377 = vst [vmem:[#allocation3 + $0x20] sm:$0x7] %v4372
        %v4378 = vld [vmem:[#allocation4 + $0x2] sm:$0xff]
        %v4379 = vld [vmem:[#allocation4 + $0xa] sm:$0xff]
        %v4380 = vld [vmem:[#allocation4 + $0x12] sm:$0xff]
        %v4381 = vld [vmem:[#allocation4 + $0x1a] sm:$0xff]
        %v4382 = vld [vmem:[#allocation4 + $0x22] sm:$0x7]
        %s4383 = scalar_lea.vmem %s3, 256
        %v4384 = vld [vmem:[%s4383] sm:$0xff]
        %v4385 = vld [vmem:[%s4383 + $0x8] sm:$0xff]
        %v4386 = vld [vmem:[%s4383 + $0x10] sm:$0xff]
        %v4387 = vld [vmem:[%s4383 + $0x18] sm:$0xff]
        %v4388 = vld [vmem:[%s4383 + $0x20] sm:$0xff]
        %v4389 = vld [vmem:[%s4383 + $0x28] sm:$0xff]
        %v4390 = vld [vmem:[%s4383 + $0x30] sm:$0xff]
        %v4391 = vld [vmem:[%s4383 + $0x38] sm:$0xff]
        %v4392 = vld [vmem:[%s4383 + $0x40] sm:$0xff]
        %v4393 = vld [vmem:[%s4383 + $0x48] sm:$0xff]
        %v4394 = vld [vmem:[%s4383 + $0x50] sm:$0xff]
        %v4395 = vld [vmem:[%s4383 + $0x58] sm:$0xff]
        %v4396 = vld [vmem:[%s4383 + $0x60] sm:$0xff]
        %v4397 = vld [vmem:[%s4383 + $0x68] sm:$0xff]
        %v4398 = vld [vmem:[%s4383 + $0x70] sm:$0xff]
        %v4399 = vld [vmem:[%s4383 + $0x78] sm:$0xff]
        %4400 = vmatprep.subr.mxu0 0.0
        %4401 = vmatpush1.msra.mxu0 %v4384
        %4402 = vmatprep.subr.mxu0 0.0
        %4403 = vmatpush1.msra.mxu0 %v4385
        %4404 = vmatprep.subr.mxu0 0.0
        %4405 = vmatpush1.msra.mxu0 %v4386
        %4406 = vmatprep.subr.mxu0 0.0
        %4407 = vmatpush1.msra.mxu0 %v4387
        %4408 = vmatprep.subr.mxu0 0.0
        %4409 = vmatpush1.msra.mxu0 %v4388
        %4410 = vmatprep.subr.mxu0 0.0
        %4411 = vmatpush1.msra.mxu0 %v4389
        %4412 = vmatprep.subr.mxu0 0.0
        %4413 = vmatpush1.msra.mxu0 %v4390
        %4414 = vmatprep.subr.mxu0 0.0
        %4415 = vmatpush1.msra.mxu0 %v4391
        %4416 = vmatprep.subr.mxu0 0.0
        %4417 = vmatpush1.msra.mxu0 %v4392
        %4418 = vmatprep.subr.mxu0 0.0
        %4419 = vmatpush1.msra.mxu0 %v4393
        %4420 = vmatprep.subr.mxu0 0.0
        %4421 = vmatpush1.msra.mxu0 %v4394
        %4422 = vmatprep.subr.mxu0 0.0
        %4423 = vmatpush1.msra.mxu0 %v4395
        %4424 = vmatprep.subr.mxu0 0.0
        %4425 = vmatpush1.msra.mxu0 %v4396
        %4426 = vmatprep.subr.mxu0 0.0
        %4427 = vmatpush1.msra.mxu0 %v4397
        %4428 = vmatprep.subr.mxu0 0.0
        %4429 = vmatpush1.msra.mxu0 %v4398
        %4430 = vmatprep.subr.mxu0 0.0
        %4431 = vmatpush1.msra.mxu0 %v4399
        %4432 = vmatprep.subr.mxu0 0.0
        %4433 = vmatpush1.msra.mxu0 0.0
        %4434 = vmatprep.subr.mxu0 0.0
        %4435 = vmatpush1.msra.mxu0 0.0
        %4436 = vmatprep.subr.mxu0 0.0
        %4437 = vmatpush1.msra.mxu0 0.0
        %4438 = vmatprep.subr.mxu0 0.0
        %4439 = vmatpush1.msra.mxu0 0.0
        %4440 = vmatprep.subr.mxu0 0.0
        %4441 = vmatpush1.msra.mxu0 0.0
        %4442 = vmatprep.subr.mxu0 0.0
        %4443 = vmatpush1.msra.mxu0 0.0
        %4444 = vmatprep.subr.mxu0 0.0
        %4445 = vmatpush1.msra.mxu0 0.0
        %4446 = vmatprep.subr.mxu0 0.0
        %4447 = vmatpush1.msra.mxu0 0.0
        %4448 = vmatprep.subr.mxu0 0.0
        %4449 = vmatpush1.msra.mxu0 0.0
        %4450 = vmatprep.subr.mxu0 0.0
        %4451 = vmatpush1.msra.mxu0 0.0
        %4452 = vmatprep.subr.mxu0 0.0
        %4453 = vmatpush1.msra.mxu0 0.0
        %4454 = vmatprep.subr.mxu0 0.0
        %4455 = vmatpush1.msra.mxu0 0.0
        %4456 = vmatprep.subr.mxu0 0.0
        %4457 = vmatpush1.msra.mxu0 0.0
        %4458 = vmatprep.subr.mxu0 0.0
        %4459 = vmatpush1.msra.mxu0 0.0
        %4460 = vmatprep.subr.mxu0 0.0
        %4461 = vmatpush1.msra.mxu0 0.0
        %4462 = vmatprep.subr.mxu0 0.0
        %4463 = vmatpush1.msra.mxu0 0.0
        %4464 = vmatprep.mubr.f32.mxu0 0.0
        %4465 = vmatmul.mubr.f32.gmra.mrb[0].mxu0 %v4378
        %v4466 = vpop.f32.mrb[0].mxu0
        %v4467 = vadd.f32 0.0, %v4466
        %v4468 = vpop.f32.mrb[0].mxu0
        %4469 = vmatprep.mubr.f32.mxu0 0.0
        %4470 = vmatmul.mubr.f32.gmra.mrb[0].mxu0 %v4379
        %v4471 = vpop.f32.mrb[0].mxu0
        %v4472 = vadd.f32 0.0, %v4471
        %v4473 = vpop.f32.mrb[0].mxu0
        %4474 = vmatprep.mubr.f32.mxu0 0.0
        %4475 = vmatmul.mubr.f32.gmra.mrb[0].mxu0 %v4380
        %v4476 = vpop.f32.mrb[0].mxu0
        %v4477 = vadd.f32 0.0, %v4476
        %v4478 = vpop.f32.mrb[0].mxu0
        %4479 = vmatprep.mubr.f32.mxu0 0.0
        %4480 = vmatmul.mubr.f32.gmra.mrb[0].mxu0 %v4381
        %v4481 = vpop.f32.mrb[0].mxu0
        %v4482 = vadd.f32 0.0, %v4481
        %v4483 = vpop.f32.mrb[0].mxu0
        %4484 = vmatprep.mubr.f32.mxu0 0.0
        %4485 = vmatmul.mubr.f32.gmra.mrb[0].mxu0 %v4382
        %v4486 = vpop.f32.mrb[0].mxu0
        %v4487 = vadd.f32 0.0, %v4486
        %v4488 = vpop.f32.mrb[0].mxu0
        %4489 = vdwg.mxu0
        %v4490 = vld [vmem:[#allocation3] sm:$0xff]
        %v4491 = vld [vmem:[#allocation3 + $0x8] sm:$0xff]
        %v4492 = vld [vmem:[#allocation3 + $0x10] sm:$0xff]
        %v4493 = vld [vmem:[#allocation3 + $0x18] sm:$0xff]
        %v4494 = vld [vmem:[#allocation3 + $0x20] sm:$0x7]
        %v4495 = vadd.f32 %v4490, %v4467
        %v4496 = vadd.f32 %v4491, %v4472
        %v4497 = vadd.f32 %v4492, %v4477
        %v4498 = vadd.f32 %v4493, %v4482
        %v4499 = vadd.f32 %v4494, %v4487
        %4500 = vst [vmem:[#allocation3] sm:$0xff] %v4495
        %4501 = vst [vmem:[#allocation3 + $0x8] sm:$0xff] %v4496
        %4502 = vst [vmem:[#allocation3 + $0x10] sm:$0xff] %v4497
        %4503 = vst [vmem:[#allocation3 + $0x18] sm:$0xff] %v4498
        %4504 = vst [vmem:[#allocation3 + $0x20] sm:$0x7] %v4499
        %v4505 = vld [vmem:[#allocation4 + $0x7] sm:$0xff]
        %v4506 = vld [vmem:[#allocation4 + $0xf] sm:$0xff]
        %v4507 = vld [vmem:[#allocation4 + $0x17] sm:$0xff]
        %v4508 = vld [vmem:[#allocation4 + $0x1f] sm:$0xff]
        %v4509 = vld [vmem:[#allocation4 + $0x27] sm:$0x7]
        %s4510 = scalar_lea.vmem %s3, 384
        %v4511 = vld [vmem:[%s4510] sm:$0xff]
        %v4512 = vld [vmem:[%s4510 + $0x8] sm:$0xff]
        %v4513 = vld [vmem:[%s4510 + $0x10] sm:$0xff]
        %v4514 = vld [vmem:[%s4510 + $0x18] sm:$0xff]
        %v4515 = vld [vmem:[%s4510 + $0x20] sm:$0xff]
        %v4516 = vld [vmem:[%s4510 + $0x28] sm:$0xff]
        %v4517 = vld [vmem:[%s4510 + $0x30] sm:$0xff]
        %v4518 = vld [vmem:[%s4510 + $0x38] sm:$0xff]
        %v4519 = vld [vmem:[%s4510 + $0x40] sm:$0xff]
        %v4520 = vld [vmem:[%s4510 + $0x48] sm:$0xff]
        %v4521 = vld [vmem:[%s4510 + $0x50] sm:$0xff]
        %v4522 = vld [vmem:[%s4510 + $0x58] sm:$0xff]
        %v4523 = vld [vmem:[%s4510 + $0x60] sm:$0xff]
        %v4524 = vld [vmem:[%s4510 + $0x68] sm:$0xff]
        %v4525 = vld [vmem:[%s4510 + $0x70] sm:$0xff]
        %v4526 = vld [vmem:[%s4510 + $0x78] sm:$0xff]
        %4527 = vmatprep.subr.mxu0 0.0
        %4528 = vmatpush1.msra.mxu0 %v4511
        %4529 = vmatprep.subr.mxu0 0.0
        %4530 = vmatpush1.msra.mxu0 %v4512
        %4531 = vmatprep.subr.mxu0 0.0
        %4532 = vmatpush1.msra.mxu0 %v4513
        %4533 = vmatprep.subr.mxu0 0.0
        %4534 = vmatpush1.msra.mxu0 %v4514
        %4535 = vmatprep.subr.mxu0 0.0
        %4536 = vmatpush1.msra.mxu0 %v4515
        %4537 = vmatprep.subr.mxu0 0.0
        %4538 = vmatpush1.msra.mxu0 %v4516
        %4539 = vmatprep.subr.mxu0 0.0
        %4540 = vmatpush1.msra.mxu0 %v4517
        %4541 = vmatprep.subr.mxu0 0.0
        %4542 = vmatpush1.msra.mxu0 %v4518
        %4543 = vmatprep.subr.mxu0 0.0
        %4544 = vmatpush1.msra.mxu0 %v4519
        %4545 = vmatprep.subr.mxu0 0.0
        %4546 = vmatpush1.msra.mxu0 %v4520
        %4547 = vmatprep.subr.mxu0 0.0
        %4548 = vmatpush1.msra.mxu0 %v4521
        %4549 = vmatprep.subr.mxu0 0.0
        %4550 = vmatpush1.msra.mxu0 %v4522
        %4551 = vmatprep.subr.mxu0 0.0
        %4552 = vmatpush1.msra.mxu0 %v4523
        %4553 = vmatprep.subr.mxu0 0.0
        %4554 = vmatpush1.msra.mxu0 %v4524
        %4555 = vmatprep.subr.mxu0 0.0
        %4556 = vmatpush1.msra.mxu0 %v4525
        %4557 = vmatprep.subr.mxu0 0.0
        %4558 = vmatpush1.msra.mxu0 %v4526
        %4559 = vmatprep.subr.mxu0 0.0
        %4560 = vmatpush1.msra.mxu0 0.0
        %4561 = vmatprep.subr.mxu0 0.0
        %4562 = vmatpush1.msra.mxu0 0.0
        %4563 = vmatprep.subr.mxu0 0.0
        %4564 = vmatpush1.msra.mxu0 0.0
        %4565 = vmatprep.subr.mxu0 0.0
        %4566 = vmatpush1.msra.mxu0 0.0
        %4567 = vmatprep.subr.mxu0 0.0
        %4568 = vmatpush1.msra.mxu0 0.0
        %4569 = vmatprep.subr.mxu0 0.0
        %4570 = vmatpush1.msra.mxu0 0.0
        %4571 = vmatprep.subr.mxu0 0.0
        %4572 = vmatpush1.msra.mxu0 0.0
        %4573 = vmatprep.subr.mxu0 0.0
        %4574 = vmatpush1.msra.mxu0 0.0
        %4575 = vmatprep.subr.mxu0 0.0
        %4576 = vmatpush1.msra.mxu0 0.0
        %4577 = vmatprep.subr.mxu0 0.0
        %4578 = vmatpush1.msra.mxu0 0.0
        %4579 = vmatprep.subr.mxu0 0.0
        %4580 = vmatpush1.msra.mxu0 0.0
        %4581 = vmatprep.subr.mxu0 0.0
        %4582 = vmatpush1.msra.mxu0 0.0
        %4583 = vmatprep.subr.mxu0 0.0
        %4584 = vmatpush1.msra.mxu0 0.0
        %4585 = vmatprep.subr.mxu0 0.0
        %4586 = vmatpush1.msra.mxu0 0.0
        %4587 = vmatprep.subr.mxu0 0.0
        %4588 = vmatpush1.msra.mxu0 0.0
        %4589 = vmatprep.subr.mxu0 0.0
        %4590 = vmatpush1.msra.mxu0 0.0
        %4591 = vmatprep.mubr.f32.mxu0 0.0
        %4592 = vmatmul.mubr.f32.gmra.mrb[0].mxu0 %v4505
        %v4593 = vpop.f32.mrb[0].mxu0
        %v4594 = vadd.f32 0.0, %v4593
        %v4595 = vpop.f32.mrb[0].mxu0
        %4596 = vmatprep.mubr.f32.mxu0 0.0
        %4597 = vmatmul.mubr.f32.gmra.mrb[0].mxu0 %v4506
        %v4598 = vpop.f32.mrb[0].mxu0
        %v4599 = vadd.f32 0.0, %v4598
        %v4600 = vpop.f32.mrb[0].mxu0
        %4601 = vmatprep.mubr.f32.mxu0 0.0
        %4602 = vmatmul.mubr.f32.gmra.mrb[0].mxu0 %v4507
        %v4603 = vpop.f32.mrb[0].mxu0
        %v4604 = vadd.f32 0.0, %v4603
        %v4605 = vpop.f32.mrb[0].mxu0
        %4606 = vmatprep.mubr.f32.mxu0 0.0
        %4607 = vmatmul.mubr.f32.gmra.mrb[0].mxu0 %v4508
        %v4608 = vpop.f32.mrb[0].mxu0
        %v4609 = vadd.f32 0.0, %v4608
        %v4610 = vpop.f32.mrb[0].mxu0
        %4611 = vmatprep.mubr.f32.mxu0 0.0
        %4612 = vmatmul.mubr.f32.gmra.mrb[0].mxu0 %v4509
        %v4613 = vpop.f32.mrb[0].mxu0
        %v4614 = vadd.f32 0.0, %v4613
        %v4615 = vpop.f32.mrb[0].mxu0
        %4616 = vdwg.mxu0
        %v4617 = vld [vmem:[#allocation3] sm:$0xff]
        %v4618 = vld [vmem:[#allocation3 + $0x8] sm:$0xff]
        %v4619 = vld [vmem:[#allocation3 + $0x10] sm:$0xff]
        %v4620 = vld [vmem:[#allocation3 + $0x18] sm:$0xff]
        %v4621 = vld [vmem:[#allocation3 + $0x20] sm:$0x7]
        %v4622 = vadd.f32 %v4617, %v4594
        %v4623 = vadd.f32 %v4618, %v4599
        %v4624 = vadd.f32 %v4619, %v4604
        %v4625 = vadd.f32 %v4620, %v4609
        %v4626 = vadd.f32 %v4621, %v4614
        %4627 = vst [vmem:[#allocation3] sm:$0xff] %v4622
        %4628 = vst [vmem:[#allocation3 + $0x8] sm:$0xff] %v4623
        %4629 = vst [vmem:[#allocation3 + $0x10] sm:$0xff] %v4624
        %4630 = vst [vmem:[#allocation3 + $0x18] sm:$0xff] %v4625
        %4631 = vst [vmem:[#allocation3 + $0x20] sm:$0x7] %v4626
        %v4632 = vld [vmem:[#allocation4 + $0x8] sm:$0xff]
        %v4633 = vld [vmem:[#allocation4 + $0x10] sm:$0xff]
        %v4634 = vld [vmem:[#allocation4 + $0x18] sm:$0xff]
        %v4635 = vld [vmem:[#allocation4 + $0x20] sm:$0xff]
        %v4636 = vld [vmem:[#allocation4 + $0x28] sm:$0x7]
        %s4637 = scalar_lea.vmem %s3, 512
        %v4638 = vld [vmem:[%s4637] sm:$0xff]
        %v4639 = vld [vmem:[%s4637 + $0x8] sm:$0xff]
        %v4640 = vld [vmem:[%s4637 + $0x10] sm:$0xff]
        %v4641 = vld [vmem:[%s4637 + $0x18] sm:$0xff]
        %v4642 = vld [vmem:[%s4637 + $0x20] sm:$0xff]
        %v4643 = vld [vmem:[%s4637 + $0x28] sm:$0xff]
        %v4644 = vld [vmem:[%s4637 + $0x30] sm:$0xff]
        %v4645 = vld [vmem:[%s4637 + $0x38] sm:$0xff]
        %v4646 = vld [vmem:[%s4637 + $0x40] sm:$0xff]
        %v4647 = vld [vmem:[%s4637 + $0x48] sm:$0xff]
        %v4648 = vld [vmem:[%s4637 + $0x50] sm:$0xff]
        %v4649 = vld [vmem:[%s4637 + $0x58] sm:$0xff]
        %v4650 = vld [vmem:[%s4637 + $0x60] sm:$0xff]
        %v4651 = vld [vmem:[%s4637 + $0x68] sm:$0xff]
        %v4652 = vld [vmem:[%s4637 + $0x70] sm:$0xff]
        %v4653 = vld [vmem:[%s4637 + $0x78] sm:$0xff]
        %4654 = vmatprep.subr.mxu0 0.0
        %4655 = vmatpush1.msra.mxu0 %v4638
        %4656 = vmatprep.subr.mxu0 0.0
        %4657 = vmatpush1.msra.mxu0 %v4639
        %4658 = vmatprep.subr.mxu0 0.0
        %4659 = vmatpush1.msra.mxu0 %v4640
        %4660 = vmatprep.subr.mxu0 0.0
        %4661 = vmatpush1.msra.mxu0 %v4641
        %4662 = vmatprep.subr.mxu0 0.0
        %4663 = vmatpush1.msra.mxu0 %v4642
        %4664 = vmatprep.subr.mxu0 0.0
        %4665 = vmatpush1.msra.mxu0 %v4643
        %4666 = vmatprep.subr.mxu0 0.0
        %4667 = vmatpush1.msra.mxu0 %v4644
        %4668 = vmatprep.subr.mxu0 0.0
        %4669 = vmatpush1.msra.mxu0 %v4645
        %4670 = vmatprep.subr.mxu0 0.0
        %4671 = vmatpush1.msra.mxu0 %v4646
        %4672 = vmatprep.subr.mxu0 0.0
        %4673 = vmatpush1.msra.mxu0 %v4647
        %4674 = vmatprep.subr.mxu0 0.0
        %4675 = vmatpush1.msra.mxu0 %v4648
        %4676 = vmatprep.subr.mxu0 0.0
        %4677 = vmatpush1.msra.mxu0 %v4649
        %4678 = vmatprep.subr.mxu0 0.0
        %4679 = vmatpush1.msra.mxu0 %v4650
        %4680 = vmatprep.subr.mxu0 0.0
        %4681 = vmatpush1.msra.mxu0 %v4651
        %4682 = vmatprep.subr.mxu0 0.0
        %4683 = vmatpush1.msra.mxu0 %v4652
        %4684 = vmatprep.subr.mxu0 0.0
        %4685 = vmatpush1.msra.mxu0 %v4653
        %4686 = vmatprep.subr.mxu0 0.0
        %4687 = vmatpush1.msra.mxu0 0.0
        %4688 = vmatprep.subr.mxu0 0.0
        %4689 = vmatpush1.msra.mxu0 0.0
        %4690 = vmatprep.subr.mxu0 0.0
        %4691 = vmatpush1.msra.mxu0 0.0
        %4692 = vmatprep.subr.mxu0 0.0
        %4693 = vmatpush1.msra.mxu0 0.0
        %4694 = vmatprep.subr.mxu0 0.0
        %4695 = vmatpush1.msra.mxu0 0.0
        %4696 = vmatprep.subr.mxu0 0.0
        %4697 = vmatpush1.msra.mxu0 0.0
        %4698 = vmatprep.subr.mxu0 0.0
        %4699 = vmatpush1.msra.mxu0 0.0
        %4700 = vmatprep.subr.mxu0 0.0
        %4701 = vmatpush1.msra.mxu0 0.0
        %4702 = vmatprep.subr.mxu0 0.0
        %4703 = vmatpush1.msra.mxu0 0.0
        %4704 = vmatprep.subr.mxu0 0.0
        %4705 = vmatpush1.msra.mxu0 0.0
        %4706 = vmatprep.subr.mxu0 0.0
        %4707 = vmatpush1.msra.mxu0 0.0
        %4708 = vmatprep.subr.mxu0 0.0
        %4709 = vmatpush1.msra.mxu0 0.0
        %4710 = vmatprep.subr.mxu0 0.0
        %4711 = vmatpush1.msra.mxu0 0.0
        %4712 = vmatprep.subr.mxu0 0.0
        %4713 = vmatpush1.msra.mxu0 0.0
        %4714 = vmatprep.subr.mxu0 0.0
        %4715 = vmatpush1.msra.mxu0 0.0
        %4716 = vmatprep.subr.mxu0 0.0
        %4717 = vmatpush1.msra.mxu0 0.0
        %4718 = vmatprep.mubr.f32.mxu0 0.0
        %4719 = vmatmul.mubr.f32.gmra.mrb[0].mxu0 %v4632
        %v4720 = vpop.f32.mrb[0].mxu0
        %v4721 = vadd.f32 0.0, %v4720
        %v4722 = vpop.f32.mrb[0].mxu0
        %4723 = vmatprep.mubr.f32.mxu0 0.0
        %4724 = vmatmul.mubr.f32.gmra.mrb[0].mxu0 %v4633
        %v4725 = vpop.f32.mrb[0].mxu0
        %v4726 = vadd.f32 0.0, %v4725
        %v4727 = vpop.f32.mrb[0].mxu0
        %4728 = vmatprep.mubr.f32.mxu0 0.0
        %4729 = vmatmul.mubr.f32.gmra.mrb[0].mxu0 %v4634
        %v4730 = vpop.f32.mrb[0].mxu0
        %v4731 = vadd.f32 0.0, %v4730
        %v4732 = vpop.f32.mrb[0].mxu0
        %4733 = vmatprep.mubr.f32.mxu0 0.0
        %4734 = vmatmul.mubr.f32.gmra.mrb[0].mxu0 %v4635
        %v4735 = vpop.f32.mrb[0].mxu0
        %v4736 = vadd.f32 0.0, %v4735
        %v4737 = vpop.f32.mrb[0].mxu0
        %4738 = vmatprep.mubr.f32.mxu0 0.0
        %4739 = vmatmul.mubr.f32.gmra.mrb[0].mxu0 %v4636
        %v4740 = vpop.f32.mrb[0].mxu0
        %v4741 = vadd.f32 0.0, %v4740
        %v4742 = vpop.f32.mrb[0].mxu0
        %4743 = vdwg.mxu0
        %v4744 = vld [vmem:[#allocation3] sm:$0xff]
        %v4745 = vld [vmem:[#allocation3 + $0x8] sm:$0xff]
        %v4746 = vld [vmem:[#allocation3 + $0x10] sm:$0xff]
        %v4747 = vld [vmem:[#allocation3 + $0x18] sm:$0xff]
        %v4748 = vld [vmem:[#allocation3 + $0x20] sm:$0x7]
        %v4749 = vadd.f32 %v4744, %v4721
        %v4750 = vadd.f32 %v4745, %v4726
        %v4751 = vadd.f32 %v4746, %v4731
        %v4752 = vadd.f32 %v4747, %v4736
        %v4753 = vadd.f32 %v4748, %v4741
        %4754 = vst [vmem:[#allocation3] sm:$0xff] %v4749
        %4755 = vst [vmem:[#allocation3 + $0x8] sm:$0xff] %v4750
        %4756 = vst [vmem:[#allocation3 + $0x10] sm:$0xff] %v4751
        %4757 = vst [vmem:[#allocation3 + $0x18] sm:$0xff] %v4752
        %4758 = vst [vmem:[#allocation3 + $0x20] sm:$0x7] %v4753
        %v4759 = vld [vmem:[#allocation4 + $0x9] sm:$0xff]
        %v4760 = vld [vmem:[#allocation4 + $0x11] sm:$0xff]
        %v4761 = vld [vmem:[#allocation4 + $0x19] sm:$0xff]
        %v4762 = vld [vmem:[#allocation4 + $0x21] sm:$0xff]
        %v4763 = vld [vmem:[#allocation4 + $0x29] sm:$0x7]
        %s4764 = scalar_lea.vmem %s3, 640
        %v4765 = vld [vmem:[%s4764] sm:$0xff]
        %v4766 = vld [vmem:[%s4764 + $0x8] sm:$0xff]
        %v4767 = vld [vmem:[%s4764 + $0x10] sm:$0xff]
        %v4768 = vld [vmem:[%s4764 + $0x18] sm:$0xff]
        %v4769 = vld [vmem:[%s4764 + $0x20] sm:$0xff]
        %v4770 = vld [vmem:[%s4764 + $0x28] sm:$0xff]
        %v4771 = vld [vmem:[%s4764 + $0x30] sm:$0xff]
        %v4772 = vld [vmem:[%s4764 + $0x38] sm:$0xff]
        %v4773 = vld [vmem:[%s4764 + $0x40] sm:$0xff]
        %v4774 = vld [vmem:[%s4764 + $0x48] sm:$0xff]
        %v4775 = vld [vmem:[%s4764 + $0x50] sm:$0xff]
        %v4776 = vld [vmem:[%s4764 + $0x58] sm:$0xff]
        %v4777 = vld [vmem:[%s4764 + $0x60] sm:$0xff]
        %v4778 = vld [vmem:[%s4764 + $0x68] sm:$0xff]
        %v4779 = vld [vmem:[%s4764 + $0x70] sm:$0xff]
        %v4780 = vld [vmem:[%s4764 + $0x78] sm:$0xff]
        %4781 = vmatprep.subr.mxu0 0.0
        %4782 = vmatpush1.msra.mxu0 %v4765
        %4783 = vmatprep.subr.mxu0 0.0
        %4784 = vmatpush1.msra.mxu0 %v4766
        %4785 = vmatprep.subr.mxu0 0.0
        %4786 = vmatpush1.msra.mxu0 %v4767
        %4787 = vmatprep.subr.mxu0 0.0
        %4788 = vmatpush1.msra.mxu0 %v4768
        %4789 = vmatprep.subr.mxu0 0.0
        %4790 = vmatpush1.msra.mxu0 %v4769
        %4791 = vmatprep.subr.mxu0 0.0
        %4792 = vmatpush1.msra.mxu0 %v4770
        %4793 = vmatprep.subr.mxu0 0.0
        %4794 = vmatpush1.msra.mxu0 %v4771
        %4795 = vmatprep.subr.mxu0 0.0
        %4796 = vmatpush1.msra.mxu0 %v4772
        %4797 = vmatprep.subr.mxu0 0.0
        %4798 = vmatpush1.msra.mxu0 %v4773
        %4799 = vmatprep.subr.mxu0 0.0
        %4800 = vmatpush1.msra.mxu0 %v4774
        %4801 = vmatprep.subr.mxu0 0.0
        %4802 = vmatpush1.msra.mxu0 %v4775
        %4803 = vmatprep.subr.mxu0 0.0
        %4804 = vmatpush1.msra.mxu0 %v4776
        %4805 = vmatprep.subr.mxu0 0.0
        %4806 = vmatpush1.msra.mxu0 %v4777
        %4807 = vmatprep.subr.mxu0 0.0
        %4808 = vmatpush1.msra.mxu0 %v4778
        %4809 = vmatprep.subr.mxu0 0.0
        %4810 = vmatpush1.msra.mxu0 %v4779
        %4811 = vmatprep.subr.mxu0 0.0
        %4812 = vmatpush1.msra.mxu0 %v4780
        %4813 = vmatprep.subr.mxu0 0.0
        %4814 = vmatpush1.msra.mxu0 0.0
        %4815 = vmatprep.subr.mxu0 0.0
        %4816 = vmatpush1.msra.mxu0 0.0
        %4817 = vmatprep.subr.mxu0 0.0
        %4818 = vmatpush1.msra.mxu0 0.0
        %4819 = vmatprep.subr.mxu0 0.0
        %4820 = vmatpush1.msra.mxu0 0.0
        %4821 = vmatprep.subr.mxu0 0.0
        %4822 = vmatpush1.msra.mxu0 0.0
        %4823 = vmatprep.subr.mxu0 0.0
        %4824 = vmatpush1.msra.mxu0 0.0
        %4825 = vmatprep.subr.mxu0 0.0
        %4826 = vmatpush1.msra.mxu0 0.0
        %4827 = vmatprep.subr.mxu0 0.0
        %4828 = vmatpush1.msra.mxu0 0.0
        %4829 = vmatprep.subr.mxu0 0.0
        %4830 = vmatpush1.msra.mxu0 0.0
        %4831 = vmatprep.subr.mxu0 0.0
        %4832 = vmatpush1.msra.mxu0 0.0
        %4833 = vmatprep.subr.mxu0 0.0
        %4834 = vmatpush1.msra.mxu0 0.0
        %4835 = vmatprep.subr.mxu0 0.0
        %4836 = vmatpush1.msra.mxu0 0.0
        %4837 = vmatprep.subr.mxu0 0.0
        %4838 = vmatpush1.msra.mxu0 0.0
        %4839 = vmatprep.subr.mxu0 0.0
        %4840 = vmatpush1.msra.mxu0 0.0
        %4841 = vmatprep.subr.mxu0 0.0
        %4842 = vmatpush1.msra.mxu0 0.0
        %4843 = vmatprep.subr.mxu0 0.0
        %4844 = vmatpush1.msra.mxu0 0.0
        %4845 = vmatprep.mubr.f32.mxu0 0.0
        %4846 = vmatmul.mubr.f32.gmra.mrb[0].mxu0 %v4759
        %v4847 = vpop.f32.mrb[0].mxu0
        %v4848 = vadd.f32 0.0, %v4847
        %v4849 = vpop.f32.mrb[0].mxu0
        %4850 = vmatprep.mubr.f32.mxu0 0.0
        %4851 = vmatmul.mubr.f32.gmra.mrb[0].mxu0 %v4760
        %v4852 = vpop.f32.mrb[0].mxu0
        %v4853 = vadd.f32 0.0, %v4852
        %v4854 = vpop.f32.mrb[0].mxu0
        %4855 = vmatprep.mubr.f32.mxu0 0.0
        %4856 = vmatmul.mubr.f32.gmra.mrb[0].mxu0 %v4761
        %v4857 = vpop.f32.mrb[0].mxu0
        %v4858 = vadd.f32 0.0, %v4857
        %v4859 = vpop.f32.mrb[0].mxu0
        %4860 = vmatprep.mubr.f32.mxu0 0.0
        %4861 = vmatmul.mubr.f32.gmra.mrb[0].mxu0 %v4762
        %v4862 = vpop.f32.mrb[0].mxu0
        %v4863 = vadd.f32 0.0, %v4862
        %v4864 = vpop.f32.mrb[0].mxu0
        %4865 = vmatprep.mubr.f32.mxu0 0.0
        %4866 = vmatmul.mubr.f32.gmra.mrb[0].mxu0 %v4763
        %v4867 = vpop.f32.mrb[0].mxu0
        %v4868 = vadd.f32 0.0, %v4867
        %v4869 = vpop.f32.mrb[0].mxu0
        %4870 = vdwg.mxu0
        %v4871 = vld [vmem:[#allocation3] sm:$0xff]
        %v4872 = vld [vmem:[#allocation3 + $0x8] sm:$0xff]
        %v4873 = vld [vmem:[#allocation3 + $0x10] sm:$0xff]
        %v4874 = vld [vmem:[#allocation3 + $0x18] sm:$0xff]
        %v4875 = vld [vmem:[#allocation3 + $0x20] sm:$0x7]
        %v4876 = vadd.f32 %v4871, %v4848
        %v4877 = vadd.f32 %v4872, %v4853
        %v4878 = vadd.f32 %v4873, %v4858
        %v4879 = vadd.f32 %v4874, %v4863
        %v4880 = vadd.f32 %v4875, %v4868
        %4881 = vst [vmem:[#allocation3] sm:$0xff] %v4876
        %4882 = vst [vmem:[#allocation3 + $0x8] sm:$0xff] %v4877
        %4883 = vst [vmem:[#allocation3 + $0x10] sm:$0xff] %v4878
        %4884 = vst [vmem:[#allocation3 + $0x18] sm:$0xff] %v4879
        %4885 = vst [vmem:[#allocation3 + $0x20] sm:$0x7] %v4880
        %v4886 = vld [vmem:[#allocation4 + $0xe] sm:$0xff]
        %v4887 = vld [vmem:[#allocation4 + $0x16] sm:$0xff]
        %v4888 = vld [vmem:[#allocation4 + $0x1e] sm:$0xff]
        %v4889 = vld [vmem:[#allocation4 + $0x26] sm:$0xff]
        %v4890 = vld [vmem:[#allocation4 + $0x2e] sm:$0x7]
        %s4891 = scalar_lea.vmem %s3, 768
        %v4892 = vld [vmem:[%s4891] sm:$0xff]
        %v4893 = vld [vmem:[%s4891 + $0x8] sm:$0xff]
        %v4894 = vld [vmem:[%s4891 + $0x10] sm:$0xff]
        %v4895 = vld [vmem:[%s4891 + $0x18] sm:$0xff]
        %v4896 = vld [vmem:[%s4891 + $0x20] sm:$0xff]
        %v4897 = vld [vmem:[%s4891 + $0x28] sm:$0xff]
        %v4898 = vld [vmem:[%s4891 + $0x30] sm:$0xff]
        %v4899 = vld [vmem:[%s4891 + $0x38] sm:$0xff]
        %v4900 = vld [vmem:[%s4891 + $0x40] sm:$0xff]
        %v4901 = vld [vmem:[%s4891 + $0x48] sm:$0xff]
        %v4902 = vld [vmem:[%s4891 + $0x50] sm:$0xff]
        %v4903 = vld [vmem:[%s4891 + $0x58] sm:$0xff]
        %v4904 = vld [vmem:[%s4891 + $0x60] sm:$0xff]
        %v4905 = vld [vmem:[%s4891 + $0x68] sm:$0xff]
        %v4906 = vld [vmem:[%s4891 + $0x70] sm:$0xff]
        %v4907 = vld [vmem:[%s4891 + $0x78] sm:$0xff]
        %4908 = vmatprep.subr.mxu0 0.0
        %4909 = vmatpush1.msra.mxu0 %v4892
        %4910 = vmatprep.subr.mxu0 0.0
        %4911 = vmatpush1.msra.mxu0 %v4893
        %4912 = vmatprep.subr.mxu0 0.0
        %4913 = vmatpush1.msra.mxu0 %v4894
        %4914 = vmatprep.subr.mxu0 0.0
        %4915 = vmatpush1.msra.mxu0 %v4895
        %4916 = vmatprep.subr.mxu0 0.0
        %4917 = vmatpush1.msra.mxu0 %v4896
        %4918 = vmatprep.subr.mxu0 0.0
        %4919 = vmatpush1.msra.mxu0 %v4897
        %4920 = vmatprep.subr.mxu0 0.0
        %4921 = vmatpush1.msra.mxu0 %v4898
        %4922 = vmatprep.subr.mxu0 0.0
        %4923 = vmatpush1.msra.mxu0 %v4899
        %4924 = vmatprep.subr.mxu0 0.0
        %4925 = vmatpush1.msra.mxu0 %v4900
        %4926 = vmatprep.subr.mxu0 0.0
        %4927 = vmatpush1.msra.mxu0 %v4901
        %4928 = vmatprep.subr.mxu0 0.0
        %4929 = vmatpush1.msra.mxu0 %v4902
        %4930 = vmatprep.subr.mxu0 0.0
        %4931 = vmatpush1.msra.mxu0 %v4903
        %4932 = vmatprep.subr.mxu0 0.0
        %4933 = vmatpush1.msra.mxu0 %v4904
        %4934 = vmatprep.subr.mxu0 0.0
        %4935 = vmatpush1.msra.mxu0 %v4905
        %4936 = vmatprep.subr.mxu0 0.0
        %4937 = vmatpush1.msra.mxu0 %v4906
        %4938 = vmatprep.subr.mxu0 0.0
        %4939 = vmatpush1.msra.mxu0 %v4907
        %4940 = vmatprep.subr.mxu0 0.0
        %4941 = vmatpush1.msra.mxu0 0.0
        %4942 = vmatprep.subr.mxu0 0.0
        %4943 = vmatpush1.msra.mxu0 0.0
        %4944 = vmatprep.subr.mxu0 0.0
        %4945 = vmatpush1.msra.mxu0 0.0
        %4946 = vmatprep.subr.mxu0 0.0
        %4947 = vmatpush1.msra.mxu0 0.0
        %4948 = vmatprep.subr.mxu0 0.0
        %4949 = vmatpush1.msra.mxu0 0.0
        %4950 = vmatprep.subr.mxu0 0.0
        %4951 = vmatpush1.msra.mxu0 0.0
        %4952 = vmatprep.subr.mxu0 0.0
        %4953 = vmatpush1.msra.mxu0 0.0
        %4954 = vmatprep.subr.mxu0 0.0
        %4955 = vmatpush1.msra.mxu0 0.0
        %4956 = vmatprep.subr.mxu0 0.0
        %4957 = vmatpush1.msra.mxu0 0.0
        %4958 = vmatprep.subr.mxu0 0.0
        %4959 = vmatpush1.msra.mxu0 0.0
        %4960 = vmatprep.subr.mxu0 0.0
        %4961 = vmatpush1.msra.mxu0 0.0
        %4962 = vmatprep.subr.mxu0 0.0
        %4963 = vmatpush1.msra.mxu0 0.0
        %4964 = vmatprep.subr.mxu0 0.0
        %4965 = vmatpush1.msra.mxu0 0.0
        %4966 = vmatprep.subr.mxu0 0.0
        %4967 = vmatpush1.msra.mxu0 0.0
        %4968 = vmatprep.subr.mxu0 0.0
        %4969 = vmatpush1.msra.mxu0 0.0
        %4970 = vmatprep.subr.mxu0 0.0
        %4971 = vmatpush1.msra.mxu0 0.0
        %4972 = vmatprep.mubr.f32.mxu0 0.0
        %4973 = vmatmul.mubr.f32.gmra.mrb[0].mxu0 %v4886
        %v4974 = vpop.f32.mrb[0].mxu0
        %v4975 = vadd.f32 0.0, %v4974
        %v4976 = vpop.f32.mrb[0].mxu0
        %4977 = vmatprep.mubr.f32.mxu0 0.0
        %4978 = vmatmul.mubr.f32.gmra.mrb[0].mxu0 %v4887
        %v4979 = vpop.f32.mrb[0].mxu0
        %v4980 = vadd.f32 0.0, %v4979
        %v4981 = vpop.f32.mrb[0].mxu0
        %4982 = vmatprep.mubr.f32.mxu0 0.0
        %4983 = vmatmul.mubr.f32.gmra.mrb[0].mxu0 %v4888
        %v4984 = vpop.f32.mrb[0].mxu0
        %v4985 = vadd.f32 0.0, %v4984
        %v4986 = vpop.f32.mrb[0].mxu0
        %4987 = vmatprep.mubr.f32.mxu0 0.0
        %4988 = vmatmul.mubr.f32.gmra.mrb[0].mxu0 %v4889
        %v4989 = vpop.f32.mrb[0].mxu0
        %v4990 = vadd.f32 0.0, %v4989
        %v4991 = vpop.f32.mrb[0].mxu0
        %4992 = vmatprep.mubr.f32.mxu0 0.0
        %4993 = vmatmul.mubr.f32.gmra.mrb[0].mxu0 %v4890
        %v4994 = vpop.f32.mrb[0].mxu0
        %v4995 = vadd.f32 0.0, %v4994
        %v4996 = vpop.f32.mrb[0].mxu0
        %4997 = vdwg.mxu0
        %v4998 = vld [vmem:[#allocation3] sm:$0xff]
        %v4999 = vld [vmem:[#allocation3 + $0x8] sm:$0xff]
        %v5000 = vld [vmem:[#allocation3 + $0x10] sm:$0xff]
        %v5001 = vld [vmem:[#allocation3 + $0x18] sm:$0xff]
        %v5002 = vld [vmem:[#allocation3 + $0x20] sm:$0x7]
        %v5003 = vadd.f32 %v4998, %v4975
        %v5004 = vadd.f32 %v4999, %v4980
        %v5005 = vadd.f32 %v5000, %v4985
        %v5006 = vadd.f32 %v5001, %v4990
        %v5007 = vadd.f32 %v5002, %v4995
        %5008 = vst [vmem:[#allocation3] sm:$0xff] %v5003
        %5009 = vst [vmem:[#allocation3 + $0x8] sm:$0xff] %v5004
        %5010 = vst [vmem:[#allocation3 + $0x10] sm:$0xff] %v5005
        %5011 = vst [vmem:[#allocation3 + $0x18] sm:$0xff] %v5006
        %5012 = vst [vmem:[#allocation3 + $0x20] sm:$0x7] %v5007
        %v5013 = vld [vmem:[#allocation4 + $0xf] sm:$0xff]
        %v5014 = vld [vmem:[#allocation4 + $0x17] sm:$0xff]
        %v5015 = vld [vmem:[#allocation4 + $0x1f] sm:$0xff]
        %v5016 = vld [vmem:[#allocation4 + $0x27] sm:$0xff]
        %v5017 = vld [vmem:[#allocation4 + $0x2f] sm:$0x7]
        %s5018 = scalar_lea.vmem %s3, 896
        %v5019 = vld [vmem:[%s5018] sm:$0xff]
        %v5020 = vld [vmem:[%s5018 + $0x8] sm:$0xff]
        %v5021 = vld [vmem:[%s5018 + $0x10] sm:$0xff]
        %v5022 = vld [vmem:[%s5018 + $0x18] sm:$0xff]
        %v5023 = vld [vmem:[%s5018 + $0x20] sm:$0xff]
        %v5024 = vld [vmem:[%s5018 + $0x28] sm:$0xff]
        %v5025 = vld [vmem:[%s5018 + $0x30] sm:$0xff]
        %v5026 = vld [vmem:[%s5018 + $0x38] sm:$0xff]
        %v5027 = vld [vmem:[%s5018 + $0x40] sm:$0xff]
        %v5028 = vld [vmem:[%s5018 + $0x48] sm:$0xff]
        %v5029 = vld [vmem:[%s5018 + $0x50] sm:$0xff]
        %v5030 = vld [vmem:[%s5018 + $0x58] sm:$0xff]
        %v5031 = vld [vmem:[%s5018 + $0x60] sm:$0xff]
        %v5032 = vld [vmem:[%s5018 + $0x68] sm:$0xff]
        %v5033 = vld [vmem:[%s5018 + $0x70] sm:$0xff]
        %v5034 = vld [vmem:[%s5018 + $0x78] sm:$0xff]
        %5035 = vmatprep.subr.mxu0 0.0
        %5036 = vmatpush1.msra.mxu0 %v5019
        %5037 = vmatprep.subr.mxu0 0.0
        %5038 = vmatpush1.msra.mxu0 %v5020
        %5039 = vmatprep.subr.mxu0 0.0
        %5040 = vmatpush1.msra.mxu0 %v5021
        %5041 = vmatprep.subr.mxu0 0.0
        %5042 = vmatpush1.msra.mxu0 %v5022
        %5043 = vmatprep.subr.mxu0 0.0
        %5044 = vmatpush1.msra.mxu0 %v5023
        %5045 = vmatprep.subr.mxu0 0.0
        %5046 = vmatpush1.msra.mxu0 %v5024
        %5047 = vmatprep.subr.mxu0 0.0
        %5048 = vmatpush1.msra.mxu0 %v5025
        %5049 = vmatprep.subr.mxu0 0.0
        %5050 = vmatpush1.msra.mxu0 %v5026
        %5051 = vmatprep.subr.mxu0 0.0
        %5052 = vmatpush1.msra.mxu0 %v5027
        %5053 = vmatprep.subr.mxu0 0.0
        %5054 = vmatpush1.msra.mxu0 %v5028
        %5055 = vmatprep.subr.mxu0 0.0
        %5056 = vmatpush1.msra.mxu0 %v5029
        %5057 = vmatprep.subr.mxu0 0.0
        %5058 = vmatpush1.msra.mxu0 %v5030
        %5059 = vmatprep.subr.mxu0 0.0
        %5060 = vmatpush1.msra.mxu0 %v5031
        %5061 = vmatprep.subr.mxu0 0.0
        %5062 = vmatpush1.msra.mxu0 %v5032
        %5063 = vmatprep.subr.mxu0 0.0
        %5064 = vmatpush1.msra.mxu0 %v5033
        %5065 = vmatprep.subr.mxu0 0.0
        %5066 = vmatpush1.msra.mxu0 %v5034
        %5067 = vmatprep.subr.mxu0 0.0
        %5068 = vmatpush1.msra.mxu0 0.0
        %5069 = vmatprep.subr.mxu0 0.0
        %5070 = vmatpush1.msra.mxu0 0.0
        %5071 = vmatprep.subr.mxu0 0.0
        %5072 = vmatpush1.msra.mxu0 0.0
        %5073 = vmatprep.subr.mxu0 0.0
        %5074 = vmatpush1.msra.mxu0 0.0
        %5075 = vmatprep.subr.mxu0 0.0
        %5076 = vmatpush1.msra.mxu0 0.0
        %5077 = vmatprep.subr.mxu0 0.0
        %5078 = vmatpush1.msra.mxu0 0.0
        %5079 = vmatprep.subr.mxu0 0.0
        %5080 = vmatpush1.msra.mxu0 0.0
        %5081 = vmatprep.subr.mxu0 0.0
        %5082 = vmatpush1.msra.mxu0 0.0
        %5083 = vmatprep.subr.mxu0 0.0
        %5084 = vmatpush1.msra.mxu0 0.0
        %5085 = vmatprep.subr.mxu0 0.0
        %5086 = vmatpush1.msra.mxu0 0.0
        %5087 = vmatprep.subr.mxu0 0.0
        %5088 = vmatpush1.msra.mxu0 0.0
        %5089 = vmatprep.subr.mxu0 0.0
        %5090 = vmatpush1.msra.mxu0 0.0
        %5091 = vmatprep.subr.mxu0 0.0
        %5092 = vmatpush1.msra.mxu0 0.0
        %5093 = vmatprep.subr.mxu0 0.0
        %5094 = vmatpush1.msra.mxu0 0.0
        %5095 = vmatprep.subr.mxu0 0.0
        %5096 = vmatpush1.msra.mxu0 0.0
        %5097 = vmatprep.subr.mxu0 0.0
        %5098 = vmatpush1.msra.mxu0 0.0
        %5099 = vmatprep.mubr.f32.mxu0 0.0
        %5100 = vmatmul.mubr.f32.gmra.mrb[0].mxu0 %v5013
        %v5101 = vpop.f32.mrb[0].mxu0
        %v5102 = vadd.f32 0.0, %v5101
        %v5103 = vpop.f32.mrb[0].mxu0
        %5104 = vmatprep.mubr.f32.mxu0 0.0
        %5105 = vmatmul.mubr.f32.gmra.mrb[0].mxu0 %v5014
        %v5106 = vpop.f32.mrb[0].mxu0
        %v5107 = vadd.f32 0.0, %v5106
        %v5108 = vpop.f32.mrb[0].mxu0
        %5109 = vmatprep.mubr.f32.mxu0 0.0
        %5110 = vmatmul.mubr.f32.gmra.mrb[0].mxu0 %v5015
        %v5111 = vpop.f32.mrb[0].mxu0
        %v5112 = vadd.f32 0.0, %v5111
        %v5113 = vpop.f32.mrb[0].mxu0
        %5114 = vmatprep.mubr.f32.mxu0 0.0
        %5115 = vmatmul.mubr.f32.gmra.mrb[0].mxu0 %v5016
        %v5116 = vpop.f32.mrb[0].mxu0
        %v5117 = vadd.f32 0.0, %v5116
        %v5118 = vpop.f32.mrb[0].mxu0
        %5119 = vmatprep.mubr.f32.mxu0 0.0
        %5120 = vmatmul.mubr.f32.gmra.mrb[0].mxu0 %v5017
        %v5121 = vpop.f32.mrb[0].mxu0
        %v5122 = vadd.f32 0.0, %v5121
        %v5123 = vpop.f32.mrb[0].mxu0
        %5124 = vdwg.mxu0
        %v5125 = vld [vmem:[#allocation3] sm:$0xff]
        %v5126 = vld [vmem:[#allocation3 + $0x8] sm:$0xff]
        %v5127 = vld [vmem:[#allocation3 + $0x10] sm:$0xff]
        %v5128 = vld [vmem:[#allocation3 + $0x18] sm:$0xff]
        %v5129 = vld [vmem:[#allocation3 + $0x20] sm:$0x7]
        %v5130 = vadd.f32 %v5125, %v5102
        %v5131 = vadd.f32 %v5126, %v5107
        %v5132 = vadd.f32 %v5127, %v5112
        %v5133 = vadd.f32 %v5128, %v5117
        %v5134 = vadd.f32 %v5129, %v5122
        %5135 = vst [vmem:[#allocation3] sm:$0xff] %v5130
        %5136 = vst [vmem:[#allocation3 + $0x8] sm:$0xff] %v5131
        %5137 = vst [vmem:[#allocation3 + $0x10] sm:$0xff] %v5132
        %5138 = vst [vmem:[#allocation3 + $0x18] sm:$0xff] %v5133
        %5139 = vst [vmem:[#allocation3 + $0x20] sm:$0x7] %v5134
        %v5140 = vld [vmem:[#allocation4 + $0x10] sm:$0xff]
        %v5141 = vld [vmem:[#allocation4 + $0x18] sm:$0xff]
        %v5142 = vld [vmem:[#allocation4 + $0x20] sm:$0xff]
        %v5143 = vld [vmem:[#allocation4 + $0x28] sm:$0xff]
        %v5144 = vld [vmem:[#allocation4 + $0x30] sm:$0x7]
        %s5145 = scalar_lea.vmem %s3, 1024
        %v5146 = vld [vmem:[%s5145] sm:$0xff]
        %v5147 = vld [vmem:[%s5145 + $0x8] sm:$0xff]
        %v5148 = vld [vmem:[%s5145 + $0x10] sm:$0xff]
        %v5149 = vld [vmem:[%s5145 + $0x18] sm:$0xff]
        %v5150 = vld [vmem:[%s5145 + $0x20] sm:$0xff]
        %v5151 = vld [vmem:[%s5145 + $0x28] sm:$0xff]
        %v5152 = vld [vmem:[%s5145 + $0x30] sm:$0xff]
        %v5153 = vld [vmem:[%s5145 + $0x38] sm:$0xff]
        %v5154 = vld [vmem:[%s5145 + $0x40] sm:$0xff]
        %v5155 = vld [vmem:[%s5145 + $0x48] sm:$0xff]
        %v5156 = vld [vmem:[%s5145 + $0x50] sm:$0xff]
        %v5157 = vld [vmem:[%s5145 + $0x58] sm:$0xff]
        %v5158 = vld [vmem:[%s5145 + $0x60] sm:$0xff]
        %v5159 = vld [vmem:[%s5145 + $0x68] sm:$0xff]
        %v5160 = vld [vmem:[%s5145 + $0x70] sm:$0xff]
        %v5161 = vld [vmem:[%s5145 + $0x78] sm:$0xff]
        %5162 = vmatprep.subr.mxu0 0.0
        %5163 = vmatpush1.msra.mxu0 %v5146
        %5164 = vmatprep.subr.mxu0 0.0
        %5165 = vmatpush1.msra.mxu0 %v5147
        %5166 = vmatprep.subr.mxu0 0.0
        %5167 = vmatpush1.msra.mxu0 %v5148
        %5168 = vmatprep.subr.mxu0 0.0
        %5169 = vmatpush1.msra.mxu0 %v5149
        %5170 = vmatprep.subr.mxu0 0.0
        %5171 = vmatpush1.msra.mxu0 %v5150
        %5172 = vmatprep.subr.mxu0 0.0
        %5173 = vmatpush1.msra.mxu0 %v5151
        %5174 = vmatprep.subr.mxu0 0.0
        %5175 = vmatpush1.msra.mxu0 %v5152
        %5176 = vmatprep.subr.mxu0 0.0
        %5177 = vmatpush1.msra.mxu0 %v5153
        %5178 = vmatprep.subr.mxu0 0.0
        %5179 = vmatpush1.msra.mxu0 %v5154
        %5180 = vmatprep.subr.mxu0 0.0
        %5181 = vmatpush1.msra.mxu0 %v5155
        %5182 = vmatprep.subr.mxu0 0.0
        %5183 = vmatpush1.msra.mxu0 %v5156
        %5184 = vmatprep.subr.mxu0 0.0
        %5185 = vmatpush1.msra.mxu0 %v5157
        %5186 = vmatprep.subr.mxu0 0.0
        %5187 = vmatpush1.msra.mxu0 %v5158
        %5188 = vmatprep.subr.mxu0 0.0
        %5189 = vmatpush1.msra.mxu0 %v5159
        %5190 = vmatprep.subr.mxu0 0.0
        %5191 = vmatpush1.msra.mxu0 %v5160
        %5192 = vmatprep.subr.mxu0 0.0
        %5193 = vmatpush1.msra.mxu0 %v5161
        %5194 = vmatprep.subr.mxu0 0.0
        %5195 = vmatpush1.msra.mxu0 0.0
        %5196 = vmatprep.subr.mxu0 0.0
        %5197 = vmatpush1.msra.mxu0 0.0
        %5198 = vmatprep.subr.mxu0 0.0
        %5199 = vmatpush1.msra.mxu0 0.0
        %5200 = vmatprep.subr.mxu0 0.0
        %5201 = vmatpush1.msra.mxu0 0.0
        %5202 = vmatprep.subr.mxu0 0.0
        %5203 = vmatpush1.msra.mxu0 0.0
        %5204 = vmatprep.subr.mxu0 0.0
        %5205 = vmatpush1.msra.mxu0 0.0
        %5206 = vmatprep.subr.mxu0 0.0
        %5207 = vmatpush1.msra.mxu0 0.0
        %5208 = vmatprep.subr.mxu0 0.0
        %5209 = vmatpush1.msra.mxu0 0.0
        %5210 = vmatprep.subr.mxu0 0.0
        %5211 = vmatpush1.msra.mxu0 0.0
        %5212 = vmatprep.subr.mxu0 0.0
        %5213 = vmatpush1.msra.mxu0 0.0
        %5214 = vmatprep.subr.mxu0 0.0
        %5215 = vmatpush1.msra.mxu0 0.0
        %5216 = vmatprep.subr.mxu0 0.0
        %5217 = vmatpush1.msra.mxu0 0.0
        %5218 = vmatprep.subr.mxu0 0.0
        %5219 = vmatpush1.msra.mxu0 0.0
        %5220 = vmatprep.subr.mxu0 0.0
        %5221 = vmatpush1.msra.mxu0 0.0
        %5222 = vmatprep.subr.mxu0 0.0
        %5223 = vmatpush1.msra.mxu0 0.0
        %5224 = vmatprep.subr.mxu0 0.0
        %5225 = vmatpush1.msra.mxu0 0.0
        %5226 = vmatprep.mubr.f32.mxu0 0.0
        %5227 = vmatmul.mubr.f32.gmra.mrb[0].mxu0 %v5140
        %v5228 = vpop.f32.mrb[0].mxu0
        %v5229 = vadd.f32 0.0, %v5228
        %v5230 = vpop.f32.mrb[0].mxu0
        %5231 = vmatprep.mubr.f32.mxu0 0.0
        %5232 = vmatmul.mubr.f32.gmra.mrb[0].mxu0 %v5141
        %v5233 = vpop.f32.mrb[0].mxu0
        %v5234 = vadd.f32 0.0, %v5233
        %v5235 = vpop.f32.mrb[0].mxu0
        %5236 = vmatprep.mubr.f32.mxu0 0.0
        %5237 = vmatmul.mubr.f32.gmra.mrb[0].mxu0 %v5142
        %v5238 = vpop.f32.mrb[0].mxu0
        %v5239 = vadd.f32 0.0, %v5238
        %v5240 = vpop.f32.mrb[0].mxu0
        %5241 = vmatprep.mubr.f32.mxu0 0.0
        %5242 = vmatmul.mubr.f32.gmra.mrb[0].mxu0 %v5143
        %v5243 = vpop.f32.mrb[0].mxu0
        %v5244 = vadd.f32 0.0, %v5243
        %v5245 = vpop.f32.mrb[0].mxu0
        %5246 = vmatprep.mubr.f32.mxu0 0.0
        %5247 = vmatmul.mubr.f32.gmra.mrb[0].mxu0 %v5144
        %v5248 = vpop.f32.mrb[0].mxu0
        %v5249 = vadd.f32 0.0, %v5248
        %v5250 = vpop.f32.mrb[0].mxu0
        %5251 = vdwg.mxu0
        %v5252 = vld [vmem:[#allocation3] sm:$0xff]
        %v5253 = vld [vmem:[#allocation3 + $0x8] sm:$0xff]
        %v5254 = vld [vmem:[#allocation3 + $0x10] sm:$0xff]
        %v5255 = vld [vmem:[#allocation3 + $0x18] sm:$0xff]
        %v5256 = vld [vmem:[#allocation3 + $0x20] sm:$0x7]
        %v5257 = vadd.f32 %v5252, %v5229
        %v5258 = vadd.f32 %v5253, %v5234
        %v5259 = vadd.f32 %v5254, %v5239
        %v5260 = vadd.f32 %v5255, %v5244
        %v5261 = vadd.f32 %v5256, %v5249
        %5262 = vst [vmem:[#allocation3] sm:$0xff] %v5257
        %5263 = vst [vmem:[#allocation3 + $0x8] sm:$0xff] %v5258
        %5264 = vst [vmem:[#allocation3 + $0x10] sm:$0xff] %v5259
        %5265 = vst [vmem:[#allocation3 + $0x18] sm:$0xff] %v5260
        %5266 = vst [vmem:[#allocation3 + $0x20] sm:$0x7] %v5261
        %v5267 = vld [vmem:[#allocation3] sm:$0xff]
        %v5268 = vld [vmem:[#allocation3 + $0x8] sm:$0xff]
        %v5269 = vld [vmem:[#allocation3 + $0x10] sm:$0xff]
        %v5270 = vld [vmem:[#allocation3 + $0x18] sm:$0xff]
        %v5271 = vld [vmem:[#allocation3 + $0x20] sm:$0x7]
        %v5272 = vld [vmem:[%s4] sm:$0x1]
        %v5274 = vlaneseq
        %v5275 = vshrl.u32 %v5274, 7
        %v5276 = vsub.s32 0, %v5275
        %v5277 = vrot.slane %v5272, %v5276
        %v5279 = vadd.f32 %v5267, %v5277
        %v5280 = vadd.f32 %v5268, %v5277
        %v5281 = vadd.f32 %v5269, %v5277
        %v5282 = vadd.f32 %v5270, %v5277
        %v5283 = vadd.f32 %v5271, %v5277
        %v5284 = vmax.f32 %v5279, 0.0
        %v5285 = vmax.f32 %v5280, 0.0
        %v5286 = vmax.f32 %v5281, 0.0
        %v5287 = vmax.f32 %v5282, 0.0
        %v5288 = vmax.f32 %v5283, 0.0
        %5289 = vst [vmem:[#allocation3] sm:$0xff] %v5284
        %5290 = vst [vmem:[#allocation3 + $0x8] sm:$0xff] %v5285
        %5291 = vst [vmem:[#allocation3 + $0x10] sm:$0xff] %v5286
        %5292 = vst [vmem:[#allocation3 + $0x18] sm:$0xff] %v5287
        %5293 = vst [vmem:[#allocation3 + $0x20] sm:$0x7] %v5288
        %5294 = vst [vmem:[#allocation5] sm:$0xff] 0.0
        %v5295 = vld [vmem:[#allocation3] sm:$0xf]
        %v5296 = vld [vmem:[#allocation3 + $0x7] sm:$0xf]
        %v5297 = vmax.f32 %v5295, %v5296
        %v5299 = vrot.slane %v5297, 1
        %v5301 = vmax.f32 %v5297, %v5299
        %5302 = vst [vmem:[#allocation5] sm:$0x1] %v5301
        %5303 = vst [vmem:[#allocation5 - $0x1] sm:$0x4] %v5301
        %v5304 = vld [vmem:[#allocation3 + $0xe] sm:$0xf]
        %v5305 = vld [vmem:[#allocation3 + $0x15] sm:$0xf]
        %v5306 = vmax.f32 %v5304, %v5305
        %v5308 = vrot.slane %v5306, 1
        %v5310 = vmax.f32 %v5306, %v5308
        %5311 = vst [vmem:[#allocation5 + $0x2] sm:$0x1] %v5310
        %5312 = vst [vmem:[#allocation5 + $0x1] sm:$0x4] %v5310
        %v5313 = vld [vmem:[%s6] sm:$0x1]
        %v5314 = vld [vmem:[#allocation5] sm:$0x1]
        %v5315 = vld [vmem:[%s5] sm:$0xff]
        %v5316 = vld [vmem:[%s5 + $0x8] sm:$0xff]
        %v5317 = vld [vmem:[%s5 + $0x10] sm:$0xff]
        %v5318 = vld [vmem:[%s5 + $0x18] sm:$0xff]
        %v5319 = vld [vmem:[%s5 + $0x20] sm:$0xff]
        %v5320 = vld [vmem:[%s5 + $0x28] sm:$0xff]
        %v5321 = vld [vmem:[%s5 + $0x30] sm:$0xff]
        %v5322 = vld [vmem:[%s5 + $0x38] sm:$0xff]
        %v5323 = vld [vmem:[%s5 + $0x40] sm:$0xff]
        %v5324 = vld [vmem:[%s5 + $0x48] sm:$0xff]
        %v5325 = vld [vmem:[%s5 + $0x50] sm:$0xff]
        %v5326 = vld [vmem:[%s5 + $0x58] sm:$0xff]
        %v5327 = vld [vmem:[%s5 + $0x60] sm:$0xff]
        %v5328 = vld [vmem:[%s5 + $0x68] sm:$0xff]
        %v5329 = vld [vmem:[%s5 + $0x70] sm:$0xff]
        %v5330 = vld [vmem:[%s5 + $0x78] sm:$0xff]
        %5331 = vmatprep.subr.mxu0 0.0
        %5332 = vmatpush1.msra.mxu0 %v5315
        %5333 = vmatprep.subr.mxu0 0.0
        %5334 = vmatpush1.msra.mxu0 %v5316
        %5335 = vmatprep.subr.mxu0 0.0
        %5336 = vmatpush1.msra.mxu0 %v5317
        %5337 = vmatprep.subr.mxu0 0.0
        %5338 = vmatpush1.msra.mxu0 %v5318
        %5339 = vmatprep.subr.mxu0 0.0
        %5340 = vmatpush1.msra.mxu0 %v5319
        %5341 = vmatprep.subr.mxu0 0.0
        %5342 = vmatpush1.msra.mxu0 %v5320
        %5343 = vmatprep.subr.mxu0 0.0
        %5344 = vmatpush1.msra.mxu0 %v5321
        %5345 = vmatprep.subr.mxu0 0.0
        %5346 = vmatpush1.msra.mxu0 %v5322
        %5347 = vmatprep.subr.mxu0 0.0
        %5348 = vmatpush1.msra.mxu0 %v5323
        %5349 = vmatprep.subr.mxu0 0.0
        %5350 = vmatpush1.msra.mxu0 %v5324
        %5351 = vmatprep.subr.mxu0 0.0
        %5352 = vmatpush1.msra.mxu0 %v5325
        %5353 = vmatprep.subr.mxu0 0.0
        %5354 = vmatpush1.msra.mxu0 %v5326
        %5355 = vmatprep.subr.mxu0 0.0
        %5356 = vmatpush1.msra.mxu0 %v5327
        %5357 = vmatprep.subr.mxu0 0.0
        %5358 = vmatpush1.msra.mxu0 %v5328
        %5359 = vmatprep.subr.mxu0 0.0
        %5360 = vmatpush1.msra.mxu0 %v5329
        %5361 = vmatprep.subr.mxu0 0.0
        %5362 = vmatpush1.msra.mxu0 %v5330
        %5363 = vmatprep.subr.mxu0 0.0
        %5364 = vmatpush1.msra.mxu0 0.0
        %5365 = vmatprep.subr.mxu0 0.0
        %5366 = vmatpush1.msra.mxu0 0.0
        %5367 = vmatprep.subr.mxu0 0.0
        %5368 = vmatpush1.msra.mxu0 0.0
        %5369 = vmatprep.subr.mxu0 0.0
        %5370 = vmatpush1.msra.mxu0 0.0
        %5371 = vmatprep.subr.mxu0 0.0
        %5372 = vmatpush1.msra.mxu0 0.0
        %5373 = vmatprep.subr.mxu0 0.0
        %5374 = vmatpush1.msra.mxu0 0.0
        %5375 = vmatprep.subr.mxu0 0.0
        %5376 = vmatpush1.msra.mxu0 0.0
        %5377 = vmatprep.subr.mxu0 0.0
        %5378 = vmatpush1.msra.mxu0 0.0
        %5379 = vmatprep.subr.mxu0 0.0
        %5380 = vmatpush1.msra.mxu0 0.0
        %5381 = vmatprep.subr.mxu0 0.0
        %5382 = vmatpush1.msra.mxu0 0.0
        %5383 = vmatprep.subr.mxu0 0.0
        %5384 = vmatpush1.msra.mxu0 0.0
        %5385 = vmatprep.subr.mxu0 0.0
        %5386 = vmatpush1.msra.mxu0 0.0
        %5387 = vmatprep.subr.mxu0 0.0
        %5388 = vmatpush1.msra.mxu0 0.0
        %5389 = vmatprep.subr.mxu0 0.0
        %5390 = vmatpush1.msra.mxu0 0.0
        %5391 = vmatprep.subr.mxu0 0.0
        %5392 = vmatpush1.msra.mxu0 0.0
        %5393 = vmatprep.subr.mxu0 0.0
        %5394 = vmatpush1.msra.mxu0 0.0
        %5395 = vmatprep.mubr.f32.mxu0 0.0
        %5396 = vmatmul.mubr.f32.gmra.mrb[0].mxu0 %v5314
        %v5397 = vpop.f32.mrb[0].mxu0
        %v5398 = vadd.f32 0.0, %v5397
        %v5399 = vpop.f32.mrb[0].mxu0
        %5400 = vdwg.mxu0
        %v5401 = vadd.f32 %v5313, %v5398
        %v5402 = vld [vmem:[#allocation5 + $0x1] sm:$0x1]
        %s5403 = scalar_lea.vmem %s5, 128
        %v5404 = vld [vmem:[%s5403] sm:$0xff]
        %v5405 = vld [vmem:[%s5403 + $0x8] sm:$0xff]
        %v5406 = vld [vmem:[%s5403 + $0x10] sm:$0xff]
        %v5407 = vld [vmem:[%s5403 + $0x18] sm:$0xff]
        %v5408 = vld [vmem:[%s5403 + $0x20] sm:$0xff]
        %v5409 = vld [vmem:[%s5403 + $0x28] sm:$0xff]
        %v5410 = vld [vmem:[%s5403 + $0x30] sm:$0xff]
        %v5411 = vld [vmem:[%s5403 + $0x38] sm:$0xff]
        %v5412 = vld [vmem:[%s5403 + $0x40] sm:$0xff]
        %v5413 = vld [vmem:[%s5403 + $0x48] sm:$0xff]
        %v5414 = vld [vmem:[%s5403 + $0x50] sm:$0xff]
        %v5415 = vld [vmem:[%s5403 + $0x58] sm:$0xff]
        %v5416 = vld [vmem:[%s5403 + $0x60] sm:$0xff]
        %v5417 = vld [vmem:[%s5403 + $0x68] sm:$0xff]
        %v5418 = vld [vmem:[%s5403 + $0x70] sm:$0xff]
        %v5419 = vld [vmem:[%s5403 + $0x78] sm:$0xff]
        %5420 = vmatprep.subr.mxu0 0.0
        %5421 = vmatpush1.msra.mxu0 %v5404
        %5422 = vmatprep.subr.mxu0 0.0
        %5423 = vmatpush1.msra.mxu0 %v5405
        %5424 = vmatprep.subr.mxu0 0.0
        %5425 = vmatpush1.msra.mxu0 %v5406
        %5426 = vmatprep.subr.mxu0 0.0
        %5427 = vmatpush1.msra.mxu0 %v5407
        %5428 = vmatprep.subr.mxu0 0.0
        %5429 = vmatpush1.msra.mxu0 %v5408
        %5430 = vmatprep.subr.mxu0 0.0
        %5431 = vmatpush1.msra.mxu0 %v5409
        %5432 = vmatprep.subr.mxu0 0.0
        %5433 = vmatpush1.msra.mxu0 %v5410
        %5434 = vmatprep.subr.mxu0 0.0
        %5435 = vmatpush1.msra.mxu0 %v5411
        %5436 = vmatprep.subr.mxu0 0.0
        %5437 = vmatpush1.msra.mxu0 %v5412
        %5438 = vmatprep.subr.mxu0 0.0
        %5439 = vmatpush1.msra.mxu0 %v5413
        %5440 = vmatprep.subr.mxu0 0.0
        %5441 = vmatpush1.msra.mxu0 %v5414
        %5442 = vmatprep.subr.mxu0 0.0
        %5443 = vmatpush1.msra.mxu0 %v5415
        %5444 = vmatprep.subr.mxu0 0.0
        %5445 = vmatpush1.msra.mxu0 %v5416
        %5446 = vmatprep.subr.mxu0 0.0
        %5447 = vmatpush1.msra.mxu0 %v5417
        %5448 = vmatprep.subr.mxu0 0.0
        %5449 = vmatpush1.msra.mxu0 %v5418
        %5450 = vmatprep.subr.mxu0 0.0
        %5451 = vmatpush1.msra.mxu0 %v5419
        %5452 = vmatprep.subr.mxu0 0.0
        %5453 = vmatpush1.msra.mxu0 0.0
        %5454 = vmatprep.subr.mxu0 0.0
        %5455 = vmatpush1.msra.mxu0 0.0
        %5456 = vmatprep.subr.mxu0 0.0
        %5457 = vmatpush1.msra.mxu0 0.0
        %5458 = vmatprep.subr.mxu0 0.0
        %5459 = vmatpush1.msra.mxu0 0.0
        %5460 = vmatprep.subr.mxu0 0.0
        %5461 = vmatpush1.msra.mxu0 0.0
        %5462 = vmatprep.subr.mxu0 0.0
        %5463 = vmatpush1.msra.mxu0 0.0
        %5464 = vmatprep.subr.mxu0 0.0
        %5465 = vmatpush1.msra.mxu0 0.0
        %5466 = vmatprep.subr.mxu0 0.0
        %5467 = vmatpush1.msra.mxu0 0.0
        %5468 = vmatprep.subr.mxu0 0.0
        %5469 = vmatpush1.msra.mxu0 0.0
        %5470 = vmatprep.subr.mxu0 0.0
        %5471 = vmatpush1.msra.mxu0 0.0
        %5472 = vmatprep.subr.mxu0 0.0
        %5473 = vmatpush1.msra.mxu0 0.0
        %5474 = vmatprep.subr.mxu0 0.0
        %5475 = vmatpush1.msra.mxu0 0.0
        %5476 = vmatprep.subr.mxu0 0.0
        %5477 = vmatpush1.msra.mxu0 0.0
        %5478 = vmatprep.subr.mxu0 0.0
        %5479 = vmatpush1.msra.mxu0 0.0
        %5480 = vmatprep.subr.mxu0 0.0
        %5481 = vmatpush1.msra.mxu0 0.0
        %5482 = vmatprep.subr.mxu0 0.0
        %5483 = vmatpush1.msra.mxu0 0.0
        %5484 = vmatprep.mubr.f32.mxu0 0.0
        %5485 = vmatmul.mubr.f32.gmra.mrb[0].mxu0 %v5402
        %v5486 = vpop.f32.mrb[0].mxu0
        %v5487 = vadd.f32 0.0, %v5486
        %v5488 = vpop.f32.mrb[0].mxu0
        %5489 = vdwg.mxu0
        %v5490 = vadd.f32 %v5401, %v5487
        %v5491 = vld [vmem:[#allocation5 + $0x2] sm:$0x1]
        %s5492 = scalar_lea.vmem %s5, 256
        %v5493 = vld [vmem:[%s5492] sm:$0xff]
        %v5494 = vld [vmem:[%s5492 + $0x8] sm:$0xff]
        %v5495 = vld [vmem:[%s5492 + $0x10] sm:$0xff]
        %v5496 = vld [vmem:[%s5492 + $0x18] sm:$0xff]
        %v5497 = vld [vmem:[%s5492 + $0x20] sm:$0xff]
        %v5498 = vld [vmem:[%s5492 + $0x28] sm:$0xff]
        %v5499 = vld [vmem:[%s5492 + $0x30] sm:$0xff]
        %v5500 = vld [vmem:[%s5492 + $0x38] sm:$0xff]
        %v5501 = vld [vmem:[%s5492 + $0x40] sm:$0xff]
        %v5502 = vld [vmem:[%s5492 + $0x48] sm:$0xff]
        %v5503 = vld [vmem:[%s5492 + $0x50] sm:$0xff]
        %v5504 = vld [vmem:[%s5492 + $0x58] sm:$0xff]
        %v5505 = vld [vmem:[%s5492 + $0x60] sm:$0xff]
        %v5506 = vld [vmem:[%s5492 + $0x68] sm:$0xff]
        %v5507 = vld [vmem:[%s5492 + $0x70] sm:$0xff]
        %v5508 = vld [vmem:[%s5492 + $0x78] sm:$0xff]
        %5509 = vmatprep.subr.mxu0 0.0
        %5510 = vmatpush1.msra.mxu0 %v5493
        %5511 = vmatprep.subr.mxu0 0.0
        %5512 = vmatpush1.msra.mxu0 %v5494
        %5513 = vmatprep.subr.mxu0 0.0
        %5514 = vmatpush1.msra.mxu0 %v5495
        %5515 = vmatprep.subr.mxu0 0.0
        %5516 = vmatpush1.msra.mxu0 %v5496
        %5517 = vmatprep.subr.mxu0 0.0
        %5518 = vmatpush1.msra.mxu0 %v5497
        %5519 = vmatprep.subr.mxu0 0.0
        %5520 = vmatpush1.msra.mxu0 %v5498
        %5521 = vmatprep.subr.mxu0 0.0
        %5522 = vmatpush1.msra.mxu0 %v5499
        %5523 = vmatprep.subr.mxu0 0.0
        %5524 = vmatpush1.msra.mxu0 %v5500
        %5525 = vmatprep.subr.mxu0 0.0
        %5526 = vmatpush1.msra.mxu0 %v5501
        %5527 = vmatprep.subr.mxu0 0.0
        %5528 = vmatpush1.msra.mxu0 %v5502
        %5529 = vmatprep.subr.mxu0 0.0
        %5530 = vmatpush1.msra.mxu0 %v5503
        %5531 = vmatprep.subr.mxu0 0.0
        %5532 = vmatpush1.msra.mxu0 %v5504
        %5533 = vmatprep.subr.mxu0 0.0
        %5534 = vmatpush1.msra.mxu0 %v5505
        %5535 = vmatprep.subr.mxu0 0.0
        %5536 = vmatpush1.msra.mxu0 %v5506
        %5537 = vmatprep.subr.mxu0 0.0
        %5538 = vmatpush1.msra.mxu0 %v5507
        %5539 = vmatprep.subr.mxu0 0.0
        %5540 = vmatpush1.msra.mxu0 %v5508
        %5541 = vmatprep.subr.mxu0 0.0
        %5542 = vmatpush1.msra.mxu0 0.0
        %5543 = vmatprep.subr.mxu0 0.0
        %5544 = vmatpush1.msra.mxu0 0.0
        %5545 = vmatprep.subr.mxu0 0.0
        %5546 = vmatpush1.msra.mxu0 0.0
        %5547 = vmatprep.subr.mxu0 0.0
        %5548 = vmatpush1.msra.mxu0 0.0
        %5549 = vmatprep.subr.mxu0 0.0
        %5550 = vmatpush1.msra.mxu0 0.0
        %5551 = vmatprep.subr.mxu0 0.0
        %5552 = vmatpush1.msra.mxu0 0.0
        %5553 = vmatprep.subr.mxu0 0.0
        %5554 = vmatpush1.msra.mxu0 0.0
        %5555 = vmatprep.subr.mxu0 0.0
        %5556 = vmatpush1.msra.mxu0 0.0
        %5557 = vmatprep.subr.mxu0 0.0
        %5558 = vmatpush1.msra.mxu0 0.0
        %5559 = vmatprep.subr.mxu0 0.0
        %5560 = vmatpush1.msra.mxu0 0.0
        %5561 = vmatprep.subr.mxu0 0.0
        %5562 = vmatpush1.msra.mxu0 0.0
        %5563 = vmatprep.subr.mxu0 0.0
        %5564 = vmatpush1.msra.mxu0 0.0
        %5565 = vmatprep.subr.mxu0 0.0
        %5566 = vmatpush1.msra.mxu0 0.0
        %5567 = vmatprep.subr.mxu0 0.0
        %5568 = vmatpush1.msra.mxu0 0.0
        %5569 = vmatprep.subr.mxu0 0.0
        %5570 = vmatpush1.msra.mxu0 0.0
        %5571 = vmatprep.subr.mxu0 0.0
        %5572 = vmatpush1.msra.mxu0 0.0
        %5573 = vmatprep.mubr.f32.mxu0 0.0
        %5574 = vmatmul.mubr.f32.gmra.mrb[0].mxu0 %v5491
        %v5575 = vpop.f32.mrb[0].mxu0
        %v5576 = vadd.f32 0.0, %v5575
        %v5577 = vpop.f32.mrb[0].mxu0
        %5578 = vdwg.mxu0
        %v5579 = vadd.f32 %v5490, %v5576
        %v5580 = vld [vmem:[#allocation5 + $0x3] sm:$0x1]
        %s5581 = scalar_lea.vmem %s5, 384
        %v5582 = vld [vmem:[%s5581] sm:$0xff]
        %v5583 = vld [vmem:[%s5581 + $0x8] sm:$0xff]
        %v5584 = vld [vmem:[%s5581 + $0x10] sm:$0xff]
        %v5585 = vld [vmem:[%s5581 + $0x18] sm:$0xff]
        %v5586 = vld [vmem:[%s5581 + $0x20] sm:$0xff]
        %v5587 = vld [vmem:[%s5581 + $0x28] sm:$0xff]
        %v5588 = vld [vmem:[%s5581 + $0x30] sm:$0xff]
        %v5589 = vld [vmem:[%s5581 + $0x38] sm:$0xff]
        %v5590 = vld [vmem:[%s5581 + $0x40] sm:$0xff]
        %v5591 = vld [vmem:[%s5581 + $0x48] sm:$0xff]
        %v5592 = vld [vmem:[%s5581 + $0x50] sm:$0xff]
        %v5593 = vld [vmem:[%s5581 + $0x58] sm:$0xff]
        %v5594 = vld [vmem:[%s5581 + $0x60] sm:$0xff]
        %v5595 = vld [vmem:[%s5581 + $0x68] sm:$0xff]
        %v5596 = vld [vmem:[%s5581 + $0x70] sm:$0xff]
        %v5597 = vld [vmem:[%s5581 + $0x78] sm:$0xff]
        %5598 = vmatprep.subr.mxu0 0.0
        %5599 = vmatpush1.msra.mxu0 %v5582
        %5600 = vmatprep.subr.mxu0 0.0
        %5601 = vmatpush1.msra.mxu0 %v5583
        %5602 = vmatprep.subr.mxu0 0.0
        %5603 = vmatpush1.msra.mxu0 %v5584
        %5604 = vmatprep.subr.mxu0 0.0
        %5605 = vmatpush1.msra.mxu0 %v5585
        %5606 = vmatprep.subr.mxu0 0.0
        %5607 = vmatpush1.msra.mxu0 %v5586
        %5608 = vmatprep.subr.mxu0 0.0
        %5609 = vmatpush1.msra.mxu0 %v5587
        %5610 = vmatprep.subr.mxu0 0.0
        %5611 = vmatpush1.msra.mxu0 %v5588
        %5612 = vmatprep.subr.mxu0 0.0
        %5613 = vmatpush1.msra.mxu0 %v5589
        %5614 = vmatprep.subr.mxu0 0.0
        %5615 = vmatpush1.msra.mxu0 %v5590
        %5616 = vmatprep.subr.mxu0 0.0
        %5617 = vmatpush1.msra.mxu0 %v5591
        %5618 = vmatprep.subr.mxu0 0.0
        %5619 = vmatpush1.msra.mxu0 %v5592
        %5620 = vmatprep.subr.mxu0 0.0
        %5621 = vmatpush1.msra.mxu0 %v5593
        %5622 = vmatprep.subr.mxu0 0.0
        %5623 = vmatpush1.msra.mxu0 %v5594
        %5624 = vmatprep.subr.mxu0 0.0
        %5625 = vmatpush1.msra.mxu0 %v5595
        %5626 = vmatprep.subr.mxu0 0.0
        %5627 = vmatpush1.msra.mxu0 %v5596
        %5628 = vmatprep.subr.mxu0 0.0
        %5629 = vmatpush1.msra.mxu0 %v5597
        %5630 = vmatprep.subr.mxu0 0.0
        %5631 = vmatpush1.msra.mxu0 0.0
        %5632 = vmatprep.subr.mxu0 0.0
        %5633 = vmatpush1.msra.mxu0 0.0
        %5634 = vmatprep.subr.mxu0 0.0
        %5635 = vmatpush1.msra.mxu0 0.0
        %5636 = vmatprep.subr.mxu0 0.0
        %5637 = vmatpush1.msra.mxu0 0.0
        %5638 = vmatprep.subr.mxu0 0.0
        %5639 = vmatpush1.msra.mxu0 0.0
        %5640 = vmatprep.subr.mxu0 0.0
        %5641 = vmatpush1.msra.mxu0 0.0
        %5642 = vmatprep.subr.mxu0 0.0
        %5643 = vmatpush1.msra.mxu0 0.0
        %5644 = vmatprep.subr.mxu0 0.0
        %5645 = vmatpush1.msra.mxu0 0.0
        %5646 = vmatprep.subr.mxu0 0.0
        %5647 = vmatpush1.msra.mxu0 0.0
        %5648 = vmatprep.subr.mxu0 0.0
        %5649 = vmatpush1.msra.mxu0 0.0
        %5650 = vmatprep.subr.mxu0 0.0
        %5651 = vmatpush1.msra.mxu0 0.0
        %5652 = vmatprep.subr.mxu0 0.0
        %5653 = vmatpush1.msra.mxu0 0.0
        %5654 = vmatprep.subr.mxu0 0.0
        %5655 = vmatpush1.msra.mxu0 0.0
        %5656 = vmatprep.subr.mxu0 0.0
        %5657 = vmatpush1.msra.mxu0 0.0
        %5658 = vmatprep.subr.mxu0 0.0
        %5659 = vmatpush1.msra.mxu0 0.0
        %5660 = vmatprep.subr.mxu0 0.0
        %5661 = vmatpush1.msra.mxu0 0.0
        %5662 = vmatprep.mubr.f32.mxu0 0.0
        %5663 = vmatmul.mubr.f32.gmra.mrb[0].mxu0 %v5580
        %v5664 = vpop.f32.mrb[0].mxu0
        %v5665 = vadd.f32 0.0, %v5664
        %v5666 = vpop.f32.mrb[0].mxu0
        %5667 = vdwg.mxu0
        %v5668 = vadd.f32 %v5579, %v5665
        %5669 = vst [vmem:[%s285] sm:$0x1] %v5668
        %s5670 = sand.u32 %s182, 1
        %s5671 = scalar_lea.sflag [#allocation8], %s5670
        %s5672 = sand.u32 %s182, 1
        %s5673 = scalar_lea.vmem [#allocation9], %s5672
        // Predicated region
        $region53: #{forward.1} parent=47 // pred_check
          %p5674 = pneg %p192
        $region54: #{forward.1} parent=47 // pred_check_branch
          %5676 = sbr.rel (%p5674) target = $region56
        $region55: #{forward.1} parent=47 // pred_region
          %s5678 = ssub.s32 16, 16
          %5679 = vsyncadd %s5671, %s5678
          %s5680 = smul.addr %s22, 16
          %s5681 = scalar_lea.hbm %s7, %s5680
          %s5683 = sshll.u32 %s5673, 4
          %s5684 = int_to_ptr.vmem [resolvable:$true] %s5683
          %5686 = dma.vmem_to_hbm [thread:$0]  %s5684, 16, %s5681, %s5671
        $region56: #{forward.1} parent=47 // pred_fallthru
          _
      $region48: #{forward.1} parent=5 // pred_fallthru
        _
      %p5687 = scmp.le.s32.totalorder 2, %s17
      // Predicated region
      $region57: #{forward.1} parent=5 // pred_check
        %p5688 = pneg %p5687
      $region58: #{forward.1} parent=5 // pred_check_branch
        %5690 = sbr.rel (%p5688) target = $region60
      $region59: #{forward.1} parent=5 // pred_region
        %s5691 = ssub.s32 %s17, 2
        // Predicated region
        $region61: #{forward.1} parent=59 // pred_check
          %p5692 = pneg %p198
        $region62: #{forward.1} parent=59 // pred_check_branch
          %5694 = sbr.rel (%p5692) target = $region64
        $region63: #{forward.1} parent=59 // pred_region
          %s5695 = sand.u32 %s183, 1
          %s5696 = scalar_lea.sflag [#allocation8], %s5695
          %s5697 = sand.u32 %s183, 1
          %s5698 = scalar_lea.vmem [#allocation9], %s5697
          %5699 = dma.done %s5696, 16
        $region64: #{forward.1} parent=59 // pred_fallthru
          _
      $region60: #{forward.1} parent=5 // pred_fallthru
        _
    $region6: #{forward.1} parent=1 // loop_footer
      %s21 = sadd.s32 1, %s17
    $region7: #{forward.1} parent=1 // loop_footer_branch
      %16 = sbr.rel target = $region3
    $region8: #{forward.1} parent=1 // loop_exit
      _
    %5700 = vsyncpa [#allocation7], 1
    %s5701 = scalar_lea.sflag [#allocation7], 1
    %5702 = vsyncpa %s5701, 1
    %5703 = vsyncpa [#allocation8], 1
    %s5704 = scalar_lea.sflag [#allocation8], 1
    %5705 = vsyncpa %s5704, 1

</llo_original>
